<compile_context>
chip_gen: v7x
topology: tpu7x:2x2x1
jax: 0.10.0
libtpu: 0.0.40
codegen_flags: <defaults>
</compile_context>

<pallas_src>
import functools

import jax
import jax.numpy as jnp
import numpy as np
from jax.experimental import pallas as pl
from jax.experimental.pallas import tpu as pltpu


# ----------------------------------------------------------------------------
# Pallas kernel: each grid step processes `bw` windows at once.
# ----------------------------------------------------------------------------
def _window_attention_kernel(x_ref, wqkv_ref, bqkv_ref, bias_ref, wproj_ref,
                             bproj_ref, o_ref, *, num_heads):
    bw, N, C = x_ref.shape
    H = num_heads
    d = C // H

    # QKV projection for all bw windows at once: (bw*N, C) @ (C, 3C) + (1, 3C)
    x2 = x_ref[...].reshape(bw * N, C)                       # bf16 stream
    qkv = jnp.dot(x2, wqkv_ref[...],
                  preferred_element_type=jnp.float32)        # f32 accumulate
    qkv = (qkv + bqkv_ref[...]).astype(jnp.bfloat16)         # bf16 MXU operands
    qkv = qkv.reshape(bw, N, 3 * C)

    bias_f32 = bias_ref[...].astype(jnp.float32)             # (H, N, N), hoisted cast

    # Per-head attention with the output projection folded per head: avoids the
    # lane-interleaving concatenate of 8-wide head chunks entirely.
    out_acc = jnp.zeros((bw * N, C), jnp.float32)
    for h in range(H):                                       # small static loop
        # qk scale already folded into the Q columns of wqkv/bqkv
        qh = qkv[:, :, h * d:(h + 1) * d]                    # (bw, N, d) bf16
        kh = qkv[:, :, C + h * d:C + (h + 1) * d]            # (bw, N, d) bf16
        vh = qkv[:, :, 2 * C + h * d:2 * C + (h + 1) * d]    # (bw, N, d) bf16

        s = jnp.einsum("bqd,bkd->bqk", qh, kh,
                       preferred_element_type=jnp.float32)   # (bw, N, N) f32
        s = s + bias_f32[h][None]                            # relative position bias
        # numerically-stable softmax over the key axis (f32)
        s = s - jnp.max(s, axis=-1, keepdims=True)
        p = jnp.exp(s)
        p = p * pl.reciprocal(jnp.sum(p, axis=-1, keepdims=True), approx=True)
        # attn_drop is p=0.0 -> identity (eval semantics)
        oh = jnp.einsum("bqk,bkd->bqd", p.astype(jnp.bfloat16), vh,
                        preferred_element_type=jnp.float32)  # (bw, N, d) f32
        # fold this head's slice of the projection: out += o_h @ wproj[h*d:(h+1)*d,:]
        out_acc = out_acc + jnp.dot(
            oh.reshape(bw * N, d).astype(jnp.bfloat16), wproj_ref[h],
            preferred_element_type=jnp.float32)

    out = out_acc + bproj_ref[...]                           # (bw*N, C) f32
    # proj_drop is p=0.0 -> identity
    # TODO(synk): a lane-dense (bw, N*C) output slab would avoid 32-lane masked
    # stores; the in-kernel relayout partially offsets the gain, so measure first.
    o_ref[...] = out.reshape(bw, N, C).astype(o_ref.dtype)


# ----------------------------------------------------------------------------
# VMEM-aware block-size / limit selection
# ----------------------------------------------------------------------------
def _vmem_limit_bytes():
    cap = 64 * 1024 * 1024          # conservative default: v7x per-TC physical VMEM
    try:
        info = pltpu.get_tpu_info()
        cap = int(getattr(info, "vmem_capacity_bytes", cap) or cap)
    except Exception:
        pass
    # ~75% of physical (48 MiB on v7x, 96 MiB on v5e/v6e), capped at 100 MiB,
    # leaving headroom for the compiler's own scratch.
    return min((cap * 3) // 4, 100 * 1024 * 1024)


def _select_block_windows(B_, N, C, H, max_block_windows, vmem_budget):
    bf16, f32 = 2, 4
    d = C // H
    # Grid-invariant inputs are still double-buffered by the pipeline.
    fixed = (2 * C * 3 * C * bf16            # wqkv
             + 2 * 3 * C * f32               # bqkv
             + 2 * H * N * N * bf16          # relative position bias (bf16)
             + 2 * H * d * C * bf16          # wproj (as (H, d, C))
             + 2 * C * f32)                  # bproj
    per_window = (2 * N * C * bf16           # x block, double-buffered
                  + 2 * N * C * bf16         # out block, double-buffered
                  + N * 3 * C * (f32 + bf16) # qkv f32 intermediate + bf16 copy
                  + H * N * N * (f32 + bf16) # scores f32 + probs bf16 (upper bound)
                  + N * d * f32              # per-head attn@V output
                  + N * C * f32)             # proj accumulator
    avail = max(vmem_budget - fixed, per_window)
    bw = max(1, min(B_, max_block_windows, avail // per_window))
    # Keep the grid at >=2 (>=4 for larger B_) steps so multi-TensorCore chips can
    # shard the "parallel" axis, but never drop below 8 windows/step (matmul shapes
    # and masked-store epilogues degrade badly below that).
    if B_ >= 16:
        min_steps = 4 if B_ >= 32 else 2
        bw = min(bw, max(8, -(-B_ // min_steps)))
    return int(bw)


def window_attention_pallas(x, wqkv, bqkv, rel_bias, wproj, bproj, *,
                            num_heads, scale, max_block_windows=32,
                            compute_dtype=jnp.bfloat16):
    """x: (B_, N, C); rel_bias: (H, N, N) precomputed relative position bias.

    Activations/weights are streamed in `compute_dtype` (bf16 by default); all
    accumulation and the softmax are f32.  Output dtype is `compute_dtype`.
    """
    B_, N, C = x.shape
    H = num_heads
    d = C // H

    vmem_limit = _vmem_limit_bytes()
    bw = _select_block_windows(B_, N, C, H, max_block_windows, vmem_limit)

    # Pad B_ up to a multiple of bw (sliced off after the call) rather than
    # degrading toward bw=1 when B_ has awkward factors.
    B_pad = -(-B_ // bw) * bw
    grid = (B_pad // bw,)

    # One-time parameter transform: fold the qk scale into the Q columns.
    col_scale = jnp.concatenate([jnp.full((C,), scale, jnp.float32),
                                 jnp.ones((2 * C,), jnp.float32)])
    wqkv_p = (wqkv.astype(jnp.float32) * col_scale[None, :]).astype(compute_dtype)
    bqkv_p = (bqkv.astype(jnp.float32) * col_scale[None, :]).astype(jnp.float32)
    wproj_p = wproj.astype(compute_dtype).reshape(H, d, C)   # head-major row blocks
    bproj_p = bproj.astype(jnp.float32)
    rel_bias_p = rel_bias.astype(compute_dtype)              # bf16 stream, f32 add
    x_p = x.astype(compute_dtype)
    if B_pad != B_:
        x_p = jnp.pad(x_p, ((0, B_pad - B_), (0, 0), (0, 0)))

    kernel = functools.partial(_window_attention_kernel, num_heads=num_heads)

    itemsize = jnp.dtype(compute_dtype).itemsize
    cost = pl.CostEstimate(
        flops=(2 * B_pad * N * C * 3 * C            # qkv projection
               + 4 * B_pad * H * N * N * d          # q@k^T and attn@v
               + 2 * B_pad * N * C * C),            # output projection
        transcendentals=B_pad * H * N * N,          # exp in softmax
        bytes_accessed=(2 * B_pad * N * C * itemsize          # x in + o out
                        + (3 * C * C + C * C) * itemsize       # weights
                        + H * N * N * itemsize + 4 * C * 4),   # bias tables
    )

    out = pl.pallas_call(
        kernel,
        out_shape=jax.ShapeDtypeStruct((B_pad, N, C), compute_dtype),
        grid_spec=pltpu.PrefetchScalarGridSpec(
            num_scalar_prefetch=0,
            grid=grid,
            in_specs=[
                pl.BlockSpec((bw, N, C), lambda b: (b, 0, 0)),     # x (bw windows)
                pl.BlockSpec((C, 3 * C), lambda b: (0, 0)),        # qkv weight
                pl.BlockSpec((1, 3 * C), lambda b: (0, 0)),        # qkv bias
                pl.BlockSpec((H, N, N), lambda b: (0, 0, 0)),      # rel pos bias
                pl.BlockSpec((H, d, C), lambda b: (0, 0, 0)),      # proj weight
                pl.BlockSpec((1, C), lambda b: (0, 0)),            # proj bias
            ],
            out_specs=pl.BlockSpec((bw, N, C), lambda b: (b, 0, 0)),
        ),
        compiler_params=pltpu.CompilerParams(
            dimension_semantics=("parallel",),
            vmem_limit_bytes=vmem_limit,
        ),
        cost_estimate=cost,
    )(x_p, wqkv_p, bqkv_p, rel_bias_p, wproj_p, bproj_p)

    return out[:B_] if B_pad != B_ else out


# ----------------------------------------------------------------------------
# Glue: relative position index (same math as the PyTorch __init__, in numpy)
# ----------------------------------------------------------------------------
def make_relative_position_index(window_size):
    Wh, Ww, Wt = window_size
    coords = np.stack(np.meshgrid(np.arange(Wh), np.arange(Ww), np.arange(Wt),
                                  indexing="ij"))                  # (3, Wh, Ww, Wt)
    coords_flatten = coords.reshape(3, -1)                         # (3, N)
    rel = coords_flatten[:, :, None] - coords_flatten[:, None, :]  # (3, N, N)
    rel = rel.transpose(1, 2, 0).copy()                            # (N, N, 3)
    rel[:, :, 0] += Wh - 1
    rel[:, :, 1] += Ww - 1
    rel[:, :, 2] += Wt - 1
    rel[:, :, 0] *= (2 * Ww - 1) * (2 * Wt - 1)
    rel[:, :, 1] *= (2 * Wt - 1)
    return rel.sum(-1)                                             # (N, N) int


def make_relative_position_bias(table, index, window_size, num_heads):
    N = window_size[0] * window_size[1] * window_size[2]
    bias = table[index.reshape(-1)].reshape(N, N, num_heads)       # gather (glue)
    return jnp.transpose(bias, (2, 0, 1)).astype(jnp.float32)      # (H, N, N)


# ----------------------------------------------------------------------------
# Pure-JAX reference (mirrors the PyTorch forward, mask=None path, full f32)
# ----------------------------------------------------------------------------
def window_attention_ref(x, wqkv, bqkv, rel_bias, wproj, bproj, *, num_heads, scale):
    B_, N, C = x.shape
    d = C // num_heads
    qkv = x @ wqkv + bqkv[0]                                       # (B_, N, 3C)
    qkv = qkv.reshape(B_, N, 3, num_heads, d).transpose(2, 0, 3, 1, 4)
    q, k, v = qkv[0] * scale, qkv[1], qkv[2]                       # (B_, H, N, d)
    attn = jnp.einsum("bhnd,bhmd->bhnm", q, k) + rel_bias[None]
    attn = jax.nn.softmax(attn, axis=-1)
    out = jnp.einsum("bhnm,bhmd->bhnd", attn, v)
    out = out.transpose(0, 2, 1, 3).reshape(B_, N, C)
    return out @ wproj + bproj[0]


# TODO(synk): optional `mask` argument (shifted-window path) is not wired into the
# kernel; it can be folded into the per-window additive bias outside the kernel.

if __name__ == "__main__":
    # Small shapes consistent with the module
    window_size = (4, 4, 4)         # Wh, Ww, Wt  -> N = 64
    dim = 32                        # C
    num_heads = 4                   # H, head_dim = 8
    B_ = 16                         # num_windows * batch
    N = window_size[0] * window_size[1] * window_size[2]
    head_dim = dim // num_heads
    scale = head_dim ** (-0.5)

    key = jax.random.PRNGKey(0)
    k_x, k_tab, k_wq, k_bq, k_wp, k_bp = jax.random.split(key, 6)

    x = jax.random.normal(k_x, (B_, N, dim), dtype=jnp.float32)

    # Deterministic parameter init (synthetic weights, not a checkpoint)
    table_size = ((2 * window_size[0] - 1) * (2 * window_size[1] - 1)
                  * (2 * window_size[2] - 1))
    rel_table = 0.02 * jax.random.normal(k_tab, (table_size, num_heads), dtype=jnp.float32)
    wqkv = 0.08 * jax.random.normal(k_wq, (dim, 3 * dim), dtype=jnp.float32)
    bqkv = 0.05 * jax.random.normal(k_bq, (1, 3 * dim), dtype=jnp.float32)
    wproj = 0.15 * jax.random.normal(k_wp, (dim, dim), dtype=jnp.float32)
    bproj = 0.05 * jax.random.normal(k_bp, (1, dim), dtype=jnp.float32)

    rel_index = make_relative_position_index(window_size)
    rel_bias = make_relative_position_bias(rel_table, rel_index, window_size, num_heads)

    out = window_attention_pallas(x, wqkv, bqkv, rel_bias, wproj, bproj,
                                  num_heads=num_heads, scale=scale)   # bw=8, grid=(2,)
    out = jax.block_until_ready(out)

    ref = window_attention_ref(x, wqkv, bqkv, rel_bias, wproj, bproj,
                               num_heads=num_heads, scale=scale)
    np.testing.assert_allclose(np.asarray(out, dtype=np.float32), np.asarray(ref),
                               atol=2.5e-2, rtol=2.5e-2)

    print("KERNEL_OK")
</pallas_src>

<mosaic_0001>
module attributes {stable_mosaic.version = 11 : i64} {
  func.func @_window_attention_kernel(%arg0: i32, %arg1: memref<8x64x32xbf16, #tpu.memory_space<vmem>>, %arg2: memref<32x96xbf16, #tpu.memory_space<vmem>>, %arg3: memref<1x96xf32, #tpu.memory_space<vmem>>, %arg4: memref<4x64x64xbf16, #tpu.memory_space<vmem>>, %arg5: memref<4x8x32xbf16, #tpu.memory_space<vmem>>, %arg6: memref<1x32xf32, #tpu.memory_space<vmem>>, %arg7: memref<8x64x32xbf16, #tpu.memory_space<vmem>>) attributes {dimension_semantics = [#tpu.dimension_semantics<parallel>], iteration_bounds = array<i64: 2>, scalar_prefetch = 0 : i64, scratch_operands = 0 : i64, tpu.core_type = #tpu.core_type<tc>, window_params = [{transform_indices = @transform_0, window_bounds = array<i64: 8, 64, 32>}, {pipeline_mode = #tpu.pipeline_mode<synchronous>, transform_indices = @transform_1, window_bounds = array<i64: 32, 96>}, {pipeline_mode = #tpu.pipeline_mode<synchronous>, transform_indices = @transform_2, window_bounds = array<i64: 1, 96>}, {pipeline_mode = #tpu.pipeline_mode<synchronous>, transform_indices = @transform_3, window_bounds = array<i64: 4, 64, 64>}, {pipeline_mode = #tpu.pipeline_mode<synchronous>, transform_indices = @transform_4, window_bounds = array<i64: 4, 8, 32>}, {pipeline_mode = #tpu.pipeline_mode<synchronous>, transform_indices = @transform_5, window_bounds = array<i64: 1, 32>}, {transform_indices = @transform_6, window_bounds = array<i64: 8, 64, 32>}]} {
    %c0 = arith.constant 0 : index
    %c0_0 = arith.constant 0 : index
    %c0_1 = arith.constant 0 : index
    %0 = vector.load %arg1[%c0, %c0_0, %c0_1] : memref<8x64x32xbf16, #tpu.memory_space<vmem>>, vector<8x64x32xbf16>
    %1 = vector.shape_cast %0 : vector<8x64x32xbf16> to vector<512x32xbf16>
    %c0_2 = arith.constant 0 : index
    %c0_3 = arith.constant 0 : index
    %2 = vector.load %arg2[%c0_2, %c0_3] : memref<32x96xbf16, #tpu.memory_space<vmem>>, vector<32x96xbf16>
    %cst = arith.constant dense<0.000000e+00> : vector<512x96xf32>
    %3 = tpu.matmul %1, %2, %cst {dimension_numbers = #tpu.dot_dimension_numbers<[1], [0], [0], [1], [0, 0, 1, 1], [], []>} : vector<512x32xbf16>, vector<32x96xbf16>, vector<512x96xf32> -> vector<512x96xf32>
    %c0_4 = arith.constant 0 : index
    %c0_5 = arith.constant 0 : index
    %4 = vector.load %arg3[%c0_4, %c0_5] : memref<1x96xf32, #tpu.memory_space<vmem>>, vector<1x96xf32>
    %5 = vector.broadcast %4 : vector<1x96xf32> to vector<512x96xf32>
    %6 = arith.addf %3, %5 : vector<512x96xf32>
    %7 = arith.truncf %6 : vector<512x96xf32> to vector<512x96xbf16>
    %8 = vector.shape_cast %7 : vector<512x96xbf16> to vector<8x64x96xbf16>
    %c0_6 = arith.constant 0 : index
    %c0_7 = arith.constant 0 : index
    %c0_8 = arith.constant 0 : index
    %9 = vector.load %arg4[%c0_6, %c0_7, %c0_8] : memref<4x64x64xbf16, #tpu.memory_space<vmem>>, vector<4x64x64xbf16>
    %10 = arith.extf %9 : vector<4x64x64xbf16> to vector<4x64x64xf32>
    %cst_9 = arith.constant 0.000000e+00 : f32
    %11 = vector.broadcast %cst_9 : f32 to vector<512x32xf32>
    %12 = vector.extract_strided_slice %8 {offsets = [0, 0, 0], sizes = [8, 64, 8], strides = [1, 1, 1]} : vector<8x64x96xbf16> to vector<8x64x8xbf16>
    %13 = vector.extract_strided_slice %8 {offsets = [0, 0, 32], sizes = [8, 64, 8], strides = [1, 1, 1]} : vector<8x64x96xbf16> to vector<8x64x8xbf16>
    %14 = vector.extract_strided_slice %8 {offsets = [0, 0, 64], sizes = [8, 64, 8], strides = [1, 1, 1]} : vector<8x64x96xbf16> to vector<8x64x8xbf16>
    "tpu.trace_start"() <{level = 10 : i32, message = "bqd,bkd->bqk"}> : () -> ()
    %cst_10 = arith.constant dense<0.000000e+00> : vector<8x64x64xf32>
    %15 = tpu.matmul %12, %13, %cst_10 {dimension_numbers = #tpu.dot_dimension_numbers<[2], [2], [1], [1], [0, 0, 0, 1, 1, 1], [0], [0]>} : vector<8x64x8xbf16>, vector<8x64x8xbf16>, vector<8x64x64xf32> -> vector<8x64x64xf32>
    "tpu.trace_stop"() : () -> ()
    %16 = vector.extract_strided_slice %10 {offsets = [0, 0, 0], sizes = [1, 64, 64], strides = [1, 1, 1]} : vector<4x64x64xf32> to vector<1x64x64xf32>
    %17 = vector.shape_cast %16 : vector<1x64x64xf32> to vector<64x64xf32>
    %18 = vector.shape_cast %17 : vector<64x64xf32> to vector<1x64x64xf32>
    %19 = vector.broadcast %18 : vector<1x64x64xf32> to vector<8x64x64xf32>
    %20 = arith.addf %15, %19 : vector<8x64x64xf32>
    %cst_11 = arith.constant dense<0xFF800000> : vector<8x64xf32>
    %21 = vector.multi_reduction <maximumf>, %20, %cst_11 [2] : vector<8x64x64xf32> to vector<8x64xf32>
    %22 = vector.shape_cast %21 : vector<8x64xf32> to vector<8x64x1xf32>
    %23 = vector.broadcast %22 : vector<8x64x1xf32> to vector<8x64x64xf32>
    %24 = arith.subf %20, %23 : vector<8x64x64xf32>
    %25 = math.exp %24 : vector<8x64x64xf32>
    %cst_12 = arith.constant dense<0.000000e+00> : vector<8x64xf32>
    %26 = vector.multi_reduction <add>, %25, %cst_12 [2] : vector<8x64x64xf32> to vector<8x64xf32>
    %27 = vector.shape_cast %26 : vector<8x64xf32> to vector<8x64x1xf32>
    %28 = tpu.reciprocal %27 {approx = true} : vector<8x64x1xf32> -> vector<8x64x1xf32>
    %29 = vector.broadcast %28 : vector<8x64x1xf32> to vector<8x64x64xf32>
    %30 = arith.mulf %25, %29 : vector<8x64x64xf32>
    %31 = arith.truncf %30 : vector<8x64x64xf32> to vector<8x64x64xbf16>
    "tpu.trace_start"() <{level = 10 : i32, message = "bqk,bkd->bqd"}> : () -> ()
    %cst_13 = arith.constant dense<0.000000e+00> : vector<8x64x8xf32>
    %32 = tpu.matmul %31, %14, %cst_13 {dimension_numbers = #tpu.dot_dimension_numbers<[2], [1], [1], [2], [0, 0, 0, 1, 1, 2], [0], [0]>} : vector<8x64x64xbf16>, vector<8x64x8xbf16>, vector<8x64x8xf32> -> vector<8x64x8xf32>
    "tpu.trace_stop"() : () -> ()
    %33 = vector.shape_cast %32 : vector<8x64x8xf32> to vector<512x8xf32>
    %34 = arith.truncf %33 : vector<512x8xf32> to vector<512x8xbf16>
    %c0_14 = arith.constant 0 : index
    %c0_15 = arith.constant 0 : index
    %c0_16 = arith.constant 0 : index
    %35 = vector.load %arg5[%c0_14, %c0_15, %c0_16] : memref<4x8x32xbf16, #tpu.memory_space<vmem>>, vector<1x8x32xbf16>
    %36 = vector.shape_cast %35 : vector<1x8x32xbf16> to vector<8x32xbf16>
    %cst_17 = arith.constant dense<0.000000e+00> : vector<512x32xf32>
    %37 = tpu.matmul %34, %36, %cst_17 {dimension_numbers = #tpu.dot_dimension_numbers<[1], [0], [0], [1], [0, 0, 1, 1], [], []>} : vector<512x8xbf16>, vector<8x32xbf16>, vector<512x32xf32> -> vector<512x32xf32>
    %38 = arith.addf %11, %37 : vector<512x32xf32>
    %39 = vector.extract_strided_slice %8 {offsets = [0, 0, 8], sizes = [8, 64, 8], strides = [1, 1, 1]} : vector<8x64x96xbf16> to vector<8x64x8xbf16>
    %40 = vector.extract_strided_slice %8 {offsets = [0, 0, 40], sizes = [8, 64, 8], strides = [1, 1, 1]} : vector<8x64x96xbf16> to vector<8x64x8xbf16>
    %41 = vector.extract_strided_slice %8 {offsets = [0, 0, 72], sizes = [8, 64, 8], strides = [1, 1, 1]} : vector<8x64x96xbf16> to vector<8x64x8xbf16>
    "tpu.trace_start"() <{level = 10 : i32, message = "bqd,bkd->bqk"}> : () -> ()
    %cst_18 = arith.constant dense<0.000000e+00> : vector<8x64x64xf32>
    %42 = tpu.matmul %39, %40, %cst_18 {dimension_numbers = #tpu.dot_dimension_numbers<[2], [2], [1], [1], [0, 0, 0, 1, 1, 1], [0], [0]>} : vector<8x64x8xbf16>, vector<8x64x8xbf16>, vector<8x64x64xf32> -> vector<8x64x64xf32>
    "tpu.trace_stop"() : () -> ()
    %43 = vector.extract_strided_slice %10 {offsets = [1, 0, 0], sizes = [1, 64, 64], strides = [1, 1, 1]} : vector<4x64x64xf32> to vector<1x64x64xf32>
    %44 = vector.shape_cast %43 : vector<1x64x64xf32> to vector<64x64xf32>
    %45 = vector.shape_cast %44 : vector<64x64xf32> to vector<1x64x64xf32>
    %46 = vector.broadcast %45 : vector<1x64x64xf32> to vector<8x64x64xf32>
    %47 = arith.addf %42, %46 : vector<8x64x64xf32>
    %cst_19 = arith.constant dense<0xFF800000> : vector<8x64xf32>
    %48 = vector.multi_reduction <maximumf>, %47, %cst_19 [2] : vector<8x64x64xf32> to vector<8x64xf32>
    %49 = vector.shape_cast %48 : vector<8x64xf32> to vector<8x64x1xf32>
    %50 = vector.broadcast %49 : vector<8x64x1xf32> to vector<8x64x64xf32>
    %51 = arith.subf %47, %50 : vector<8x64x64xf32>
    %52 = math.exp %51 : vector<8x64x64xf32>
    %cst_20 = arith.constant dense<0.000000e+00> : vector<8x64xf32>
    %53 = vector.multi_reduction <add>, %52, %cst_20 [2] : vector<8x64x64xf32> to vector<8x64xf32>
    %54 = vector.shape_cast %53 : vector<8x64xf32> to vector<8x64x1xf32>
    %55 = tpu.reciprocal %54 {approx = true} : vector<8x64x1xf32> -> vector<8x64x1xf32>
    %56 = vector.broadcast %55 : vector<8x64x1xf32> to vector<8x64x64xf32>
    %57 = arith.mulf %52, %56 : vector<8x64x64xf32>
    %58 = arith.truncf %57 : vector<8x64x64xf32> to vector<8x64x64xbf16>
    "tpu.trace_start"() <{level = 10 : i32, message = "bqk,bkd->bqd"}> : () -> ()
    %cst_21 = arith.constant dense<0.000000e+00> : vector<8x64x8xf32>
    %59 = tpu.matmul %58, %41, %cst_21 {dimension_numbers = #tpu.dot_dimension_numbers<[2], [1], [1], [2], [0, 0, 0, 1, 1, 2], [0], [0]>} : vector<8x64x64xbf16>, vector<8x64x8xbf16>, vector<8x64x8xf32> -> vector<8x64x8xf32>
    "tpu.trace_stop"() : () -> ()
    %60 = vector.shape_cast %59 : vector<8x64x8xf32> to vector<512x8xf32>
    %61 = arith.truncf %60 : vector<512x8xf32> to vector<512x8xbf16>
    %c1 = arith.constant 1 : index
    %c0_22 = arith.constant 0 : index
    %c0_23 = arith.constant 0 : index
    %62 = vector.load %arg5[%c1, %c0_22, %c0_23] : memref<4x8x32xbf16, #tpu.memory_space<vmem>>, vector<1x8x32xbf16>
    %63 = vector.shape_cast %62 : vector<1x8x32xbf16> to vector<8x32xbf16>
    %cst_24 = arith.constant dense<0.000000e+00> : vector<512x32xf32>
    %64 = tpu.matmul %61, %63, %cst_24 {dimension_numbers = #tpu.dot_dimension_numbers<[1], [0], [0], [1], [0, 0, 1, 1], [], []>} : vector<512x8xbf16>, vector<8x32xbf16>, vector<512x32xf32> -> vector<512x32xf32>
    %65 = arith.addf %38, %64 : vector<512x32xf32>
    %66 = vector.extract_strided_slice %8 {offsets = [0, 0, 16], sizes = [8, 64, 8], strides = [1, 1, 1]} : vector<8x64x96xbf16> to vector<8x64x8xbf16>
    %67 = vector.extract_strided_slice %8 {offsets = [0, 0, 48], sizes = [8, 64, 8], strides = [1, 1, 1]} : vector<8x64x96xbf16> to vector<8x64x8xbf16>
    %68 = vector.extract_strided_slice %8 {offsets = [0, 0, 80], sizes = [8, 64, 8], strides = [1, 1, 1]} : vector<8x64x96xbf16> to vector<8x64x8xbf16>
    "tpu.trace_start"() <{level = 10 : i32, message = "bqd,bkd->bqk"}> : () -> ()
    %cst_25 = arith.constant dense<0.000000e+00> : vector<8x64x64xf32>
    %69 = tpu.matmul %66, %67, %cst_25 {dimension_numbers = #tpu.dot_dimension_numbers<[2], [2], [1], [1], [0, 0, 0, 1, 1, 1], [0], [0]>} : vector<8x64x8xbf16>, vector<8x64x8xbf16>, vector<8x64x64xf32> -> vector<8x64x64xf32>
    "tpu.trace_stop"() : () -> ()
    %70 = vector.extract_strided_slice %10 {offsets = [2, 0, 0], sizes = [1, 64, 64], strides = [1, 1, 1]} : vector<4x64x64xf32> to vector<1x64x64xf32>
    %71 = vector.shape_cast %70 : vector<1x64x64xf32> to vector<64x64xf32>
    %72 = vector.shape_cast %71 : vector<64x64xf32> to vector<1x64x64xf32>
    %73 = vector.broadcast %72 : vector<1x64x64xf32> to vector<8x64x64xf32>
    %74 = arith.addf %69, %73 : vector<8x64x64xf32>
    %cst_26 = arith.constant dense<0xFF800000> : vector<8x64xf32>
    %75 = vector.multi_reduction <maximumf>, %74, %cst_26 [2] : vector<8x64x64xf32> to vector<8x64xf32>
    %76 = vector.shape_cast %75 : vector<8x64xf32> to vector<8x64x1xf32>
    %77 = vector.broadcast %76 : vector<8x64x1xf32> to vector<8x64x64xf32>
    %78 = arith.subf %74, %77 : vector<8x64x64xf32>
    %79 = math.exp %78 : vector<8x64x64xf32>
    %cst_27 = arith.constant dense<0.000000e+00> : vector<8x64xf32>
    %80 = vector.multi_reduction <add>, %79, %cst_27 [2] : vector<8x64x64xf32> to vector<8x64xf32>
    %81 = vector.shape_cast %80 : vector<8x64xf32> to vector<8x64x1xf32>
    %82 = tpu.reciprocal %81 {approx = true} : vector<8x64x1xf32> -> vector<8x64x1xf32>
    %83 = vector.broadcast %82 : vector<8x64x1xf32> to vector<8x64x64xf32>
    %84 = arith.mulf %79, %83 : vector<8x64x64xf32>
    %85 = arith.truncf %84 : vector<8x64x64xf32> to vector<8x64x64xbf16>
    "tpu.trace_start"() <{level = 10 : i32, message = "bqk,bkd->bqd"}> : () -> ()
    %cst_28 = arith.constant dense<0.000000e+00> : vector<8x64x8xf32>
    %86 = tpu.matmul %85, %68, %cst_28 {dimension_numbers = #tpu.dot_dimension_numbers<[2], [1], [1], [2], [0, 0, 0, 1, 1, 2], [0], [0]>} : vector<8x64x64xbf16>, vector<8x64x8xbf16>, vector<8x64x8xf32> -> vector<8x64x8xf32>
    "tpu.trace_stop"() : () -> ()
    %87 = vector.shape_cast %86 : vector<8x64x8xf32> to vector<512x8xf32>
    %88 = arith.truncf %87 : vector<512x8xf32> to vector<512x8xbf16>
    %c2 = arith.constant 2 : index
    %c0_29 = arith.constant 0 : index
    %c0_30 = arith.constant 0 : index
    %89 = vector.load %arg5[%c2, %c0_29, %c0_30] : memref<4x8x32xbf16, #tpu.memory_space<vmem>>, vector<1x8x32xbf16>
    %90 = vector.shape_cast %89 : vector<1x8x32xbf16> to vector<8x32xbf16>
    %cst_31 = arith.constant dense<0.000000e+00> : vector<512x32xf32>
    %91 = tpu.matmul %88, %90, %cst_31 {dimension_numbers = #tpu.dot_dimension_numbers<[1], [0], [0], [1], [0, 0, 1, 1], [], []>} : vector<512x8xbf16>, vector<8x32xbf16>, vector<512x32xf32> -> vector<512x32xf32>
    %92 = arith.addf %65, %91 : vector<512x32xf32>
    %93 = vector.extract_strided_slice %8 {offsets = [0, 0, 24], sizes = [8, 64, 8], strides = [1, 1, 1]} : vector<8x64x96xbf16> to vector<8x64x8xbf16>
    %94 = vector.extract_strided_slice %8 {offsets = [0, 0, 56], sizes = [8, 64, 8], strides = [1, 1, 1]} : vector<8x64x96xbf16> to vector<8x64x8xbf16>
    %95 = vector.extract_strided_slice %8 {offsets = [0, 0, 88], sizes = [8, 64, 8], strides = [1, 1, 1]} : vector<8x64x96xbf16> to vector<8x64x8xbf16>
    "tpu.trace_start"() <{level = 10 : i32, message = "bqd,bkd->bqk"}> : () -> ()
    %cst_32 = arith.constant dense<0.000000e+00> : vector<8x64x64xf32>
    %96 = tpu.matmul %93, %94, %cst_32 {dimension_numbers = #tpu.dot_dimension_numbers<[2], [2], [1], [1], [0, 0, 0, 1, 1, 1], [0], [0]>} : vector<8x64x8xbf16>, vector<8x64x8xbf16>, vector<8x64x64xf32> -> vector<8x64x64xf32>
    "tpu.trace_stop"() : () -> ()
    %97 = vector.extract_strided_slice %10 {offsets = [3, 0, 0], sizes = [1, 64, 64], strides = [1, 1, 1]} : vector<4x64x64xf32> to vector<1x64x64xf32>
    %98 = vector.shape_cast %97 : vector<1x64x64xf32> to vector<64x64xf32>
    %99 = vector.shape_cast %98 : vector<64x64xf32> to vector<1x64x64xf32>
    %100 = vector.broadcast %99 : vector<1x64x64xf32> to vector<8x64x64xf32>
    %101 = arith.addf %96, %100 : vector<8x64x64xf32>
    %cst_33 = arith.constant dense<0xFF800000> : vector<8x64xf32>
    %102 = vector.multi_reduction <maximumf>, %101, %cst_33 [2] : vector<8x64x64xf32> to vector<8x64xf32>
    %103 = vector.shape_cast %102 : vector<8x64xf32> to vector<8x64x1xf32>
    %104 = vector.broadcast %103 : vector<8x64x1xf32> to vector<8x64x64xf32>
    %105 = arith.subf %101, %104 : vector<8x64x64xf32>
    %106 = math.exp %105 : vector<8x64x64xf32>
    %cst_34 = arith.constant dense<0.000000e+00> : vector<8x64xf32>
    %107 = vector.multi_reduction <add>, %106, %cst_34 [2] : vector<8x64x64xf32> to vector<8x64xf32>
    %108 = vector.shape_cast %107 : vector<8x64xf32> to vector<8x64x1xf32>
    %109 = tpu.reciprocal %108 {approx = true} : vector<8x64x1xf32> -> vector<8x64x1xf32>
    %110 = vector.broadcast %109 : vector<8x64x1xf32> to vector<8x64x64xf32>
    %111 = arith.mulf %106, %110 : vector<8x64x64xf32>
    %112 = arith.truncf %111 : vector<8x64x64xf32> to vector<8x64x64xbf16>
    "tpu.trace_start"() <{level = 10 : i32, message = "bqk,bkd->bqd"}> : () -> ()
    %cst_35 = arith.constant dense<0.000000e+00> : vector<8x64x8xf32>
    %113 = tpu.matmul %112, %95, %cst_35 {dimension_numbers = #tpu.dot_dimension_numbers<[2], [1], [1], [2], [0, 0, 0, 1, 1, 2], [0], [0]>} : vector<8x64x64xbf16>, vector<8x64x8xbf16>, vector<8x64x8xf32> -> vector<8x64x8xf32>
    "tpu.trace_stop"() : () -> ()
    %114 = vector.shape_cast %113 : vector<8x64x8xf32> to vector<512x8xf32>
    %115 = arith.truncf %114 : vector<512x8xf32> to vector<512x8xbf16>
    %c3 = arith.constant 3 : index
    %c0_36 = arith.constant 0 : index
    %c0_37 = arith.constant 0 : index
    %116 = vector.load %arg5[%c3, %c0_36, %c0_37] : memref<4x8x32xbf16, #tpu.memory_space<vmem>>, vector<1x8x32xbf16>
    %117 = vector.shape_cast %116 : vector<1x8x32xbf16> to vector<8x32xbf16>
    %cst_38 = arith.constant dense<0.000000e+00> : vector<512x32xf32>
    %118 = tpu.matmul %115, %117, %cst_38 {dimension_numbers = #tpu.dot_dimension_numbers<[1], [0], [0], [1], [0, 0, 1, 1], [], []>} : vector<512x8xbf16>, vector<8x32xbf16>, vector<512x32xf32> -> vector<512x32xf32>
    %119 = arith.addf %92, %118 : vector<512x32xf32>
    %c0_39 = arith.constant 0 : index
    %c0_40 = arith.constant 0 : index
    %120 = vector.load %arg6[%c0_39, %c0_40] : memref<1x32xf32, #tpu.memory_space<vmem>>, vector<1x32xf32>
    %121 = vector.broadcast %120 : vector<1x32xf32> to vector<512x32xf32>
    %122 = arith.addf %119, %121 : vector<512x32xf32>
    %123 = vector.shape_cast %122 : vector<512x32xf32> to vector<8x64x32xf32>
    %124 = arith.truncf %123 : vector<8x64x32xf32> to vector<8x64x32xbf16>
    %c0_41 = arith.constant 0 : index
    %c0_42 = arith.constant 0 : index
    %c0_43 = arith.constant 0 : index
    %125 = vector.load %arg7[%c0_41, %c0_42, %c0_43] : memref<8x64x32xbf16, #tpu.memory_space<vmem>>, vector<8x64x32xbf16>
    tpu.vector_store %arg7[%c0_41, %c0_42, %c0_43], %124 {strides = array<i32>} : memref<8x64x32xbf16, #tpu.memory_space<vmem>>, vector<8x64x32xbf16>,
    return
  }
  func.func @transform_0(%arg0: i32) -> (i32, i32, i32) {
    %c0_i32 = arith.constant 0 : i32
    %c0_i32_0 = arith.constant 0 : i32
    %c0_i32_1 = arith.constant 0 : i32
    return %arg0, %c0_i32, %c0_i32_0 : i32, i32, i32
  }
  func.func @transform_1(%arg0: i32) -> (i32, i32) {
    %c0_i32 = arith.constant 0 : i32
    %c0_i32_0 = arith.constant 0 : i32
    %c0_i32_1 = arith.constant 0 : i32
    return %c0_i32, %c0_i32_0 : i32, i32
  }
  func.func @transform_2(%arg0: i32) -> (i32, i32) {
    %c0_i32 = arith.constant 0 : i32
    %c0_i32_0 = arith.constant 0 : i32
    %c0_i32_1 = arith.constant 0 : i32
    return %c0_i32, %c0_i32_0 : i32, i32
  }
  func.func @transform_3(%arg0: i32) -> (i32, i32, i32) {
    %c0_i32 = arith.constant 0 : i32
    %c0_i32_0 = arith.constant 0 : i32
    %c0_i32_1 = arith.constant 0 : i32
    %c0_i32_2 = arith.constant 0 : i32
    return %c0_i32, %c0_i32_0, %c0_i32_1 : i32, i32, i32
  }
  func.func @transform_4(%arg0: i32) -> (i32, i32, i32) {
    %c0_i32 = arith.constant 0 : i32
    %c0_i32_0 = arith.constant 0 : i32
    %c0_i32_1 = arith.constant 0 : i32
    %c0_i32_2 = arith.constant 0 : i32
    return %c0_i32, %c0_i32_0, %c0_i32_1 : i32, i32, i32
  }
  func.func @transform_5(%arg0: i32) -> (i32, i32) {
    %c0_i32 = arith.constant 0 : i32
    %c0_i32_0 = arith.constant 0 : i32
    %c0_i32_1 = arith.constant 0 : i32
    return %c0_i32, %c0_i32_0 : i32, i32
  }
  func.func @transform_6(%arg0: i32) -> (i32, i32, i32) {
    %c0_i32 = arith.constant 0 : i32
    %c0_i32_0 = arith.constant 0 : i32
    %c0_i32_1 = arith.constant 0 : i32
    return %arg0, %c0_i32, %c0_i32_0 : i32, i32, i32
  }
}

</mosaic_0001>

<llo_original>
// kernel: tpu_custom_call.1
$region0: #{tpu_custom_call.1}
  #allocation0 [shape = 'u32[]', space=smem, size = 0x4, offset = 0x4, fixed_abs, tag = 'smem constant byte address 0x4 - core index']
  #allocation1 [shape = 'u32[144,128]{1,0:T(1,128)}', space=vmem, size = 0x12000, scoped, tag = 'internal scratch']
  %s0 = inlined_call_operand.vmem [shape: bf16[16,64,32], index: 0, kind: input, shape index: {}]
  %s1 = inlined_call_operand.vmem [shape: bf16[32,96], index: 1, kind: input, shape index: {}]
  %s2 = inlined_call_operand.vmem [shape: f32[1,96], index: 2, kind: input, shape index: {}]
  %s3 = inlined_call_operand.vmem [shape: bf16[4,64,64], index: 3, kind: input, shape index: {}]
  %s4 = inlined_call_operand.vmem [shape: bf16[4,8,32], index: 4, kind: input, shape index: {}]
  %s5 = inlined_call_operand.vmem [shape: f32[1,32], index: 5, kind: input, shape index: {}]
  %s6 = inlined_call_operand.vmem [shape: bf16[16,64,32], index: 6, kind: output, shape index: {}]
  %s7 = sld [smem:[#allocation0]]
  $region57: #{tpu_custom_call.1} parent=0
    _
  %s9 = ssub.s32 1, %s7
  %s10 = scalar_select 0, %s9, %s7
  loop: start=0, step=1, limit=4
  $region2: #{tpu_custom_call.1} parent=0 // loop_pre_header
    _
  $region3: #{tpu_custom_call.1} parent=0 // loop_header
    %s12 = sphi 0, %s16
    %p13 = scmp.ge.s32.totalorder %s12, 4
    %s22 = sphi 0, %s24
    %s25 = sphi 0, %s22
    %s26 = sphi 0, %s25
    %s42 = sphi 0, %s26
    %s46 = sphi 0, %s46
    %s48 = sphi 0, %s46
    %s49 = sphi 0, %s48
    %s63 = sphi 0, %s49
    %s67 = sphi 0, %s67
    %s69 = sphi 0, %s67
    %s70 = sphi 0, %s69
    %s84 = sphi 0, %s70
    %s88 = sphi 0, %s88
    %s90 = sphi 0, %s88
    %s91 = sphi 0, %s90
    %s105 = sphi 0, %s91
    %s109 = sphi 0, %s109
    %s111 = sphi 0, %s109
    %s112 = sphi 0, %s111
    %s126 = sphi 0, %s112
    %s130 = sphi 0, %s130
    %s132 = sphi 0, %s130
    %s133 = sphi 0, %s132
    %s147 = sphi 0, %s133
    %s153 = sphi 0, %s155
    %s156 = sphi 0, %s153
    %s157 = sphi 0, %s156
    %s173 = sphi 0, %s157
  $region4: #{tpu_custom_call.1} parent=0 // loop_header_branch
    %15 = sbr.rel (%p13) target = $region8
  $region5: #{tpu_custom_call.1} parent=0 // loop_body
    %s17 = ssub.s32 %s12, 1
    %s18 = ssub.s32 %s12, 2
    %s19 = sadd.s32 %s12, 1
    %s20 = ssub.s32 %s12, %s19
    %p21 = scmp.eq.s32.totalorder %s20, 0
    %s23 = sadd.s32 %s22, 1
    %s24 = scalar_select %p21, %s22, %s23
    %p27 = pneg %p21
    %p28 = scmp.eq.s32.totalorder %s12, 1
    %p29 = por %p27, %p28
    %p30 = scmp.ne.s32.totalorder %s22, %s25
    %p31 = scmp.eq.s32.totalorder %s12, 0
    %p32 = por %p30, %p31
    %p33 = scmp.ne.s32.totalorder %s22, %s25
    %p34 = scmp.eq.s32.totalorder %s17, 1
    %p35 = por %p33, %p34
    %p36 = scmp.ne.s32.totalorder %s25, %s26
    %p37 = scmp.eq.s32.totalorder %s17, 0
    %p38 = por %p36, %p37
    %p39 = scmp.ne.s32.totalorder %s25, %s26
    %p40 = scmp.eq.s32.totalorder %s18, 1
    %p41 = por %p39, %p40
    %p43 = scmp.ne.s32.totalorder %s26, %s42
    %p44 = scmp.eq.s32.totalorder %s18, 0
    %p45 = por %p43, %p44
    %s47 = sadd.s32 %s46, 1
    %p50 = scmp.eq.s32.totalorder %s12, 1
    %p51 = scmp.ne.s32.totalorder %s46, %s48
    %p52 = scmp.eq.s32.totalorder %s12, 0
    %p53 = por %p51, %p52
    %p54 = scmp.ne.s32.totalorder %s46, %s48
    %p55 = scmp.eq.s32.totalorder %s17, 1
    %p56 = por %p54, %p55
    %p57 = scmp.ne.s32.totalorder %s48, %s49
    %p58 = scmp.eq.s32.totalorder %s17, 0
    %p59 = por %p57, %p58
    %p60 = scmp.ne.s32.totalorder %s48, %s49
    %p61 = scmp.eq.s32.totalorder %s18, 1
    %p62 = por %p60, %p61
    %p64 = scmp.ne.s32.totalorder %s49, %s63
    %p65 = scmp.eq.s32.totalorder %s18, 0
    %p66 = por %p64, %p65
    %s68 = sadd.s32 %s67, 1
    %p71 = scmp.eq.s32.totalorder %s12, 1
    %p72 = scmp.ne.s32.totalorder %s67, %s69
    %p73 = scmp.eq.s32.totalorder %s12, 0
    %p74 = por %p72, %p73
    %p75 = scmp.ne.s32.totalorder %s67, %s69
    %p76 = scmp.eq.s32.totalorder %s17, 1
    %p77 = por %p75, %p76
    %p78 = scmp.ne.s32.totalorder %s69, %s70
    %p79 = scmp.eq.s32.totalorder %s17, 0
    %p80 = por %p78, %p79
    %p81 = scmp.ne.s32.totalorder %s69, %s70
    %p82 = scmp.eq.s32.totalorder %s18, 1
    %p83 = por %p81, %p82
    %p85 = scmp.ne.s32.totalorder %s70, %s84
    %p86 = scmp.eq.s32.totalorder %s18, 0
    %p87 = por %p85, %p86
    %s89 = sadd.s32 %s88, 1
    %p92 = scmp.eq.s32.totalorder %s12, 1
    %p93 = scmp.ne.s32.totalorder %s88, %s90
    %p94 = scmp.eq.s32.totalorder %s12, 0
    %p95 = por %p93, %p94
    %p96 = scmp.ne.s32.totalorder %s88, %s90
    %p97 = scmp.eq.s32.totalorder %s17, 1
    %p98 = por %p96, %p97
    %p99 = scmp.ne.s32.totalorder %s90, %s91
    %p100 = scmp.eq.s32.totalorder %s17, 0
    %p101 = por %p99, %p100
    %p102 = scmp.ne.s32.totalorder %s90, %s91
    %p103 = scmp.eq.s32.totalorder %s18, 1
    %p104 = por %p102, %p103
    %p106 = scmp.ne.s32.totalorder %s91, %s105
    %p107 = scmp.eq.s32.totalorder %s18, 0
    %p108 = por %p106, %p107
    %s110 = sadd.s32 %s109, 1
    %p113 = scmp.eq.s32.totalorder %s12, 1
    %p114 = scmp.ne.s32.totalorder %s109, %s111
    %p115 = scmp.eq.s32.totalorder %s12, 0
    %p116 = por %p114, %p115
    %p117 = scmp.ne.s32.totalorder %s109, %s111
    %p118 = scmp.eq.s32.totalorder %s17, 1
    %p119 = por %p117, %p118
    %p120 = scmp.ne.s32.totalorder %s111, %s112
    %p121 = scmp.eq.s32.totalorder %s17, 0
    %p122 = por %p120, %p121
    %p123 = scmp.ne.s32.totalorder %s111, %s112
    %p124 = scmp.eq.s32.totalorder %s18, 1
    %p125 = por %p123, %p124
    %p127 = scmp.ne.s32.totalorder %s112, %s126
    %p128 = scmp.eq.s32.totalorder %s18, 0
    %p129 = por %p127, %p128
    %s131 = sadd.s32 %s130, 1
    %p134 = scmp.eq.s32.totalorder %s12, 1
    %p135 = scmp.ne.s32.totalorder %s130, %s132
    %p136 = scmp.eq.s32.totalorder %s12, 0
    %p137 = por %p135, %p136
    %p138 = scmp.ne.s32.totalorder %s130, %s132
    %p139 = scmp.eq.s32.totalorder %s17, 1
    %p140 = por %p138, %p139
    %p141 = scmp.ne.s32.totalorder %s132, %s133
    %p142 = scmp.eq.s32.totalorder %s17, 0
    %p143 = por %p141, %p142
    %p144 = scmp.ne.s32.totalorder %s132, %s133
    %p145 = scmp.eq.s32.totalorder %s18, 1
    %p146 = por %p144, %p145
    %p148 = scmp.ne.s32.totalorder %s133, %s147
    %p149 = scmp.eq.s32.totalorder %s18, 0
    %p150 = por %p148, %p149
    %s151 = ssub.s32 %s12, %s19
    %p152 = scmp.eq.s32.totalorder %s151, 0
    %s154 = sadd.s32 %s153, 1
    %s155 = scalar_select %p152, %s153, %s154
    %p158 = pneg %p152
    %p159 = scmp.eq.s32.totalorder %s12, 1
    %p160 = por %p158, %p159
    %p161 = scmp.ne.s32.totalorder %s153, %s156
    %p162 = scmp.eq.s32.totalorder %s12, 0
    %p163 = por %p161, %p162
    %p164 = scmp.ne.s32.totalorder %s153, %s156
    %p165 = scmp.eq.s32.totalorder %s17, 1
    %p166 = por %p164, %p165
    %p167 = scmp.ne.s32.totalorder %s156, %s157
    %p168 = scmp.eq.s32.totalorder %s17, 0
    %p169 = por %p167, %p168
    %p170 = scmp.ne.s32.totalorder %s156, %s157
    %p171 = scmp.eq.s32.totalorder %s18, 1
    %p172 = por %p170, %p171
    %p174 = scmp.ne.s32.totalorder %s157, %s173
    %p175 = scmp.eq.s32.totalorder %s18, 0
    %p176 = por %p174, %p175
    %p177 = scmp.le.s32.totalorder 1, %s12
    %p178 = scmp.lt.s32.totalorder %s12, 3
    %p179 = pnand %p177, %p178
    %p180 = pneg %p179
    // Predicated region
    $region9: #{tpu_custom_call.1} parent=5 // pred_check
      _
    $region10: #{tpu_custom_call.1} parent=5 // pred_check_branch
      %182 = sbr.rel (%p179) target = $region12
    $region11: #{tpu_custom_call.1} parent=5 // pred_region
      %s183 = ssub.s32 %s12, 1
      // Predicated region
      $region13: #{tpu_custom_call.1} parent=11 // pred_check
        %p184 = pneg %p59
      $region14: #{tpu_custom_call.1} parent=11 // pred_check_branch
        %186 = sbr.rel (%p184) target = $region16
      $region15: #{tpu_custom_call.1} parent=11 // pred_region
        _
      $region16: #{tpu_custom_call.1} parent=11 // pred_fallthru
        _
      // Predicated region
      $region17: #{tpu_custom_call.1} parent=11 // pred_check
        %p187 = pneg %p80
      $region18: #{tpu_custom_call.1} parent=11 // pred_check_branch
        %189 = sbr.rel (%p187) target = $region20
      $region19: #{tpu_custom_call.1} parent=11 // pred_region
        _
      $region20: #{tpu_custom_call.1} parent=11 // pred_fallthru
        _
      // Predicated region
      $region21: #{tpu_custom_call.1} parent=11 // pred_check
        %p190 = pneg %p101
      $region22: #{tpu_custom_call.1} parent=11 // pred_check_branch
        %192 = sbr.rel (%p190) target = $region24
      $region23: #{tpu_custom_call.1} parent=11 // pred_region
        _
      $region24: #{tpu_custom_call.1} parent=11 // pred_fallthru
        _
      // Predicated region
      $region25: #{tpu_custom_call.1} parent=11 // pred_check
        %p193 = pneg %p122
      $region26: #{tpu_custom_call.1} parent=11 // pred_check_branch
        %195 = sbr.rel (%p193) target = $region28
      $region27: #{tpu_custom_call.1} parent=11 // pred_region
        _
      $region28: #{tpu_custom_call.1} parent=11 // pred_fallthru
        _
      // Predicated region
      $region29: #{tpu_custom_call.1} parent=11 // pred_check
        %p196 = pneg %p143
      $region30: #{tpu_custom_call.1} parent=11 // pred_check_branch
        %198 = sbr.rel (%p196) target = $region32
      $region31: #{tpu_custom_call.1} parent=11 // pred_region
        _
      $region32: #{tpu_custom_call.1} parent=11 // pred_fallthru
        _
    $region12: #{tpu_custom_call.1} parent=5 // pred_fallthru
      _
    %p199 = scmp.lt.s32.totalorder %s12, 2
    // Predicated region
    $region33: #{tpu_custom_call.1} parent=5 // pred_check
      %p200 = pneg %p199
    $region34: #{tpu_custom_call.1} parent=5 // pred_check_branch
      %202 = sbr.rel (%p200) target = $region36
    $region35: #{tpu_custom_call.1} parent=5 // pred_region
      // Predicated region
      $region37: #{tpu_custom_call.1} parent=35 // pred_check
        %p203 = pneg %p32
      $region38: #{tpu_custom_call.1} parent=35 // pred_check_branch
        %205 = sbr.rel (%p203) target = $region40
      $region39: #{tpu_custom_call.1} parent=35 // pred_region
        %s206 = smul.u32 8, %s12
        %p207 = scmp.lt.s32.totalorder %s206, 15
        %s208 = scalar_select %p207, %s206, 15
        %s209 = smul.addr %s208, 8
        %s210 = smul.addr %s209, 4
        %s211 = scalar_lea.vmem %s0, %s210
        %s212 = smul.u32 8, %s12
      $region40: #{tpu_custom_call.1} parent=35 // pred_fallthru
        _
    $region36: #{tpu_custom_call.1} parent=5 // pred_fallthru
      _
    %p213 = scmp.le.s32.totalorder 1, %s12
    %p214 = scmp.lt.s32.totalorder %s12, 3
    %p215 = pnand %p213, %p214
    %p216 = pneg %p215
    // Predicated region
    $region41: #{tpu_custom_call.1} parent=5 // pred_check
      _
    $region42: #{tpu_custom_call.1} parent=5 // pred_check_branch
      %218 = sbr.rel (%p215) target = $region44
    $region43: #{tpu_custom_call.1} parent=5 // pred_region
      %s219 = ssub.s32 %s12, 1
      %s220 = smul.u32 8, %s17
      %p221 = scmp.lt.s32.totalorder %s220, 15
      %s222 = scalar_select %p221, %s220, 15
      %s223 = smul.addr %s222, 8
      %s224 = smul.addr %s223, 4
      %s225 = scalar_lea.vmem %s0, %s224
      %p226 = pneg %p38
      %p227 = pneg %p35
      %p228 = pneg %p59
      %p229 = pneg %p56
      %p230 = pneg %p80
      %p231 = pneg %p77
      %p232 = pneg %p101
      %p233 = pneg %p98
      %p234 = pneg %p122
      %p235 = pneg %p119
      %p236 = pneg %p143
      %p237 = pneg %p140
      %p238 = pneg %p169
      %p239 = pneg %p166
      %s240 = smul.u32 8, %s17
      %p241 = scmp.lt.s32.totalorder %s240, 15
      %s242 = scalar_select %p241, %s240, 15
      %s243 = smul.addr %s242, 8
      %s244 = smul.addr %s243, 4
      %s245 = scalar_lea.vmem %s6, %s244
      %s246 = smul.u32 8, %s17
      %p247 = scmp.lt.s32.totalorder %s246, 15
      %s248 = scalar_select %p247, %s246, 15
      %s249 = smul.addr %s248, 8
      %s250 = smul.addr %s249, 4
      %s251 = scalar_lea.vmem %s0, %s250
      %s252 = smul.u32 8, %s17
      %s253 = smul.u32 8, %s17
      %p254 = scmp.lt.s32.totalorder %s253, 15
      %s255 = scalar_select %p254, %s253, 15
      %s256 = smul.addr %s255, 8
      %s257 = smul.addr %s256, 4
      %s258 = scalar_lea.vmem %s6, %s257
      %s259 = smul.u32 8, %s17
      %v261 = vld [vmem:[%s251] sm:$0xf]
      %v262 = vld [vmem:[%s251 + $0x4] sm:$0xf]
      %v263 = vld [vmem:[%s251 + $0x8] sm:$0xf]
      %v264 = vld [vmem:[%s251 + $0xc] sm:$0xf]
      %v265 = vld [vmem:[%s251 + $0x10] sm:$0xf]
      %v266 = vld [vmem:[%s251 + $0x14] sm:$0xf]
      %v267 = vld [vmem:[%s251 + $0x18] sm:$0xf]
      %v268 = vld [vmem:[%s251 + $0x1c] sm:$0xf]
      %v269 = vld [vmem:[%s251 + $0x20] sm:$0xf]
      %v270 = vld [vmem:[%s251 + $0x24] sm:$0xf]
      %v271 = vld [vmem:[%s251 + $0x28] sm:$0xf]
      %v272 = vld [vmem:[%s251 + $0x2c] sm:$0xf]
      %v273 = vld [vmem:[%s251 + $0x30] sm:$0xf]
      %v274 = vld [vmem:[%s251 + $0x34] sm:$0xf]
      %v275 = vld [vmem:[%s251 + $0x38] sm:$0xf]
      %v276 = vld [vmem:[%s251 + $0x3c] sm:$0xf]
      %v277 = vld [vmem:[%s251 + $0x40] sm:$0xf]
      %v278 = vld [vmem:[%s251 + $0x44] sm:$0xf]
      %v279 = vld [vmem:[%s251 + $0x48] sm:$0xf]
      %v280 = vld [vmem:[%s251 + $0x4c] sm:$0xf]
      %v281 = vld [vmem:[%s251 + $0x50] sm:$0xf]
      %v282 = vld [vmem:[%s251 + $0x54] sm:$0xf]
      %v283 = vld [vmem:[%s251 + $0x58] sm:$0xf]
      %v284 = vld [vmem:[%s251 + $0x5c] sm:$0xf]
      %v285 = vld [vmem:[%s251 + $0x60] sm:$0xf]
      %v286 = vld [vmem:[%s251 + $0x64] sm:$0xf]
      %v287 = vld [vmem:[%s251 + $0x68] sm:$0xf]
      %v288 = vld [vmem:[%s251 + $0x6c] sm:$0xf]
      %v289 = vld [vmem:[%s251 + $0x70] sm:$0xf]
      %v290 = vld [vmem:[%s251 + $0x74] sm:$0xf]
      %v291 = vld [vmem:[%s251 + $0x78] sm:$0xf]
      %v292 = vld [vmem:[%s251 + $0x7c] sm:$0xf]
      %v293 = vld [vmem:[%s251 + $0x80] sm:$0xf]
      %v294 = vld [vmem:[%s251 + $0x84] sm:$0xf]
      %v295 = vld [vmem:[%s251 + $0x88] sm:$0xf]
      %v296 = vld [vmem:[%s251 + $0x8c] sm:$0xf]
      %v297 = vld [vmem:[%s251 + $0x90] sm:$0xf]
      %v298 = vld [vmem:[%s251 + $0x94] sm:$0xf]
      %v299 = vld [vmem:[%s251 + $0x98] sm:$0xf]
      %v300 = vld [vmem:[%s251 + $0x9c] sm:$0xf]
      %v301 = vld [vmem:[%s251 + $0xa0] sm:$0xf]
      %v302 = vld [vmem:[%s251 + $0xa4] sm:$0xf]
      %v303 = vld [vmem:[%s251 + $0xa8] sm:$0xf]
      %v304 = vld [vmem:[%s251 + $0xac] sm:$0xf]
      %v305 = vld [vmem:[%s251 + $0xb0] sm:$0xf]
      %v306 = vld [vmem:[%s251 + $0xb4] sm:$0xf]
      %v307 = vld [vmem:[%s251 + $0xb8] sm:$0xf]
      %v308 = vld [vmem:[%s251 + $0xbc] sm:$0xf]
      %v309 = vld [vmem:[%s251 + $0xc0] sm:$0xf]
      %v310 = vld [vmem:[%s251 + $0xc4] sm:$0xf]
      %v311 = vld [vmem:[%s251 + $0xc8] sm:$0xf]
      %v312 = vld [vmem:[%s251 + $0xcc] sm:$0xf]
      %v313 = vld [vmem:[%s251 + $0xd0] sm:$0xf]
      %v314 = vld [vmem:[%s251 + $0xd4] sm:$0xf]
      %v315 = vld [vmem:[%s251 + $0xd8] sm:$0xf]
      %v316 = vld [vmem:[%s251 + $0xdc] sm:$0xf]
      %v317 = vld [vmem:[%s251 + $0xe0] sm:$0xf]
      %v318 = vld [vmem:[%s251 + $0xe4] sm:$0xf]
      %v319 = vld [vmem:[%s251 + $0xe8] sm:$0xf]
      %v320 = vld [vmem:[%s251 + $0xec] sm:$0xf]
      %v321 = vld [vmem:[%s251 + $0xf0] sm:$0xf]
      %v322 = vld [vmem:[%s251 + $0xf4] sm:$0xf]
      %v323 = vld [vmem:[%s251 + $0xf8] sm:$0xf]
      %v324 = vld [vmem:[%s251 + $0xfc] sm:$0xf]
      %v325 = vld [vmem:[%s1] sm:$0xf]
      %v326 = vld [vmem:[%s1 + $0x4] sm:$0xf]
      %v327 = vld [vmem:[%s1 + $0x8] sm:$0xf]
      %v328 = vld [vmem:[%s1 + $0xc] sm:$0xf]
      %v329 = vld [vmem:[%s2] sm:$0x1]
      %v331 = vlaneseq
      %v332 = vshrl.u32 %v331, 7
      %v333 = vsub.s32 0, %v332
      %v334 = vrot.slane %v329, %v333
      %v400 = vunpack.c.l.b16 %v261
      %v401 = vunpack.c.l.b16 %v262
      %v402 = vunpack.c.l.b16 %v263
      %v403 = vunpack.c.l.b16 %v264
      %v404 = vunpack.c.l.b16 %v265
      %v405 = vunpack.c.l.b16 %v266
      %v406 = vunpack.c.l.b16 %v267
      %v407 = vunpack.c.l.b16 %v268
      %v408 = vunpack.c.l.b16 %v269
      %v409 = vunpack.c.l.b16 %v270
      %v410 = vunpack.c.l.b16 %v271
      %v411 = vunpack.c.l.b16 %v272
      %v412 = vunpack.c.l.b16 %v273
      %v413 = vunpack.c.l.b16 %v274
      %v414 = vunpack.c.l.b16 %v275
      %v415 = vunpack.c.l.b16 %v276
      %v416 = vunpack.c.l.b16 %v277
      %v417 = vunpack.c.l.b16 %v278
      %v418 = vunpack.c.l.b16 %v279
      %v419 = vunpack.c.l.b16 %v280
      %v420 = vunpack.c.l.b16 %v281
      %v421 = vunpack.c.l.b16 %v282
      %v422 = vunpack.c.l.b16 %v283
      %v423 = vunpack.c.l.b16 %v284
      %v424 = vunpack.c.l.b16 %v285
      %v425 = vunpack.c.l.b16 %v286
      %v426 = vunpack.c.l.b16 %v287
      %v427 = vunpack.c.l.b16 %v288
      %v428 = vunpack.c.l.b16 %v289
      %v429 = vunpack.c.l.b16 %v290
      %v430 = vunpack.c.l.b16 %v291
      %v431 = vunpack.c.l.b16 %v292
      %v432 = vunpack.c.l.b16 %v293
      %v433 = vunpack.c.l.b16 %v294
      %v434 = vunpack.c.l.b16 %v295
      %v435 = vunpack.c.l.b16 %v296
      %v436 = vunpack.c.l.b16 %v297
      %v437 = vunpack.c.l.b16 %v298
      %v438 = vunpack.c.l.b16 %v299
      %v439 = vunpack.c.l.b16 %v300
      %v440 = vunpack.c.l.b16 %v301
      %v441 = vunpack.c.l.b16 %v302
      %v442 = vunpack.c.l.b16 %v303
      %v443 = vunpack.c.l.b16 %v304
      %v444 = vunpack.c.l.b16 %v305
      %v445 = vunpack.c.l.b16 %v306
      %v446 = vunpack.c.l.b16 %v307
      %v447 = vunpack.c.l.b16 %v308
      %v448 = vunpack.c.l.b16 %v309
      %v449 = vunpack.c.l.b16 %v310
      %v450 = vunpack.c.l.b16 %v311
      %v451 = vunpack.c.l.b16 %v312
      %v452 = vunpack.c.l.b16 %v313
      %v453 = vunpack.c.l.b16 %v314
      %v454 = vunpack.c.l.b16 %v315
      %v455 = vunpack.c.l.b16 %v316
      %v456 = vunpack.c.l.b16 %v317
      %v457 = vunpack.c.l.b16 %v318
      %v458 = vunpack.c.l.b16 %v319
      %v459 = vunpack.c.l.b16 %v320
      %v460 = vunpack.c.l.b16 %v321
      %v461 = vunpack.c.l.b16 %v322
      %v462 = vunpack.c.l.b16 %v323
      %v463 = vunpack.c.l.b16 %v324
      %v464 = vpack.c.b16 %v401, %v400
      %v465 = vpack.c.b16 %v403, %v402
      %v466 = vpack.c.b16 %v405, %v404
      %v467 = vpack.c.b16 %v407, %v406
      %v468 = vpack.c.b16 %v409, %v408
      %v469 = vpack.c.b16 %v411, %v410
      %v470 = vpack.c.b16 %v413, %v412
      %v471 = vpack.c.b16 %v415, %v414
      %v472 = vpack.c.b16 %v417, %v416
      %v473 = vpack.c.b16 %v419, %v418
      %v474 = vpack.c.b16 %v421, %v420
      %v475 = vpack.c.b16 %v423, %v422
      %v476 = vpack.c.b16 %v425, %v424
      %v477 = vpack.c.b16 %v427, %v426
      %v478 = vpack.c.b16 %v429, %v428
      %v479 = vpack.c.b16 %v431, %v430
      %v480 = vpack.c.b16 %v433, %v432
      %v481 = vpack.c.b16 %v435, %v434
      %v482 = vpack.c.b16 %v437, %v436
      %v483 = vpack.c.b16 %v439, %v438
      %v484 = vpack.c.b16 %v441, %v440
      %v485 = vpack.c.b16 %v443, %v442
      %v486 = vpack.c.b16 %v445, %v444
      %v487 = vpack.c.b16 %v447, %v446
      %v488 = vpack.c.b16 %v449, %v448
      %v489 = vpack.c.b16 %v451, %v450
      %v490 = vpack.c.b16 %v453, %v452
      %v491 = vpack.c.b16 %v455, %v454
      %v492 = vpack.c.b16 %v457, %v456
      %v493 = vpack.c.b16 %v459, %v458
      %v494 = vpack.c.b16 %v461, %v460
      %v495 = vpack.c.b16 %v463, %v462
      %v500 = vunpack.c.l.b16 %v325
      %v501 = vunpack.c.l.b16 %v326
      %v502 = vunpack.c.l.b16 %v327
      %v503 = vunpack.c.l.b16 %v328
      %v504 = vpack.c.b16 %v501, %v500
      %v505 = vpack.c.b16 %v503, %v502
      %vm508 = vcmask 261120
      %v510 = vsel %vm508, %v464, 0
      %v513 = vsel %vm508, %v465, 0
      %v516 = vsel %vm508, %v466, 0
      %v519 = vsel %vm508, %v467, 0
      %v522 = vsel %vm508, %v468, 0
      %v525 = vsel %vm508, %v469, 0
      %v528 = vsel %vm508, %v470, 0
      %v531 = vsel %vm508, %v471, 0
      %v534 = vsel %vm508, %v472, 0
      %v537 = vsel %vm508, %v473, 0
      %v540 = vsel %vm508, %v474, 0
      %v543 = vsel %vm508, %v475, 0
      %v546 = vsel %vm508, %v476, 0
      %v549 = vsel %vm508, %v477, 0
      %v552 = vsel %vm508, %v478, 0
      %v555 = vsel %vm508, %v479, 0
      %v558 = vsel %vm508, %v480, 0
      %v561 = vsel %vm508, %v481, 0
      %v564 = vsel %vm508, %v482, 0
      %v567 = vsel %vm508, %v483, 0
      %v570 = vsel %vm508, %v484, 0
      %v573 = vsel %vm508, %v485, 0
      %v576 = vsel %vm508, %v486, 0
      %v579 = vsel %vm508, %v487, 0
      %v582 = vsel %vm508, %v488, 0
      %v585 = vsel %vm508, %v489, 0
      %v588 = vsel %vm508, %v490, 0
      %v591 = vsel %vm508, %v491, 0
      %v594 = vsel %vm508, %v492, 0
      %v597 = vsel %vm508, %v493, 0
      %v600 = vsel %vm508, %v494, 0
      %v603 = vsel %vm508, %v495, 0
      %605 = vmatprep.subr.bf16.mxu0 0
      %606 = vmatpush1.bf16.msra.mxu0 %v504
      %607 = vmatprep.subr.bf16.mxu0 0
      %608 = vmatpush1.bf16.msra.mxu0 %v505
      %609 = vmatprep.subr.bf16.mxu0 0
      %610 = vmatpush1.bf16.msra.mxu0 0
      %611 = vmatprep.subr.bf16.mxu0 0
      %612 = vmatpush1.bf16.msra.mxu0 0
      %613 = vmatprep.subr.bf16.mxu0 0
      %614 = vmatpush1.bf16.msra.mxu0 0
      %615 = vmatprep.subr.bf16.mxu0 0
      %616 = vmatpush1.bf16.msra.mxu0 0
      %617 = vmatprep.subr.bf16.mxu0 0
      %618 = vmatpush1.bf16.msra.mxu0 0
      %619 = vmatprep.subr.bf16.mxu0 0
      %620 = vmatpush1.bf16.msra.mxu0 0
      %621 = vmatprep.subr.bf16.mxu0 0
      %622 = vmatpush1.bf16.msra.mxu0 0
      %623 = vmatprep.subr.bf16.mxu0 0
      %624 = vmatpush1.bf16.msra.mxu0 0
      %625 = vmatprep.subr.bf16.mxu0 0
      %626 = vmatpush1.bf16.msra.mxu0 0
      %627 = vmatprep.subr.bf16.mxu0 0
      %628 = vmatpush1.bf16.msra.mxu0 0
      %629 = vmatprep.subr.bf16.mxu0 0
      %630 = vmatpush1.bf16.msra.mxu0 0
      %631 = vmatprep.subr.bf16.mxu0 0
      %632 = vmatpush1.bf16.msra.mxu0 0
      %633 = vmatprep.subr.bf16.mxu0 0
      %634 = vmatpush1.bf16.msra.mxu0 0
      %635 = vmatprep.subr.bf16.mxu0 0
      %636 = vmatpush1.bf16.msra.mxu0 0
      %637 = vmatprep.mubr.bf16.mxu0 0
      %638 = vmatmul.mubr.bf16.gmra.mrb[0].mxu0 %v510
      %v639 = vpop.f32.mrb[0].mxu0
      %v640 = vadd.f32 %v334, %v639
      %v641 = vpop.f32.mrb[0].mxu0
      %v642 = vpop.f32.mrb[0].mxu0
      %v643 = vadd.f32 %v334, %v642
      %v644 = vpop.f32.mrb[0].mxu0
      %645 = vmatprep.mubr.bf16.mxu0 0
      %646 = vmatmul.mubr.bf16.gmra.mrb[0].mxu0 %v513
      %v647 = vpop.f32.mrb[0].mxu0
      %v648 = vadd.f32 %v334, %v647
      %v649 = vpop.f32.mrb[0].mxu0
      %v650 = vpop.f32.mrb[0].mxu0
      %v651 = vadd.f32 %v334, %v650
      %v652 = vpop.f32.mrb[0].mxu0
      %653 = vmatprep.mubr.bf16.mxu0 0
      %654 = vmatmul.mubr.bf16.gmra.mrb[0].mxu0 %v516
      %v655 = vpop.f32.mrb[0].mxu0
      %v656 = vadd.f32 %v334, %v655
      %v657 = vpop.f32.mrb[0].mxu0
      %v658 = vpop.f32.mrb[0].mxu0
      %v659 = vadd.f32 %v334, %v658
      %v660 = vpop.f32.mrb[0].mxu0
      %661 = vmatprep.mubr.bf16.mxu0 0
      %662 = vmatmul.mubr.bf16.gmra.mrb[0].mxu0 %v519
      %v663 = vpop.f32.mrb[0].mxu0
      %v664 = vadd.f32 %v334, %v663
      %v665 = vpop.f32.mrb[0].mxu0
      %v666 = vpop.f32.mrb[0].mxu0
      %v667 = vadd.f32 %v334, %v666
      %v668 = vpop.f32.mrb[0].mxu0
      %669 = vmatprep.mubr.bf16.mxu0 0
      %670 = vmatmul.mubr.bf16.gmra.mrb[0].mxu0 %v522
      %v671 = vpop.f32.mrb[0].mxu0
      %v672 = vadd.f32 %v334, %v671
      %v673 = vpop.f32.mrb[0].mxu0
      %v674 = vpop.f32.mrb[0].mxu0
      %v675 = vadd.f32 %v334, %v674
      %v676 = vpop.f32.mrb[0].mxu0
      %677 = vmatprep.mubr.bf16.mxu0 0
      %678 = vmatmul.mubr.bf16.gmra.mrb[0].mxu0 %v525
      %v679 = vpop.f32.mrb[0].mxu0
      %v680 = vadd.f32 %v334, %v679
      %v681 = vpop.f32.mrb[0].mxu0
      %v682 = vpop.f32.mrb[0].mxu0
      %v683 = vadd.f32 %v334, %v682
      %v684 = vpop.f32.mrb[0].mxu0
      %685 = vmatprep.mubr.bf16.mxu0 0
      %686 = vmatmul.mubr.bf16.gmra.mrb[0].mxu0 %v528
      %v687 = vpop.f32.mrb[0].mxu0
      %v688 = vadd.f32 %v334, %v687
      %v689 = vpop.f32.mrb[0].mxu0
      %v690 = vpop.f32.mrb[0].mxu0
      %v691 = vadd.f32 %v334, %v690
      %v692 = vpop.f32.mrb[0].mxu0
      %693 = vmatprep.mubr.bf16.mxu0 0
      %694 = vmatmul.mubr.bf16.gmra.mrb[0].mxu0 %v531
      %v695 = vpop.f32.mrb[0].mxu0
      %v696 = vadd.f32 %v334, %v695
      %v697 = vpop.f32.mrb[0].mxu0
      %v698 = vpop.f32.mrb[0].mxu0
      %v699 = vadd.f32 %v334, %v698
      %v700 = vpop.f32.mrb[0].mxu0
      %701 = vmatprep.mubr.bf16.mxu0 0
      %702 = vmatmul.mubr.bf16.gmra.mrb[0].mxu0 %v534
      %v703 = vpop.f32.mrb[0].mxu0
      %v704 = vadd.f32 %v334, %v703
      %v705 = vpop.f32.mrb[0].mxu0
      %v706 = vpop.f32.mrb[0].mxu0
      %v707 = vadd.f32 %v334, %v706
      %v708 = vpop.f32.mrb[0].mxu0
      %709 = vmatprep.mubr.bf16.mxu0 0
      %710 = vmatmul.mubr.bf16.gmra.mrb[0].mxu0 %v537
      %v711 = vpop.f32.mrb[0].mxu0
      %v712 = vadd.f32 %v334, %v711
      %v713 = vpop.f32.mrb[0].mxu0
      %v714 = vpop.f32.mrb[0].mxu0
      %v715 = vadd.f32 %v334, %v714
      %v716 = vpop.f32.mrb[0].mxu0
      %717 = vmatprep.mubr.bf16.mxu0 0
      %718 = vmatmul.mubr.bf16.gmra.mrb[0].mxu0 %v540
      %v719 = vpop.f32.mrb[0].mxu0
      %v720 = vadd.f32 %v334, %v719
      %v721 = vpop.f32.mrb[0].mxu0
      %v722 = vpop.f32.mrb[0].mxu0
      %v723 = vadd.f32 %v334, %v722
      %v724 = vpop.f32.mrb[0].mxu0
      %725 = vmatprep.mubr.bf16.mxu0 0
      %726 = vmatmul.mubr.bf16.gmra.mrb[0].mxu0 %v543
      %v727 = vpop.f32.mrb[0].mxu0
      %v728 = vadd.f32 %v334, %v727
      %v729 = vpop.f32.mrb[0].mxu0
      %v730 = vpop.f32.mrb[0].mxu0
      %v731 = vadd.f32 %v334, %v730
      %v732 = vpop.f32.mrb[0].mxu0
      %733 = vmatprep.mubr.bf16.mxu0 0
      %734 = vmatmul.mubr.bf16.gmra.mrb[0].mxu0 %v546
      %v735 = vpop.f32.mrb[0].mxu0
      %v736 = vadd.f32 %v334, %v735
      %v737 = vpop.f32.mrb[0].mxu0
      %v738 = vpop.f32.mrb[0].mxu0
      %v739 = vadd.f32 %v334, %v738
      %v740 = vpop.f32.mrb[0].mxu0
      %741 = vmatprep.mubr.bf16.mxu0 0
      %742 = vmatmul.mubr.bf16.gmra.mrb[0].mxu0 %v549
      %v743 = vpop.f32.mrb[0].mxu0
      %v744 = vadd.f32 %v334, %v743
      %v745 = vpop.f32.mrb[0].mxu0
      %v746 = vpop.f32.mrb[0].mxu0
      %v747 = vadd.f32 %v334, %v746
      %v748 = vpop.f32.mrb[0].mxu0
      %749 = vmatprep.mubr.bf16.mxu0 0
      %750 = vmatmul.mubr.bf16.gmra.mrb[0].mxu0 %v552
      %v751 = vpop.f32.mrb[0].mxu0
      %v752 = vadd.f32 %v334, %v751
      %v753 = vpop.f32.mrb[0].mxu0
      %v754 = vpop.f32.mrb[0].mxu0
      %v755 = vadd.f32 %v334, %v754
      %v756 = vpop.f32.mrb[0].mxu0
      %757 = vmatprep.mubr.bf16.mxu0 0
      %758 = vmatmul.mubr.bf16.gmra.mrb[0].mxu0 %v555
      %v759 = vpop.f32.mrb[0].mxu0
      %v760 = vadd.f32 %v334, %v759
      %v761 = vpop.f32.mrb[0].mxu0
      %v762 = vpop.f32.mrb[0].mxu0
      %v763 = vadd.f32 %v334, %v762
      %v764 = vpop.f32.mrb[0].mxu0
      %765 = vmatprep.mubr.bf16.mxu0 0
      %766 = vmatmul.mubr.bf16.gmra.mrb[0].mxu0 %v558
      %v767 = vpop.f32.mrb[0].mxu0
      %v768 = vadd.f32 %v334, %v767
      %v769 = vpop.f32.mrb[0].mxu0
      %v770 = vpop.f32.mrb[0].mxu0
      %v771 = vadd.f32 %v334, %v770
      %v772 = vpop.f32.mrb[0].mxu0
      %773 = vmatprep.mubr.bf16.mxu0 0
      %774 = vmatmul.mubr.bf16.gmra.mrb[0].mxu0 %v561
      %v775 = vpop.f32.mrb[0].mxu0
      %v776 = vadd.f32 %v334, %v775
      %v777 = vpop.f32.mrb[0].mxu0
      %v778 = vpop.f32.mrb[0].mxu0
      %v779 = vadd.f32 %v334, %v778
      %v780 = vpop.f32.mrb[0].mxu0
      %781 = vmatprep.mubr.bf16.mxu0 0
      %782 = vmatmul.mubr.bf16.gmra.mrb[0].mxu0 %v564
      %v783 = vpop.f32.mrb[0].mxu0
      %v784 = vadd.f32 %v334, %v783
      %v785 = vpop.f32.mrb[0].mxu0
      %v786 = vpop.f32.mrb[0].mxu0
      %v787 = vadd.f32 %v334, %v786
      %v788 = vpop.f32.mrb[0].mxu0
      %789 = vmatprep.mubr.bf16.mxu0 0
      %790 = vmatmul.mubr.bf16.gmra.mrb[0].mxu0 %v567
      %v791 = vpop.f32.mrb[0].mxu0
      %v792 = vadd.f32 %v334, %v791
      %v793 = vpop.f32.mrb[0].mxu0
      %v794 = vpop.f32.mrb[0].mxu0
      %v795 = vadd.f32 %v334, %v794
      %v796 = vpop.f32.mrb[0].mxu0
      %797 = vmatprep.mubr.bf16.mxu0 0
      %798 = vmatmul.mubr.bf16.gmra.mrb[0].mxu0 %v570
      %v799 = vpop.f32.mrb[0].mxu0
      %v800 = vadd.f32 %v334, %v799
      %v801 = vpop.f32.mrb[0].mxu0
      %v802 = vpop.f32.mrb[0].mxu0
      %v803 = vadd.f32 %v334, %v802
      %v804 = vpop.f32.mrb[0].mxu0
      %805 = vmatprep.mubr.bf16.mxu0 0
      %806 = vmatmul.mubr.bf16.gmra.mrb[0].mxu0 %v573
      %v807 = vpop.f32.mrb[0].mxu0
      %v808 = vadd.f32 %v334, %v807
      %v809 = vpop.f32.mrb[0].mxu0
      %v810 = vpop.f32.mrb[0].mxu0
      %v811 = vadd.f32 %v334, %v810
      %v812 = vpop.f32.mrb[0].mxu0
      %813 = vmatprep.mubr.bf16.mxu0 0
      %814 = vmatmul.mubr.bf16.gmra.mrb[0].mxu0 %v576
      %v815 = vpop.f32.mrb[0].mxu0
      %v816 = vadd.f32 %v334, %v815
      %v817 = vpop.f32.mrb[0].mxu0
      %v818 = vpop.f32.mrb[0].mxu0
      %v819 = vadd.f32 %v334, %v818
      %v820 = vpop.f32.mrb[0].mxu0
      %821 = vmatprep.mubr.bf16.mxu0 0
      %822 = vmatmul.mubr.bf16.gmra.mrb[0].mxu0 %v579
      %v823 = vpop.f32.mrb[0].mxu0
      %v824 = vadd.f32 %v334, %v823
      %v825 = vpop.f32.mrb[0].mxu0
      %v826 = vpop.f32.mrb[0].mxu0
      %v827 = vadd.f32 %v334, %v826
      %v828 = vpop.f32.mrb[0].mxu0
      %829 = vmatprep.mubr.bf16.mxu0 0
      %830 = vmatmul.mubr.bf16.gmra.mrb[0].mxu0 %v582
      %v831 = vpop.f32.mrb[0].mxu0
      %v832 = vadd.f32 %v334, %v831
      %v833 = vpop.f32.mrb[0].mxu0
      %v834 = vpop.f32.mrb[0].mxu0
      %v835 = vadd.f32 %v334, %v834
      %v836 = vpop.f32.mrb[0].mxu0
      %837 = vmatprep.mubr.bf16.mxu0 0
      %838 = vmatmul.mubr.bf16.gmra.mrb[0].mxu0 %v585
      %v839 = vpop.f32.mrb[0].mxu0
      %v840 = vadd.f32 %v334, %v839
      %v841 = vpop.f32.mrb[0].mxu0
      %v842 = vpop.f32.mrb[0].mxu0
      %v843 = vadd.f32 %v334, %v842
      %v844 = vpop.f32.mrb[0].mxu0
      %845 = vmatprep.mubr.bf16.mxu0 0
      %846 = vmatmul.mubr.bf16.gmra.mrb[0].mxu0 %v588
      %v847 = vpop.f32.mrb[0].mxu0
      %v848 = vadd.f32 %v334, %v847
      %v849 = vpop.f32.mrb[0].mxu0
      %v850 = vpop.f32.mrb[0].mxu0
      %v851 = vadd.f32 %v334, %v850
      %v852 = vpop.f32.mrb[0].mxu0
      %853 = vmatprep.mubr.bf16.mxu0 0
      %854 = vmatmul.mubr.bf16.gmra.mrb[0].mxu0 %v591
      %v855 = vpop.f32.mrb[0].mxu0
      %v856 = vadd.f32 %v334, %v855
      %v857 = vpop.f32.mrb[0].mxu0
      %v858 = vpop.f32.mrb[0].mxu0
      %v859 = vadd.f32 %v334, %v858
      %v860 = vpop.f32.mrb[0].mxu0
      %861 = vmatprep.mubr.bf16.mxu0 0
      %862 = vmatmul.mubr.bf16.gmra.mrb[0].mxu0 %v594
      %v863 = vpop.f32.mrb[0].mxu0
      %v864 = vadd.f32 %v334, %v863
      %v865 = vpop.f32.mrb[0].mxu0
      %v866 = vpop.f32.mrb[0].mxu0
      %v867 = vadd.f32 %v334, %v866
      %v868 = vpop.f32.mrb[0].mxu0
      %869 = vmatprep.mubr.bf16.mxu0 0
      %870 = vmatmul.mubr.bf16.gmra.mrb[0].mxu0 %v597
      %v871 = vpop.f32.mrb[0].mxu0
      %v872 = vadd.f32 %v334, %v871
      %v873 = vpop.f32.mrb[0].mxu0
      %v874 = vpop.f32.mrb[0].mxu0
      %v875 = vadd.f32 %v334, %v874
      %v876 = vpop.f32.mrb[0].mxu0
      %877 = vmatprep.mubr.bf16.mxu0 0
      %878 = vmatmul.mubr.bf16.gmra.mrb[0].mxu0 %v600
      %v879 = vpop.f32.mrb[0].mxu0
      %v880 = vadd.f32 %v334, %v879
      %v881 = vpop.f32.mrb[0].mxu0
      %v882 = vpop.f32.mrb[0].mxu0
      %v883 = vadd.f32 %v334, %v882
      %v884 = vpop.f32.mrb[0].mxu0
      %885 = vmatprep.mubr.bf16.mxu0 0
      %886 = vmatmul.mubr.bf16.gmra.mrb[0].mxu0 %v603
      %v887 = vpop.f32.mrb[0].mxu0
      %v888 = vadd.f32 %v334, %v887
      %v889 = vpop.f32.mrb[0].mxu0
      %v890 = vpop.f32.mrb[0].mxu0
      %v891 = vadd.f32 %v334, %v890
      %v892 = vpop.f32.mrb[0].mxu0
      %893 = vdwg.mxu0
      %v894 = vpack.c.bf16 %v643, %v640
      %v895 = vpack.c.bf16 %v651, %v648
      %v896 = vpack.c.bf16 %v659, %v656
      %v897 = vpack.c.bf16 %v667, %v664
      %v898 = vpack.c.bf16 %v675, %v672
      %v899 = vpack.c.bf16 %v683, %v680
      %v900 = vpack.c.bf16 %v691, %v688
      %v901 = vpack.c.bf16 %v699, %v696
      %v902 = vpack.c.bf16 %v707, %v704
      %v903 = vpack.c.bf16 %v715, %v712
      %v904 = vpack.c.bf16 %v723, %v720
      %v905 = vpack.c.bf16 %v731, %v728
      %v906 = vpack.c.bf16 %v739, %v736
      %v907 = vpack.c.bf16 %v747, %v744
      %v908 = vpack.c.bf16 %v755, %v752
      %v909 = vpack.c.bf16 %v763, %v760
      %v910 = vpack.c.bf16 %v771, %v768
      %v911 = vpack.c.bf16 %v779, %v776
      %v912 = vpack.c.bf16 %v787, %v784
      %v913 = vpack.c.bf16 %v795, %v792
      %v914 = vpack.c.bf16 %v803, %v800
      %v915 = vpack.c.bf16 %v811, %v808
      %v916 = vpack.c.bf16 %v819, %v816
      %v917 = vpack.c.bf16 %v827, %v824
      %v918 = vpack.c.bf16 %v835, %v832
      %v919 = vpack.c.bf16 %v843, %v840
      %v920 = vpack.c.bf16 %v851, %v848
      %v921 = vpack.c.bf16 %v859, %v856
      %v922 = vpack.c.bf16 %v867, %v864
      %v923 = vpack.c.bf16 %v875, %v872
      %v924 = vpack.c.bf16 %v883, %v880
      %v925 = vpack.c.bf16 %v891, %v888
      %v926 = vld [vmem:[%s3] sm:$0xf]
      %v927 = vld [vmem:[%s3 + $0x4] sm:$0xf]
      %v928 = vld [vmem:[%s3 + $0x8] sm:$0xf]
      %v929 = vld [vmem:[%s3 + $0xc] sm:$0xf]
      %v930 = vld [vmem:[%s3 + $0x10] sm:$0xf]
      %v931 = vld [vmem:[%s3 + $0x14] sm:$0xf]
      %v932 = vld [vmem:[%s3 + $0x18] sm:$0xf]
      %v933 = vld [vmem:[%s3 + $0x1c] sm:$0xf]
      %v934 = vld [vmem:[%s3 + $0x20] sm:$0xf]
      %v935 = vld [vmem:[%s3 + $0x24] sm:$0xf]
      %v936 = vld [vmem:[%s3 + $0x28] sm:$0xf]
      %v937 = vld [vmem:[%s3 + $0x2c] sm:$0xf]
      %v938 = vld [vmem:[%s3 + $0x30] sm:$0xf]
      %v939 = vld [vmem:[%s3 + $0x34] sm:$0xf]
      %v940 = vld [vmem:[%s3 + $0x38] sm:$0xf]
      %v941 = vld [vmem:[%s3 + $0x3c] sm:$0xf]
      %v942 = vld [vmem:[%s3 + $0x40] sm:$0xf]
      %v943 = vld [vmem:[%s3 + $0x44] sm:$0xf]
      %v944 = vld [vmem:[%s3 + $0x48] sm:$0xf]
      %v945 = vld [vmem:[%s3 + $0x4c] sm:$0xf]
      %v946 = vld [vmem:[%s3 + $0x50] sm:$0xf]
      %v947 = vld [vmem:[%s3 + $0x54] sm:$0xf]
      %v948 = vld [vmem:[%s3 + $0x58] sm:$0xf]
      %v949 = vld [vmem:[%s3 + $0x5c] sm:$0xf]
      %v950 = vld [vmem:[%s3 + $0x60] sm:$0xf]
      %v951 = vld [vmem:[%s3 + $0x64] sm:$0xf]
      %v952 = vld [vmem:[%s3 + $0x68] sm:$0xf]
      %v953 = vld [vmem:[%s3 + $0x6c] sm:$0xf]
      %v954 = vld [vmem:[%s3 + $0x70] sm:$0xf]
      %v955 = vld [vmem:[%s3 + $0x74] sm:$0xf]
      %v956 = vld [vmem:[%s3 + $0x78] sm:$0xf]
      %v957 = vld [vmem:[%s3 + $0x7c] sm:$0xf]
      %v958 = vunpack.c.l.bf16 %v926
      %v959 = vunpack.c.l.bf16 %v927
      %v960 = vunpack.c.l.bf16 %v928
      %v961 = vunpack.c.l.bf16 %v929
      %v962 = vunpack.c.l.bf16 %v930
      %v963 = vunpack.c.l.bf16 %v931
      %v964 = vunpack.c.l.bf16 %v932
      %v965 = vunpack.c.l.bf16 %v933
      %v966 = vunpack.c.l.bf16 %v934
      %v967 = vunpack.c.l.bf16 %v935
      %v968 = vunpack.c.l.bf16 %v936
      %v969 = vunpack.c.l.bf16 %v937
      %v970 = vunpack.c.l.bf16 %v938
      %v971 = vunpack.c.l.bf16 %v939
      %v972 = vunpack.c.l.bf16 %v940
      %v973 = vunpack.c.l.bf16 %v941
      %v974 = vunpack.c.l.bf16 %v942
      %v975 = vunpack.c.l.bf16 %v943
      %v976 = vunpack.c.l.bf16 %v944
      %v977 = vunpack.c.l.bf16 %v945
      %v978 = vunpack.c.l.bf16 %v946
      %v979 = vunpack.c.l.bf16 %v947
      %v980 = vunpack.c.l.bf16 %v948
      %v981 = vunpack.c.l.bf16 %v949
      %v982 = vunpack.c.l.bf16 %v950
      %v983 = vunpack.c.l.bf16 %v951
      %v984 = vunpack.c.l.bf16 %v952
      %v985 = vunpack.c.l.bf16 %v953
      %v986 = vunpack.c.l.bf16 %v954
      %v987 = vunpack.c.l.bf16 %v955
      %v988 = vunpack.c.l.bf16 %v956
      %v989 = vunpack.c.l.bf16 %v957
      %994 = vrot.lane.b32.xlu0 %v894, 96
      %v995 = vpop.permute.xlu0 %994
      %996 = vrot.lane.b32.xlu0 %v895, 96
      %v997 = vpop.permute.xlu0 %996
      %998 = vrot.lane.b32.xlu0 %v896, 96
      %v999 = vpop.permute.xlu0 %998
      %1000 = vrot.lane.b32.xlu0 %v897, 96
      %v1001 = vpop.permute.xlu0 %1000
      %vm1002 = vcmask 64512
      %v1004 = vsel %vm1002, %v894, 0
      %v1007 = vsel %vm1002, %v895, 0
      %v1010 = vsel %vm1002, %v896, 0
      %v1013 = vsel %vm1002, %v897, 0
      %v1016 = vsel %vm1002, %v995, 0
      %v1019 = vsel %vm1002, %v997, 0
      %v1022 = vsel %vm1002, %v999, 0
      %v1025 = vsel %vm1002, %v1001, 0
      %1027 = vmatprep.subr.bf16.mxu0 0
      %1028 = vmatpush1.bf16.xpose.msra.mxu0 %v1016
      %1029 = vmatprep.subr.bf16.mxu0 0
      %1030 = vmatpush1.bf16.xpose.msra.mxu0 %v1019
      %1031 = vmatprep.subr.bf16.mxu0 0
      %1032 = vmatpush1.bf16.xpose.msra.mxu0 %v1022
      %1033 = vmatprep.subr.bf16.mxu0 0
      %1034 = vmatpush1.bf16.xpose.msra.mxu0 %v1025
      %1035 = vmatprep.subr.bf16.mxu0 0
      %1036 = vmatpush1.bf16.xpose.msra.mxu0 0
      %1037 = vmatprep.subr.bf16.mxu0 0
      %1038 = vmatpush1.bf16.xpose.msra.mxu0 0
      %1039 = vmatprep.subr.bf16.mxu0 0
      %1040 = vmatpush1.bf16.xpose.msra.mxu0 0
      %1041 = vmatprep.subr.bf16.mxu0 0
      %1042 = vmatpush1.bf16.xpose.msra.mxu0 0
      %1043 = vmatprep.subr.bf16.mxu0 0
      %1044 = vmatpush1.bf16.xpose.msra.mxu0 0
      %1045 = vmatprep.subr.bf16.mxu0 0
      %1046 = vmatpush1.bf16.xpose.msra.mxu0 0
      %1047 = vmatprep.subr.bf16.mxu0 0
      %1048 = vmatpush1.bf16.xpose.msra.mxu0 0
      %1049 = vmatprep.subr.bf16.mxu0 0
      %1050 = vmatpush1.bf16.xpose.msra.mxu0 0
      %1051 = vmatprep.subr.bf16.mxu0 0
      %1052 = vmatpush1.bf16.xpose.msra.mxu0 0
      %1053 = vmatprep.subr.bf16.mxu0 0
      %1054 = vmatpush1.bf16.xpose.msra.mxu0 0
      %1055 = vmatprep.subr.bf16.mxu0 0
      %1056 = vmatpush1.bf16.xpose.msra.mxu0 0
      %1057 = vmatprep.subr.bf16.mxu0 0
      %1058 = vmatpush1.bf16.xpose.msra.mxu0 0
      %1059 = vmatprep.mubr.bf16.mxu0 0
      %1060 = vmatmul.mubr.bf16.gmra.mrb[0].mxu0 %v1004
      %v1061 = vpop.f32.mrb[0].mxu0
      %v1062 = vadd.f32 %v958, %v1061
      %v1063 = vpop.f32.mrb[0].mxu0
      %v1064 = vpop.f32.mrb[0].mxu0
      %v1065 = vadd.f32 %v959, %v1064
      %v1066 = vpop.f32.mrb[0].mxu0
      %1067 = vmatprep.mubr.bf16.mxu0 0
      %1068 = vmatmul.mubr.bf16.gmra.mrb[0].mxu0 %v1007
      %v1069 = vpop.f32.mrb[0].mxu0
      %v1070 = vadd.f32 %v960, %v1069
      %v1071 = vpop.f32.mrb[0].mxu0
      %v1072 = vpop.f32.mrb[0].mxu0
      %v1073 = vadd.f32 %v961, %v1072
      %v1074 = vpop.f32.mrb[0].mxu0
      %1075 = vmatprep.mubr.bf16.mxu0 0
      %1076 = vmatmul.mubr.bf16.gmra.mrb[0].mxu0 %v1010
      %v1077 = vpop.f32.mrb[0].mxu0
      %v1078 = vadd.f32 %v962, %v1077
      %v1079 = vpop.f32.mrb[0].mxu0
      %v1080 = vpop.f32.mrb[0].mxu0
      %v1081 = vadd.f32 %v963, %v1080
      %v1082 = vpop.f32.mrb[0].mxu0
      %1083 = vmatprep.mubr.bf16.mxu0 0
      %1084 = vmatmul.mubr.bf16.gmra.mrb[0].mxu0 %v1013
      %v1085 = vpop.f32.mrb[0].mxu0
      %v1086 = vadd.f32 %v964, %v1085
      %v1087 = vpop.f32.mrb[0].mxu0
      %v1088 = vpop.f32.mrb[0].mxu0
      %v1089 = vadd.f32 %v965, %v1088
      %v1090 = vpop.f32.mrb[0].mxu0
      %1091 = vdwg.mxu0
      %1096 = vrot.lane.b32.xlu0 %v898, 96
      %v1097 = vpop.permute.xlu0 %1096
      %1098 = vrot.lane.b32.xlu0 %v899, 96
      %v1099 = vpop.permute.xlu0 %1098
      %1100 = vrot.lane.b32.xlu0 %v900, 96
      %v1101 = vpop.permute.xlu0 %1100
      %1102 = vrot.lane.b32.xlu0 %v901, 96
      %v1103 = vpop.permute.xlu0 %1102
      %v1105 = vsel %vm1002, %v898, 0
      %v1108 = vsel %vm1002, %v899, 0
      %v1111 = vsel %vm1002, %v900, 0
      %v1114 = vsel %vm1002, %v901, 0
      %v1117 = vsel %vm1002, %v1097, 0
      %v1120 = vsel %vm1002, %v1099, 0
      %v1123 = vsel %vm1002, %v1101, 0
      %v1126 = vsel %vm1002, %v1103, 0
      %1128 = vmatprep.subr.bf16.mxu0 0
      %1129 = vmatpush1.bf16.xpose.msra.mxu0 %v1117
      %1130 = vmatprep.subr.bf16.mxu0 0
      %1131 = vmatpush1.bf16.xpose.msra.mxu0 %v1120
      %1132 = vmatprep.subr.bf16.mxu0 0
      %1133 = vmatpush1.bf16.xpose.msra.mxu0 %v1123
      %1134 = vmatprep.subr.bf16.mxu0 0
      %1135 = vmatpush1.bf16.xpose.msra.mxu0 %v1126
      %1136 = vmatprep.subr.bf16.mxu0 0
      %1137 = vmatpush1.bf16.xpose.msra.mxu0 0
      %1138 = vmatprep.subr.bf16.mxu0 0
      %1139 = vmatpush1.bf16.xpose.msra.mxu0 0
      %1140 = vmatprep.subr.bf16.mxu0 0
      %1141 = vmatpush1.bf16.xpose.msra.mxu0 0
      %1142 = vmatprep.subr.bf16.mxu0 0
      %1143 = vmatpush1.bf16.xpose.msra.mxu0 0
      %1144 = vmatprep.subr.bf16.mxu0 0
      %1145 = vmatpush1.bf16.xpose.msra.mxu0 0
      %1146 = vmatprep.subr.bf16.mxu0 0
      %1147 = vmatpush1.bf16.xpose.msra.mxu0 0
      %1148 = vmatprep.subr.bf16.mxu0 0
      %1149 = vmatpush1.bf16.xpose.msra.mxu0 0
      %1150 = vmatprep.subr.bf16.mxu0 0
      %1151 = vmatpush1.bf16.xpose.msra.mxu0 0
      %1152 = vmatprep.subr.bf16.mxu0 0
      %1153 = vmatpush1.bf16.xpose.msra.mxu0 0
      %1154 = vmatprep.subr.bf16.mxu0 0
      %1155 = vmatpush1.bf16.xpose.msra.mxu0 0
      %1156 = vmatprep.subr.bf16.mxu0 0
      %1157 = vmatpush1.bf16.xpose.msra.mxu0 0
      %1158 = vmatprep.subr.bf16.mxu0 0
      %1159 = vmatpush1.bf16.xpose.msra.mxu0 0
      %1160 = vmatprep.mubr.bf16.mxu0 0
      %1161 = vmatmul.mubr.bf16.gmra.mrb[0].mxu0 %v1105
      %v1162 = vpop.f32.mrb[0].mxu0
      %v1163 = vadd.f32 %v958, %v1162
      %v1164 = vpop.f32.mrb[0].mxu0
      %v1165 = vpop.f32.mrb[0].mxu0
      %v1166 = vadd.f32 %v959, %v1165
      %v1167 = vpop.f32.mrb[0].mxu0
      %1168 = vmatprep.mubr.bf16.mxu0 0
      %1169 = vmatmul.mubr.bf16.gmra.mrb[0].mxu0 %v1108
      %v1170 = vpop.f32.mrb[0].mxu0
      %v1171 = vadd.f32 %v960, %v1170
      %v1172 = vpop.f32.mrb[0].mxu0
      %v1173 = vpop.f32.mrb[0].mxu0
      %v1174 = vadd.f32 %v961, %v1173
      %v1175 = vpop.f32.mrb[0].mxu0
      %1176 = vmatprep.mubr.bf16.mxu0 0
      %1177 = vmatmul.mubr.bf16.gmra.mrb[0].mxu0 %v1111
      %v1178 = vpop.f32.mrb[0].mxu0
      %v1179 = vadd.f32 %v962, %v1178
      %v1180 = vpop.f32.mrb[0].mxu0
      %v1181 = vpop.f32.mrb[0].mxu0
      %v1182 = vadd.f32 %v963, %v1181
      %v1183 = vpop.f32.mrb[0].mxu0
      %1184 = vmatprep.mubr.bf16.mxu0 0
      %1185 = vmatmul.mubr.bf16.gmra.mrb[0].mxu0 %v1114
      %v1186 = vpop.f32.mrb[0].mxu0
      %v1187 = vadd.f32 %v964, %v1186
      %v1188 = vpop.f32.mrb[0].mxu0
      %v1189 = vpop.f32.mrb[0].mxu0
      %v1190 = vadd.f32 %v965, %v1189
      %v1191 = vpop.f32.mrb[0].mxu0
      %1192 = vdwg.mxu0
      %1197 = vrot.lane.b32.xlu0 %v902, 96
      %v1198 = vpop.permute.xlu0 %1197
      %1199 = vrot.lane.b32.xlu0 %v903, 96
      %v1200 = vpop.permute.xlu0 %1199
      %1201 = vrot.lane.b32.xlu0 %v904, 96
      %v1202 = vpop.permute.xlu0 %1201
      %1203 = vrot.lane.b32.xlu0 %v905, 96
      %v1204 = vpop.permute.xlu0 %1203
      %v1206 = vsel %vm1002, %v902, 0
      %v1209 = vsel %vm1002, %v903, 0
      %v1212 = vsel %vm1002, %v904, 0
      %v1215 = vsel %vm1002, %v905, 0
      %v1218 = vsel %vm1002, %v1198, 0
      %v1221 = vsel %vm1002, %v1200, 0
      %v1224 = vsel %vm1002, %v1202, 0
      %v1227 = vsel %vm1002, %v1204, 0
      %1229 = vmatprep.subr.bf16.mxu0 0
      %1230 = vmatpush1.bf16.xpose.msra.mxu0 %v1218
      %1231 = vmatprep.subr.bf16.mxu0 0
      %1232 = vmatpush1.bf16.xpose.msra.mxu0 %v1221
      %1233 = vmatprep.subr.bf16.mxu0 0
      %1234 = vmatpush1.bf16.xpose.msra.mxu0 %v1224
      %1235 = vmatprep.subr.bf16.mxu0 0
      %1236 = vmatpush1.bf16.xpose.msra.mxu0 %v1227
      %1237 = vmatprep.subr.bf16.mxu0 0
      %1238 = vmatpush1.bf16.xpose.msra.mxu0 0
      %1239 = vmatprep.subr.bf16.mxu0 0
      %1240 = vmatpush1.bf16.xpose.msra.mxu0 0
      %1241 = vmatprep.subr.bf16.mxu0 0
      %1242 = vmatpush1.bf16.xpose.msra.mxu0 0
      %1243 = vmatprep.subr.bf16.mxu0 0
      %1244 = vmatpush1.bf16.xpose.msra.mxu0 0
      %1245 = vmatprep.subr.bf16.mxu0 0
      %1246 = vmatpush1.bf16.xpose.msra.mxu0 0
      %1247 = vmatprep.subr.bf16.mxu0 0
      %1248 = vmatpush1.bf16.xpose.msra.mxu0 0
      %1249 = vmatprep.subr.bf16.mxu0 0
      %1250 = vmatpush1.bf16.xpose.msra.mxu0 0
      %1251 = vmatprep.subr.bf16.mxu0 0
      %1252 = vmatpush1.bf16.xpose.msra.mxu0 0
      %1253 = vmatprep.subr.bf16.mxu0 0
      %1254 = vmatpush1.bf16.xpose.msra.mxu0 0
      %1255 = vmatprep.subr.bf16.mxu0 0
      %1256 = vmatpush1.bf16.xpose.msra.mxu0 0
      %1257 = vmatprep.subr.bf16.mxu0 0
      %1258 = vmatpush1.bf16.xpose.msra.mxu0 0
      %1259 = vmatprep.subr.bf16.mxu0 0
      %1260 = vmatpush1.bf16.xpose.msra.mxu0 0
      %1261 = vmatprep.mubr.bf16.mxu0 0
      %1262 = vmatmul.mubr.bf16.gmra.mrb[0].mxu0 %v1206
      %v1263 = vpop.f32.mrb[0].mxu0
      %v1264 = vadd.f32 %v958, %v1263
      %v1265 = vpop.f32.mrb[0].mxu0
      %v1266 = vpop.f32.mrb[0].mxu0
      %v1267 = vadd.f32 %v959, %v1266
      %v1268 = vpop.f32.mrb[0].mxu0
      %1269 = vmatprep.mubr.bf16.mxu0 0
      %1270 = vmatmul.mubr.bf16.gmra.mrb[0].mxu0 %v1209
      %v1271 = vpop.f32.mrb[0].mxu0
      %v1272 = vadd.f32 %v960, %v1271
      %v1273 = vpop.f32.mrb[0].mxu0
      %v1274 = vpop.f32.mrb[0].mxu0
      %v1275 = vadd.f32 %v961, %v1274
      %v1276 = vpop.f32.mrb[0].mxu0
      %1277 = vmatprep.mubr.bf16.mxu0 0
      %1278 = vmatmul.mubr.bf16.gmra.mrb[0].mxu0 %v1212
      %v1279 = vpop.f32.mrb[0].mxu0
      %v1280 = vadd.f32 %v962, %v1279
      %v1281 = vpop.f32.mrb[0].mxu0
      %v1282 = vpop.f32.mrb[0].mxu0
      %v1283 = vadd.f32 %v963, %v1282
      %v1284 = vpop.f32.mrb[0].mxu0
      %1285 = vmatprep.mubr.bf16.mxu0 0
      %1286 = vmatmul.mubr.bf16.gmra.mrb[0].mxu0 %v1215
      %v1287 = vpop.f32.mrb[0].mxu0
      %v1288 = vadd.f32 %v964, %v1287
      %v1289 = vpop.f32.mrb[0].mxu0
      %v1290 = vpop.f32.mrb[0].mxu0
      %v1291 = vadd.f32 %v965, %v1290
      %v1292 = vpop.f32.mrb[0].mxu0
      %1293 = vdwg.mxu0
      %1298 = vrot.lane.b32.xlu0 %v906, 96
      %v1299 = vpop.permute.xlu0 %1298
      %1300 = vrot.lane.b32.xlu0 %v907, 96
      %v1301 = vpop.permute.xlu0 %1300
      %1302 = vrot.lane.b32.xlu0 %v908, 96
      %v1303 = vpop.permute.xlu0 %1302
      %1304 = vrot.lane.b32.xlu0 %v909, 96
      %v1305 = vpop.permute.xlu0 %1304
      %v1307 = vsel %vm1002, %v906, 0
      %v1310 = vsel %vm1002, %v907, 0
      %v1313 = vsel %vm1002, %v908, 0
      %v1316 = vsel %vm1002, %v909, 0
      %v1319 = vsel %vm1002, %v1299, 0
      %v1322 = vsel %vm1002, %v1301, 0
      %v1325 = vsel %vm1002, %v1303, 0
      %v1328 = vsel %vm1002, %v1305, 0
      %1330 = vmatprep.subr.bf16.mxu0 0
      %1331 = vmatpush1.bf16.xpose.msra.mxu0 %v1319
      %1332 = vmatprep.subr.bf16.mxu0 0
      %1333 = vmatpush1.bf16.xpose.msra.mxu0 %v1322
      %1334 = vmatprep.subr.bf16.mxu0 0
      %1335 = vmatpush1.bf16.xpose.msra.mxu0 %v1325
      %1336 = vmatprep.subr.bf16.mxu0 0
      %1337 = vmatpush1.bf16.xpose.msra.mxu0 %v1328
      %1338 = vmatprep.subr.bf16.mxu0 0
      %1339 = vmatpush1.bf16.xpose.msra.mxu0 0
      %1340 = vmatprep.subr.bf16.mxu0 0
      %1341 = vmatpush1.bf16.xpose.msra.mxu0 0
      %1342 = vmatprep.subr.bf16.mxu0 0
      %1343 = vmatpush1.bf16.xpose.msra.mxu0 0
      %1344 = vmatprep.subr.bf16.mxu0 0
      %1345 = vmatpush1.bf16.xpose.msra.mxu0 0
      %1346 = vmatprep.subr.bf16.mxu0 0
      %1347 = vmatpush1.bf16.xpose.msra.mxu0 0
      %1348 = vmatprep.subr.bf16.mxu0 0
      %1349 = vmatpush1.bf16.xpose.msra.mxu0 0
      %1350 = vmatprep.subr.bf16.mxu0 0
      %1351 = vmatpush1.bf16.xpose.msra.mxu0 0
      %1352 = vmatprep.subr.bf16.mxu0 0
      %1353 = vmatpush1.bf16.xpose.msra.mxu0 0
      %1354 = vmatprep.subr.bf16.mxu0 0
      %1355 = vmatpush1.bf16.xpose.msra.mxu0 0
      %1356 = vmatprep.subr.bf16.mxu0 0
      %1357 = vmatpush1.bf16.xpose.msra.mxu0 0
      %1358 = vmatprep.subr.bf16.mxu0 0
      %1359 = vmatpush1.bf16.xpose.msra.mxu0 0
      %1360 = vmatprep.subr.bf16.mxu0 0
      %1361 = vmatpush1.bf16.xpose.msra.mxu0 0
      %1362 = vmatprep.mubr.bf16.mxu0 0
      %1363 = vmatmul.mubr.bf16.gmra.mrb[0].mxu0 %v1307
      %v1364 = vpop.f32.mrb[0].mxu0
      %v1365 = vadd.f32 %v958, %v1364
      %v1366 = vpop.f32.mrb[0].mxu0
      %v1367 = vpop.f32.mrb[0].mxu0
      %v1368 = vadd.f32 %v959, %v1367
      %v1369 = vpop.f32.mrb[0].mxu0
      %1370 = vmatprep.mubr.bf16.mxu0 0
      %1371 = vmatmul.mubr.bf16.gmra.mrb[0].mxu0 %v1310
      %v1372 = vpop.f32.mrb[0].mxu0
      %v1373 = vadd.f32 %v960, %v1372
      %v1374 = vpop.f32.mrb[0].mxu0
      %v1375 = vpop.f32.mrb[0].mxu0
      %v1376 = vadd.f32 %v961, %v1375
      %v1377 = vpop.f32.mrb[0].mxu0
      %1378 = vmatprep.mubr.bf16.mxu0 0
      %1379 = vmatmul.mubr.bf16.gmra.mrb[0].mxu0 %v1313
      %v1380 = vpop.f32.mrb[0].mxu0
      %v1381 = vadd.f32 %v962, %v1380
      %v1382 = vpop.f32.mrb[0].mxu0
      %v1383 = vpop.f32.mrb[0].mxu0
      %v1384 = vadd.f32 %v963, %v1383
      %v1385 = vpop.f32.mrb[0].mxu0
      %1386 = vmatprep.mubr.bf16.mxu0 0
      %1387 = vmatmul.mubr.bf16.gmra.mrb[0].mxu0 %v1316
      %v1388 = vpop.f32.mrb[0].mxu0
      %v1389 = vadd.f32 %v964, %v1388
      %v1390 = vpop.f32.mrb[0].mxu0
      %v1391 = vpop.f32.mrb[0].mxu0
      %v1392 = vadd.f32 %v965, %v1391
      %v1393 = vpop.f32.mrb[0].mxu0
      %1394 = vdwg.mxu0
      %1399 = vrot.lane.b32.xlu0 %v910, 96
      %v1400 = vpop.permute.xlu0 %1399
      %1401 = vrot.lane.b32.xlu0 %v911, 96
      %v1402 = vpop.permute.xlu0 %1401
      %1403 = vrot.lane.b32.xlu0 %v912, 96
      %v1404 = vpop.permute.xlu0 %1403
      %1405 = vrot.lane.b32.xlu0 %v913, 96
      %v1406 = vpop.permute.xlu0 %1405
      %v1408 = vsel %vm1002, %v910, 0
      %v1411 = vsel %vm1002, %v911, 0
      %v1414 = vsel %vm1002, %v912, 0
      %v1417 = vsel %vm1002, %v913, 0
      %v1420 = vsel %vm1002, %v1400, 0
      %v1423 = vsel %vm1002, %v1402, 0
      %v1426 = vsel %vm1002, %v1404, 0
      %v1429 = vsel %vm1002, %v1406, 0
      %1431 = vmatprep.subr.bf16.mxu0 0
      %1432 = vmatpush1.bf16.xpose.msra.mxu0 %v1420
      %1433 = vmatprep.subr.bf16.mxu0 0
      %1434 = vmatpush1.bf16.xpose.msra.mxu0 %v1423
      %1435 = vmatprep.subr.bf16.mxu0 0
      %1436 = vmatpush1.bf16.xpose.msra.mxu0 %v1426
      %1437 = vmatprep.subr.bf16.mxu0 0
      %1438 = vmatpush1.bf16.xpose.msra.mxu0 %v1429
      %1439 = vmatprep.subr.bf16.mxu0 0
      %1440 = vmatpush1.bf16.xpose.msra.mxu0 0
      %1441 = vmatprep.subr.bf16.mxu0 0
      %1442 = vmatpush1.bf16.xpose.msra.mxu0 0
      %1443 = vmatprep.subr.bf16.mxu0 0
      %1444 = vmatpush1.bf16.xpose.msra.mxu0 0
      %1445 = vmatprep.subr.bf16.mxu0 0
      %1446 = vmatpush1.bf16.xpose.msra.mxu0 0
      %1447 = vmatprep.subr.bf16.mxu0 0
      %1448 = vmatpush1.bf16.xpose.msra.mxu0 0
      %1449 = vmatprep.subr.bf16.mxu0 0
      %1450 = vmatpush1.bf16.xpose.msra.mxu0 0
      %1451 = vmatprep.subr.bf16.mxu0 0
      %1452 = vmatpush1.bf16.xpose.msra.mxu0 0
      %1453 = vmatprep.subr.bf16.mxu0 0
      %1454 = vmatpush1.bf16.xpose.msra.mxu0 0
      %1455 = vmatprep.subr.bf16.mxu0 0
      %1456 = vmatpush1.bf16.xpose.msra.mxu0 0
      %1457 = vmatprep.subr.bf16.mxu0 0
      %1458 = vmatpush1.bf16.xpose.msra.mxu0 0
      %1459 = vmatprep.subr.bf16.mxu0 0
      %1460 = vmatpush1.bf16.xpose.msra.mxu0 0
      %1461 = vmatprep.subr.bf16.mxu0 0
      %1462 = vmatpush1.bf16.xpose.msra.mxu0 0
      %1463 = vmatprep.mubr.bf16.mxu0 0
      %1464 = vmatmul.mubr.bf16.gmra.mrb[0].mxu0 %v1408
      %v1465 = vpop.f32.mrb[0].mxu0
      %v1466 = vadd.f32 %v958, %v1465
      %v1467 = vpop.f32.mrb[0].mxu0
      %v1468 = vpop.f32.mrb[0].mxu0
      %v1469 = vadd.f32 %v959, %v1468
      %v1470 = vpop.f32.mrb[0].mxu0
      %1471 = vmatprep.mubr.bf16.mxu0 0
      %1472 = vmatmul.mubr.bf16.gmra.mrb[0].mxu0 %v1411
      %v1473 = vpop.f32.mrb[0].mxu0
      %v1474 = vadd.f32 %v960, %v1473
      %v1475 = vpop.f32.mrb[0].mxu0
      %v1476 = vpop.f32.mrb[0].mxu0
      %v1477 = vadd.f32 %v961, %v1476
      %v1478 = vpop.f32.mrb[0].mxu0
      %1479 = vmatprep.mubr.bf16.mxu0 0
      %1480 = vmatmul.mubr.bf16.gmra.mrb[0].mxu0 %v1414
      %v1481 = vpop.f32.mrb[0].mxu0
      %v1482 = vadd.f32 %v962, %v1481
      %v1483 = vpop.f32.mrb[0].mxu0
      %v1484 = vpop.f32.mrb[0].mxu0
      %v1485 = vadd.f32 %v963, %v1484
      %v1486 = vpop.f32.mrb[0].mxu0
      %1487 = vmatprep.mubr.bf16.mxu0 0
      %1488 = vmatmul.mubr.bf16.gmra.mrb[0].mxu0 %v1417
      %v1489 = vpop.f32.mrb[0].mxu0
      %v1490 = vadd.f32 %v964, %v1489
      %v1491 = vpop.f32.mrb[0].mxu0
      %v1492 = vpop.f32.mrb[0].mxu0
      %v1493 = vadd.f32 %v965, %v1492
      %v1494 = vpop.f32.mrb[0].mxu0
      %1495 = vdwg.mxu0
      %1500 = vrot.lane.b32.xlu0 %v914, 96
      %v1501 = vpop.permute.xlu0 %1500
      %1502 = vrot.lane.b32.xlu0 %v915, 96
      %v1503 = vpop.permute.xlu0 %1502
      %1504 = vrot.lane.b32.xlu0 %v916, 96
      %v1505 = vpop.permute.xlu0 %1504
      %1506 = vrot.lane.b32.xlu0 %v917, 96
      %v1507 = vpop.permute.xlu0 %1506
      %v1509 = vsel %vm1002, %v914, 0
      %v1512 = vsel %vm1002, %v915, 0
      %v1515 = vsel %vm1002, %v916, 0
      %v1518 = vsel %vm1002, %v917, 0
      %v1521 = vsel %vm1002, %v1501, 0
      %v1524 = vsel %vm1002, %v1503, 0
      %v1527 = vsel %vm1002, %v1505, 0
      %v1530 = vsel %vm1002, %v1507, 0
      %1532 = vmatprep.subr.bf16.mxu0 0
      %1533 = vmatpush1.bf16.xpose.msra.mxu0 %v1521
      %1534 = vmatprep.subr.bf16.mxu0 0
      %1535 = vmatpush1.bf16.xpose.msra.mxu0 %v1524
      %1536 = vmatprep.subr.bf16.mxu0 0
      %1537 = vmatpush1.bf16.xpose.msra.mxu0 %v1527
      %1538 = vmatprep.subr.bf16.mxu0 0
      %1539 = vmatpush1.bf16.xpose.msra.mxu0 %v1530
      %1540 = vmatprep.subr.bf16.mxu0 0
      %1541 = vmatpush1.bf16.xpose.msra.mxu0 0
      %1542 = vmatprep.subr.bf16.mxu0 0
      %1543 = vmatpush1.bf16.xpose.msra.mxu0 0
      %1544 = vmatprep.subr.bf16.mxu0 0
      %1545 = vmatpush1.bf16.xpose.msra.mxu0 0
      %1546 = vmatprep.subr.bf16.mxu0 0
      %1547 = vmatpush1.bf16.xpose.msra.mxu0 0
      %1548 = vmatprep.subr.bf16.mxu0 0
      %1549 = vmatpush1.bf16.xpose.msra.mxu0 0
      %1550 = vmatprep.subr.bf16.mxu0 0
      %1551 = vmatpush1.bf16.xpose.msra.mxu0 0
      %1552 = vmatprep.subr.bf16.mxu0 0
      %1553 = vmatpush1.bf16.xpose.msra.mxu0 0
      %1554 = vmatprep.subr.bf16.mxu0 0
      %1555 = vmatpush1.bf16.xpose.msra.mxu0 0
      %1556 = vmatprep.subr.bf16.mxu0 0
      %1557 = vmatpush1.bf16.xpose.msra.mxu0 0
      %1558 = vmatprep.subr.bf16.mxu0 0
      %1559 = vmatpush1.bf16.xpose.msra.mxu0 0
      %1560 = vmatprep.subr.bf16.mxu0 0
      %1561 = vmatpush1.bf16.xpose.msra.mxu0 0
      %1562 = vmatprep.subr.bf16.mxu0 0
      %1563 = vmatpush1.bf16.xpose.msra.mxu0 0
      %1564 = vmatprep.mubr.bf16.mxu0 0
      %1565 = vmatmul.mubr.bf16.gmra.mrb[0].mxu0 %v1509
      %v1566 = vpop.f32.mrb[0].mxu0
      %v1567 = vadd.f32 %v958, %v1566
      %v1568 = vpop.f32.mrb[0].mxu0
      %v1569 = vpop.f32.mrb[0].mxu0
      %v1570 = vadd.f32 %v959, %v1569
      %v1571 = vpop.f32.mrb[0].mxu0
      %1572 = vmatprep.mubr.bf16.mxu0 0
      %1573 = vmatmul.mubr.bf16.gmra.mrb[0].mxu0 %v1512
      %v1574 = vpop.f32.mrb[0].mxu0
      %v1575 = vadd.f32 %v960, %v1574
      %v1576 = vpop.f32.mrb[0].mxu0
      %v1577 = vpop.f32.mrb[0].mxu0
      %v1578 = vadd.f32 %v961, %v1577
      %v1579 = vpop.f32.mrb[0].mxu0
      %1580 = vmatprep.mubr.bf16.mxu0 0
      %1581 = vmatmul.mubr.bf16.gmra.mrb[0].mxu0 %v1515
      %v1582 = vpop.f32.mrb[0].mxu0
      %v1583 = vadd.f32 %v962, %v1582
      %v1584 = vpop.f32.mrb[0].mxu0
      %v1585 = vpop.f32.mrb[0].mxu0
      %v1586 = vadd.f32 %v963, %v1585
      %v1587 = vpop.f32.mrb[0].mxu0
      %1588 = vmatprep.mubr.bf16.mxu0 0
      %1589 = vmatmul.mubr.bf16.gmra.mrb[0].mxu0 %v1518
      %v1590 = vpop.f32.mrb[0].mxu0
      %v1591 = vadd.f32 %v964, %v1590
      %v1592 = vpop.f32.mrb[0].mxu0
      %v1593 = vpop.f32.mrb[0].mxu0
      %v1594 = vadd.f32 %v965, %v1593
      %v1595 = vpop.f32.mrb[0].mxu0
      %1596 = vdwg.mxu0
      %1601 = vrot.lane.b32.xlu0 %v918, 96
      %v1602 = vpop.permute.xlu0 %1601
      %1603 = vrot.lane.b32.xlu0 %v919, 96
      %v1604 = vpop.permute.xlu0 %1603
      %1605 = vrot.lane.b32.xlu0 %v920, 96
      %v1606 = vpop.permute.xlu0 %1605
      %1607 = vrot.lane.b32.xlu0 %v921, 96
      %v1608 = vpop.permute.xlu0 %1607
      %v1610 = vsel %vm1002, %v918, 0
      %v1613 = vsel %vm1002, %v919, 0
      %v1616 = vsel %vm1002, %v920, 0
      %v1619 = vsel %vm1002, %v921, 0
      %v1622 = vsel %vm1002, %v1602, 0
      %v1625 = vsel %vm1002, %v1604, 0
      %v1628 = vsel %vm1002, %v1606, 0
      %v1631 = vsel %vm1002, %v1608, 0
      %1633 = vmatprep.subr.bf16.mxu0 0
      %1634 = vmatpush1.bf16.xpose.msra.mxu0 %v1622
      %1635 = vmatprep.subr.bf16.mxu0 0
      %1636 = vmatpush1.bf16.xpose.msra.mxu0 %v1625
      %1637 = vmatprep.subr.bf16.mxu0 0
      %1638 = vmatpush1.bf16.xpose.msra.mxu0 %v1628
      %1639 = vmatprep.subr.bf16.mxu0 0
      %1640 = vmatpush1.bf16.xpose.msra.mxu0 %v1631
      %1641 = vmatprep.subr.bf16.mxu0 0
      %1642 = vmatpush1.bf16.xpose.msra.mxu0 0
      %1643 = vmatprep.subr.bf16.mxu0 0
      %1644 = vmatpush1.bf16.xpose.msra.mxu0 0
      %1645 = vmatprep.subr.bf16.mxu0 0
      %1646 = vmatpush1.bf16.xpose.msra.mxu0 0
      %1647 = vmatprep.subr.bf16.mxu0 0
      %1648 = vmatpush1.bf16.xpose.msra.mxu0 0
      %1649 = vmatprep.subr.bf16.mxu0 0
      %1650 = vmatpush1.bf16.xpose.msra.mxu0 0
      %1651 = vmatprep.subr.bf16.mxu0 0
      %1652 = vmatpush1.bf16.xpose.msra.mxu0 0
      %1653 = vmatprep.subr.bf16.mxu0 0
      %1654 = vmatpush1.bf16.xpose.msra.mxu0 0
      %1655 = vmatprep.subr.bf16.mxu0 0
      %1656 = vmatpush1.bf16.xpose.msra.mxu0 0
      %1657 = vmatprep.subr.bf16.mxu0 0
      %1658 = vmatpush1.bf16.xpose.msra.mxu0 0
      %1659 = vmatprep.subr.bf16.mxu0 0
      %1660 = vmatpush1.bf16.xpose.msra.mxu0 0
      %1661 = vmatprep.subr.bf16.mxu0 0
      %1662 = vmatpush1.bf16.xpose.msra.mxu0 0
      %1663 = vmatprep.subr.bf16.mxu0 0
      %1664 = vmatpush1.bf16.xpose.msra.mxu0 0
      %1665 = vmatprep.mubr.bf16.mxu0 0
      %1666 = vmatmul.mubr.bf16.gmra.mrb[0].mxu0 %v1610
      %v1667 = vpop.f32.mrb[0].mxu0
      %v1668 = vadd.f32 %v958, %v1667
      %v1669 = vpop.f32.mrb[0].mxu0
      %v1670 = vpop.f32.mrb[0].mxu0
      %v1671 = vadd.f32 %v959, %v1670
      %v1672 = vpop.f32.mrb[0].mxu0
      %1673 = vmatprep.mubr.bf16.mxu0 0
      %1674 = vmatmul.mubr.bf16.gmra.mrb[0].mxu0 %v1613
      %v1675 = vpop.f32.mrb[0].mxu0
      %v1676 = vadd.f32 %v960, %v1675
      %v1677 = vpop.f32.mrb[0].mxu0
      %v1678 = vpop.f32.mrb[0].mxu0
      %v1679 = vadd.f32 %v961, %v1678
      %v1680 = vpop.f32.mrb[0].mxu0
      %1681 = vmatprep.mubr.bf16.mxu0 0
      %1682 = vmatmul.mubr.bf16.gmra.mrb[0].mxu0 %v1616
      %v1683 = vpop.f32.mrb[0].mxu0
      %v1684 = vadd.f32 %v962, %v1683
      %v1685 = vpop.f32.mrb[0].mxu0
      %v1686 = vpop.f32.mrb[0].mxu0
      %v1687 = vadd.f32 %v963, %v1686
      %v1688 = vpop.f32.mrb[0].mxu0
      %1689 = vmatprep.mubr.bf16.mxu0 0
      %1690 = vmatmul.mubr.bf16.gmra.mrb[0].mxu0 %v1619
      %v1691 = vpop.f32.mrb[0].mxu0
      %v1692 = vadd.f32 %v964, %v1691
      %v1693 = vpop.f32.mrb[0].mxu0
      %v1694 = vpop.f32.mrb[0].mxu0
      %v1695 = vadd.f32 %v965, %v1694
      %v1696 = vpop.f32.mrb[0].mxu0
      %1697 = vdwg.mxu0
      %1702 = vrot.lane.b32.xlu0 %v922, 96
      %v1703 = vpop.permute.xlu0 %1702
      %1704 = vrot.lane.b32.xlu0 %v923, 96
      %v1705 = vpop.permute.xlu0 %1704
      %1706 = vrot.lane.b32.xlu0 %v924, 96
      %v1707 = vpop.permute.xlu0 %1706
      %1708 = vrot.lane.b32.xlu0 %v925, 96
      %v1709 = vpop.permute.xlu0 %1708
      %v1711 = vsel %vm1002, %v922, 0
      %v1714 = vsel %vm1002, %v923, 0
      %v1717 = vsel %vm1002, %v924, 0
      %v1720 = vsel %vm1002, %v925, 0
      %v1723 = vsel %vm1002, %v1703, 0
      %v1726 = vsel %vm1002, %v1705, 0
      %v1729 = vsel %vm1002, %v1707, 0
      %v1732 = vsel %vm1002, %v1709, 0
      %1734 = vmatprep.subr.bf16.mxu0 0
      %1735 = vmatpush1.bf16.xpose.msra.mxu0 %v1723
      %1736 = vmatprep.subr.bf16.mxu0 0
      %1737 = vmatpush1.bf16.xpose.msra.mxu0 %v1726
      %1738 = vmatprep.subr.bf16.mxu0 0
      %1739 = vmatpush1.bf16.xpose.msra.mxu0 %v1729
      %1740 = vmatprep.subr.bf16.mxu0 0
      %1741 = vmatpush1.bf16.xpose.msra.mxu0 %v1732
      %1742 = vmatprep.subr.bf16.mxu0 0
      %1743 = vmatpush1.bf16.xpose.msra.mxu0 0
      %1744 = vmatprep.subr.bf16.mxu0 0
      %1745 = vmatpush1.bf16.xpose.msra.mxu0 0
      %1746 = vmatprep.subr.bf16.mxu0 0
      %1747 = vmatpush1.bf16.xpose.msra.mxu0 0
      %1748 = vmatprep.subr.bf16.mxu0 0
      %1749 = vmatpush1.bf16.xpose.msra.mxu0 0
      %1750 = vmatprep.subr.bf16.mxu0 0
      %1751 = vmatpush1.bf16.xpose.msra.mxu0 0
      %1752 = vmatprep.subr.bf16.mxu0 0
      %1753 = vmatpush1.bf16.xpose.msra.mxu0 0
      %1754 = vmatprep.subr.bf16.mxu0 0
      %1755 = vmatpush1.bf16.xpose.msra.mxu0 0
      %1756 = vmatprep.subr.bf16.mxu0 0
      %1757 = vmatpush1.bf16.xpose.msra.mxu0 0
      %1758 = vmatprep.subr.bf16.mxu0 0
      %1759 = vmatpush1.bf16.xpose.msra.mxu0 0
      %1760 = vmatprep.subr.bf16.mxu0 0
      %1761 = vmatpush1.bf16.xpose.msra.mxu0 0
      %1762 = vmatprep.subr.bf16.mxu0 0
      %1763 = vmatpush1.bf16.xpose.msra.mxu0 0
      %1764 = vmatprep.subr.bf16.mxu0 0
      %1765 = vmatpush1.bf16.xpose.msra.mxu0 0
      %1766 = vmatprep.mubr.bf16.mxu0 0
      %1767 = vmatmul.mubr.bf16.gmra.mrb[0].mxu0 %v1711
      %v1768 = vpop.f32.mrb[0].mxu0
      %v1769 = vadd.f32 %v958, %v1768
      %v1770 = vpop.f32.mrb[0].mxu0
      %v1771 = vpop.f32.mrb[0].mxu0
      %v1772 = vadd.f32 %v959, %v1771
      %v1773 = vpop.f32.mrb[0].mxu0
      %1774 = vmatprep.mubr.bf16.mxu0 0
      %1775 = vmatmul.mubr.bf16.gmra.mrb[0].mxu0 %v1714
      %v1776 = vpop.f32.mrb[0].mxu0
      %v1777 = vadd.f32 %v960, %v1776
      %v1778 = vpop.f32.mrb[0].mxu0
      %v1779 = vpop.f32.mrb[0].mxu0
      %v1780 = vadd.f32 %v961, %v1779
      %v1781 = vpop.f32.mrb[0].mxu0
      %1782 = vmatprep.mubr.bf16.mxu0 0
      %1783 = vmatmul.mubr.bf16.gmra.mrb[0].mxu0 %v1717
      %v1784 = vpop.f32.mrb[0].mxu0
      %v1785 = vadd.f32 %v962, %v1784
      %v1786 = vpop.f32.mrb[0].mxu0
      %v1787 = vpop.f32.mrb[0].mxu0
      %v1788 = vadd.f32 %v963, %v1787
      %v1789 = vpop.f32.mrb[0].mxu0
      %1790 = vmatprep.mubr.bf16.mxu0 0
      %1791 = vmatmul.mubr.bf16.gmra.mrb[0].mxu0 %v1720
      %v1792 = vpop.f32.mrb[0].mxu0
      %v1793 = vadd.f32 %v964, %v1792
      %v1794 = vpop.f32.mrb[0].mxu0
      %v1795 = vpop.f32.mrb[0].mxu0
      %v1796 = vadd.f32 %v965, %v1795
      %v1797 = vpop.f32.mrb[0].mxu0
      %1798 = vdwg.mxu0
      %vm1799 = vcmask 523264
      %v1800 = vsel %vm1799, %v1062, -inf
      %1801 = vmax.xlane.f32.xlu0 %v1800
      %v1802 = vpop.xlane.xlu0 %1801
      %v1803 = vsel %vm1799, %v1065, -inf
      %1804 = vmax.xlane.f32.xlu0 %v1803
      %v1805 = vpop.xlane.xlu0 %1804
      %v1806 = vsel %vm1799, %v1070, -inf
      %1807 = vmax.xlane.f32.xlu0 %v1806
      %v1808 = vpop.xlane.xlu0 %1807
      %v1809 = vsel %vm1799, %v1073, -inf
      %1810 = vmax.xlane.f32.xlu0 %v1809
      %v1811 = vpop.xlane.xlu0 %1810
      %v1812 = vsel %vm1799, %v1078, -inf
      %1813 = vmax.xlane.f32.xlu0 %v1812
      %v1814 = vpop.xlane.xlu0 %1813
      %v1815 = vsel %vm1799, %v1081, -inf
      %1816 = vmax.xlane.f32.xlu0 %v1815
      %v1817 = vpop.xlane.xlu0 %1816
      %v1818 = vsel %vm1799, %v1086, -inf
      %1819 = vmax.xlane.f32.xlu0 %v1818
      %v1820 = vpop.xlane.xlu0 %1819
      %v1821 = vsel %vm1799, %v1089, -inf
      %1822 = vmax.xlane.f32.xlu0 %v1821
      %v1823 = vpop.xlane.xlu0 %1822
      %v1824 = vsel %vm1799, %v1163, -inf
      %1825 = vmax.xlane.f32.xlu0 %v1824
      %v1826 = vpop.xlane.xlu0 %1825
      %v1827 = vsel %vm1799, %v1166, -inf
      %1828 = vmax.xlane.f32.xlu0 %v1827
      %v1829 = vpop.xlane.xlu0 %1828
      %v1830 = vsel %vm1799, %v1171, -inf
      %1831 = vmax.xlane.f32.xlu0 %v1830
      %v1832 = vpop.xlane.xlu0 %1831
      %v1833 = vsel %vm1799, %v1174, -inf
      %1834 = vmax.xlane.f32.xlu0 %v1833
      %v1835 = vpop.xlane.xlu0 %1834
      %v1836 = vsel %vm1799, %v1179, -inf
      %1837 = vmax.xlane.f32.xlu0 %v1836
      %v1838 = vpop.xlane.xlu0 %1837
      %v1839 = vsel %vm1799, %v1182, -inf
      %1840 = vmax.xlane.f32.xlu0 %v1839
      %v1841 = vpop.xlane.xlu0 %1840
      %v1842 = vsel %vm1799, %v1187, -inf
      %1843 = vmax.xlane.f32.xlu0 %v1842
      %v1844 = vpop.xlane.xlu0 %1843
      %v1845 = vsel %vm1799, %v1190, -inf
      %1846 = vmax.xlane.f32.xlu0 %v1845
      %v1847 = vpop.xlane.xlu0 %1846
      %v1848 = vsel %vm1799, %v1264, -inf
      %1849 = vmax.xlane.f32.xlu0 %v1848
      %v1850 = vpop.xlane.xlu0 %1849
      %v1851 = vsel %vm1799, %v1267, -inf
      %1852 = vmax.xlane.f32.xlu0 %v1851
      %v1853 = vpop.xlane.xlu0 %1852
      %v1854 = vsel %vm1799, %v1272, -inf
      %1855 = vmax.xlane.f32.xlu0 %v1854
      %v1856 = vpop.xlane.xlu0 %1855
      %v1857 = vsel %vm1799, %v1275, -inf
      %1858 = vmax.xlane.f32.xlu0 %v1857
      %v1859 = vpop.xlane.xlu0 %1858
      %v1860 = vsel %vm1799, %v1280, -inf
      %1861 = vmax.xlane.f32.xlu0 %v1860
      %v1862 = vpop.xlane.xlu0 %1861
      %v1863 = vsel %vm1799, %v1283, -inf
      %1864 = vmax.xlane.f32.xlu0 %v1863
      %v1865 = vpop.xlane.xlu0 %1864
      %v1866 = vsel %vm1799, %v1288, -inf
      %1867 = vmax.xlane.f32.xlu0 %v1866
      %v1868 = vpop.xlane.xlu0 %1867
      %v1869 = vsel %vm1799, %v1291, -inf
      %1870 = vmax.xlane.f32.xlu0 %v1869
      %v1871 = vpop.xlane.xlu0 %1870
      %v1872 = vsel %vm1799, %v1365, -inf
      %1873 = vmax.xlane.f32.xlu0 %v1872
      %v1874 = vpop.xlane.xlu0 %1873
      %v1875 = vsel %vm1799, %v1368, -inf
      %1876 = vmax.xlane.f32.xlu0 %v1875
      %v1877 = vpop.xlane.xlu0 %1876
      %v1878 = vsel %vm1799, %v1373, -inf
      %1879 = vmax.xlane.f32.xlu0 %v1878
      %v1880 = vpop.xlane.xlu0 %1879
      %v1881 = vsel %vm1799, %v1376, -inf
      %1882 = vmax.xlane.f32.xlu0 %v1881
      %v1883 = vpop.xlane.xlu0 %1882
      %v1884 = vsel %vm1799, %v1381, -inf
      %1885 = vmax.xlane.f32.xlu0 %v1884
      %v1886 = vpop.xlane.xlu0 %1885
      %v1887 = vsel %vm1799, %v1384, -inf
      %1888 = vmax.xlane.f32.xlu0 %v1887
      %v1889 = vpop.xlane.xlu0 %1888
      %v1890 = vsel %vm1799, %v1389, -inf
      %1891 = vmax.xlane.f32.xlu0 %v1890
      %v1892 = vpop.xlane.xlu0 %1891
      %v1893 = vsel %vm1799, %v1392, -inf
      %1894 = vmax.xlane.f32.xlu0 %v1893
      %v1895 = vpop.xlane.xlu0 %1894
      %v1896 = vsel %vm1799, %v1466, -inf
      %1897 = vmax.xlane.f32.xlu0 %v1896
      %v1898 = vpop.xlane.xlu0 %1897
      %v1899 = vsel %vm1799, %v1469, -inf
      %1900 = vmax.xlane.f32.xlu0 %v1899
      %v1901 = vpop.xlane.xlu0 %1900
      %v1902 = vsel %vm1799, %v1474, -inf
      %1903 = vmax.xlane.f32.xlu0 %v1902
      %v1904 = vpop.xlane.xlu0 %1903
      %v1905 = vsel %vm1799, %v1477, -inf
      %1906 = vmax.xlane.f32.xlu0 %v1905
      %v1907 = vpop.xlane.xlu0 %1906
      %v1908 = vsel %vm1799, %v1482, -inf
      %1909 = vmax.xlane.f32.xlu0 %v1908
      %v1910 = vpop.xlane.xlu0 %1909
      %v1911 = vsel %vm1799, %v1485, -inf
      %1912 = vmax.xlane.f32.xlu0 %v1911
      %v1913 = vpop.xlane.xlu0 %1912
      %v1914 = vsel %vm1799, %v1490, -inf
      %1915 = vmax.xlane.f32.xlu0 %v1914
      %v1916 = vpop.xlane.xlu0 %1915
      %v1917 = vsel %vm1799, %v1493, -inf
      %1918 = vmax.xlane.f32.xlu0 %v1917
      %v1919 = vpop.xlane.xlu0 %1918
      %v1920 = vsel %vm1799, %v1567, -inf
      %1921 = vmax.xlane.f32.xlu0 %v1920
      %v1922 = vpop.xlane.xlu0 %1921
      %v1923 = vsel %vm1799, %v1570, -inf
      %1924 = vmax.xlane.f32.xlu0 %v1923
      %v1925 = vpop.xlane.xlu0 %1924
      %v1926 = vsel %vm1799, %v1575, -inf
      %1927 = vmax.xlane.f32.xlu0 %v1926
      %v1928 = vpop.xlane.xlu0 %1927
      %v1929 = vsel %vm1799, %v1578, -inf
      %1930 = vmax.xlane.f32.xlu0 %v1929
      %v1931 = vpop.xlane.xlu0 %1930
      %v1932 = vsel %vm1799, %v1583, -inf
      %1933 = vmax.xlane.f32.xlu0 %v1932
      %v1934 = vpop.xlane.xlu0 %1933
      %v1935 = vsel %vm1799, %v1586, -inf
      %1936 = vmax.xlane.f32.xlu0 %v1935
      %v1937 = vpop.xlane.xlu0 %1936
      %v1938 = vsel %vm1799, %v1591, -inf
      %1939 = vmax.xlane.f32.xlu0 %v1938
      %v1940 = vpop.xlane.xlu0 %1939
      %v1941 = vsel %vm1799, %v1594, -inf
      %1942 = vmax.xlane.f32.xlu0 %v1941
      %v1943 = vpop.xlane.xlu0 %1942
      %v1944 = vsel %vm1799, %v1668, -inf
      %1945 = vmax.xlane.f32.xlu0 %v1944
      %v1946 = vpop.xlane.xlu0 %1945
      %v1947 = vsel %vm1799, %v1671, -inf
      %1948 = vmax.xlane.f32.xlu0 %v1947
      %v1949 = vpop.xlane.xlu0 %1948
      %v1950 = vsel %vm1799, %v1676, -inf
      %1951 = vmax.xlane.f32.xlu0 %v1950
      %v1952 = vpop.xlane.xlu0 %1951
      %v1953 = vsel %vm1799, %v1679, -inf
      %1954 = vmax.xlane.f32.xlu0 %v1953
      %v1955 = vpop.xlane.xlu0 %1954
      %v1956 = vsel %vm1799, %v1684, -inf
      %1957 = vmax.xlane.f32.xlu0 %v1956
      %v1958 = vpop.xlane.xlu0 %1957
      %v1959 = vsel %vm1799, %v1687, -inf
      %1960 = vmax.xlane.f32.xlu0 %v1959
      %v1961 = vpop.xlane.xlu0 %1960
      %v1962 = vsel %vm1799, %v1692, -inf
      %1963 = vmax.xlane.f32.xlu0 %v1962
      %v1964 = vpop.xlane.xlu0 %1963
      %v1965 = vsel %vm1799, %v1695, -inf
      %1966 = vmax.xlane.f32.xlu0 %v1965
      %v1967 = vpop.xlane.xlu0 %1966
      %v1968 = vsel %vm1799, %v1769, -inf
      %1969 = vmax.xlane.f32.xlu0 %v1968
      %v1970 = vpop.xlane.xlu0 %1969
      %v1971 = vsel %vm1799, %v1772, -inf
      %1972 = vmax.xlane.f32.xlu0 %v1971
      %v1973 = vpop.xlane.xlu0 %1972
      %v1974 = vsel %vm1799, %v1777, -inf
      %1975 = vmax.xlane.f32.xlu0 %v1974
      %v1976 = vpop.xlane.xlu0 %1975
      %v1977 = vsel %vm1799, %v1780, -inf
      %1978 = vmax.xlane.f32.xlu0 %v1977
      %v1979 = vpop.xlane.xlu0 %1978
      %v1980 = vsel %vm1799, %v1785, -inf
      %1981 = vmax.xlane.f32.xlu0 %v1980
      %v1982 = vpop.xlane.xlu0 %1981
      %v1983 = vsel %vm1799, %v1788, -inf
      %1984 = vmax.xlane.f32.xlu0 %v1983
      %v1985 = vpop.xlane.xlu0 %1984
      %v1986 = vsel %vm1799, %v1793, -inf
      %1987 = vmax.xlane.f32.xlu0 %v1986
      %v1988 = vpop.xlane.xlu0 %1987
      %v1989 = vsel %vm1799, %v1796, -inf
      %1990 = vmax.xlane.f32.xlu0 %v1989
      %v1991 = vpop.xlane.xlu0 %1990
      %v1992 = vsub.f32 %v1062, %v1802
      %v1993 = vsub.f32 %v1065, %v1805
      %v1994 = vsub.f32 %v1070, %v1808
      %v1995 = vsub.f32 %v1073, %v1811
      %v1996 = vsub.f32 %v1078, %v1814
      %v1997 = vsub.f32 %v1081, %v1817
      %v1998 = vsub.f32 %v1086, %v1820
      %v1999 = vsub.f32 %v1089, %v1823
      %v2000 = vsub.f32 %v1163, %v1826
      %v2001 = vsub.f32 %v1166, %v1829
      %v2002 = vsub.f32 %v1171, %v1832
      %v2003 = vsub.f32 %v1174, %v1835
      %v2004 = vsub.f32 %v1179, %v1838
      %v2005 = vsub.f32 %v1182, %v1841
      %v2006 = vsub.f32 %v1187, %v1844
      %v2007 = vsub.f32 %v1190, %v1847
      %v2008 = vsub.f32 %v1264, %v1850
      %v2009 = vsub.f32 %v1267, %v1853
      %v2010 = vsub.f32 %v1272, %v1856
      %v2011 = vsub.f32 %v1275, %v1859
      %v2012 = vsub.f32 %v1280, %v1862
      %v2013 = vsub.f32 %v1283, %v1865
      %v2014 = vsub.f32 %v1288, %v1868
      %v2015 = vsub.f32 %v1291, %v1871
      %v2016 = vsub.f32 %v1365, %v1874
      %v2017 = vsub.f32 %v1368, %v1877
      %v2018 = vsub.f32 %v1373, %v1880
      %v2019 = vsub.f32 %v1376, %v1883
      %v2020 = vsub.f32 %v1381, %v1886
      %v2021 = vsub.f32 %v1384, %v1889
      %v2022 = vsub.f32 %v1389, %v1892
      %v2023 = vsub.f32 %v1392, %v1895
      %v2024 = vsub.f32 %v1466, %v1898
      %v2025 = vsub.f32 %v1469, %v1901
      %v2026 = vsub.f32 %v1474, %v1904
      %v2027 = vsub.f32 %v1477, %v1907
      %v2028 = vsub.f32 %v1482, %v1910
      %v2029 = vsub.f32 %v1485, %v1913
      %v2030 = vsub.f32 %v1490, %v1916
      %v2031 = vsub.f32 %v1493, %v1919
      %v2032 = vsub.f32 %v1567, %v1922
      %v2033 = vsub.f32 %v1570, %v1925
      %v2034 = vsub.f32 %v1575, %v1928
      %v2035 = vsub.f32 %v1578, %v1931
      %v2036 = vsub.f32 %v1583, %v1934
      %v2037 = vsub.f32 %v1586, %v1937
      %v2038 = vsub.f32 %v1591, %v1940
      %v2039 = vsub.f32 %v1594, %v1943
      %v2040 = vsub.f32 %v1668, %v1946
      %v2041 = vsub.f32 %v1671, %v1949
      %v2042 = vsub.f32 %v1676, %v1952
      %v2043 = vsub.f32 %v1679, %v1955
      %v2044 = vsub.f32 %v1684, %v1958
      %v2045 = vsub.f32 %v1687, %v1961
      %v2046 = vsub.f32 %v1692, %v1964
      %v2047 = vsub.f32 %v1695, %v1967
      %v2048 = vsub.f32 %v1769, %v1970
      %v2049 = vsub.f32 %v1772, %v1973
      %v2050 = vsub.f32 %v1777, %v1976
      %v2051 = vsub.f32 %v1780, %v1979
      %v2052 = vsub.f32 %v1785, %v1982
      %v2053 = vsub.f32 %v1788, %v1985
      %v2054 = vsub.f32 %v1793, %v1988
      %v2055 = vsub.f32 %v1796, %v1991
      %v2056 = vmul.f32 %v1992, 1.442695
      %v2057 = vpow.pop %v2056
      %v2058 = vmul.f32 %v1993, 1.442695
      %v2059 = vpow.pop %v2058
      %v2060 = vmul.f32 %v1994, 1.442695
      %v2061 = vpow.pop %v2060
      %v2062 = vmul.f32 %v1995, 1.442695
      %v2063 = vpow.pop %v2062
      %v2064 = vmul.f32 %v1996, 1.442695
      %v2065 = vpow.pop %v2064
      %v2066 = vmul.f32 %v1997, 1.442695
      %v2067 = vpow.pop %v2066
      %v2068 = vmul.f32 %v1998, 1.442695
      %v2069 = vpow.pop %v2068
      %v2070 = vmul.f32 %v1999, 1.442695
      %v2071 = vpow.pop %v2070
      %v2072 = vmul.f32 %v2000, 1.442695
      %v2073 = vpow.pop %v2072
      %v2074 = vmul.f32 %v2001, 1.442695
      %v2075 = vpow.pop %v2074
      %v2076 = vmul.f32 %v2002, 1.442695
      %v2077 = vpow.pop %v2076
      %v2078 = vmul.f32 %v2003, 1.442695
      %v2079 = vpow.pop %v2078
      %v2080 = vmul.f32 %v2004, 1.442695
      %v2081 = vpow.pop %v2080
      %v2082 = vmul.f32 %v2005, 1.442695
      %v2083 = vpow.pop %v2082
      %v2084 = vmul.f32 %v2006, 1.442695
      %v2085 = vpow.pop %v2084
      %v2086 = vmul.f32 %v2007, 1.442695
      %v2087 = vpow.pop %v2086
      %v2088 = vmul.f32 %v2008, 1.442695
      %v2089 = vpow.pop %v2088
      %v2090 = vmul.f32 %v2009, 1.442695
      %v2091 = vpow.pop %v2090
      %v2092 = vmul.f32 %v2010, 1.442695
      %v2093 = vpow.pop %v2092
      %v2094 = vmul.f32 %v2011, 1.442695
      %v2095 = vpow.pop %v2094
      %v2096 = vmul.f32 %v2012, 1.442695
      %v2097 = vpow.pop %v2096
      %v2098 = vmul.f32 %v2013, 1.442695
      %v2099 = vpow.pop %v2098
      %v2100 = vmul.f32 %v2014, 1.442695
      %v2101 = vpow.pop %v2100
      %v2102 = vmul.f32 %v2015, 1.442695
      %v2103 = vpow.pop %v2102
      %v2104 = vmul.f32 %v2016, 1.442695
      %v2105 = vpow.pop %v2104
      %v2106 = vmul.f32 %v2017, 1.442695
      %v2107 = vpow.pop %v2106
      %v2108 = vmul.f32 %v2018, 1.442695
      %v2109 = vpow.pop %v2108
      %v2110 = vmul.f32 %v2019, 1.442695
      %v2111 = vpow.pop %v2110
      %v2112 = vmul.f32 %v2020, 1.442695
      %v2113 = vpow.pop %v2112
      %v2114 = vmul.f32 %v2021, 1.442695
      %v2115 = vpow.pop %v2114
      %v2116 = vmul.f32 %v2022, 1.442695
      %v2117 = vpow.pop %v2116
      %v2118 = vmul.f32 %v2023, 1.442695
      %v2119 = vpow.pop %v2118
      %v2120 = vmul.f32 %v2024, 1.442695
      %v2121 = vpow.pop %v2120
      %v2122 = vmul.f32 %v2025, 1.442695
      %v2123 = vpow.pop %v2122
      %v2124 = vmul.f32 %v2026, 1.442695
      %v2125 = vpow.pop %v2124
      %v2126 = vmul.f32 %v2027, 1.442695
      %v2127 = vpow.pop %v2126
      %v2128 = vmul.f32 %v2028, 1.442695
      %v2129 = vpow.pop %v2128
      %v2130 = vmul.f32 %v2029, 1.442695
      %v2131 = vpow.pop %v2130
      %v2132 = vmul.f32 %v2030, 1.442695
      %v2133 = vpow.pop %v2132
      %v2134 = vmul.f32 %v2031, 1.442695
      %v2135 = vpow.pop %v2134
      %v2136 = vmul.f32 %v2032, 1.442695
      %v2137 = vpow.pop %v2136
      %v2138 = vmul.f32 %v2033, 1.442695
      %v2139 = vpow.pop %v2138
      %v2140 = vmul.f32 %v2034, 1.442695
      %v2141 = vpow.pop %v2140
      %v2142 = vmul.f32 %v2035, 1.442695
      %v2143 = vpow.pop %v2142
      %v2144 = vmul.f32 %v2036, 1.442695
      %v2145 = vpow.pop %v2144
      %v2146 = vmul.f32 %v2037, 1.442695
      %v2147 = vpow.pop %v2146
      %v2148 = vmul.f32 %v2038, 1.442695
      %v2149 = vpow.pop %v2148
      %v2150 = vmul.f32 %v2039, 1.442695
      %v2151 = vpow.pop %v2150
      %v2152 = vmul.f32 %v2040, 1.442695
      %v2153 = vpow.pop %v2152
      %v2154 = vmul.f32 %v2041, 1.442695
      %v2155 = vpow.pop %v2154
      %v2156 = vmul.f32 %v2042, 1.442695
      %v2157 = vpow.pop %v2156
      %v2158 = vmul.f32 %v2043, 1.442695
      %v2159 = vpow.pop %v2158
      %v2160 = vmul.f32 %v2044, 1.442695
      %v2161 = vpow.pop %v2160
      %v2162 = vmul.f32 %v2045, 1.442695
      %v2163 = vpow.pop %v2162
      %v2164 = vmul.f32 %v2046, 1.442695
      %v2165 = vpow.pop %v2164
      %v2166 = vmul.f32 %v2047, 1.442695
      %v2167 = vpow.pop %v2166
      %v2168 = vmul.f32 %v2048, 1.442695
      %v2169 = vpow.pop %v2168
      %v2170 = vmul.f32 %v2049, 1.442695
      %v2171 = vpow.pop %v2170
      %v2172 = vmul.f32 %v2050, 1.442695
      %v2173 = vpow.pop %v2172
      %v2174 = vmul.f32 %v2051, 1.442695
      %v2175 = vpow.pop %v2174
      %v2176 = vmul.f32 %v2052, 1.442695
      %v2177 = vpow.pop %v2176
      %v2178 = vmul.f32 %v2053, 1.442695
      %v2179 = vpow.pop %v2178
      %v2180 = vmul.f32 %v2054, 1.442695
      %v2181 = vpow.pop %v2180
      %v2182 = vmul.f32 %v2055, 1.442695
      %v2183 = vpow.pop %v2182
      %v2184 = vsel %vm1799, %v2057, 0.0
      %2185 = vadd.xlane.f32.xlu0 %v2184
      %v2186 = vpop.xlane.xlu0 %2185
      %v2187 = vsel %vm1799, %v2059, 0.0
      %2188 = vadd.xlane.f32.xlu0 %v2187
      %v2189 = vpop.xlane.xlu0 %2188
      %v2190 = vsel %vm1799, %v2061, 0.0
      %2191 = vadd.xlane.f32.xlu0 %v2190
      %v2192 = vpop.xlane.xlu0 %2191
      %v2193 = vsel %vm1799, %v2063, 0.0
      %2194 = vadd.xlane.f32.xlu0 %v2193
      %v2195 = vpop.xlane.xlu0 %2194
      %v2196 = vsel %vm1799, %v2065, 0.0
      %2197 = vadd.xlane.f32.xlu0 %v2196
      %v2198 = vpop.xlane.xlu0 %2197
      %v2199 = vsel %vm1799, %v2067, 0.0
      %2200 = vadd.xlane.f32.xlu0 %v2199
      %v2201 = vpop.xlane.xlu0 %2200
      %v2202 = vsel %vm1799, %v2069, 0.0
      %2203 = vadd.xlane.f32.xlu0 %v2202
      %v2204 = vpop.xlane.xlu0 %2203
      %v2205 = vsel %vm1799, %v2071, 0.0
      %2206 = vadd.xlane.f32.xlu0 %v2205
      %v2207 = vpop.xlane.xlu0 %2206
      %v2208 = vsel %vm1799, %v2073, 0.0
      %2209 = vadd.xlane.f32.xlu0 %v2208
      %v2210 = vpop.xlane.xlu0 %2209
      %v2211 = vsel %vm1799, %v2075, 0.0
      %2212 = vadd.xlane.f32.xlu0 %v2211
      %v2213 = vpop.xlane.xlu0 %2212
      %v2214 = vsel %vm1799, %v2077, 0.0
      %2215 = vadd.xlane.f32.xlu0 %v2214
      %v2216 = vpop.xlane.xlu0 %2215
      %v2217 = vsel %vm1799, %v2079, 0.0
      %2218 = vadd.xlane.f32.xlu0 %v2217
      %v2219 = vpop.xlane.xlu0 %2218
      %v2220 = vsel %vm1799, %v2081, 0.0
      %2221 = vadd.xlane.f32.xlu0 %v2220
      %v2222 = vpop.xlane.xlu0 %2221
      %v2223 = vsel %vm1799, %v2083, 0.0
      %2224 = vadd.xlane.f32.xlu0 %v2223
      %v2225 = vpop.xlane.xlu0 %2224
      %v2226 = vsel %vm1799, %v2085, 0.0
      %2227 = vadd.xlane.f32.xlu0 %v2226
      %v2228 = vpop.xlane.xlu0 %2227
      %v2229 = vsel %vm1799, %v2087, 0.0
      %2230 = vadd.xlane.f32.xlu0 %v2229
      %v2231 = vpop.xlane.xlu0 %2230
      %v2232 = vsel %vm1799, %v2089, 0.0
      %2233 = vadd.xlane.f32.xlu0 %v2232
      %v2234 = vpop.xlane.xlu0 %2233
      %v2235 = vsel %vm1799, %v2091, 0.0
      %2236 = vadd.xlane.f32.xlu0 %v2235
      %v2237 = vpop.xlane.xlu0 %2236
      %v2238 = vsel %vm1799, %v2093, 0.0
      %2239 = vadd.xlane.f32.xlu0 %v2238
      %v2240 = vpop.xlane.xlu0 %2239
      %v2241 = vsel %vm1799, %v2095, 0.0
      %2242 = vadd.xlane.f32.xlu0 %v2241
      %v2243 = vpop.xlane.xlu0 %2242
      %v2244 = vsel %vm1799, %v2097, 0.0
      %2245 = vadd.xlane.f32.xlu0 %v2244
      %v2246 = vpop.xlane.xlu0 %2245
      %v2247 = vsel %vm1799, %v2099, 0.0
      %2248 = vadd.xlane.f32.xlu0 %v2247
      %v2249 = vpop.xlane.xlu0 %2248
      %v2250 = vsel %vm1799, %v2101, 0.0
      %2251 = vadd.xlane.f32.xlu0 %v2250
      %v2252 = vpop.xlane.xlu0 %2251
      %v2253 = vsel %vm1799, %v2103, 0.0
      %2254 = vadd.xlane.f32.xlu0 %v2253
      %v2255 = vpop.xlane.xlu0 %2254
      %v2256 = vsel %vm1799, %v2105, 0.0
      %2257 = vadd.xlane.f32.xlu0 %v2256
      %v2258 = vpop.xlane.xlu0 %2257
      %v2259 = vsel %vm1799, %v2107, 0.0
      %2260 = vadd.xlane.f32.xlu0 %v2259
      %v2261 = vpop.xlane.xlu0 %2260
      %v2262 = vsel %vm1799, %v2109, 0.0
      %2263 = vadd.xlane.f32.xlu0 %v2262
      %v2264 = vpop.xlane.xlu0 %2263
      %v2265 = vsel %vm1799, %v2111, 0.0
      %2266 = vadd.xlane.f32.xlu0 %v2265
      %v2267 = vpop.xlane.xlu0 %2266
      %v2268 = vsel %vm1799, %v2113, 0.0
      %2269 = vadd.xlane.f32.xlu0 %v2268
      %v2270 = vpop.xlane.xlu0 %2269
      %v2271 = vsel %vm1799, %v2115, 0.0
      %2272 = vadd.xlane.f32.xlu0 %v2271
      %v2273 = vpop.xlane.xlu0 %2272
      %v2274 = vsel %vm1799, %v2117, 0.0
      %2275 = vadd.xlane.f32.xlu0 %v2274
      %v2276 = vpop.xlane.xlu0 %2275
      %v2277 = vsel %vm1799, %v2119, 0.0
      %2278 = vadd.xlane.f32.xlu0 %v2277
      %v2279 = vpop.xlane.xlu0 %2278
      %v2280 = vsel %vm1799, %v2121, 0.0
      %2281 = vadd.xlane.f32.xlu0 %v2280
      %v2282 = vpop.xlane.xlu0 %2281
      %v2283 = vsel %vm1799, %v2123, 0.0
      %2284 = vadd.xlane.f32.xlu0 %v2283
      %v2285 = vpop.xlane.xlu0 %2284
      %v2286 = vsel %vm1799, %v2125, 0.0
      %2287 = vadd.xlane.f32.xlu0 %v2286
      %v2288 = vpop.xlane.xlu0 %2287
      %v2289 = vsel %vm1799, %v2127, 0.0
      %2290 = vadd.xlane.f32.xlu0 %v2289
      %v2291 = vpop.xlane.xlu0 %2290
      %v2292 = vsel %vm1799, %v2129, 0.0
      %2293 = vadd.xlane.f32.xlu0 %v2292
      %v2294 = vpop.xlane.xlu0 %2293
      %v2295 = vsel %vm1799, %v2131, 0.0
      %2296 = vadd.xlane.f32.xlu0 %v2295
      %v2297 = vpop.xlane.xlu0 %2296
      %v2298 = vsel %vm1799, %v2133, 0.0
      %2299 = vadd.xlane.f32.xlu0 %v2298
      %v2300 = vpop.xlane.xlu0 %2299
      %v2301 = vsel %vm1799, %v2135, 0.0
      %2302 = vadd.xlane.f32.xlu0 %v2301
      %v2303 = vpop.xlane.xlu0 %2302
      %v2304 = vsel %vm1799, %v2137, 0.0
      %2305 = vadd.xlane.f32.xlu0 %v2304
      %v2306 = vpop.xlane.xlu0 %2305
      %v2307 = vsel %vm1799, %v2139, 0.0
      %2308 = vadd.xlane.f32.xlu0 %v2307
      %v2309 = vpop.xlane.xlu0 %2308
      %v2310 = vsel %vm1799, %v2141, 0.0
      %2311 = vadd.xlane.f32.xlu0 %v2310
      %v2312 = vpop.xlane.xlu0 %2311
      %v2313 = vsel %vm1799, %v2143, 0.0
      %2314 = vadd.xlane.f32.xlu0 %v2313
      %v2315 = vpop.xlane.xlu0 %2314
      %v2316 = vsel %vm1799, %v2145, 0.0
      %2317 = vadd.xlane.f32.xlu0 %v2316
      %v2318 = vpop.xlane.xlu0 %2317
      %v2319 = vsel %vm1799, %v2147, 0.0
      %2320 = vadd.xlane.f32.xlu0 %v2319
      %v2321 = vpop.xlane.xlu0 %2320
      %v2322 = vsel %vm1799, %v2149, 0.0
      %2323 = vadd.xlane.f32.xlu0 %v2322
      %v2324 = vpop.xlane.xlu0 %2323
      %v2325 = vsel %vm1799, %v2151, 0.0
      %2326 = vadd.xlane.f32.xlu0 %v2325
      %v2327 = vpop.xlane.xlu0 %2326
      %v2328 = vsel %vm1799, %v2153, 0.0
      %2329 = vadd.xlane.f32.xlu0 %v2328
      %v2330 = vpop.xlane.xlu0 %2329
      %v2331 = vsel %vm1799, %v2155, 0.0
      %2332 = vadd.xlane.f32.xlu0 %v2331
      %v2333 = vpop.xlane.xlu0 %2332
      %v2334 = vsel %vm1799, %v2157, 0.0
      %2335 = vadd.xlane.f32.xlu0 %v2334
      %v2336 = vpop.xlane.xlu0 %2335
      %v2337 = vsel %vm1799, %v2159, 0.0
      %2338 = vadd.xlane.f32.xlu0 %v2337
      %v2339 = vpop.xlane.xlu0 %2338
      %v2340 = vsel %vm1799, %v2161, 0.0
      %2341 = vadd.xlane.f32.xlu0 %v2340
      %v2342 = vpop.xlane.xlu0 %2341
      %v2343 = vsel %vm1799, %v2163, 0.0
      %2344 = vadd.xlane.f32.xlu0 %v2343
      %v2345 = vpop.xlane.xlu0 %2344
      %v2346 = vsel %vm1799, %v2165, 0.0
      %2347 = vadd.xlane.f32.xlu0 %v2346
      %v2348 = vpop.xlane.xlu0 %2347
      %v2349 = vsel %vm1799, %v2167, 0.0
      %2350 = vadd.xlane.f32.xlu0 %v2349
      %v2351 = vpop.xlane.xlu0 %2350
      %v2352 = vsel %vm1799, %v2169, 0.0
      %2353 = vadd.xlane.f32.xlu0 %v2352
      %v2354 = vpop.xlane.xlu0 %2353
      %v2355 = vsel %vm1799, %v2171, 0.0
      %2356 = vadd.xlane.f32.xlu0 %v2355
      %v2357 = vpop.xlane.xlu0 %2356
      %v2358 = vsel %vm1799, %v2173, 0.0
      %2359 = vadd.xlane.f32.xlu0 %v2358
      %v2360 = vpop.xlane.xlu0 %2359
      %v2361 = vsel %vm1799, %v2175, 0.0
      %2362 = vadd.xlane.f32.xlu0 %v2361
      %v2363 = vpop.xlane.xlu0 %2362
      %v2364 = vsel %vm1799, %v2177, 0.0
      %2365 = vadd.xlane.f32.xlu0 %v2364
      %v2366 = vpop.xlane.xlu0 %2365
      %v2367 = vsel %vm1799, %v2179, 0.0
      %2368 = vadd.xlane.f32.xlu0 %v2367
      %v2369 = vpop.xlane.xlu0 %2368
      %v2370 = vsel %vm1799, %v2181, 0.0
      %2371 = vadd.xlane.f32.xlu0 %v2370
      %v2372 = vpop.xlane.xlu0 %2371
      %v2373 = vsel %vm1799, %v2183, 0.0
      %2374 = vadd.xlane.f32.xlu0 %v2373
      %v2375 = vpop.xlane.xlu0 %2374
      %v2376 = vrcp.pop %v2186
      %v2377 = vrcp.pop %v2189
      %v2378 = vrcp.pop %v2192
      %v2379 = vrcp.pop %v2195
      %v2380 = vrcp.pop %v2198
      %v2381 = vrcp.pop %v2201
      %v2382 = vrcp.pop %v2204
      %v2383 = vrcp.pop %v2207
      %v2384 = vrcp.pop %v2210
      %v2385 = vrcp.pop %v2213
      %v2386 = vrcp.pop %v2216
      %v2387 = vrcp.pop %v2219
      %v2388 = vrcp.pop %v2222
      %v2389 = vrcp.pop %v2225
      %v2390 = vrcp.pop %v2228
      %v2391 = vrcp.pop %v2231
      %v2392 = vrcp.pop %v2234
      %v2393 = vrcp.pop %v2237
      %v2394 = vrcp.pop %v2240
      %v2395 = vrcp.pop %v2243
      %v2396 = vrcp.pop %v2246
      %v2397 = vrcp.pop %v2249
      %v2398 = vrcp.pop %v2252
      %v2399 = vrcp.pop %v2255
      %v2400 = vrcp.pop %v2258
      %v2401 = vrcp.pop %v2261
      %v2402 = vrcp.pop %v2264
      %v2403 = vrcp.pop %v2267
      %v2404 = vrcp.pop %v2270
      %v2405 = vrcp.pop %v2273
      %v2406 = vrcp.pop %v2276
      %v2407 = vrcp.pop %v2279
      %v2408 = vrcp.pop %v2282
      %v2409 = vrcp.pop %v2285
      %v2410 = vrcp.pop %v2288
      %v2411 = vrcp.pop %v2291
      %v2412 = vrcp.pop %v2294
      %v2413 = vrcp.pop %v2297
      %v2414 = vrcp.pop %v2300
      %v2415 = vrcp.pop %v2303
      %v2416 = vrcp.pop %v2306
      %v2417 = vrcp.pop %v2309
      %v2418 = vrcp.pop %v2312
      %v2419 = vrcp.pop %v2315
      %v2420 = vrcp.pop %v2318
      %v2421 = vrcp.pop %v2321
      %v2422 = vrcp.pop %v2324
      %v2423 = vrcp.pop %v2327
      %v2424 = vrcp.pop %v2330
      %v2425 = vrcp.pop %v2333
      %v2426 = vrcp.pop %v2336
      %v2427 = vrcp.pop %v2339
      %v2428 = vrcp.pop %v2342
      %v2429 = vrcp.pop %v2345
      %v2430 = vrcp.pop %v2348
      %v2431 = vrcp.pop %v2351
      %v2432 = vrcp.pop %v2354
      %v2433 = vrcp.pop %v2357
      %v2434 = vrcp.pop %v2360
      %v2435 = vrcp.pop %v2363
      %v2436 = vrcp.pop %v2366
      %v2437 = vrcp.pop %v2369
      %v2438 = vrcp.pop %v2372
      %v2439 = vrcp.pop %v2375
      %v2440 = vmul.f32 %v2057, %v2376
      %v2441 = vmul.f32 %v2059, %v2377
      %v2442 = vmul.f32 %v2061, %v2378
      %v2443 = vmul.f32 %v2063, %v2379
      %v2444 = vmul.f32 %v2065, %v2380
      %v2445 = vmul.f32 %v2067, %v2381
      %v2446 = vmul.f32 %v2069, %v2382
      %v2447 = vmul.f32 %v2071, %v2383
      %v2448 = vmul.f32 %v2073, %v2384
      %v2449 = vmul.f32 %v2075, %v2385
      %v2450 = vmul.f32 %v2077, %v2386
      %v2451 = vmul.f32 %v2079, %v2387
      %v2452 = vmul.f32 %v2081, %v2388
      %v2453 = vmul.f32 %v2083, %v2389
      %v2454 = vmul.f32 %v2085, %v2390
      %v2455 = vmul.f32 %v2087, %v2391
      %v2456 = vmul.f32 %v2089, %v2392
      %v2457 = vmul.f32 %v2091, %v2393
      %v2458 = vmul.f32 %v2093, %v2394
      %v2459 = vmul.f32 %v2095, %v2395
      %v2460 = vmul.f32 %v2097, %v2396
      %v2461 = vmul.f32 %v2099, %v2397
      %v2462 = vmul.f32 %v2101, %v2398
      %v2463 = vmul.f32 %v2103, %v2399
      %v2464 = vmul.f32 %v2105, %v2400
      %v2465 = vmul.f32 %v2107, %v2401
      %v2466 = vmul.f32 %v2109, %v2402
      %v2467 = vmul.f32 %v2111, %v2403
      %v2468 = vmul.f32 %v2113, %v2404
      %v2469 = vmul.f32 %v2115, %v2405
      %v2470 = vmul.f32 %v2117, %v2406
      %v2471 = vmul.f32 %v2119, %v2407
      %v2472 = vmul.f32 %v2121, %v2408
      %v2473 = vmul.f32 %v2123, %v2409
      %v2474 = vmul.f32 %v2125, %v2410
      %v2475 = vmul.f32 %v2127, %v2411
      %v2476 = vmul.f32 %v2129, %v2412
      %v2477 = vmul.f32 %v2131, %v2413
      %v2478 = vmul.f32 %v2133, %v2414
      %v2479 = vmul.f32 %v2135, %v2415
      %v2480 = vmul.f32 %v2137, %v2416
      %v2481 = vmul.f32 %v2139, %v2417
      %v2482 = vmul.f32 %v2141, %v2418
      %v2483 = vmul.f32 %v2143, %v2419
      %v2484 = vmul.f32 %v2145, %v2420
      %v2485 = vmul.f32 %v2147, %v2421
      %v2486 = vmul.f32 %v2149, %v2422
      %v2487 = vmul.f32 %v2151, %v2423
      %v2488 = vmul.f32 %v2153, %v2424
      %v2489 = vmul.f32 %v2155, %v2425
      %v2490 = vmul.f32 %v2157, %v2426
      %v2491 = vmul.f32 %v2159, %v2427
      %v2492 = vmul.f32 %v2161, %v2428
      %v2493 = vmul.f32 %v2163, %v2429
      %v2494 = vmul.f32 %v2165, %v2430
      %v2495 = vmul.f32 %v2167, %v2431
      %v2496 = vmul.f32 %v2169, %v2432
      %v2497 = vmul.f32 %v2171, %v2433
      %v2498 = vmul.f32 %v2173, %v2434
      %v2499 = vmul.f32 %v2175, %v2435
      %v2500 = vmul.f32 %v2177, %v2436
      %v2501 = vmul.f32 %v2179, %v2437
      %v2502 = vmul.f32 %v2181, %v2438
      %v2503 = vmul.f32 %v2183, %v2439
      %v2504 = vpack.c.bf16 %v2441, %v2440
      %v2505 = vpack.c.bf16 %v2443, %v2442
      %v2506 = vpack.c.bf16 %v2445, %v2444
      %v2507 = vpack.c.bf16 %v2447, %v2446
      %v2508 = vpack.c.bf16 %v2449, %v2448
      %v2509 = vpack.c.bf16 %v2451, %v2450
      %v2510 = vpack.c.bf16 %v2453, %v2452
      %v2511 = vpack.c.bf16 %v2455, %v2454
      %v2512 = vpack.c.bf16 %v2457, %v2456
      %v2513 = vpack.c.bf16 %v2459, %v2458
      %v2514 = vpack.c.bf16 %v2461, %v2460
      %v2515 = vpack.c.bf16 %v2463, %v2462
      %v2516 = vpack.c.bf16 %v2465, %v2464
      %v2517 = vpack.c.bf16 %v2467, %v2466
      %v2518 = vpack.c.bf16 %v2469, %v2468
      %v2519 = vpack.c.bf16 %v2471, %v2470
      %v2520 = vpack.c.bf16 %v2473, %v2472
      %v2521 = vpack.c.bf16 %v2475, %v2474
      %v2522 = vpack.c.bf16 %v2477, %v2476
      %v2523 = vpack.c.bf16 %v2479, %v2478
      %v2524 = vpack.c.bf16 %v2481, %v2480
      %v2525 = vpack.c.bf16 %v2483, %v2482
      %v2526 = vpack.c.bf16 %v2485, %v2484
      %v2527 = vpack.c.bf16 %v2487, %v2486
      %v2528 = vpack.c.bf16 %v2489, %v2488
      %v2529 = vpack.c.bf16 %v2491, %v2490
      %v2530 = vpack.c.bf16 %v2493, %v2492
      %v2531 = vpack.c.bf16 %v2495, %v2494
      %v2532 = vpack.c.bf16 %v2497, %v2496
      %v2533 = vpack.c.bf16 %v2499, %v2498
      %v2534 = vpack.c.bf16 %v2501, %v2500
      %v2535 = vpack.c.bf16 %v2503, %v2502
      %2536 = vrot.lane.b32.xlu0 %v894, 64
      %v2537 = vpop.permute.xlu0 %2536
      %2538 = vrot.lane.b32.xlu0 %v895, 64
      %v2539 = vpop.permute.xlu0 %2538
      %2540 = vrot.lane.b32.xlu0 %v896, 64
      %v2541 = vpop.permute.xlu0 %2540
      %2542 = vrot.lane.b32.xlu0 %v897, 64
      %v2543 = vpop.permute.xlu0 %2542
      %v2549 = vsel %vm1799, %v2504, 0
      %v2552 = vsel %vm1799, %v2505, 0
      %v2555 = vsel %vm1799, %v2506, 0
      %v2558 = vsel %vm1799, %v2507, 0
      %2560 = vmatprep.subr.bf16.mxu0 0
      %2561 = vmatpush1.bf16.msra.mxu0 %v2537
      %2562 = vmatprep.subr.bf16.mxu0 0
      %2563 = vmatpush1.bf16.msra.mxu0 %v2539
      %2564 = vmatprep.subr.bf16.mxu0 0
      %2565 = vmatpush1.bf16.msra.mxu0 %v2541
      %2566 = vmatprep.subr.bf16.mxu0 0
      %2567 = vmatpush1.bf16.msra.mxu0 %v2543
      %2568 = vmatprep.subr.bf16.mxu0 0
      %2569 = vmatpush1.bf16.msra.mxu0 0
      %2570 = vmatprep.subr.bf16.mxu0 0
      %2571 = vmatpush1.bf16.msra.mxu0 0
      %2572 = vmatprep.subr.bf16.mxu0 0
      %2573 = vmatpush1.bf16.msra.mxu0 0
      %2574 = vmatprep.subr.bf16.mxu0 0
      %2575 = vmatpush1.bf16.msra.mxu0 0
      %2576 = vmatprep.subr.bf16.mxu0 0
      %2577 = vmatpush1.bf16.msra.mxu0 0
      %2578 = vmatprep.subr.bf16.mxu0 0
      %2579 = vmatpush1.bf16.msra.mxu0 0
      %2580 = vmatprep.subr.bf16.mxu0 0
      %2581 = vmatpush1.bf16.msra.mxu0 0
      %2582 = vmatprep.subr.bf16.mxu0 0
      %2583 = vmatpush1.bf16.msra.mxu0 0
      %2584 = vmatprep.subr.bf16.mxu0 0
      %2585 = vmatpush1.bf16.msra.mxu0 0
      %2586 = vmatprep.subr.bf16.mxu0 0
      %2587 = vmatpush1.bf16.msra.mxu0 0
      %2588 = vmatprep.subr.bf16.mxu0 0
      %2589 = vmatpush1.bf16.msra.mxu0 0
      %2590 = vmatprep.subr.bf16.mxu0 0
      %2591 = vmatpush1.bf16.msra.mxu0 0
      %2592 = vmatprep.mubr.bf16.mxu0 0
      %2593 = vmatmul.mubr.bf16.gmra.mrb[0].mxu0 %v2549
      %v2594 = vpop.f32.mrb[0].mxu0
      %v2595 = vadd.f32 0.0, %v2594
      %v2596 = vpop.f32.mrb[0].mxu0
      %v2597 = vpop.f32.mrb[0].mxu0
      %v2598 = vadd.f32 0.0, %v2597
      %v2599 = vpop.f32.mrb[0].mxu0
      %2600 = vmatprep.mubr.bf16.mxu0 0
      %2601 = vmatmul.mubr.bf16.gmra.mrb[0].mxu0 %v2552
      %v2602 = vpop.f32.mrb[0].mxu0
      %v2603 = vadd.f32 0.0, %v2602
      %v2604 = vpop.f32.mrb[0].mxu0
      %v2605 = vpop.f32.mrb[0].mxu0
      %v2606 = vadd.f32 0.0, %v2605
      %v2607 = vpop.f32.mrb[0].mxu0
      %2608 = vmatprep.mubr.bf16.mxu0 0
      %2609 = vmatmul.mubr.bf16.gmra.mrb[0].mxu0 %v2555
      %v2610 = vpop.f32.mrb[0].mxu0
      %v2611 = vadd.f32 0.0, %v2610
      %v2612 = vpop.f32.mrb[0].mxu0
      %v2613 = vpop.f32.mrb[0].mxu0
      %v2614 = vadd.f32 0.0, %v2613
      %v2615 = vpop.f32.mrb[0].mxu0
      %2616 = vmatprep.mubr.bf16.mxu0 0
      %2617 = vmatmul.mubr.bf16.gmra.mrb[0].mxu0 %v2558
      %v2618 = vpop.f32.mrb[0].mxu0
      %v2619 = vadd.f32 0.0, %v2618
      %v2620 = vpop.f32.mrb[0].mxu0
      %v2621 = vpop.f32.mrb[0].mxu0
      %v2622 = vadd.f32 0.0, %v2621
      %v2623 = vpop.f32.mrb[0].mxu0
      %2624 = vdwg.mxu0
      %2625 = vrot.lane.b32.xlu0 %v898, 64
      %v2626 = vpop.permute.xlu0 %2625
      %2627 = vrot.lane.b32.xlu0 %v899, 64
      %v2628 = vpop.permute.xlu0 %2627
      %2629 = vrot.lane.b32.xlu0 %v900, 64
      %v2630 = vpop.permute.xlu0 %2629
      %2631 = vrot.lane.b32.xlu0 %v901, 64
      %v2632 = vpop.permute.xlu0 %2631
      %v2638 = vsel %vm1799, %v2508, 0
      %v2641 = vsel %vm1799, %v2509, 0
      %v2644 = vsel %vm1799, %v2510, 0
      %v2647 = vsel %vm1799, %v2511, 0
      %2649 = vmatprep.subr.bf16.mxu0 0
      %2650 = vmatpush1.bf16.msra.mxu0 %v2626
      %2651 = vmatprep.subr.bf16.mxu0 0
      %2652 = vmatpush1.bf16.msra.mxu0 %v2628
      %2653 = vmatprep.subr.bf16.mxu0 0
      %2654 = vmatpush1.bf16.msra.mxu0 %v2630
      %2655 = vmatprep.subr.bf16.mxu0 0
      %2656 = vmatpush1.bf16.msra.mxu0 %v2632
      %2657 = vmatprep.subr.bf16.mxu0 0
      %2658 = vmatpush1.bf16.msra.mxu0 0
      %2659 = vmatprep.subr.bf16.mxu0 0
      %2660 = vmatpush1.bf16.msra.mxu0 0
      %2661 = vmatprep.subr.bf16.mxu0 0
      %2662 = vmatpush1.bf16.msra.mxu0 0
      %2663 = vmatprep.subr.bf16.mxu0 0
      %2664 = vmatpush1.bf16.msra.mxu0 0
      %2665 = vmatprep.subr.bf16.mxu0 0
      %2666 = vmatpush1.bf16.msra.mxu0 0
      %2667 = vmatprep.subr.bf16.mxu0 0
      %2668 = vmatpush1.bf16.msra.mxu0 0
      %2669 = vmatprep.subr.bf16.mxu0 0
      %2670 = vmatpush1.bf16.msra.mxu0 0
      %2671 = vmatprep.subr.bf16.mxu0 0
      %2672 = vmatpush1.bf16.msra.mxu0 0
      %2673 = vmatprep.subr.bf16.mxu0 0
      %2674 = vmatpush1.bf16.msra.mxu0 0
      %2675 = vmatprep.subr.bf16.mxu0 0
      %2676 = vmatpush1.bf16.msra.mxu0 0
      %2677 = vmatprep.subr.bf16.mxu0 0
      %2678 = vmatpush1.bf16.msra.mxu0 0
      %2679 = vmatprep.subr.bf16.mxu0 0
      %2680 = vmatpush1.bf16.msra.mxu0 0
      %2681 = vmatprep.mubr.bf16.mxu0 0
      %2682 = vmatmul.mubr.bf16.gmra.mrb[0].mxu0 %v2638
      %v2683 = vpop.f32.mrb[0].mxu0
      %v2684 = vadd.f32 0.0, %v2683
      %v2685 = vpop.f32.mrb[0].mxu0
      %v2686 = vpop.f32.mrb[0].mxu0
      %v2687 = vadd.f32 0.0, %v2686
      %v2688 = vpop.f32.mrb[0].mxu0
      %2689 = vmatprep.mubr.bf16.mxu0 0
      %2690 = vmatmul.mubr.bf16.gmra.mrb[0].mxu0 %v2641
      %v2691 = vpop.f32.mrb[0].mxu0
      %v2692 = vadd.f32 0.0, %v2691
      %v2693 = vpop.f32.mrb[0].mxu0
      %v2694 = vpop.f32.mrb[0].mxu0
      %v2695 = vadd.f32 0.0, %v2694
      %v2696 = vpop.f32.mrb[0].mxu0
      %2697 = vmatprep.mubr.bf16.mxu0 0
      %2698 = vmatmul.mubr.bf16.gmra.mrb[0].mxu0 %v2644
      %v2699 = vpop.f32.mrb[0].mxu0
      %v2700 = vadd.f32 0.0, %v2699
      %v2701 = vpop.f32.mrb[0].mxu0
      %v2702 = vpop.f32.mrb[0].mxu0
      %v2703 = vadd.f32 0.0, %v2702
      %v2704 = vpop.f32.mrb[0].mxu0
      %2705 = vmatprep.mubr.bf16.mxu0 0
      %2706 = vmatmul.mubr.bf16.gmra.mrb[0].mxu0 %v2647
      %v2707 = vpop.f32.mrb[0].mxu0
      %v2708 = vadd.f32 0.0, %v2707
      %v2709 = vpop.f32.mrb[0].mxu0
      %v2710 = vpop.f32.mrb[0].mxu0
      %v2711 = vadd.f32 0.0, %v2710
      %v2712 = vpop.f32.mrb[0].mxu0
      %2713 = vdwg.mxu0
      %2714 = vrot.lane.b32.xlu0 %v902, 64
      %v2715 = vpop.permute.xlu0 %2714
      %2716 = vrot.lane.b32.xlu0 %v903, 64
      %v2717 = vpop.permute.xlu0 %2716
      %2718 = vrot.lane.b32.xlu0 %v904, 64
      %v2719 = vpop.permute.xlu0 %2718
      %2720 = vrot.lane.b32.xlu0 %v905, 64
      %v2721 = vpop.permute.xlu0 %2720
      %v2727 = vsel %vm1799, %v2512, 0
      %v2730 = vsel %vm1799, %v2513, 0
      %v2733 = vsel %vm1799, %v2514, 0
      %v2736 = vsel %vm1799, %v2515, 0
      %2738 = vmatprep.subr.bf16.mxu0 0
      %2739 = vmatpush1.bf16.msra.mxu0 %v2715
      %2740 = vmatprep.subr.bf16.mxu0 0
      %2741 = vmatpush1.bf16.msra.mxu0 %v2717
      %2742 = vmatprep.subr.bf16.mxu0 0
      %2743 = vmatpush1.bf16.msra.mxu0 %v2719
      %2744 = vmatprep.subr.bf16.mxu0 0
      %2745 = vmatpush1.bf16.msra.mxu0 %v2721
      %2746 = vmatprep.subr.bf16.mxu0 0
      %2747 = vmatpush1.bf16.msra.mxu0 0
      %2748 = vmatprep.subr.bf16.mxu0 0
      %2749 = vmatpush1.bf16.msra.mxu0 0
      %2750 = vmatprep.subr.bf16.mxu0 0
      %2751 = vmatpush1.bf16.msra.mxu0 0
      %2752 = vmatprep.subr.bf16.mxu0 0
      %2753 = vmatpush1.bf16.msra.mxu0 0
      %2754 = vmatprep.subr.bf16.mxu0 0
      %2755 = vmatpush1.bf16.msra.mxu0 0
      %2756 = vmatprep.subr.bf16.mxu0 0
      %2757 = vmatpush1.bf16.msra.mxu0 0
      %2758 = vmatprep.subr.bf16.mxu0 0
      %2759 = vmatpush1.bf16.msra.mxu0 0
      %2760 = vmatprep.subr.bf16.mxu0 0
      %2761 = vmatpush1.bf16.msra.mxu0 0
      %2762 = vmatprep.subr.bf16.mxu0 0
      %2763 = vmatpush1.bf16.msra.mxu0 0
      %2764 = vmatprep.subr.bf16.mxu0 0
      %2765 = vmatpush1.bf16.msra.mxu0 0
      %2766 = vmatprep.subr.bf16.mxu0 0
      %2767 = vmatpush1.bf16.msra.mxu0 0
      %2768 = vmatprep.subr.bf16.mxu0 0
      %2769 = vmatpush1.bf16.msra.mxu0 0
      %2770 = vmatprep.mubr.bf16.mxu0 0
      %2771 = vmatmul.mubr.bf16.gmra.mrb[0].mxu0 %v2727
      %v2772 = vpop.f32.mrb[0].mxu0
      %v2773 = vadd.f32 0.0, %v2772
      %v2774 = vpop.f32.mrb[0].mxu0
      %v2775 = vpop.f32.mrb[0].mxu0
      %v2776 = vadd.f32 0.0, %v2775
      %v2777 = vpop.f32.mrb[0].mxu0
      %2778 = vmatprep.mubr.bf16.mxu0 0
      %2779 = vmatmul.mubr.bf16.gmra.mrb[0].mxu0 %v2730
      %v2780 = vpop.f32.mrb[0].mxu0
      %v2781 = vadd.f32 0.0, %v2780
      %v2782 = vpop.f32.mrb[0].mxu0
      %v2783 = vpop.f32.mrb[0].mxu0
      %v2784 = vadd.f32 0.0, %v2783
      %v2785 = vpop.f32.mrb[0].mxu0
      %2786 = vmatprep.mubr.bf16.mxu0 0
      %2787 = vmatmul.mubr.bf16.gmra.mrb[0].mxu0 %v2733
      %v2788 = vpop.f32.mrb[0].mxu0
      %v2789 = vadd.f32 0.0, %v2788
      %v2790 = vpop.f32.mrb[0].mxu0
      %v2791 = vpop.f32.mrb[0].mxu0
      %v2792 = vadd.f32 0.0, %v2791
      %v2793 = vpop.f32.mrb[0].mxu0
      %2794 = vmatprep.mubr.bf16.mxu0 0
      %2795 = vmatmul.mubr.bf16.gmra.mrb[0].mxu0 %v2736
      %v2796 = vpop.f32.mrb[0].mxu0
      %v2797 = vadd.f32 0.0, %v2796
      %v2798 = vpop.f32.mrb[0].mxu0
      %v2799 = vpop.f32.mrb[0].mxu0
      %v2800 = vadd.f32 0.0, %v2799
      %v2801 = vpop.f32.mrb[0].mxu0
      %2802 = vdwg.mxu0
      %2803 = vrot.lane.b32.xlu0 %v906, 64
      %v2804 = vpop.permute.xlu0 %2803
      %2805 = vrot.lane.b32.xlu0 %v907, 64
      %v2806 = vpop.permute.xlu0 %2805
      %2807 = vrot.lane.b32.xlu0 %v908, 64
      %v2808 = vpop.permute.xlu0 %2807
      %2809 = vrot.lane.b32.xlu0 %v909, 64
      %v2810 = vpop.permute.xlu0 %2809
      %v2816 = vsel %vm1799, %v2516, 0
      %v2819 = vsel %vm1799, %v2517, 0
      %v2822 = vsel %vm1799, %v2518, 0
      %v2825 = vsel %vm1799, %v2519, 0
      %2827 = vmatprep.subr.bf16.mxu0 0
      %2828 = vmatpush1.bf16.msra.mxu0 %v2804
      %2829 = vmatprep.subr.bf16.mxu0 0
      %2830 = vmatpush1.bf16.msra.mxu0 %v2806
      %2831 = vmatprep.subr.bf16.mxu0 0
      %2832 = vmatpush1.bf16.msra.mxu0 %v2808
      %2833 = vmatprep.subr.bf16.mxu0 0
      %2834 = vmatpush1.bf16.msra.mxu0 %v2810
      %2835 = vmatprep.subr.bf16.mxu0 0
      %2836 = vmatpush1.bf16.msra.mxu0 0
      %2837 = vmatprep.subr.bf16.mxu0 0
      %2838 = vmatpush1.bf16.msra.mxu0 0
      %2839 = vmatprep.subr.bf16.mxu0 0
      %2840 = vmatpush1.bf16.msra.mxu0 0
      %2841 = vmatprep.subr.bf16.mxu0 0
      %2842 = vmatpush1.bf16.msra.mxu0 0
      %2843 = vmatprep.subr.bf16.mxu0 0
      %2844 = vmatpush1.bf16.msra.mxu0 0
      %2845 = vmatprep.subr.bf16.mxu0 0
      %2846 = vmatpush1.bf16.msra.mxu0 0
      %2847 = vmatprep.subr.bf16.mxu0 0
      %2848 = vmatpush1.bf16.msra.mxu0 0
      %2849 = vmatprep.subr.bf16.mxu0 0
      %2850 = vmatpush1.bf16.msra.mxu0 0
      %2851 = vmatprep.subr.bf16.mxu0 0
      %2852 = vmatpush1.bf16.msra.mxu0 0
      %2853 = vmatprep.subr.bf16.mxu0 0
      %2854 = vmatpush1.bf16.msra.mxu0 0
      %2855 = vmatprep.subr.bf16.mxu0 0
      %2856 = vmatpush1.bf16.msra.mxu0 0
      %2857 = vmatprep.subr.bf16.mxu0 0
      %2858 = vmatpush1.bf16.msra.mxu0 0
      %2859 = vmatprep.mubr.bf16.mxu0 0
      %2860 = vmatmul.mubr.bf16.gmra.mrb[0].mxu0 %v2816
      %v2861 = vpop.f32.mrb[0].mxu0
      %v2862 = vadd.f32 0.0, %v2861
      %v2863 = vpop.f32.mrb[0].mxu0
      %v2864 = vpop.f32.mrb[0].mxu0
      %v2865 = vadd.f32 0.0, %v2864
      %v2866 = vpop.f32.mrb[0].mxu0
      %2867 = vmatprep.mubr.bf16.mxu0 0
      %2868 = vmatmul.mubr.bf16.gmra.mrb[0].mxu0 %v2819
      %v2869 = vpop.f32.mrb[0].mxu0
      %v2870 = vadd.f32 0.0, %v2869
      %v2871 = vpop.f32.mrb[0].mxu0
      %v2872 = vpop.f32.mrb[0].mxu0
      %v2873 = vadd.f32 0.0, %v2872
      %v2874 = vpop.f32.mrb[0].mxu0
      %2875 = vmatprep.mubr.bf16.mxu0 0
      %2876 = vmatmul.mubr.bf16.gmra.mrb[0].mxu0 %v2822
      %v2877 = vpop.f32.mrb[0].mxu0
      %v2878 = vadd.f32 0.0, %v2877
      %v2879 = vpop.f32.mrb[0].mxu0
      %v2880 = vpop.f32.mrb[0].mxu0
      %v2881 = vadd.f32 0.0, %v2880
      %v2882 = vpop.f32.mrb[0].mxu0
      %2883 = vmatprep.mubr.bf16.mxu0 0
      %2884 = vmatmul.mubr.bf16.gmra.mrb[0].mxu0 %v2825
      %v2885 = vpop.f32.mrb[0].mxu0
      %v2886 = vadd.f32 0.0, %v2885
      %v2887 = vpop.f32.mrb[0].mxu0
      %v2888 = vpop.f32.mrb[0].mxu0
      %v2889 = vadd.f32 0.0, %v2888
      %v2890 = vpop.f32.mrb[0].mxu0
      %2891 = vdwg.mxu0
      %2892 = vrot.lane.b32.xlu0 %v910, 64
      %v2893 = vpop.permute.xlu0 %2892
      %2894 = vrot.lane.b32.xlu0 %v911, 64
      %v2895 = vpop.permute.xlu0 %2894
      %2896 = vrot.lane.b32.xlu0 %v912, 64
      %v2897 = vpop.permute.xlu0 %2896
      %2898 = vrot.lane.b32.xlu0 %v913, 64
      %v2899 = vpop.permute.xlu0 %2898
      %v2905 = vsel %vm1799, %v2520, 0
      %v2908 = vsel %vm1799, %v2521, 0
      %v2911 = vsel %vm1799, %v2522, 0
      %v2914 = vsel %vm1799, %v2523, 0
      %2916 = vmatprep.subr.bf16.mxu0 0
      %2917 = vmatpush1.bf16.msra.mxu0 %v2893
      %2918 = vmatprep.subr.bf16.mxu0 0
      %2919 = vmatpush1.bf16.msra.mxu0 %v2895
      %2920 = vmatprep.subr.bf16.mxu0 0
      %2921 = vmatpush1.bf16.msra.mxu0 %v2897
      %2922 = vmatprep.subr.bf16.mxu0 0
      %2923 = vmatpush1.bf16.msra.mxu0 %v2899
      %2924 = vmatprep.subr.bf16.mxu0 0
      %2925 = vmatpush1.bf16.msra.mxu0 0
      %2926 = vmatprep.subr.bf16.mxu0 0
      %2927 = vmatpush1.bf16.msra.mxu0 0
      %2928 = vmatprep.subr.bf16.mxu0 0
      %2929 = vmatpush1.bf16.msra.mxu0 0
      %2930 = vmatprep.subr.bf16.mxu0 0
      %2931 = vmatpush1.bf16.msra.mxu0 0
      %2932 = vmatprep.subr.bf16.mxu0 0
      %2933 = vmatpush1.bf16.msra.mxu0 0
      %2934 = vmatprep.subr.bf16.mxu0 0
      %2935 = vmatpush1.bf16.msra.mxu0 0
      %2936 = vmatprep.subr.bf16.mxu0 0
      %2937 = vmatpush1.bf16.msra.mxu0 0
      %2938 = vmatprep.subr.bf16.mxu0 0
      %2939 = vmatpush1.bf16.msra.mxu0 0
      %2940 = vmatprep.subr.bf16.mxu0 0
      %2941 = vmatpush1.bf16.msra.mxu0 0
      %2942 = vmatprep.subr.bf16.mxu0 0
      %2943 = vmatpush1.bf16.msra.mxu0 0
      %2944 = vmatprep.subr.bf16.mxu0 0
      %2945 = vmatpush1.bf16.msra.mxu0 0
      %2946 = vmatprep.subr.bf16.mxu0 0
      %2947 = vmatpush1.bf16.msra.mxu0 0
      %2948 = vmatprep.mubr.bf16.mxu0 0
      %2949 = vmatmul.mubr.bf16.gmra.mrb[0].mxu0 %v2905
      %v2950 = vpop.f32.mrb[0].mxu0
      %v2951 = vadd.f32 0.0, %v2950
      %v2952 = vpop.f32.mrb[0].mxu0
      %v2953 = vpop.f32.mrb[0].mxu0
      %v2954 = vadd.f32 0.0, %v2953
      %v2955 = vpop.f32.mrb[0].mxu0
      %2956 = vmatprep.mubr.bf16.mxu0 0
      %2957 = vmatmul.mubr.bf16.gmra.mrb[0].mxu0 %v2908
      %v2958 = vpop.f32.mrb[0].mxu0
      %v2959 = vadd.f32 0.0, %v2958
      %v2960 = vpop.f32.mrb[0].mxu0
      %v2961 = vpop.f32.mrb[0].mxu0
      %v2962 = vadd.f32 0.0, %v2961
      %v2963 = vpop.f32.mrb[0].mxu0
      %2964 = vmatprep.mubr.bf16.mxu0 0
      %2965 = vmatmul.mubr.bf16.gmra.mrb[0].mxu0 %v2911
      %v2966 = vpop.f32.mrb[0].mxu0
      %v2967 = vadd.f32 0.0, %v2966
      %v2968 = vpop.f32.mrb[0].mxu0
      %v2969 = vpop.f32.mrb[0].mxu0
      %v2970 = vadd.f32 0.0, %v2969
      %v2971 = vpop.f32.mrb[0].mxu0
      %2972 = vmatprep.mubr.bf16.mxu0 0
      %2973 = vmatmul.mubr.bf16.gmra.mrb[0].mxu0 %v2914
      %v2974 = vpop.f32.mrb[0].mxu0
      %v2975 = vadd.f32 0.0, %v2974
      %v2976 = vpop.f32.mrb[0].mxu0
      %v2977 = vpop.f32.mrb[0].mxu0
      %v2978 = vadd.f32 0.0, %v2977
      %v2979 = vpop.f32.mrb[0].mxu0
      %2980 = vdwg.mxu0
      %2981 = vrot.lane.b32.xlu0 %v914, 64
      %v2982 = vpop.permute.xlu0 %2981
      %2983 = vrot.lane.b32.xlu0 %v915, 64
      %v2984 = vpop.permute.xlu0 %2983
      %2985 = vrot.lane.b32.xlu0 %v916, 64
      %v2986 = vpop.permute.xlu0 %2985
      %2987 = vrot.lane.b32.xlu0 %v917, 64
      %v2988 = vpop.permute.xlu0 %2987
      %v2994 = vsel %vm1799, %v2524, 0
      %v2997 = vsel %vm1799, %v2525, 0
      %v3000 = vsel %vm1799, %v2526, 0
      %v3003 = vsel %vm1799, %v2527, 0
      %3005 = vmatprep.subr.bf16.mxu0 0
      %3006 = vmatpush1.bf16.msra.mxu0 %v2982
      %3007 = vmatprep.subr.bf16.mxu0 0
      %3008 = vmatpush1.bf16.msra.mxu0 %v2984
      %3009 = vmatprep.subr.bf16.mxu0 0
      %3010 = vmatpush1.bf16.msra.mxu0 %v2986
      %3011 = vmatprep.subr.bf16.mxu0 0
      %3012 = vmatpush1.bf16.msra.mxu0 %v2988
      %3013 = vmatprep.subr.bf16.mxu0 0
      %3014 = vmatpush1.bf16.msra.mxu0 0
      %3015 = vmatprep.subr.bf16.mxu0 0
      %3016 = vmatpush1.bf16.msra.mxu0 0
      %3017 = vmatprep.subr.bf16.mxu0 0
      %3018 = vmatpush1.bf16.msra.mxu0 0
      %3019 = vmatprep.subr.bf16.mxu0 0
      %3020 = vmatpush1.bf16.msra.mxu0 0
      %3021 = vmatprep.subr.bf16.mxu0 0
      %3022 = vmatpush1.bf16.msra.mxu0 0
      %3023 = vmatprep.subr.bf16.mxu0 0
      %3024 = vmatpush1.bf16.msra.mxu0 0
      %3025 = vmatprep.subr.bf16.mxu0 0
      %3026 = vmatpush1.bf16.msra.mxu0 0
      %3027 = vmatprep.subr.bf16.mxu0 0
      %3028 = vmatpush1.bf16.msra.mxu0 0
      %3029 = vmatprep.subr.bf16.mxu0 0
      %3030 = vmatpush1.bf16.msra.mxu0 0
      %3031 = vmatprep.subr.bf16.mxu0 0
      %3032 = vmatpush1.bf16.msra.mxu0 0
      %3033 = vmatprep.subr.bf16.mxu0 0
      %3034 = vmatpush1.bf16.msra.mxu0 0
      %3035 = vmatprep.subr.bf16.mxu0 0
      %3036 = vmatpush1.bf16.msra.mxu0 0
      %3037 = vmatprep.mubr.bf16.mxu0 0
      %3038 = vmatmul.mubr.bf16.gmra.mrb[0].mxu0 %v2994
      %v3039 = vpop.f32.mrb[0].mxu0
      %v3040 = vadd.f32 0.0, %v3039
      %v3041 = vpop.f32.mrb[0].mxu0
      %v3042 = vpop.f32.mrb[0].mxu0
      %v3043 = vadd.f32 0.0, %v3042
      %v3044 = vpop.f32.mrb[0].mxu0
      %3045 = vmatprep.mubr.bf16.mxu0 0
      %3046 = vmatmul.mubr.bf16.gmra.mrb[0].mxu0 %v2997
      %v3047 = vpop.f32.mrb[0].mxu0
      %v3048 = vadd.f32 0.0, %v3047
      %v3049 = vpop.f32.mrb[0].mxu0
      %v3050 = vpop.f32.mrb[0].mxu0
      %v3051 = vadd.f32 0.0, %v3050
      %v3052 = vpop.f32.mrb[0].mxu0
      %3053 = vmatprep.mubr.bf16.mxu0 0
      %3054 = vmatmul.mubr.bf16.gmra.mrb[0].mxu0 %v3000
      %v3055 = vpop.f32.mrb[0].mxu0
      %v3056 = vadd.f32 0.0, %v3055
      %v3057 = vpop.f32.mrb[0].mxu0
      %v3058 = vpop.f32.mrb[0].mxu0
      %v3059 = vadd.f32 0.0, %v3058
      %v3060 = vpop.f32.mrb[0].mxu0
      %3061 = vmatprep.mubr.bf16.mxu0 0
      %3062 = vmatmul.mubr.bf16.gmra.mrb[0].mxu0 %v3003
      %v3063 = vpop.f32.mrb[0].mxu0
      %v3064 = vadd.f32 0.0, %v3063
      %v3065 = vpop.f32.mrb[0].mxu0
      %v3066 = vpop.f32.mrb[0].mxu0
      %v3067 = vadd.f32 0.0, %v3066
      %v3068 = vpop.f32.mrb[0].mxu0
      %3069 = vdwg.mxu0
      %3070 = vrot.lane.b32.xlu0 %v918, 64
      %v3071 = vpop.permute.xlu0 %3070
      %3072 = vrot.lane.b32.xlu0 %v919, 64
      %v3073 = vpop.permute.xlu0 %3072
      %3074 = vrot.lane.b32.xlu0 %v920, 64
      %v3075 = vpop.permute.xlu0 %3074
      %3076 = vrot.lane.b32.xlu0 %v921, 64
      %v3077 = vpop.permute.xlu0 %3076
      %v3083 = vsel %vm1799, %v2528, 0
      %v3086 = vsel %vm1799, %v2529, 0
      %v3089 = vsel %vm1799, %v2530, 0
      %v3092 = vsel %vm1799, %v2531, 0
      %3094 = vmatprep.subr.bf16.mxu0 0
      %3095 = vmatpush1.bf16.msra.mxu0 %v3071
      %3096 = vmatprep.subr.bf16.mxu0 0
      %3097 = vmatpush1.bf16.msra.mxu0 %v3073
      %3098 = vmatprep.subr.bf16.mxu0 0
      %3099 = vmatpush1.bf16.msra.mxu0 %v3075
      %3100 = vmatprep.subr.bf16.mxu0 0
      %3101 = vmatpush1.bf16.msra.mxu0 %v3077
      %3102 = vmatprep.subr.bf16.mxu0 0
      %3103 = vmatpush1.bf16.msra.mxu0 0
      %3104 = vmatprep.subr.bf16.mxu0 0
      %3105 = vmatpush1.bf16.msra.mxu0 0
      %3106 = vmatprep.subr.bf16.mxu0 0
      %3107 = vmatpush1.bf16.msra.mxu0 0
      %3108 = vmatprep.subr.bf16.mxu0 0
      %3109 = vmatpush1.bf16.msra.mxu0 0
      %3110 = vmatprep.subr.bf16.mxu0 0
      %3111 = vmatpush1.bf16.msra.mxu0 0
      %3112 = vmatprep.subr.bf16.mxu0 0
      %3113 = vmatpush1.bf16.msra.mxu0 0
      %3114 = vmatprep.subr.bf16.mxu0 0
      %3115 = vmatpush1.bf16.msra.mxu0 0
      %3116 = vmatprep.subr.bf16.mxu0 0
      %3117 = vmatpush1.bf16.msra.mxu0 0
      %3118 = vmatprep.subr.bf16.mxu0 0
      %3119 = vmatpush1.bf16.msra.mxu0 0
      %3120 = vmatprep.subr.bf16.mxu0 0
      %3121 = vmatpush1.bf16.msra.mxu0 0
      %3122 = vmatprep.subr.bf16.mxu0 0
      %3123 = vmatpush1.bf16.msra.mxu0 0
      %3124 = vmatprep.subr.bf16.mxu0 0
      %3125 = vmatpush1.bf16.msra.mxu0 0
      %3126 = vmatprep.mubr.bf16.mxu0 0
      %3127 = vmatmul.mubr.bf16.gmra.mrb[0].mxu0 %v3083
      %v3128 = vpop.f32.mrb[0].mxu0
      %v3129 = vadd.f32 0.0, %v3128
      %v3130 = vpop.f32.mrb[0].mxu0
      %v3131 = vpop.f32.mrb[0].mxu0
      %v3132 = vadd.f32 0.0, %v3131
      %v3133 = vpop.f32.mrb[0].mxu0
      %3134 = vmatprep.mubr.bf16.mxu0 0
      %3135 = vmatmul.mubr.bf16.gmra.mrb[0].mxu0 %v3086
      %v3136 = vpop.f32.mrb[0].mxu0
      %v3137 = vadd.f32 0.0, %v3136
      %v3138 = vpop.f32.mrb[0].mxu0
      %v3139 = vpop.f32.mrb[0].mxu0
      %v3140 = vadd.f32 0.0, %v3139
      %v3141 = vpop.f32.mrb[0].mxu0
      %3142 = vmatprep.mubr.bf16.mxu0 0
      %3143 = vmatmul.mubr.bf16.gmra.mrb[0].mxu0 %v3089
      %v3144 = vpop.f32.mrb[0].mxu0
      %v3145 = vadd.f32 0.0, %v3144
      %v3146 = vpop.f32.mrb[0].mxu0
      %v3147 = vpop.f32.mrb[0].mxu0
      %v3148 = vadd.f32 0.0, %v3147
      %v3149 = vpop.f32.mrb[0].mxu0
      %3150 = vmatprep.mubr.bf16.mxu0 0
      %3151 = vmatmul.mubr.bf16.gmra.mrb[0].mxu0 %v3092
      %v3152 = vpop.f32.mrb[0].mxu0
      %v3153 = vadd.f32 0.0, %v3152
      %v3154 = vpop.f32.mrb[0].mxu0
      %v3155 = vpop.f32.mrb[0].mxu0
      %v3156 = vadd.f32 0.0, %v3155
      %v3157 = vpop.f32.mrb[0].mxu0
      %3158 = vdwg.mxu0
      %3159 = vrot.lane.b32.xlu0 %v922, 64
      %v3160 = vpop.permute.xlu0 %3159
      %3161 = vrot.lane.b32.xlu0 %v923, 64
      %v3162 = vpop.permute.xlu0 %3161
      %3163 = vrot.lane.b32.xlu0 %v924, 64
      %v3164 = vpop.permute.xlu0 %3163
      %3165 = vrot.lane.b32.xlu0 %v925, 64
      %v3166 = vpop.permute.xlu0 %3165
      %v3172 = vsel %vm1799, %v2532, 0
      %v3175 = vsel %vm1799, %v2533, 0
      %v3178 = vsel %vm1799, %v2534, 0
      %v3181 = vsel %vm1799, %v2535, 0
      %3183 = vmatprep.subr.bf16.mxu0 0
      %3184 = vmatpush1.bf16.msra.mxu0 %v3160
      %3185 = vmatprep.subr.bf16.mxu0 0
      %3186 = vmatpush1.bf16.msra.mxu0 %v3162
      %3187 = vmatprep.subr.bf16.mxu0 0
      %3188 = vmatpush1.bf16.msra.mxu0 %v3164
      %3189 = vmatprep.subr.bf16.mxu0 0
      %3190 = vmatpush1.bf16.msra.mxu0 %v3166
      %3191 = vmatprep.subr.bf16.mxu0 0
      %3192 = vmatpush1.bf16.msra.mxu0 0
      %3193 = vmatprep.subr.bf16.mxu0 0
      %3194 = vmatpush1.bf16.msra.mxu0 0
      %3195 = vmatprep.subr.bf16.mxu0 0
      %3196 = vmatpush1.bf16.msra.mxu0 0
      %3197 = vmatprep.subr.bf16.mxu0 0
      %3198 = vmatpush1.bf16.msra.mxu0 0
      %3199 = vmatprep.subr.bf16.mxu0 0
      %3200 = vmatpush1.bf16.msra.mxu0 0
      %3201 = vmatprep.subr.bf16.mxu0 0
      %3202 = vmatpush1.bf16.msra.mxu0 0
      %3203 = vmatprep.subr.bf16.mxu0 0
      %3204 = vmatpush1.bf16.msra.mxu0 0
      %3205 = vmatprep.subr.bf16.mxu0 0
      %3206 = vmatpush1.bf16.msra.mxu0 0
      %3207 = vmatprep.subr.bf16.mxu0 0
      %3208 = vmatpush1.bf16.msra.mxu0 0
      %3209 = vmatprep.subr.bf16.mxu0 0
      %3210 = vmatpush1.bf16.msra.mxu0 0
      %3211 = vmatprep.subr.bf16.mxu0 0
      %3212 = vmatpush1.bf16.msra.mxu0 0
      %3213 = vmatprep.subr.bf16.mxu0 0
      %3214 = vmatpush1.bf16.msra.mxu0 0
      %3215 = vmatprep.mubr.bf16.mxu0 0
      %3216 = vmatmul.mubr.bf16.gmra.mrb[0].mxu0 %v3172
      %v3217 = vpop.f32.mrb[0].mxu0
      %v3218 = vadd.f32 0.0, %v3217
      %v3219 = vpop.f32.mrb[0].mxu0
      %v3220 = vpop.f32.mrb[0].mxu0
      %v3221 = vadd.f32 0.0, %v3220
      %v3222 = vpop.f32.mrb[0].mxu0
      %3223 = vmatprep.mubr.bf16.mxu0 0
      %3224 = vmatmul.mubr.bf16.gmra.mrb[0].mxu0 %v3175
      %v3225 = vpop.f32.mrb[0].mxu0
      %v3226 = vadd.f32 0.0, %v3225
      %v3227 = vpop.f32.mrb[0].mxu0
      %v3228 = vpop.f32.mrb[0].mxu0
      %v3229 = vadd.f32 0.0, %v3228
      %v3230 = vpop.f32.mrb[0].mxu0
      %3231 = vmatprep.mubr.bf16.mxu0 0
      %3232 = vmatmul.mubr.bf16.gmra.mrb[0].mxu0 %v3178
      %v3233 = vpop.f32.mrb[0].mxu0
      %v3234 = vadd.f32 0.0, %v3233
      %v3235 = vpop.f32.mrb[0].mxu0
      %v3236 = vpop.f32.mrb[0].mxu0
      %v3237 = vadd.f32 0.0, %v3236
      %v3238 = vpop.f32.mrb[0].mxu0
      %3239 = vmatprep.mubr.bf16.mxu0 0
      %3240 = vmatmul.mubr.bf16.gmra.mrb[0].mxu0 %v3181
      %v3241 = vpop.f32.mrb[0].mxu0
      %v3242 = vadd.f32 0.0, %v3241
      %v3243 = vpop.f32.mrb[0].mxu0
      %v3244 = vpop.f32.mrb[0].mxu0
      %v3245 = vadd.f32 0.0, %v3244
      %v3246 = vpop.f32.mrb[0].mxu0
      %3247 = vdwg.mxu0
      %v3248 = vpack.c.bf16 %v2598, %v2595
      %v3249 = vpack.c.bf16 %v2606, %v2603
      %v3250 = vpack.c.bf16 %v2614, %v2611
      %v3251 = vpack.c.bf16 %v2622, %v2619
      %v3252 = vpack.c.bf16 %v2687, %v2684
      %v3253 = vpack.c.bf16 %v2695, %v2692
      %v3254 = vpack.c.bf16 %v2703, %v2700
      %v3255 = vpack.c.bf16 %v2711, %v2708
      %v3256 = vpack.c.bf16 %v2776, %v2773
      %v3257 = vpack.c.bf16 %v2784, %v2781
      %v3258 = vpack.c.bf16 %v2792, %v2789
      %v3259 = vpack.c.bf16 %v2800, %v2797
      %v3260 = vpack.c.bf16 %v2865, %v2862
      %v3261 = vpack.c.bf16 %v2873, %v2870
      %v3262 = vpack.c.bf16 %v2881, %v2878
      %v3263 = vpack.c.bf16 %v2889, %v2886
      %v3264 = vpack.c.bf16 %v2954, %v2951
      %v3265 = vpack.c.bf16 %v2962, %v2959
      %v3266 = vpack.c.bf16 %v2970, %v2967
      %v3267 = vpack.c.bf16 %v2978, %v2975
      %v3268 = vpack.c.bf16 %v3043, %v3040
      %v3269 = vpack.c.bf16 %v3051, %v3048
      %v3270 = vpack.c.bf16 %v3059, %v3056
      %v3271 = vpack.c.bf16 %v3067, %v3064
      %v3272 = vpack.c.bf16 %v3132, %v3129
      %v3273 = vpack.c.bf16 %v3140, %v3137
      %v3274 = vpack.c.bf16 %v3148, %v3145
      %v3275 = vpack.c.bf16 %v3156, %v3153
      %v3276 = vpack.c.bf16 %v3221, %v3218
      %v3277 = vpack.c.bf16 %v3229, %v3226
      %v3278 = vpack.c.bf16 %v3237, %v3234
      %v3279 = vpack.c.bf16 %v3245, %v3242
      %v3280 = vld [vmem:[%s4] sm:$0xf]
      %3281 = vrot.lane.b32.xlu0 %v894, 120
      %v3282 = vpop.permute.xlu0 %3281
      %3283 = vrot.lane.b32.xlu0 %v895, 120
      %v3284 = vpop.permute.xlu0 %3283
      %3285 = vrot.lane.b32.xlu0 %v896, 120
      %v3286 = vpop.permute.xlu0 %3285
      %3287 = vrot.lane.b32.xlu0 %v897, 120
      %v3288 = vpop.permute.xlu0 %3287
      %3289 = vrot.lane.b32.xlu0 %v894, 88
      %v3290 = vpop.permute.xlu0 %3289
      %3291 = vrot.lane.b32.xlu0 %v895, 88
      %v3292 = vpop.permute.xlu0 %3291
      %3293 = vrot.lane.b32.xlu0 %v896, 88
      %v3294 = vpop.permute.xlu0 %3293
      %3295 = vrot.lane.b32.xlu0 %v897, 88
      %v3296 = vpop.permute.xlu0 %3295
      %v3298 = vsel %vm1002, %v3282, 0
      %v3301 = vsel %vm1002, %v3284, 0
      %v3304 = vsel %vm1002, %v3286, 0
      %v3307 = vsel %vm1002, %v3288, 0
      %v3310 = vsel %vm1002, %v3290, 0
      %v3313 = vsel %vm1002, %v3292, 0
      %v3316 = vsel %vm1002, %v3294, 0
      %v3319 = vsel %vm1002, %v3296, 0
      %3321 = vmatprep.subr.bf16.mxu0 0
      %3322 = vmatpush1.bf16.xpose.msra.mxu0 %v3310
      %3323 = vmatprep.subr.bf16.mxu0 0
      %3324 = vmatpush1.bf16.xpose.msra.mxu0 %v3313
      %3325 = vmatprep.subr.bf16.mxu0 0
      %3326 = vmatpush1.bf16.xpose.msra.mxu0 %v3316
      %3327 = vmatprep.subr.bf16.mxu0 0
      %3328 = vmatpush1.bf16.xpose.msra.mxu0 %v3319
      %3329 = vmatprep.subr.bf16.mxu0 0
      %3330 = vmatpush1.bf16.xpose.msra.mxu0 0
      %3331 = vmatprep.subr.bf16.mxu0 0
      %3332 = vmatpush1.bf16.xpose.msra.mxu0 0
      %3333 = vmatprep.subr.bf16.mxu0 0
      %3334 = vmatpush1.bf16.xpose.msra.mxu0 0
      %3335 = vmatprep.subr.bf16.mxu0 0
      %3336 = vmatpush1.bf16.xpose.msra.mxu0 0
      %3337 = vmatprep.subr.bf16.mxu0 0
      %3338 = vmatpush1.bf16.xpose.msra.mxu0 0
      %3339 = vmatprep.subr.bf16.mxu0 0
      %3340 = vmatpush1.bf16.xpose.msra.mxu0 0
      %3341 = vmatprep.subr.bf16.mxu0 0
      %3342 = vmatpush1.bf16.xpose.msra.mxu0 0
      %3343 = vmatprep.subr.bf16.mxu0 0
      %3344 = vmatpush1.bf16.xpose.msra.mxu0 0
      %3345 = vmatprep.subr.bf16.mxu0 0
      %3346 = vmatpush1.bf16.xpose.msra.mxu0 0
      %3347 = vmatprep.subr.bf16.mxu0 0
      %3348 = vmatpush1.bf16.xpose.msra.mxu0 0
      %3349 = vmatprep.subr.bf16.mxu0 0
      %3350 = vmatpush1.bf16.xpose.msra.mxu0 0
      %3351 = vmatprep.subr.bf16.mxu0 0
      %3352 = vmatpush1.bf16.xpose.msra.mxu0 0
      %3353 = vmatprep.mubr.bf16.mxu0 0
      %3354 = vmatmul.mubr.bf16.gmra.mrb[0].mxu0 %v3298
      %v3355 = vpop.f32.mrb[0].mxu0
      %v3356 = vadd.f32 %v966, %v3355
      %v3357 = vpop.f32.mrb[0].mxu0
      %v3358 = vpop.f32.mrb[0].mxu0
      %v3359 = vadd.f32 %v967, %v3358
      %v3360 = vpop.f32.mrb[0].mxu0
      %3361 = vmatprep.mubr.bf16.mxu0 0
      %3362 = vmatmul.mubr.bf16.gmra.mrb[0].mxu0 %v3301
      %v3363 = vpop.f32.mrb[0].mxu0
      %v3364 = vadd.f32 %v968, %v3363
      %v3365 = vpop.f32.mrb[0].mxu0
      %v3366 = vpop.f32.mrb[0].mxu0
      %v3367 = vadd.f32 %v969, %v3366
      %v3368 = vpop.f32.mrb[0].mxu0
      %3369 = vmatprep.mubr.bf16.mxu0 0
      %3370 = vmatmul.mubr.bf16.gmra.mrb[0].mxu0 %v3304
      %v3371 = vpop.f32.mrb[0].mxu0
      %v3372 = vadd.f32 %v970, %v3371
      %v3373 = vpop.f32.mrb[0].mxu0
      %v3374 = vpop.f32.mrb[0].mxu0
      %v3375 = vadd.f32 %v971, %v3374
      %v3376 = vpop.f32.mrb[0].mxu0
      %3377 = vmatprep.mubr.bf16.mxu0 0
      %3378 = vmatmul.mubr.bf16.gmra.mrb[0].mxu0 %v3307
      %v3379 = vpop.f32.mrb[0].mxu0
      %v3380 = vadd.f32 %v972, %v3379
      %v3381 = vpop.f32.mrb[0].mxu0
      %v3382 = vpop.f32.mrb[0].mxu0
      %v3383 = vadd.f32 %v973, %v3382
      %v3384 = vpop.f32.mrb[0].mxu0
      %3385 = vdwg.mxu0
      %3386 = vrot.lane.b32.xlu0 %v898, 120
      %v3387 = vpop.permute.xlu0 %3386
      %3388 = vrot.lane.b32.xlu0 %v899, 120
      %v3389 = vpop.permute.xlu0 %3388
      %3390 = vrot.lane.b32.xlu0 %v900, 120
      %v3391 = vpop.permute.xlu0 %3390
      %3392 = vrot.lane.b32.xlu0 %v901, 120
      %v3393 = vpop.permute.xlu0 %3392
      %3394 = vrot.lane.b32.xlu0 %v898, 88
      %v3395 = vpop.permute.xlu0 %3394
      %3396 = vrot.lane.b32.xlu0 %v899, 88
      %v3397 = vpop.permute.xlu0 %3396
      %3398 = vrot.lane.b32.xlu0 %v900, 88
      %v3399 = vpop.permute.xlu0 %3398
      %3400 = vrot.lane.b32.xlu0 %v901, 88
      %v3401 = vpop.permute.xlu0 %3400
      %v3403 = vsel %vm1002, %v3387, 0
      %v3406 = vsel %vm1002, %v3389, 0
      %v3409 = vsel %vm1002, %v3391, 0
      %v3412 = vsel %vm1002, %v3393, 0
      %v3415 = vsel %vm1002, %v3395, 0
      %v3418 = vsel %vm1002, %v3397, 0
      %v3421 = vsel %vm1002, %v3399, 0
      %v3424 = vsel %vm1002, %v3401, 0
      %3426 = vmatprep.subr.bf16.mxu0 0
      %3427 = vmatpush1.bf16.xpose.msra.mxu0 %v3415
      %3428 = vmatprep.subr.bf16.mxu0 0
      %3429 = vmatpush1.bf16.xpose.msra.mxu0 %v3418
      %3430 = vmatprep.subr.bf16.mxu0 0
      %3431 = vmatpush1.bf16.xpose.msra.mxu0 %v3421
      %3432 = vmatprep.subr.bf16.mxu0 0
      %3433 = vmatpush1.bf16.xpose.msra.mxu0 %v3424
      %3434 = vmatprep.subr.bf16.mxu0 0
      %3435 = vmatpush1.bf16.xpose.msra.mxu0 0
      %3436 = vmatprep.subr.bf16.mxu0 0
      %3437 = vmatpush1.bf16.xpose.msra.mxu0 0
      %3438 = vmatprep.subr.bf16.mxu0 0
      %3439 = vmatpush1.bf16.xpose.msra.mxu0 0
      %3440 = vmatprep.subr.bf16.mxu0 0
      %3441 = vmatpush1.bf16.xpose.msra.mxu0 0
      %3442 = vmatprep.subr.bf16.mxu0 0
      %3443 = vmatpush1.bf16.xpose.msra.mxu0 0
      %3444 = vmatprep.subr.bf16.mxu0 0
      %3445 = vmatpush1.bf16.xpose.msra.mxu0 0
      %3446 = vmatprep.subr.bf16.mxu0 0
      %3447 = vmatpush1.bf16.xpose.msra.mxu0 0
      %3448 = vmatprep.subr.bf16.mxu0 0
      %3449 = vmatpush1.bf16.xpose.msra.mxu0 0
      %3450 = vmatprep.subr.bf16.mxu0 0
      %3451 = vmatpush1.bf16.xpose.msra.mxu0 0
      %3452 = vmatprep.subr.bf16.mxu0 0
      %3453 = vmatpush1.bf16.xpose.msra.mxu0 0
      %3454 = vmatprep.subr.bf16.mxu0 0
      %3455 = vmatpush1.bf16.xpose.msra.mxu0 0
      %3456 = vmatprep.subr.bf16.mxu0 0
      %3457 = vmatpush1.bf16.xpose.msra.mxu0 0
      %3458 = vmatprep.mubr.bf16.mxu0 0
      %3459 = vmatmul.mubr.bf16.gmra.mrb[0].mxu0 %v3403
      %v3460 = vpop.f32.mrb[0].mxu0
      %v3461 = vadd.f32 %v966, %v3460
      %v3462 = vpop.f32.mrb[0].mxu0
      %v3463 = vpop.f32.mrb[0].mxu0
      %v3464 = vadd.f32 %v967, %v3463
      %v3465 = vpop.f32.mrb[0].mxu0
      %3466 = vmatprep.mubr.bf16.mxu0 0
      %3467 = vmatmul.mubr.bf16.gmra.mrb[0].mxu0 %v3406
      %v3468 = vpop.f32.mrb[0].mxu0
      %v3469 = vadd.f32 %v968, %v3468
      %v3470 = vpop.f32.mrb[0].mxu0
      %v3471 = vpop.f32.mrb[0].mxu0
      %v3472 = vadd.f32 %v969, %v3471
      %v3473 = vpop.f32.mrb[0].mxu0
      %3474 = vmatprep.mubr.bf16.mxu0 0
      %3475 = vmatmul.mubr.bf16.gmra.mrb[0].mxu0 %v3409
      %v3476 = vpop.f32.mrb[0].mxu0
      %v3477 = vadd.f32 %v970, %v3476
      %v3478 = vpop.f32.mrb[0].mxu0
      %v3479 = vpop.f32.mrb[0].mxu0
      %v3480 = vadd.f32 %v971, %v3479
      %v3481 = vpop.f32.mrb[0].mxu0
      %3482 = vmatprep.mubr.bf16.mxu0 0
      %3483 = vmatmul.mubr.bf16.gmra.mrb[0].mxu0 %v3412
      %v3484 = vpop.f32.mrb[0].mxu0
      %v3485 = vadd.f32 %v972, %v3484
      %v3486 = vpop.f32.mrb[0].mxu0
      %v3487 = vpop.f32.mrb[0].mxu0
      %v3488 = vadd.f32 %v973, %v3487
      %v3489 = vpop.f32.mrb[0].mxu0
      %3490 = vdwg.mxu0
      %3491 = vrot.lane.b32.xlu0 %v902, 120
      %v3492 = vpop.permute.xlu0 %3491
      %3493 = vrot.lane.b32.xlu0 %v903, 120
      %v3494 = vpop.permute.xlu0 %3493
      %3495 = vrot.lane.b32.xlu0 %v904, 120
      %v3496 = vpop.permute.xlu0 %3495
      %3497 = vrot.lane.b32.xlu0 %v905, 120
      %v3498 = vpop.permute.xlu0 %3497
      %3499 = vrot.lane.b32.xlu0 %v902, 88
      %v3500 = vpop.permute.xlu0 %3499
      %3501 = vrot.lane.b32.xlu0 %v903, 88
      %v3502 = vpop.permute.xlu0 %3501
      %3503 = vrot.lane.b32.xlu0 %v904, 88
      %v3504 = vpop.permute.xlu0 %3503
      %3505 = vrot.lane.b32.xlu0 %v905, 88
      %v3506 = vpop.permute.xlu0 %3505
      %v3508 = vsel %vm1002, %v3492, 0
      %v3511 = vsel %vm1002, %v3494, 0
      %v3514 = vsel %vm1002, %v3496, 0
      %v3517 = vsel %vm1002, %v3498, 0
      %v3520 = vsel %vm1002, %v3500, 0
      %v3523 = vsel %vm1002, %v3502, 0
      %v3526 = vsel %vm1002, %v3504, 0
      %v3529 = vsel %vm1002, %v3506, 0
      %3531 = vmatprep.subr.bf16.mxu0 0
      %3532 = vmatpush1.bf16.xpose.msra.mxu0 %v3520
      %3533 = vmatprep.subr.bf16.mxu0 0
      %3534 = vmatpush1.bf16.xpose.msra.mxu0 %v3523
      %3535 = vmatprep.subr.bf16.mxu0 0
      %3536 = vmatpush1.bf16.xpose.msra.mxu0 %v3526
      %3537 = vmatprep.subr.bf16.mxu0 0
      %3538 = vmatpush1.bf16.xpose.msra.mxu0 %v3529
      %3539 = vmatprep.subr.bf16.mxu0 0
      %3540 = vmatpush1.bf16.xpose.msra.mxu0 0
      %3541 = vmatprep.subr.bf16.mxu0 0
      %3542 = vmatpush1.bf16.xpose.msra.mxu0 0
      %3543 = vmatprep.subr.bf16.mxu0 0
      %3544 = vmatpush1.bf16.xpose.msra.mxu0 0
      %3545 = vmatprep.subr.bf16.mxu0 0
      %3546 = vmatpush1.bf16.xpose.msra.mxu0 0
      %3547 = vmatprep.subr.bf16.mxu0 0
      %3548 = vmatpush1.bf16.xpose.msra.mxu0 0
      %3549 = vmatprep.subr.bf16.mxu0 0
      %3550 = vmatpush1.bf16.xpose.msra.mxu0 0
      %3551 = vmatprep.subr.bf16.mxu0 0
      %3552 = vmatpush1.bf16.xpose.msra.mxu0 0
      %3553 = vmatprep.subr.bf16.mxu0 0
      %3554 = vmatpush1.bf16.xpose.msra.mxu0 0
      %3555 = vmatprep.subr.bf16.mxu0 0
      %3556 = vmatpush1.bf16.xpose.msra.mxu0 0
      %3557 = vmatprep.subr.bf16.mxu0 0
      %3558 = vmatpush1.bf16.xpose.msra.mxu0 0
      %3559 = vmatprep.subr.bf16.mxu0 0
      %3560 = vmatpush1.bf16.xpose.msra.mxu0 0
      %3561 = vmatprep.subr.bf16.mxu0 0
      %3562 = vmatpush1.bf16.xpose.msra.mxu0 0
      %3563 = vmatprep.mubr.bf16.mxu0 0
      %3564 = vmatmul.mubr.bf16.gmra.mrb[0].mxu0 %v3508
      %v3565 = vpop.f32.mrb[0].mxu0
      %v3566 = vadd.f32 %v966, %v3565
      %v3567 = vpop.f32.mrb[0].mxu0
      %v3568 = vpop.f32.mrb[0].mxu0
      %v3569 = vadd.f32 %v967, %v3568
      %v3570 = vpop.f32.mrb[0].mxu0
      %3571 = vmatprep.mubr.bf16.mxu0 0
      %3572 = vmatmul.mubr.bf16.gmra.mrb[0].mxu0 %v3511
      %v3573 = vpop.f32.mrb[0].mxu0
      %v3574 = vadd.f32 %v968, %v3573
      %v3575 = vpop.f32.mrb[0].mxu0
      %v3576 = vpop.f32.mrb[0].mxu0
      %v3577 = vadd.f32 %v969, %v3576
      %v3578 = vpop.f32.mrb[0].mxu0
      %3579 = vmatprep.mubr.bf16.mxu0 0
      %3580 = vmatmul.mubr.bf16.gmra.mrb[0].mxu0 %v3514
      %v3581 = vpop.f32.mrb[0].mxu0
      %v3582 = vadd.f32 %v970, %v3581
      %v3583 = vpop.f32.mrb[0].mxu0
      %v3584 = vpop.f32.mrb[0].mxu0
      %v3585 = vadd.f32 %v971, %v3584
      %v3586 = vpop.f32.mrb[0].mxu0
      %3587 = vmatprep.mubr.bf16.mxu0 0
      %3588 = vmatmul.mubr.bf16.gmra.mrb[0].mxu0 %v3517
      %v3589 = vpop.f32.mrb[0].mxu0
      %v3590 = vadd.f32 %v972, %v3589
      %v3591 = vpop.f32.mrb[0].mxu0
      %v3592 = vpop.f32.mrb[0].mxu0
      %v3593 = vadd.f32 %v973, %v3592
      %v3594 = vpop.f32.mrb[0].mxu0
      %3595 = vdwg.mxu0
      %3596 = vrot.lane.b32.xlu0 %v906, 120
      %v3597 = vpop.permute.xlu0 %3596
      %3598 = vrot.lane.b32.xlu0 %v907, 120
      %v3599 = vpop.permute.xlu0 %3598
      %3600 = vrot.lane.b32.xlu0 %v908, 120
      %v3601 = vpop.permute.xlu0 %3600
      %3602 = vrot.lane.b32.xlu0 %v909, 120
      %v3603 = vpop.permute.xlu0 %3602
      %3604 = vrot.lane.b32.xlu0 %v906, 88
      %v3605 = vpop.permute.xlu0 %3604
      %3606 = vrot.lane.b32.xlu0 %v907, 88
      %v3607 = vpop.permute.xlu0 %3606
      %3608 = vrot.lane.b32.xlu0 %v908, 88
      %v3609 = vpop.permute.xlu0 %3608
      %3610 = vrot.lane.b32.xlu0 %v909, 88
      %v3611 = vpop.permute.xlu0 %3610
      %v3613 = vsel %vm1002, %v3597, 0
      %v3616 = vsel %vm1002, %v3599, 0
      %v3619 = vsel %vm1002, %v3601, 0
      %v3622 = vsel %vm1002, %v3603, 0
      %v3625 = vsel %vm1002, %v3605, 0
      %v3628 = vsel %vm1002, %v3607, 0
      %v3631 = vsel %vm1002, %v3609, 0
      %v3634 = vsel %vm1002, %v3611, 0
      %3636 = vmatprep.subr.bf16.mxu0 0
      %3637 = vmatpush1.bf16.xpose.msra.mxu0 %v3625
      %3638 = vmatprep.subr.bf16.mxu0 0
      %3639 = vmatpush1.bf16.xpose.msra.mxu0 %v3628
      %3640 = vmatprep.subr.bf16.mxu0 0
      %3641 = vmatpush1.bf16.xpose.msra.mxu0 %v3631
      %3642 = vmatprep.subr.bf16.mxu0 0
      %3643 = vmatpush1.bf16.xpose.msra.mxu0 %v3634
      %3644 = vmatprep.subr.bf16.mxu0 0
      %3645 = vmatpush1.bf16.xpose.msra.mxu0 0
      %3646 = vmatprep.subr.bf16.mxu0 0
      %3647 = vmatpush1.bf16.xpose.msra.mxu0 0
      %3648 = vmatprep.subr.bf16.mxu0 0
      %3649 = vmatpush1.bf16.xpose.msra.mxu0 0
      %3650 = vmatprep.subr.bf16.mxu0 0
      %3651 = vmatpush1.bf16.xpose.msra.mxu0 0
      %3652 = vmatprep.subr.bf16.mxu0 0
      %3653 = vmatpush1.bf16.xpose.msra.mxu0 0
      %3654 = vmatprep.subr.bf16.mxu0 0
      %3655 = vmatpush1.bf16.xpose.msra.mxu0 0
      %3656 = vmatprep.subr.bf16.mxu0 0
      %3657 = vmatpush1.bf16.xpose.msra.mxu0 0
      %3658 = vmatprep.subr.bf16.mxu0 0
      %3659 = vmatpush1.bf16.xpose.msra.mxu0 0
      %3660 = vmatprep.subr.bf16.mxu0 0
      %3661 = vmatpush1.bf16.xpose.msra.mxu0 0
      %3662 = vmatprep.subr.bf16.mxu0 0
      %3663 = vmatpush1.bf16.xpose.msra.mxu0 0
      %3664 = vmatprep.subr.bf16.mxu0 0
      %3665 = vmatpush1.bf16.xpose.msra.mxu0 0
      %3666 = vmatprep.subr.bf16.mxu0 0
      %3667 = vmatpush1.bf16.xpose.msra.mxu0 0
      %3668 = vmatprep.mubr.bf16.mxu0 0
      %3669 = vmatmul.mubr.bf16.gmra.mrb[0].mxu0 %v3613
      %v3670 = vpop.f32.mrb[0].mxu0
      %v3671 = vadd.f32 %v966, %v3670
      %v3672 = vpop.f32.mrb[0].mxu0
      %v3673 = vpop.f32.mrb[0].mxu0
      %v3674 = vadd.f32 %v967, %v3673
      %v3675 = vpop.f32.mrb[0].mxu0
      %3676 = vmatprep.mubr.bf16.mxu0 0
      %3677 = vmatmul.mubr.bf16.gmra.mrb[0].mxu0 %v3616
      %v3678 = vpop.f32.mrb[0].mxu0
      %v3679 = vadd.f32 %v968, %v3678
      %v3680 = vpop.f32.mrb[0].mxu0
      %v3681 = vpop.f32.mrb[0].mxu0
      %v3682 = vadd.f32 %v969, %v3681
      %v3683 = vpop.f32.mrb[0].mxu0
      %3684 = vmatprep.mubr.bf16.mxu0 0
      %3685 = vmatmul.mubr.bf16.gmra.mrb[0].mxu0 %v3619
      %v3686 = vpop.f32.mrb[0].mxu0
      %v3687 = vadd.f32 %v970, %v3686
      %v3688 = vpop.f32.mrb[0].mxu0
      %v3689 = vpop.f32.mrb[0].mxu0
      %v3690 = vadd.f32 %v971, %v3689
      %v3691 = vpop.f32.mrb[0].mxu0
      %3692 = vmatprep.mubr.bf16.mxu0 0
      %3693 = vmatmul.mubr.bf16.gmra.mrb[0].mxu0 %v3622
      %v3694 = vpop.f32.mrb[0].mxu0
      %v3695 = vadd.f32 %v972, %v3694
      %v3696 = vpop.f32.mrb[0].mxu0
      %v3697 = vpop.f32.mrb[0].mxu0
      %v3698 = vadd.f32 %v973, %v3697
      %v3699 = vpop.f32.mrb[0].mxu0
      %3700 = vdwg.mxu0
      %3701 = vrot.lane.b32.xlu0 %v910, 120
      %v3702 = vpop.permute.xlu0 %3701
      %3703 = vrot.lane.b32.xlu0 %v911, 120
      %v3704 = vpop.permute.xlu0 %3703
      %3705 = vrot.lane.b32.xlu0 %v912, 120
      %v3706 = vpop.permute.xlu0 %3705
      %3707 = vrot.lane.b32.xlu0 %v913, 120
      %v3708 = vpop.permute.xlu0 %3707
      %3709 = vrot.lane.b32.xlu0 %v910, 88
      %v3710 = vpop.permute.xlu0 %3709
      %3711 = vrot.lane.b32.xlu0 %v911, 88
      %v3712 = vpop.permute.xlu0 %3711
      %3713 = vrot.lane.b32.xlu0 %v912, 88
      %v3714 = vpop.permute.xlu0 %3713
      %3715 = vrot.lane.b32.xlu0 %v913, 88
      %v3716 = vpop.permute.xlu0 %3715
      %v3718 = vsel %vm1002, %v3702, 0
      %v3721 = vsel %vm1002, %v3704, 0
      %v3724 = vsel %vm1002, %v3706, 0
      %v3727 = vsel %vm1002, %v3708, 0
      %v3730 = vsel %vm1002, %v3710, 0
      %v3733 = vsel %vm1002, %v3712, 0
      %v3736 = vsel %vm1002, %v3714, 0
      %v3739 = vsel %vm1002, %v3716, 0
      %3741 = vmatprep.subr.bf16.mxu0 0
      %3742 = vmatpush1.bf16.xpose.msra.mxu0 %v3730
      %3743 = vmatprep.subr.bf16.mxu0 0
      %3744 = vmatpush1.bf16.xpose.msra.mxu0 %v3733
      %3745 = vmatprep.subr.bf16.mxu0 0
      %3746 = vmatpush1.bf16.xpose.msra.mxu0 %v3736
      %3747 = vmatprep.subr.bf16.mxu0 0
      %3748 = vmatpush1.bf16.xpose.msra.mxu0 %v3739
      %3749 = vmatprep.subr.bf16.mxu0 0
      %3750 = vmatpush1.bf16.xpose.msra.mxu0 0
      %3751 = vmatprep.subr.bf16.mxu0 0
      %3752 = vmatpush1.bf16.xpose.msra.mxu0 0
      %3753 = vmatprep.subr.bf16.mxu0 0
      %3754 = vmatpush1.bf16.xpose.msra.mxu0 0
      %3755 = vmatprep.subr.bf16.mxu0 0
      %3756 = vmatpush1.bf16.xpose.msra.mxu0 0
      %3757 = vmatprep.subr.bf16.mxu0 0
      %3758 = vmatpush1.bf16.xpose.msra.mxu0 0
      %3759 = vmatprep.subr.bf16.mxu0 0
      %3760 = vmatpush1.bf16.xpose.msra.mxu0 0
      %3761 = vmatprep.subr.bf16.mxu0 0
      %3762 = vmatpush1.bf16.xpose.msra.mxu0 0
      %3763 = vmatprep.subr.bf16.mxu0 0
      %3764 = vmatpush1.bf16.xpose.msra.mxu0 0
      %3765 = vmatprep.subr.bf16.mxu0 0
      %3766 = vmatpush1.bf16.xpose.msra.mxu0 0
      %3767 = vmatprep.subr.bf16.mxu0 0
      %3768 = vmatpush1.bf16.xpose.msra.mxu0 0
      %3769 = vmatprep.subr.bf16.mxu0 0
      %3770 = vmatpush1.bf16.xpose.msra.mxu0 0
      %3771 = vmatprep.subr.bf16.mxu0 0
      %3772 = vmatpush1.bf16.xpose.msra.mxu0 0
      %3773 = vmatprep.mubr.bf16.mxu0 0
      %3774 = vmatmul.mubr.bf16.gmra.mrb[0].mxu0 %v3718
      %v3775 = vpop.f32.mrb[0].mxu0
      %v3776 = vadd.f32 %v966, %v3775
      %v3777 = vpop.f32.mrb[0].mxu0
      %v3778 = vpop.f32.mrb[0].mxu0
      %v3779 = vadd.f32 %v967, %v3778
      %v3780 = vpop.f32.mrb[0].mxu0
      %3781 = vmatprep.mubr.bf16.mxu0 0
      %3782 = vmatmul.mubr.bf16.gmra.mrb[0].mxu0 %v3721
      %v3783 = vpop.f32.mrb[0].mxu0
      %v3784 = vadd.f32 %v968, %v3783
      %v3785 = vpop.f32.mrb[0].mxu0
      %v3786 = vpop.f32.mrb[0].mxu0
      %v3787 = vadd.f32 %v969, %v3786
      %v3788 = vpop.f32.mrb[0].mxu0
      %3789 = vmatprep.mubr.bf16.mxu0 0
      %3790 = vmatmul.mubr.bf16.gmra.mrb[0].mxu0 %v3724
      %v3791 = vpop.f32.mrb[0].mxu0
      %v3792 = vadd.f32 %v970, %v3791
      %v3793 = vpop.f32.mrb[0].mxu0
      %v3794 = vpop.f32.mrb[0].mxu0
      %v3795 = vadd.f32 %v971, %v3794
      %v3796 = vpop.f32.mrb[0].mxu0
      %3797 = vmatprep.mubr.bf16.mxu0 0
      %3798 = vmatmul.mubr.bf16.gmra.mrb[0].mxu0 %v3727
      %v3799 = vpop.f32.mrb[0].mxu0
      %v3800 = vadd.f32 %v972, %v3799
      %v3801 = vpop.f32.mrb[0].mxu0
      %v3802 = vpop.f32.mrb[0].mxu0
      %v3803 = vadd.f32 %v973, %v3802
      %v3804 = vpop.f32.mrb[0].mxu0
      %3805 = vdwg.mxu0
      %3806 = vrot.lane.b32.xlu0 %v914, 120
      %v3807 = vpop.permute.xlu0 %3806
      %3808 = vrot.lane.b32.xlu0 %v915, 120
      %v3809 = vpop.permute.xlu0 %3808
      %3810 = vrot.lane.b32.xlu0 %v916, 120
      %v3811 = vpop.permute.xlu0 %3810
      %3812 = vrot.lane.b32.xlu0 %v917, 120
      %v3813 = vpop.permute.xlu0 %3812
      %3814 = vrot.lane.b32.xlu0 %v914, 88
      %v3815 = vpop.permute.xlu0 %3814
      %3816 = vrot.lane.b32.xlu0 %v915, 88
      %v3817 = vpop.permute.xlu0 %3816
      %3818 = vrot.lane.b32.xlu0 %v916, 88
      %v3819 = vpop.permute.xlu0 %3818
      %3820 = vrot.lane.b32.xlu0 %v917, 88
      %v3821 = vpop.permute.xlu0 %3820
      %v3823 = vsel %vm1002, %v3807, 0
      %v3826 = vsel %vm1002, %v3809, 0
      %v3829 = vsel %vm1002, %v3811, 0
      %v3832 = vsel %vm1002, %v3813, 0
      %v3835 = vsel %vm1002, %v3815, 0
      %v3838 = vsel %vm1002, %v3817, 0
      %v3841 = vsel %vm1002, %v3819, 0
      %v3844 = vsel %vm1002, %v3821, 0
      %3846 = vmatprep.subr.bf16.mxu0 0
      %3847 = vmatpush1.bf16.xpose.msra.mxu0 %v3835
      %3848 = vmatprep.subr.bf16.mxu0 0
      %3849 = vmatpush1.bf16.xpose.msra.mxu0 %v3838
      %3850 = vmatprep.subr.bf16.mxu0 0
      %3851 = vmatpush1.bf16.xpose.msra.mxu0 %v3841
      %3852 = vmatprep.subr.bf16.mxu0 0
      %3853 = vmatpush1.bf16.xpose.msra.mxu0 %v3844
      %3854 = vmatprep.subr.bf16.mxu0 0
      %3855 = vmatpush1.bf16.xpose.msra.mxu0 0
      %3856 = vmatprep.subr.bf16.mxu0 0
      %3857 = vmatpush1.bf16.xpose.msra.mxu0 0
      %3858 = vmatprep.subr.bf16.mxu0 0
      %3859 = vmatpush1.bf16.xpose.msra.mxu0 0
      %3860 = vmatprep.subr.bf16.mxu0 0
      %3861 = vmatpush1.bf16.xpose.msra.mxu0 0
      %3862 = vmatprep.subr.bf16.mxu0 0
      %3863 = vmatpush1.bf16.xpose.msra.mxu0 0
      %3864 = vmatprep.subr.bf16.mxu0 0
      %3865 = vmatpush1.bf16.xpose.msra.mxu0 0
      %3866 = vmatprep.subr.bf16.mxu0 0
      %3867 = vmatpush1.bf16.xpose.msra.mxu0 0
      %3868 = vmatprep.subr.bf16.mxu0 0
      %3869 = vmatpush1.bf16.xpose.msra.mxu0 0
      %3870 = vmatprep.subr.bf16.mxu0 0
      %3871 = vmatpush1.bf16.xpose.msra.mxu0 0
      %3872 = vmatprep.subr.bf16.mxu0 0
      %3873 = vmatpush1.bf16.xpose.msra.mxu0 0
      %3874 = vmatprep.subr.bf16.mxu0 0
      %3875 = vmatpush1.bf16.xpose.msra.mxu0 0
      %3876 = vmatprep.subr.bf16.mxu0 0
      %3877 = vmatpush1.bf16.xpose.msra.mxu0 0
      %3878 = vmatprep.mubr.bf16.mxu0 0
      %3879 = vmatmul.mubr.bf16.gmra.mrb[0].mxu0 %v3823
      %v3880 = vpop.f32.mrb[0].mxu0
      %v3881 = vadd.f32 %v966, %v3880
      %v3882 = vpop.f32.mrb[0].mxu0
      %v3883 = vpop.f32.mrb[0].mxu0
      %v3884 = vadd.f32 %v967, %v3883
      %v3885 = vpop.f32.mrb[0].mxu0
      %3886 = vmatprep.mubr.bf16.mxu0 0
      %3887 = vmatmul.mubr.bf16.gmra.mrb[0].mxu0 %v3826
      %v3888 = vpop.f32.mrb[0].mxu0
      %v3889 = vadd.f32 %v968, %v3888
      %v3890 = vpop.f32.mrb[0].mxu0
      %v3891 = vpop.f32.mrb[0].mxu0
      %v3892 = vadd.f32 %v969, %v3891
      %v3893 = vpop.f32.mrb[0].mxu0
      %3894 = vmatprep.mubr.bf16.mxu0 0
      %3895 = vmatmul.mubr.bf16.gmra.mrb[0].mxu0 %v3829
      %v3896 = vpop.f32.mrb[0].mxu0
      %v3897 = vadd.f32 %v970, %v3896
      %v3898 = vpop.f32.mrb[0].mxu0
      %v3899 = vpop.f32.mrb[0].mxu0
      %v3900 = vadd.f32 %v971, %v3899
      %v3901 = vpop.f32.mrb[0].mxu0
      %3902 = vmatprep.mubr.bf16.mxu0 0
      %3903 = vmatmul.mubr.bf16.gmra.mrb[0].mxu0 %v3832
      %v3904 = vpop.f32.mrb[0].mxu0
      %v3905 = vadd.f32 %v972, %v3904
      %v3906 = vpop.f32.mrb[0].mxu0
      %v3907 = vpop.f32.mrb[0].mxu0
      %v3908 = vadd.f32 %v973, %v3907
      %v3909 = vpop.f32.mrb[0].mxu0
      %3910 = vdwg.mxu0
      %3911 = vrot.lane.b32.xlu0 %v918, 120
      %v3912 = vpop.permute.xlu0 %3911
      %3913 = vrot.lane.b32.xlu0 %v919, 120
      %v3914 = vpop.permute.xlu0 %3913
      %3915 = vrot.lane.b32.xlu0 %v920, 120
      %v3916 = vpop.permute.xlu0 %3915
      %3917 = vrot.lane.b32.xlu0 %v921, 120
      %v3918 = vpop.permute.xlu0 %3917
      %3919 = vrot.lane.b32.xlu0 %v918, 88
      %v3920 = vpop.permute.xlu0 %3919
      %3921 = vrot.lane.b32.xlu0 %v919, 88
      %v3922 = vpop.permute.xlu0 %3921
      %3923 = vrot.lane.b32.xlu0 %v920, 88
      %v3924 = vpop.permute.xlu0 %3923
      %3925 = vrot.lane.b32.xlu0 %v921, 88
      %v3926 = vpop.permute.xlu0 %3925
      %v3928 = vsel %vm1002, %v3912, 0
      %v3931 = vsel %vm1002, %v3914, 0
      %v3934 = vsel %vm1002, %v3916, 0
      %v3937 = vsel %vm1002, %v3918, 0
      %v3940 = vsel %vm1002, %v3920, 0
      %v3943 = vsel %vm1002, %v3922, 0
      %v3946 = vsel %vm1002, %v3924, 0
      %v3949 = vsel %vm1002, %v3926, 0
      %3951 = vmatprep.subr.bf16.mxu0 0
      %3952 = vmatpush1.bf16.xpose.msra.mxu0 %v3940
      %3953 = vmatprep.subr.bf16.mxu0 0
      %3954 = vmatpush1.bf16.xpose.msra.mxu0 %v3943
      %3955 = vmatprep.subr.bf16.mxu0 0
      %3956 = vmatpush1.bf16.xpose.msra.mxu0 %v3946
      %3957 = vmatprep.subr.bf16.mxu0 0
      %3958 = vmatpush1.bf16.xpose.msra.mxu0 %v3949
      %3959 = vmatprep.subr.bf16.mxu0 0
      %3960 = vmatpush1.bf16.xpose.msra.mxu0 0
      %3961 = vmatprep.subr.bf16.mxu0 0
      %3962 = vmatpush1.bf16.xpose.msra.mxu0 0
      %3963 = vmatprep.subr.bf16.mxu0 0
      %3964 = vmatpush1.bf16.xpose.msra.mxu0 0
      %3965 = vmatprep.subr.bf16.mxu0 0
      %3966 = vmatpush1.bf16.xpose.msra.mxu0 0
      %3967 = vmatprep.subr.bf16.mxu0 0
      %3968 = vmatpush1.bf16.xpose.msra.mxu0 0
      %3969 = vmatprep.subr.bf16.mxu0 0
      %3970 = vmatpush1.bf16.xpose.msra.mxu0 0
      %3971 = vmatprep.subr.bf16.mxu0 0
      %3972 = vmatpush1.bf16.xpose.msra.mxu0 0
      %3973 = vmatprep.subr.bf16.mxu0 0
      %3974 = vmatpush1.bf16.xpose.msra.mxu0 0
      %3975 = vmatprep.subr.bf16.mxu0 0
      %3976 = vmatpush1.bf16.xpose.msra.mxu0 0
      %3977 = vmatprep.subr.bf16.mxu0 0
      %3978 = vmatpush1.bf16.xpose.msra.mxu0 0
      %3979 = vmatprep.subr.bf16.mxu0 0
      %3980 = vmatpush1.bf16.xpose.msra.mxu0 0
      %3981 = vmatprep.subr.bf16.mxu0 0
      %3982 = vmatpush1.bf16.xpose.msra.mxu0 0
      %3983 = vmatprep.mubr.bf16.mxu0 0
      %3984 = vmatmul.mubr.bf16.gmra.mrb[0].mxu0 %v3928
      %v3985 = vpop.f32.mrb[0].mxu0
      %v3986 = vadd.f32 %v966, %v3985
      %v3987 = vpop.f32.mrb[0].mxu0
      %v3988 = vpop.f32.mrb[0].mxu0
      %v3989 = vadd.f32 %v967, %v3988
      %v3990 = vpop.f32.mrb[0].mxu0
      %3991 = vmatprep.mubr.bf16.mxu0 0
      %3992 = vmatmul.mubr.bf16.gmra.mrb[0].mxu0 %v3931
      %v3993 = vpop.f32.mrb[0].mxu0
      %v3994 = vadd.f32 %v968, %v3993
      %v3995 = vpop.f32.mrb[0].mxu0
      %v3996 = vpop.f32.mrb[0].mxu0
      %v3997 = vadd.f32 %v969, %v3996
      %v3998 = vpop.f32.mrb[0].mxu0
      %3999 = vmatprep.mubr.bf16.mxu0 0
      %4000 = vmatmul.mubr.bf16.gmra.mrb[0].mxu0 %v3934
      %v4001 = vpop.f32.mrb[0].mxu0
      %v4002 = vadd.f32 %v970, %v4001
      %v4003 = vpop.f32.mrb[0].mxu0
      %v4004 = vpop.f32.mrb[0].mxu0
      %v4005 = vadd.f32 %v971, %v4004
      %v4006 = vpop.f32.mrb[0].mxu0
      %4007 = vmatprep.mubr.bf16.mxu0 0
      %4008 = vmatmul.mubr.bf16.gmra.mrb[0].mxu0 %v3937
      %v4009 = vpop.f32.mrb[0].mxu0
      %v4010 = vadd.f32 %v972, %v4009
      %v4011 = vpop.f32.mrb[0].mxu0
      %v4012 = vpop.f32.mrb[0].mxu0
      %v4013 = vadd.f32 %v973, %v4012
      %v4014 = vpop.f32.mrb[0].mxu0
      %4015 = vdwg.mxu0
      %4016 = vrot.lane.b32.xlu0 %v922, 120
      %v4017 = vpop.permute.xlu0 %4016
      %4018 = vrot.lane.b32.xlu0 %v923, 120
      %v4019 = vpop.permute.xlu0 %4018
      %4020 = vrot.lane.b32.xlu0 %v924, 120
      %v4021 = vpop.permute.xlu0 %4020
      %4022 = vrot.lane.b32.xlu0 %v925, 120
      %v4023 = vpop.permute.xlu0 %4022
      %4024 = vrot.lane.b32.xlu0 %v922, 88
      %v4025 = vpop.permute.xlu0 %4024
      %4026 = vrot.lane.b32.xlu0 %v923, 88
      %v4027 = vpop.permute.xlu0 %4026
      %4028 = vrot.lane.b32.xlu0 %v924, 88
      %v4029 = vpop.permute.xlu0 %4028
      %4030 = vrot.lane.b32.xlu0 %v925, 88
      %v4031 = vpop.permute.xlu0 %4030
      %v4033 = vsel %vm1002, %v4017, 0
      %v4036 = vsel %vm1002, %v4019, 0
      %v4039 = vsel %vm1002, %v4021, 0
      %v4042 = vsel %vm1002, %v4023, 0
      %v4045 = vsel %vm1002, %v4025, 0
      %v4048 = vsel %vm1002, %v4027, 0
      %v4051 = vsel %vm1002, %v4029, 0
      %v4054 = vsel %vm1002, %v4031, 0
      %4056 = vmatprep.subr.bf16.mxu0 0
      %4057 = vmatpush1.bf16.xpose.msra.mxu0 %v4045
      %4058 = vmatprep.subr.bf16.mxu0 0
      %4059 = vmatpush1.bf16.xpose.msra.mxu0 %v4048
      %4060 = vmatprep.subr.bf16.mxu0 0
      %4061 = vmatpush1.bf16.xpose.msra.mxu0 %v4051
      %4062 = vmatprep.subr.bf16.mxu0 0
      %4063 = vmatpush1.bf16.xpose.msra.mxu0 %v4054
      %4064 = vmatprep.subr.bf16.mxu0 0
      %4065 = vmatpush1.bf16.xpose.msra.mxu0 0
      %4066 = vmatprep.subr.bf16.mxu0 0
      %4067 = vmatpush1.bf16.xpose.msra.mxu0 0
      %4068 = vmatprep.subr.bf16.mxu0 0
      %4069 = vmatpush1.bf16.xpose.msra.mxu0 0
      %4070 = vmatprep.subr.bf16.mxu0 0
      %4071 = vmatpush1.bf16.xpose.msra.mxu0 0
      %4072 = vmatprep.subr.bf16.mxu0 0
      %4073 = vmatpush1.bf16.xpose.msra.mxu0 0
      %4074 = vmatprep.subr.bf16.mxu0 0
      %4075 = vmatpush1.bf16.xpose.msra.mxu0 0
      %4076 = vmatprep.subr.bf16.mxu0 0
      %4077 = vmatpush1.bf16.xpose.msra.mxu0 0
      %4078 = vmatprep.subr.bf16.mxu0 0
      %4079 = vmatpush1.bf16.xpose.msra.mxu0 0
      %4080 = vmatprep.subr.bf16.mxu0 0
      %4081 = vmatpush1.bf16.xpose.msra.mxu0 0
      %4082 = vmatprep.subr.bf16.mxu0 0
      %4083 = vmatpush1.bf16.xpose.msra.mxu0 0
      %4084 = vmatprep.subr.bf16.mxu0 0
      %4085 = vmatpush1.bf16.xpose.msra.mxu0 0
      %4086 = vmatprep.subr.bf16.mxu0 0
      %4087 = vmatpush1.bf16.xpose.msra.mxu0 0
      %4088 = vmatprep.mubr.bf16.mxu0 0
      %4089 = vmatmul.mubr.bf16.gmra.mrb[0].mxu0 %v4033
      %v4090 = vpop.f32.mrb[0].mxu0
      %v4091 = vadd.f32 %v966, %v4090
      %v4092 = vpop.f32.mrb[0].mxu0
      %v4093 = vpop.f32.mrb[0].mxu0
      %v4094 = vadd.f32 %v967, %v4093
      %v4095 = vpop.f32.mrb[0].mxu0
      %4096 = vmatprep.mubr.bf16.mxu0 0
      %4097 = vmatmul.mubr.bf16.gmra.mrb[0].mxu0 %v4036
      %v4098 = vpop.f32.mrb[0].mxu0
      %v4099 = vadd.f32 %v968, %v4098
      %v4100 = vpop.f32.mrb[0].mxu0
      %v4101 = vpop.f32.mrb[0].mxu0
      %v4102 = vadd.f32 %v969, %v4101
      %v4103 = vpop.f32.mrb[0].mxu0
      %4104 = vmatprep.mubr.bf16.mxu0 0
      %4105 = vmatmul.mubr.bf16.gmra.mrb[0].mxu0 %v4039
      %v4106 = vpop.f32.mrb[0].mxu0
      %v4107 = vadd.f32 %v970, %v4106
      %v4108 = vpop.f32.mrb[0].mxu0
      %v4109 = vpop.f32.mrb[0].mxu0
      %v4110 = vadd.f32 %v971, %v4109
      %v4111 = vpop.f32.mrb[0].mxu0
      %4112 = vmatprep.mubr.bf16.mxu0 0
      %4113 = vmatmul.mubr.bf16.gmra.mrb[0].mxu0 %v4042
      %v4114 = vpop.f32.mrb[0].mxu0
      %v4115 = vadd.f32 %v972, %v4114
      %v4116 = vpop.f32.mrb[0].mxu0
      %v4117 = vpop.f32.mrb[0].mxu0
      %v4118 = vadd.f32 %v973, %v4117
      %v4119 = vpop.f32.mrb[0].mxu0
      %4120 = vdwg.mxu0
      %v4121 = vsel %vm1799, %v3356, -inf
      %4122 = vmax.xlane.f32.xlu0 %v4121
      %v4123 = vpop.xlane.xlu0 %4122
      %v4124 = vsel %vm1799, %v3359, -inf
      %4125 = vmax.xlane.f32.xlu0 %v4124
      %v4126 = vpop.xlane.xlu0 %4125
      %v4127 = vsel %vm1799, %v3364, -inf
      %4128 = vmax.xlane.f32.xlu0 %v4127
      %v4129 = vpop.xlane.xlu0 %4128
      %v4130 = vsel %vm1799, %v3367, -inf
      %4131 = vmax.xlane.f32.xlu0 %v4130
      %v4132 = vpop.xlane.xlu0 %4131
      %v4133 = vsel %vm1799, %v3372, -inf
      %4134 = vmax.xlane.f32.xlu0 %v4133
      %v4135 = vpop.xlane.xlu0 %4134
      %v4136 = vsel %vm1799, %v3375, -inf
      %4137 = vmax.xlane.f32.xlu0 %v4136
      %v4138 = vpop.xlane.xlu0 %4137
      %v4139 = vsel %vm1799, %v3380, -inf
      %4140 = vmax.xlane.f32.xlu0 %v4139
      %v4141 = vpop.xlane.xlu0 %4140
      %v4142 = vsel %vm1799, %v3383, -inf
      %4143 = vmax.xlane.f32.xlu0 %v4142
      %v4144 = vpop.xlane.xlu0 %4143
      %v4145 = vsel %vm1799, %v3461, -inf
      %4146 = vmax.xlane.f32.xlu0 %v4145
      %v4147 = vpop.xlane.xlu0 %4146
      %v4148 = vsel %vm1799, %v3464, -inf
      %4149 = vmax.xlane.f32.xlu0 %v4148
      %v4150 = vpop.xlane.xlu0 %4149
      %v4151 = vsel %vm1799, %v3469, -inf
      %4152 = vmax.xlane.f32.xlu0 %v4151
      %v4153 = vpop.xlane.xlu0 %4152
      %v4154 = vsel %vm1799, %v3472, -inf
      %4155 = vmax.xlane.f32.xlu0 %v4154
      %v4156 = vpop.xlane.xlu0 %4155
      %v4157 = vsel %vm1799, %v3477, -inf
      %4158 = vmax.xlane.f32.xlu0 %v4157
      %v4159 = vpop.xlane.xlu0 %4158
      %v4160 = vsel %vm1799, %v3480, -inf
      %4161 = vmax.xlane.f32.xlu0 %v4160
      %v4162 = vpop.xlane.xlu0 %4161
      %v4163 = vsel %vm1799, %v3485, -inf
      %4164 = vmax.xlane.f32.xlu0 %v4163
      %v4165 = vpop.xlane.xlu0 %4164
      %v4166 = vsel %vm1799, %v3488, -inf
      %4167 = vmax.xlane.f32.xlu0 %v4166
      %v4168 = vpop.xlane.xlu0 %4167
      %v4169 = vsel %vm1799, %v3566, -inf
      %4170 = vmax.xlane.f32.xlu0 %v4169
      %v4171 = vpop.xlane.xlu0 %4170
      %v4172 = vsel %vm1799, %v3569, -inf
      %4173 = vmax.xlane.f32.xlu0 %v4172
      %v4174 = vpop.xlane.xlu0 %4173
      %v4175 = vsel %vm1799, %v3574, -inf
      %4176 = vmax.xlane.f32.xlu0 %v4175
      %v4177 = vpop.xlane.xlu0 %4176
      %v4178 = vsel %vm1799, %v3577, -inf
      %4179 = vmax.xlane.f32.xlu0 %v4178
      %v4180 = vpop.xlane.xlu0 %4179
      %v4181 = vsel %vm1799, %v3582, -inf
      %4182 = vmax.xlane.f32.xlu0 %v4181
      %v4183 = vpop.xlane.xlu0 %4182
      %v4184 = vsel %vm1799, %v3585, -inf
      %4185 = vmax.xlane.f32.xlu0 %v4184
      %v4186 = vpop.xlane.xlu0 %4185
      %v4187 = vsel %vm1799, %v3590, -inf
      %4188 = vmax.xlane.f32.xlu0 %v4187
      %v4189 = vpop.xlane.xlu0 %4188
      %v4190 = vsel %vm1799, %v3593, -inf
      %4191 = vmax.xlane.f32.xlu0 %v4190
      %v4192 = vpop.xlane.xlu0 %4191
      %v4193 = vsel %vm1799, %v3671, -inf
      %4194 = vmax.xlane.f32.xlu0 %v4193
      %v4195 = vpop.xlane.xlu0 %4194
      %v4196 = vsel %vm1799, %v3674, -inf
      %4197 = vmax.xlane.f32.xlu0 %v4196
      %v4198 = vpop.xlane.xlu0 %4197
      %v4199 = vsel %vm1799, %v3679, -inf
      %4200 = vmax.xlane.f32.xlu0 %v4199
      %v4201 = vpop.xlane.xlu0 %4200
      %v4202 = vsel %vm1799, %v3682, -inf
      %4203 = vmax.xlane.f32.xlu0 %v4202
      %v4204 = vpop.xlane.xlu0 %4203
      %v4205 = vsel %vm1799, %v3687, -inf
      %4206 = vmax.xlane.f32.xlu0 %v4205
      %v4207 = vpop.xlane.xlu0 %4206
      %v4208 = vsel %vm1799, %v3690, -inf
      %4209 = vmax.xlane.f32.xlu0 %v4208
      %v4210 = vpop.xlane.xlu0 %4209
      %v4211 = vsel %vm1799, %v3695, -inf
      %4212 = vmax.xlane.f32.xlu0 %v4211
      %v4213 = vpop.xlane.xlu0 %4212
      %v4214 = vsel %vm1799, %v3698, -inf
      %4215 = vmax.xlane.f32.xlu0 %v4214
      %v4216 = vpop.xlane.xlu0 %4215
      %v4217 = vsel %vm1799, %v3776, -inf
      %4218 = vmax.xlane.f32.xlu0 %v4217
      %v4219 = vpop.xlane.xlu0 %4218
      %v4220 = vsel %vm1799, %v3779, -inf
      %4221 = vmax.xlane.f32.xlu0 %v4220
      %v4222 = vpop.xlane.xlu0 %4221
      %v4223 = vsel %vm1799, %v3784, -inf
      %4224 = vmax.xlane.f32.xlu0 %v4223
      %v4225 = vpop.xlane.xlu0 %4224
      %v4226 = vsel %vm1799, %v3787, -inf
      %4227 = vmax.xlane.f32.xlu0 %v4226
      %v4228 = vpop.xlane.xlu0 %4227
      %v4229 = vsel %vm1799, %v3792, -inf
      %4230 = vmax.xlane.f32.xlu0 %v4229
      %v4231 = vpop.xlane.xlu0 %4230
      %v4232 = vsel %vm1799, %v3795, -inf
      %4233 = vmax.xlane.f32.xlu0 %v4232
      %v4234 = vpop.xlane.xlu0 %4233
      %v4235 = vsel %vm1799, %v3800, -inf
      %4236 = vmax.xlane.f32.xlu0 %v4235
      %v4237 = vpop.xlane.xlu0 %4236
      %v4238 = vsel %vm1799, %v3803, -inf
      %4239 = vmax.xlane.f32.xlu0 %v4238
      %v4240 = vpop.xlane.xlu0 %4239
      %v4241 = vsel %vm1799, %v3881, -inf
      %4242 = vmax.xlane.f32.xlu0 %v4241
      %v4243 = vpop.xlane.xlu0 %4242
      %v4244 = vsel %vm1799, %v3884, -inf
      %4245 = vmax.xlane.f32.xlu0 %v4244
      %v4246 = vpop.xlane.xlu0 %4245
      %v4247 = vsel %vm1799, %v3889, -inf
      %4248 = vmax.xlane.f32.xlu0 %v4247
      %v4249 = vpop.xlane.xlu0 %4248
      %v4250 = vsel %vm1799, %v3892, -inf
      %4251 = vmax.xlane.f32.xlu0 %v4250
      %v4252 = vpop.xlane.xlu0 %4251
      %v4253 = vsel %vm1799, %v3897, -inf
      %4254 = vmax.xlane.f32.xlu0 %v4253
      %v4255 = vpop.xlane.xlu0 %4254
      %v4256 = vsel %vm1799, %v3900, -inf
      %4257 = vmax.xlane.f32.xlu0 %v4256
      %v4258 = vpop.xlane.xlu0 %4257
      %v4259 = vsel %vm1799, %v3905, -inf
      %4260 = vmax.xlane.f32.xlu0 %v4259
      %v4261 = vpop.xlane.xlu0 %4260
      %v4262 = vsel %vm1799, %v3908, -inf
      %4263 = vmax.xlane.f32.xlu0 %v4262
      %v4264 = vpop.xlane.xlu0 %4263
      %v4265 = vsel %vm1799, %v3986, -inf
      %4266 = vmax.xlane.f32.xlu0 %v4265
      %v4267 = vpop.xlane.xlu0 %4266
      %v4268 = vsel %vm1799, %v3989, -inf
      %4269 = vmax.xlane.f32.xlu0 %v4268
      %v4270 = vpop.xlane.xlu0 %4269
      %v4271 = vsel %vm1799, %v3994, -inf
      %4272 = vmax.xlane.f32.xlu0 %v4271
      %v4273 = vpop.xlane.xlu0 %4272
      %v4274 = vsel %vm1799, %v3997, -inf
      %4275 = vmax.xlane.f32.xlu0 %v4274
      %v4276 = vpop.xlane.xlu0 %4275
      %v4277 = vsel %vm1799, %v4002, -inf
      %4278 = vmax.xlane.f32.xlu0 %v4277
      %v4279 = vpop.xlane.xlu0 %4278
      %v4280 = vsel %vm1799, %v4005, -inf
      %4281 = vmax.xlane.f32.xlu0 %v4280
      %v4282 = vpop.xlane.xlu0 %4281
      %v4283 = vsel %vm1799, %v4010, -inf
      %4284 = vmax.xlane.f32.xlu0 %v4283
      %v4285 = vpop.xlane.xlu0 %4284
      %v4286 = vsel %vm1799, %v4013, -inf
      %4287 = vmax.xlane.f32.xlu0 %v4286
      %v4288 = vpop.xlane.xlu0 %4287
      %v4289 = vsel %vm1799, %v4091, -inf
      %4290 = vmax.xlane.f32.xlu0 %v4289
      %v4291 = vpop.xlane.xlu0 %4290
      %v4292 = vsel %vm1799, %v4094, -inf
      %4293 = vmax.xlane.f32.xlu0 %v4292
      %v4294 = vpop.xlane.xlu0 %4293
      %v4295 = vsel %vm1799, %v4099, -inf
      %4296 = vmax.xlane.f32.xlu0 %v4295
      %v4297 = vpop.xlane.xlu0 %4296
      %v4298 = vsel %vm1799, %v4102, -inf
      %4299 = vmax.xlane.f32.xlu0 %v4298
      %v4300 = vpop.xlane.xlu0 %4299
      %v4301 = vsel %vm1799, %v4107, -inf
      %4302 = vmax.xlane.f32.xlu0 %v4301
      %v4303 = vpop.xlane.xlu0 %4302
      %v4304 = vsel %vm1799, %v4110, -inf
      %4305 = vmax.xlane.f32.xlu0 %v4304
      %v4306 = vpop.xlane.xlu0 %4305
      %v4307 = vsel %vm1799, %v4115, -inf
      %4308 = vmax.xlane.f32.xlu0 %v4307
      %v4309 = vpop.xlane.xlu0 %4308
      %v4310 = vsel %vm1799, %v4118, -inf
      %4311 = vmax.xlane.f32.xlu0 %v4310
      %v4312 = vpop.xlane.xlu0 %4311
      %v4313 = vsub.f32 %v3356, %v4123
      %v4314 = vsub.f32 %v3359, %v4126
      %v4315 = vsub.f32 %v3364, %v4129
      %v4316 = vsub.f32 %v3367, %v4132
      %v4317 = vsub.f32 %v3372, %v4135
      %v4318 = vsub.f32 %v3375, %v4138
      %v4319 = vsub.f32 %v3380, %v4141
      %v4320 = vsub.f32 %v3383, %v4144
      %v4321 = vsub.f32 %v3461, %v4147
      %v4322 = vsub.f32 %v3464, %v4150
      %v4323 = vsub.f32 %v3469, %v4153
      %v4324 = vsub.f32 %v3472, %v4156
      %v4325 = vsub.f32 %v3477, %v4159
      %v4326 = vsub.f32 %v3480, %v4162
      %v4327 = vsub.f32 %v3485, %v4165
      %v4328 = vsub.f32 %v3488, %v4168
      %v4329 = vsub.f32 %v3566, %v4171
      %v4330 = vsub.f32 %v3569, %v4174
      %v4331 = vsub.f32 %v3574, %v4177
      %v4332 = vsub.f32 %v3577, %v4180
      %v4333 = vsub.f32 %v3582, %v4183
      %v4334 = vsub.f32 %v3585, %v4186
      %v4335 = vsub.f32 %v3590, %v4189
      %v4336 = vsub.f32 %v3593, %v4192
      %v4337 = vsub.f32 %v3671, %v4195
      %v4338 = vsub.f32 %v3674, %v4198
      %v4339 = vsub.f32 %v3679, %v4201
      %v4340 = vsub.f32 %v3682, %v4204
      %v4341 = vsub.f32 %v3687, %v4207
      %v4342 = vsub.f32 %v3690, %v4210
      %v4343 = vsub.f32 %v3695, %v4213
      %v4344 = vsub.f32 %v3698, %v4216
      %v4345 = vsub.f32 %v3776, %v4219
      %v4346 = vsub.f32 %v3779, %v4222
      %v4347 = vsub.f32 %v3784, %v4225
      %v4348 = vsub.f32 %v3787, %v4228
      %v4349 = vsub.f32 %v3792, %v4231
      %v4350 = vsub.f32 %v3795, %v4234
      %v4351 = vsub.f32 %v3800, %v4237
      %v4352 = vsub.f32 %v3803, %v4240
      %v4353 = vsub.f32 %v3881, %v4243
      %v4354 = vsub.f32 %v3884, %v4246
      %v4355 = vsub.f32 %v3889, %v4249
      %v4356 = vsub.f32 %v3892, %v4252
      %v4357 = vsub.f32 %v3897, %v4255
      %v4358 = vsub.f32 %v3900, %v4258
      %v4359 = vsub.f32 %v3905, %v4261
      %v4360 = vsub.f32 %v3908, %v4264
      %v4361 = vsub.f32 %v3986, %v4267
      %v4362 = vsub.f32 %v3989, %v4270
      %v4363 = vsub.f32 %v3994, %v4273
      %v4364 = vsub.f32 %v3997, %v4276
      %v4365 = vsub.f32 %v4002, %v4279
      %v4366 = vsub.f32 %v4005, %v4282
      %v4367 = vsub.f32 %v4010, %v4285
      %v4368 = vsub.f32 %v4013, %v4288
      %v4369 = vsub.f32 %v4091, %v4291
      %v4370 = vsub.f32 %v4094, %v4294
      %v4371 = vsub.f32 %v4099, %v4297
      %v4372 = vsub.f32 %v4102, %v4300
      %v4373 = vsub.f32 %v4107, %v4303
      %v4374 = vsub.f32 %v4110, %v4306
      %v4375 = vsub.f32 %v4115, %v4309
      %v4376 = vsub.f32 %v4118, %v4312
      %v4377 = vmul.f32 %v4313, 1.442695
      %v4378 = vpow.pop %v4377
      %v4379 = vmul.f32 %v4314, 1.442695
      %v4380 = vpow.pop %v4379
      %v4381 = vmul.f32 %v4315, 1.442695
      %v4382 = vpow.pop %v4381
      %v4383 = vmul.f32 %v4316, 1.442695
      %v4384 = vpow.pop %v4383
      %v4385 = vmul.f32 %v4317, 1.442695
      %v4386 = vpow.pop %v4385
      %v4387 = vmul.f32 %v4318, 1.442695
      %v4388 = vpow.pop %v4387
      %v4389 = vmul.f32 %v4319, 1.442695
      %v4390 = vpow.pop %v4389
      %v4391 = vmul.f32 %v4320, 1.442695
      %v4392 = vpow.pop %v4391
      %v4393 = vmul.f32 %v4321, 1.442695
      %v4394 = vpow.pop %v4393
      %v4395 = vmul.f32 %v4322, 1.442695
      %v4396 = vpow.pop %v4395
      %v4397 = vmul.f32 %v4323, 1.442695
      %v4398 = vpow.pop %v4397
      %v4399 = vmul.f32 %v4324, 1.442695
      %v4400 = vpow.pop %v4399
      %v4401 = vmul.f32 %v4325, 1.442695
      %v4402 = vpow.pop %v4401
      %v4403 = vmul.f32 %v4326, 1.442695
      %v4404 = vpow.pop %v4403
      %v4405 = vmul.f32 %v4327, 1.442695
      %v4406 = vpow.pop %v4405
      %v4407 = vmul.f32 %v4328, 1.442695
      %v4408 = vpow.pop %v4407
      %v4409 = vmul.f32 %v4329, 1.442695
      %v4410 = vpow.pop %v4409
      %v4411 = vmul.f32 %v4330, 1.442695
      %v4412 = vpow.pop %v4411
      %v4413 = vmul.f32 %v4331, 1.442695
      %v4414 = vpow.pop %v4413
      %v4415 = vmul.f32 %v4332, 1.442695
      %v4416 = vpow.pop %v4415
      %v4417 = vmul.f32 %v4333, 1.442695
      %v4418 = vpow.pop %v4417
      %v4419 = vmul.f32 %v4334, 1.442695
      %v4420 = vpow.pop %v4419
      %v4421 = vmul.f32 %v4335, 1.442695
      %v4422 = vpow.pop %v4421
      %v4423 = vmul.f32 %v4336, 1.442695
      %v4424 = vpow.pop %v4423
      %v4425 = vmul.f32 %v4337, 1.442695
      %v4426 = vpow.pop %v4425
      %v4427 = vmul.f32 %v4338, 1.442695
      %v4428 = vpow.pop %v4427
      %v4429 = vmul.f32 %v4339, 1.442695
      %v4430 = vpow.pop %v4429
      %v4431 = vmul.f32 %v4340, 1.442695
      %v4432 = vpow.pop %v4431
      %v4433 = vmul.f32 %v4341, 1.442695
      %v4434 = vpow.pop %v4433
      %v4435 = vmul.f32 %v4342, 1.442695
      %v4436 = vpow.pop %v4435
      %v4437 = vmul.f32 %v4343, 1.442695
      %v4438 = vpow.pop %v4437
      %v4439 = vmul.f32 %v4344, 1.442695
      %v4440 = vpow.pop %v4439
      %v4441 = vmul.f32 %v4345, 1.442695
      %v4442 = vpow.pop %v4441
      %v4443 = vmul.f32 %v4346, 1.442695
      %v4444 = vpow.pop %v4443
      %v4445 = vmul.f32 %v4347, 1.442695
      %v4446 = vpow.pop %v4445
      %v4447 = vmul.f32 %v4348, 1.442695
      %v4448 = vpow.pop %v4447
      %v4449 = vmul.f32 %v4349, 1.442695
      %v4450 = vpow.pop %v4449
      %v4451 = vmul.f32 %v4350, 1.442695
      %v4452 = vpow.pop %v4451
      %v4453 = vmul.f32 %v4351, 1.442695
      %v4454 = vpow.pop %v4453
      %v4455 = vmul.f32 %v4352, 1.442695
      %v4456 = vpow.pop %v4455
      %v4457 = vmul.f32 %v4353, 1.442695
      %v4458 = vpow.pop %v4457
      %v4459 = vmul.f32 %v4354, 1.442695
      %v4460 = vpow.pop %v4459
      %v4461 = vmul.f32 %v4355, 1.442695
      %v4462 = vpow.pop %v4461
      %v4463 = vmul.f32 %v4356, 1.442695
      %v4464 = vpow.pop %v4463
      %v4465 = vmul.f32 %v4357, 1.442695
      %v4466 = vpow.pop %v4465
      %v4467 = vmul.f32 %v4358, 1.442695
      %v4468 = vpow.pop %v4467
      %v4469 = vmul.f32 %v4359, 1.442695
      %v4470 = vpow.pop %v4469
      %v4471 = vmul.f32 %v4360, 1.442695
      %v4472 = vpow.pop %v4471
      %v4473 = vmul.f32 %v4361, 1.442695
      %v4474 = vpow.pop %v4473
      %v4475 = vmul.f32 %v4362, 1.442695
      %v4476 = vpow.pop %v4475
      %v4477 = vmul.f32 %v4363, 1.442695
      %v4478 = vpow.pop %v4477
      %v4479 = vmul.f32 %v4364, 1.442695
      %v4480 = vpow.pop %v4479
      %v4481 = vmul.f32 %v4365, 1.442695
      %v4482 = vpow.pop %v4481
      %v4483 = vmul.f32 %v4366, 1.442695
      %v4484 = vpow.pop %v4483
      %v4485 = vmul.f32 %v4367, 1.442695
      %v4486 = vpow.pop %v4485
      %v4487 = vmul.f32 %v4368, 1.442695
      %v4488 = vpow.pop %v4487
      %v4489 = vmul.f32 %v4369, 1.442695
      %v4490 = vpow.pop %v4489
      %v4491 = vmul.f32 %v4370, 1.442695
      %v4492 = vpow.pop %v4491
      %v4493 = vmul.f32 %v4371, 1.442695
      %v4494 = vpow.pop %v4493
      %v4495 = vmul.f32 %v4372, 1.442695
      %v4496 = vpow.pop %v4495
      %v4497 = vmul.f32 %v4373, 1.442695
      %v4498 = vpow.pop %v4497
      %v4499 = vmul.f32 %v4374, 1.442695
      %v4500 = vpow.pop %v4499
      %v4501 = vmul.f32 %v4375, 1.442695
      %v4502 = vpow.pop %v4501
      %v4503 = vmul.f32 %v4376, 1.442695
      %v4504 = vpow.pop %v4503
      %v4505 = vsel %vm1799, %v4378, 0.0
      %4506 = vadd.xlane.f32.xlu0 %v4505
      %v4507 = vpop.xlane.xlu0 %4506
      %v4508 = vsel %vm1799, %v4380, 0.0
      %4509 = vadd.xlane.f32.xlu0 %v4508
      %v4510 = vpop.xlane.xlu0 %4509
      %v4511 = vsel %vm1799, %v4382, 0.0
      %4512 = vadd.xlane.f32.xlu0 %v4511
      %v4513 = vpop.xlane.xlu0 %4512
      %v4514 = vsel %vm1799, %v4384, 0.0
      %4515 = vadd.xlane.f32.xlu0 %v4514
      %v4516 = vpop.xlane.xlu0 %4515
      %v4517 = vsel %vm1799, %v4386, 0.0
      %4518 = vadd.xlane.f32.xlu0 %v4517
      %v4519 = vpop.xlane.xlu0 %4518
      %v4520 = vsel %vm1799, %v4388, 0.0
      %4521 = vadd.xlane.f32.xlu0 %v4520
      %v4522 = vpop.xlane.xlu0 %4521
      %v4523 = vsel %vm1799, %v4390, 0.0
      %4524 = vadd.xlane.f32.xlu0 %v4523
      %v4525 = vpop.xlane.xlu0 %4524
      %v4526 = vsel %vm1799, %v4392, 0.0
      %4527 = vadd.xlane.f32.xlu0 %v4526
      %v4528 = vpop.xlane.xlu0 %4527
      %v4529 = vsel %vm1799, %v4394, 0.0
      %4530 = vadd.xlane.f32.xlu0 %v4529
      %v4531 = vpop.xlane.xlu0 %4530
      %v4532 = vsel %vm1799, %v4396, 0.0
      %4533 = vadd.xlane.f32.xlu0 %v4532
      %v4534 = vpop.xlane.xlu0 %4533
      %v4535 = vsel %vm1799, %v4398, 0.0
      %4536 = vadd.xlane.f32.xlu0 %v4535
      %v4537 = vpop.xlane.xlu0 %4536
      %v4538 = vsel %vm1799, %v4400, 0.0
      %4539 = vadd.xlane.f32.xlu0 %v4538
      %v4540 = vpop.xlane.xlu0 %4539
      %v4541 = vsel %vm1799, %v4402, 0.0
      %4542 = vadd.xlane.f32.xlu0 %v4541
      %v4543 = vpop.xlane.xlu0 %4542
      %v4544 = vsel %vm1799, %v4404, 0.0
      %4545 = vadd.xlane.f32.xlu0 %v4544
      %v4546 = vpop.xlane.xlu0 %4545
      %v4547 = vsel %vm1799, %v4406, 0.0
      %4548 = vadd.xlane.f32.xlu0 %v4547
      %v4549 = vpop.xlane.xlu0 %4548
      %v4550 = vsel %vm1799, %v4408, 0.0
      %4551 = vadd.xlane.f32.xlu0 %v4550
      %v4552 = vpop.xlane.xlu0 %4551
      %v4553 = vsel %vm1799, %v4410, 0.0
      %4554 = vadd.xlane.f32.xlu0 %v4553
      %v4555 = vpop.xlane.xlu0 %4554
      %v4556 = vsel %vm1799, %v4412, 0.0
      %4557 = vadd.xlane.f32.xlu0 %v4556
      %v4558 = vpop.xlane.xlu0 %4557
      %v4559 = vsel %vm1799, %v4414, 0.0
      %4560 = vadd.xlane.f32.xlu0 %v4559
      %v4561 = vpop.xlane.xlu0 %4560
      %v4562 = vsel %vm1799, %v4416, 0.0
      %4563 = vadd.xlane.f32.xlu0 %v4562
      %v4564 = vpop.xlane.xlu0 %4563
      %v4565 = vsel %vm1799, %v4418, 0.0
      %4566 = vadd.xlane.f32.xlu0 %v4565
      %v4567 = vpop.xlane.xlu0 %4566
      %v4568 = vsel %vm1799, %v4420, 0.0
      %4569 = vadd.xlane.f32.xlu0 %v4568
      %v4570 = vpop.xlane.xlu0 %4569
      %v4571 = vsel %vm1799, %v4422, 0.0
      %4572 = vadd.xlane.f32.xlu0 %v4571
      %v4573 = vpop.xlane.xlu0 %4572
      %v4574 = vsel %vm1799, %v4424, 0.0
      %4575 = vadd.xlane.f32.xlu0 %v4574
      %v4576 = vpop.xlane.xlu0 %4575
      %v4577 = vsel %vm1799, %v4426, 0.0
      %4578 = vadd.xlane.f32.xlu0 %v4577
      %v4579 = vpop.xlane.xlu0 %4578
      %v4580 = vsel %vm1799, %v4428, 0.0
      %4581 = vadd.xlane.f32.xlu0 %v4580
      %v4582 = vpop.xlane.xlu0 %4581
      %v4583 = vsel %vm1799, %v4430, 0.0
      %4584 = vadd.xlane.f32.xlu0 %v4583
      %v4585 = vpop.xlane.xlu0 %4584
      %v4586 = vsel %vm1799, %v4432, 0.0
      %4587 = vadd.xlane.f32.xlu0 %v4586
      %v4588 = vpop.xlane.xlu0 %4587
      %v4589 = vsel %vm1799, %v4434, 0.0
      %4590 = vadd.xlane.f32.xlu0 %v4589
      %v4591 = vpop.xlane.xlu0 %4590
      %v4592 = vsel %vm1799, %v4436, 0.0
      %4593 = vadd.xlane.f32.xlu0 %v4592
      %v4594 = vpop.xlane.xlu0 %4593
      %v4595 = vsel %vm1799, %v4438, 0.0
      %4596 = vadd.xlane.f32.xlu0 %v4595
      %v4597 = vpop.xlane.xlu0 %4596
      %v4598 = vsel %vm1799, %v4440, 0.0
      %4599 = vadd.xlane.f32.xlu0 %v4598
      %v4600 = vpop.xlane.xlu0 %4599
      %v4601 = vsel %vm1799, %v4442, 0.0
      %4602 = vadd.xlane.f32.xlu0 %v4601
      %v4603 = vpop.xlane.xlu0 %4602
      %v4604 = vsel %vm1799, %v4444, 0.0
      %4605 = vadd.xlane.f32.xlu0 %v4604
      %v4606 = vpop.xlane.xlu0 %4605
      %v4607 = vsel %vm1799, %v4446, 0.0
      %4608 = vadd.xlane.f32.xlu0 %v4607
      %v4609 = vpop.xlane.xlu0 %4608
      %v4610 = vsel %vm1799, %v4448, 0.0
      %4611 = vadd.xlane.f32.xlu0 %v4610
      %v4612 = vpop.xlane.xlu0 %4611
      %v4613 = vsel %vm1799, %v4450, 0.0
      %4614 = vadd.xlane.f32.xlu0 %v4613
      %v4615 = vpop.xlane.xlu0 %4614
      %v4616 = vsel %vm1799, %v4452, 0.0
      %4617 = vadd.xlane.f32.xlu0 %v4616
      %v4618 = vpop.xlane.xlu0 %4617
      %v4619 = vsel %vm1799, %v4454, 0.0
      %4620 = vadd.xlane.f32.xlu0 %v4619
      %v4621 = vpop.xlane.xlu0 %4620
      %v4622 = vsel %vm1799, %v4456, 0.0
      %4623 = vadd.xlane.f32.xlu0 %v4622
      %v4624 = vpop.xlane.xlu0 %4623
      %v4625 = vsel %vm1799, %v4458, 0.0
      %4626 = vadd.xlane.f32.xlu0 %v4625
      %v4627 = vpop.xlane.xlu0 %4626
      %v4628 = vsel %vm1799, %v4460, 0.0
      %4629 = vadd.xlane.f32.xlu0 %v4628
      %v4630 = vpop.xlane.xlu0 %4629
      %v4631 = vsel %vm1799, %v4462, 0.0
      %4632 = vadd.xlane.f32.xlu0 %v4631
      %v4633 = vpop.xlane.xlu0 %4632
      %v4634 = vsel %vm1799, %v4464, 0.0
      %4635 = vadd.xlane.f32.xlu0 %v4634
      %v4636 = vpop.xlane.xlu0 %4635
      %v4637 = vsel %vm1799, %v4466, 0.0
      %4638 = vadd.xlane.f32.xlu0 %v4637
      %v4639 = vpop.xlane.xlu0 %4638
      %v4640 = vsel %vm1799, %v4468, 0.0
      %4641 = vadd.xlane.f32.xlu0 %v4640
      %v4642 = vpop.xlane.xlu0 %4641
      %v4643 = vsel %vm1799, %v4470, 0.0
      %4644 = vadd.xlane.f32.xlu0 %v4643
      %v4645 = vpop.xlane.xlu0 %4644
      %v4646 = vsel %vm1799, %v4472, 0.0
      %4647 = vadd.xlane.f32.xlu0 %v4646
      %v4648 = vpop.xlane.xlu0 %4647
      %v4649 = vsel %vm1799, %v4474, 0.0
      %4650 = vadd.xlane.f32.xlu0 %v4649
      %v4651 = vpop.xlane.xlu0 %4650
      %v4652 = vsel %vm1799, %v4476, 0.0
      %4653 = vadd.xlane.f32.xlu0 %v4652
      %v4654 = vpop.xlane.xlu0 %4653
      %v4655 = vsel %vm1799, %v4478, 0.0
      %4656 = vadd.xlane.f32.xlu0 %v4655
      %v4657 = vpop.xlane.xlu0 %4656
      %v4658 = vsel %vm1799, %v4480, 0.0
      %4659 = vadd.xlane.f32.xlu0 %v4658
      %v4660 = vpop.xlane.xlu0 %4659
      %v4661 = vsel %vm1799, %v4482, 0.0
      %4662 = vadd.xlane.f32.xlu0 %v4661
      %v4663 = vpop.xlane.xlu0 %4662
      %v4664 = vsel %vm1799, %v4484, 0.0
      %4665 = vadd.xlane.f32.xlu0 %v4664
      %v4666 = vpop.xlane.xlu0 %4665
      %v4667 = vsel %vm1799, %v4486, 0.0
      %4668 = vadd.xlane.f32.xlu0 %v4667
      %v4669 = vpop.xlane.xlu0 %4668
      %v4670 = vsel %vm1799, %v4488, 0.0
      %4671 = vadd.xlane.f32.xlu0 %v4670
      %v4672 = vpop.xlane.xlu0 %4671
      %v4673 = vsel %vm1799, %v4490, 0.0
      %4674 = vadd.xlane.f32.xlu0 %v4673
      %v4675 = vpop.xlane.xlu0 %4674
      %v4676 = vsel %vm1799, %v4492, 0.0
      %4677 = vadd.xlane.f32.xlu0 %v4676
      %v4678 = vpop.xlane.xlu0 %4677
      %v4679 = vsel %vm1799, %v4494, 0.0
      %4680 = vadd.xlane.f32.xlu0 %v4679
      %v4681 = vpop.xlane.xlu0 %4680
      %v4682 = vsel %vm1799, %v4496, 0.0
      %4683 = vadd.xlane.f32.xlu0 %v4682
      %v4684 = vpop.xlane.xlu0 %4683
      %v4685 = vsel %vm1799, %v4498, 0.0
      %4686 = vadd.xlane.f32.xlu0 %v4685
      %v4687 = vpop.xlane.xlu0 %4686
      %v4688 = vsel %vm1799, %v4500, 0.0
      %4689 = vadd.xlane.f32.xlu0 %v4688
      %v4690 = vpop.xlane.xlu0 %4689
      %v4691 = vsel %vm1799, %v4502, 0.0
      %4692 = vadd.xlane.f32.xlu0 %v4691
      %v4693 = vpop.xlane.xlu0 %4692
      %v4694 = vsel %vm1799, %v4504, 0.0
      %4695 = vadd.xlane.f32.xlu0 %v4694
      %v4696 = vpop.xlane.xlu0 %4695
      %v4697 = vrcp.pop %v4507
      %v4698 = vrcp.pop %v4510
      %v4699 = vrcp.pop %v4513
      %v4700 = vrcp.pop %v4516
      %v4701 = vrcp.pop %v4519
      %v4702 = vrcp.pop %v4522
      %v4703 = vrcp.pop %v4525
      %v4704 = vrcp.pop %v4528
      %v4705 = vrcp.pop %v4531
      %v4706 = vrcp.pop %v4534
      %v4707 = vrcp.pop %v4537
      %v4708 = vrcp.pop %v4540
      %v4709 = vrcp.pop %v4543
      %v4710 = vrcp.pop %v4546
      %v4711 = vrcp.pop %v4549
      %v4712 = vrcp.pop %v4552
      %v4713 = vrcp.pop %v4555
      %v4714 = vrcp.pop %v4558
      %v4715 = vrcp.pop %v4561
      %v4716 = vrcp.pop %v4564
      %v4717 = vrcp.pop %v4567
      %v4718 = vrcp.pop %v4570
      %v4719 = vrcp.pop %v4573
      %v4720 = vrcp.pop %v4576
      %v4721 = vrcp.pop %v4579
      %v4722 = vrcp.pop %v4582
      %v4723 = vrcp.pop %v4585
      %v4724 = vrcp.pop %v4588
      %v4725 = vrcp.pop %v4591
      %v4726 = vrcp.pop %v4594
      %v4727 = vrcp.pop %v4597
      %v4728 = vrcp.pop %v4600
      %v4729 = vrcp.pop %v4603
      %v4730 = vrcp.pop %v4606
      %v4731 = vrcp.pop %v4609
      %v4732 = vrcp.pop %v4612
      %v4733 = vrcp.pop %v4615
      %v4734 = vrcp.pop %v4618
      %v4735 = vrcp.pop %v4621
      %v4736 = vrcp.pop %v4624
      %v4737 = vrcp.pop %v4627
      %v4738 = vrcp.pop %v4630
      %v4739 = vrcp.pop %v4633
      %v4740 = vrcp.pop %v4636
      %v4741 = vrcp.pop %v4639
      %v4742 = vrcp.pop %v4642
      %v4743 = vrcp.pop %v4645
      %v4744 = vrcp.pop %v4648
      %v4745 = vrcp.pop %v4651
      %v4746 = vrcp.pop %v4654
      %v4747 = vrcp.pop %v4657
      %v4748 = vrcp.pop %v4660
      %v4749 = vrcp.pop %v4663
      %v4750 = vrcp.pop %v4666
      %v4751 = vrcp.pop %v4669
      %v4752 = vrcp.pop %v4672
      %v4753 = vrcp.pop %v4675
      %v4754 = vrcp.pop %v4678
      %v4755 = vrcp.pop %v4681
      %v4756 = vrcp.pop %v4684
      %v4757 = vrcp.pop %v4687
      %v4758 = vrcp.pop %v4690
      %v4759 = vrcp.pop %v4693
      %v4760 = vrcp.pop %v4696
      %v4761 = vmul.f32 %v4378, %v4697
      %v4762 = vmul.f32 %v4380, %v4698
      %v4763 = vmul.f32 %v4382, %v4699
      %v4764 = vmul.f32 %v4384, %v4700
      %v4765 = vmul.f32 %v4386, %v4701
      %v4766 = vmul.f32 %v4388, %v4702
      %v4767 = vmul.f32 %v4390, %v4703
      %v4768 = vmul.f32 %v4392, %v4704
      %v4769 = vmul.f32 %v4394, %v4705
      %v4770 = vmul.f32 %v4396, %v4706
      %v4771 = vmul.f32 %v4398, %v4707
      %v4772 = vmul.f32 %v4400, %v4708
      %v4773 = vmul.f32 %v4402, %v4709
      %v4774 = vmul.f32 %v4404, %v4710
      %v4775 = vmul.f32 %v4406, %v4711
      %v4776 = vmul.f32 %v4408, %v4712
      %v4777 = vmul.f32 %v4410, %v4713
      %v4778 = vmul.f32 %v4412, %v4714
      %v4779 = vmul.f32 %v4414, %v4715
      %v4780 = vmul.f32 %v4416, %v4716
      %v4781 = vmul.f32 %v4418, %v4717
      %v4782 = vmul.f32 %v4420, %v4718
      %v4783 = vmul.f32 %v4422, %v4719
      %v4784 = vmul.f32 %v4424, %v4720
      %v4785 = vmul.f32 %v4426, %v4721
      %v4786 = vmul.f32 %v4428, %v4722
      %v4787 = vmul.f32 %v4430, %v4723
      %v4788 = vmul.f32 %v4432, %v4724
      %v4789 = vmul.f32 %v4434, %v4725
      %v4790 = vmul.f32 %v4436, %v4726
      %v4791 = vmul.f32 %v4438, %v4727
      %v4792 = vmul.f32 %v4440, %v4728
      %v4793 = vmul.f32 %v4442, %v4729
      %v4794 = vmul.f32 %v4444, %v4730
      %v4795 = vmul.f32 %v4446, %v4731
      %v4796 = vmul.f32 %v4448, %v4732
      %v4797 = vmul.f32 %v4450, %v4733
      %v4798 = vmul.f32 %v4452, %v4734
      %v4799 = vmul.f32 %v4454, %v4735
      %v4800 = vmul.f32 %v4456, %v4736
      %v4801 = vmul.f32 %v4458, %v4737
      %v4802 = vmul.f32 %v4460, %v4738
      %v4803 = vmul.f32 %v4462, %v4739
      %v4804 = vmul.f32 %v4464, %v4740
      %v4805 = vmul.f32 %v4466, %v4741
      %v4806 = vmul.f32 %v4468, %v4742
      %v4807 = vmul.f32 %v4470, %v4743
      %v4808 = vmul.f32 %v4472, %v4744
      %v4809 = vmul.f32 %v4474, %v4745
      %v4810 = vmul.f32 %v4476, %v4746
      %v4811 = vmul.f32 %v4478, %v4747
      %v4812 = vmul.f32 %v4480, %v4748
      %v4813 = vmul.f32 %v4482, %v4749
      %v4814 = vmul.f32 %v4484, %v4750
      %v4815 = vmul.f32 %v4486, %v4751
      %v4816 = vmul.f32 %v4488, %v4752
      %v4817 = vmul.f32 %v4490, %v4753
      %v4818 = vmul.f32 %v4492, %v4754
      %v4819 = vmul.f32 %v4494, %v4755
      %v4820 = vmul.f32 %v4496, %v4756
      %v4821 = vmul.f32 %v4498, %v4757
      %v4822 = vmul.f32 %v4500, %v4758
      %v4823 = vmul.f32 %v4502, %v4759
      %v4824 = vmul.f32 %v4504, %v4760
      %v4825 = vpack.c.bf16 %v4762, %v4761
      %v4826 = vpack.c.bf16 %v4764, %v4763
      %v4827 = vpack.c.bf16 %v4766, %v4765
      %v4828 = vpack.c.bf16 %v4768, %v4767
      %v4829 = vpack.c.bf16 %v4770, %v4769
      %v4830 = vpack.c.bf16 %v4772, %v4771
      %v4831 = vpack.c.bf16 %v4774, %v4773
      %v4832 = vpack.c.bf16 %v4776, %v4775
      %v4833 = vpack.c.bf16 %v4778, %v4777
      %v4834 = vpack.c.bf16 %v4780, %v4779
      %v4835 = vpack.c.bf16 %v4782, %v4781
      %v4836 = vpack.c.bf16 %v4784, %v4783
      %v4837 = vpack.c.bf16 %v4786, %v4785
      %v4838 = vpack.c.bf16 %v4788, %v4787
      %v4839 = vpack.c.bf16 %v4790, %v4789
      %v4840 = vpack.c.bf16 %v4792, %v4791
      %v4841 = vpack.c.bf16 %v4794, %v4793
      %v4842 = vpack.c.bf16 %v4796, %v4795
      %v4843 = vpack.c.bf16 %v4798, %v4797
      %v4844 = vpack.c.bf16 %v4800, %v4799
      %v4845 = vpack.c.bf16 %v4802, %v4801
      %v4846 = vpack.c.bf16 %v4804, %v4803
      %v4847 = vpack.c.bf16 %v4806, %v4805
      %v4848 = vpack.c.bf16 %v4808, %v4807
      %v4849 = vpack.c.bf16 %v4810, %v4809
      %v4850 = vpack.c.bf16 %v4812, %v4811
      %v4851 = vpack.c.bf16 %v4814, %v4813
      %v4852 = vpack.c.bf16 %v4816, %v4815
      %v4853 = vpack.c.bf16 %v4818, %v4817
      %v4854 = vpack.c.bf16 %v4820, %v4819
      %v4855 = vpack.c.bf16 %v4822, %v4821
      %v4856 = vpack.c.bf16 %v4824, %v4823
      %4857 = vrot.lane.b32.xlu0 %v894, 56
      %v4858 = vpop.permute.xlu0 %4857
      %4859 = vrot.lane.b32.xlu0 %v895, 56
      %v4860 = vpop.permute.xlu0 %4859
      %4861 = vrot.lane.b32.xlu0 %v896, 56
      %v4862 = vpop.permute.xlu0 %4861
      %4863 = vrot.lane.b32.xlu0 %v897, 56
      %v4864 = vpop.permute.xlu0 %4863
      %v4870 = vsel %vm1799, %v4825, 0
      %v4873 = vsel %vm1799, %v4826, 0
      %v4876 = vsel %vm1799, %v4827, 0
      %v4879 = vsel %vm1799, %v4828, 0
      %4881 = vmatprep.subr.bf16.mxu0 0
      %4882 = vmatpush1.bf16.msra.mxu0 %v4858
      %4883 = vmatprep.subr.bf16.mxu0 0
      %4884 = vmatpush1.bf16.msra.mxu0 %v4860
      %4885 = vmatprep.subr.bf16.mxu0 0
      %4886 = vmatpush1.bf16.msra.mxu0 %v4862
      %4887 = vmatprep.subr.bf16.mxu0 0
      %4888 = vmatpush1.bf16.msra.mxu0 %v4864
      %4889 = vmatprep.subr.bf16.mxu0 0
      %4890 = vmatpush1.bf16.msra.mxu0 0
      %4891 = vmatprep.subr.bf16.mxu0 0
      %4892 = vmatpush1.bf16.msra.mxu0 0
      %4893 = vmatprep.subr.bf16.mxu0 0
      %4894 = vmatpush1.bf16.msra.mxu0 0
      %4895 = vmatprep.subr.bf16.mxu0 0
      %4896 = vmatpush1.bf16.msra.mxu0 0
      %4897 = vmatprep.subr.bf16.mxu0 0
      %4898 = vmatpush1.bf16.msra.mxu0 0
      %4899 = vmatprep.subr.bf16.mxu0 0
      %4900 = vmatpush1.bf16.msra.mxu0 0
      %4901 = vmatprep.subr.bf16.mxu0 0
      %4902 = vmatpush1.bf16.msra.mxu0 0
      %4903 = vmatprep.subr.bf16.mxu0 0
      %4904 = vmatpush1.bf16.msra.mxu0 0
      %4905 = vmatprep.subr.bf16.mxu0 0
      %4906 = vmatpush1.bf16.msra.mxu0 0
      %4907 = vmatprep.subr.bf16.mxu0 0
      %4908 = vmatpush1.bf16.msra.mxu0 0
      %4909 = vmatprep.subr.bf16.mxu0 0
      %4910 = vmatpush1.bf16.msra.mxu0 0
      %4911 = vmatprep.subr.bf16.mxu0 0
      %4912 = vmatpush1.bf16.msra.mxu0 0
      %4913 = vmatprep.mubr.bf16.mxu0 0
      %4914 = vmatmul.mubr.bf16.gmra.mrb[0].mxu0 %v4870
      %v4915 = vpop.f32.mrb[0].mxu0
      %v4916 = vadd.f32 0.0, %v4915
      %v4917 = vpop.f32.mrb[0].mxu0
      %v4918 = vpop.f32.mrb[0].mxu0
      %v4919 = vadd.f32 0.0, %v4918
      %v4920 = vpop.f32.mrb[0].mxu0
      %4921 = vmatprep.mubr.bf16.mxu0 0
      %4922 = vmatmul.mubr.bf16.gmra.mrb[0].mxu0 %v4873
      %v4923 = vpop.f32.mrb[0].mxu0
      %v4924 = vadd.f32 0.0, %v4923
      %v4925 = vpop.f32.mrb[0].mxu0
      %v4926 = vpop.f32.mrb[0].mxu0
      %v4927 = vadd.f32 0.0, %v4926
      %v4928 = vpop.f32.mrb[0].mxu0
      %4929 = vmatprep.mubr.bf16.mxu0 0
      %4930 = vmatmul.mubr.bf16.gmra.mrb[0].mxu0 %v4876
      %v4931 = vpop.f32.mrb[0].mxu0
      %v4932 = vadd.f32 0.0, %v4931
      %v4933 = vpop.f32.mrb[0].mxu0
      %v4934 = vpop.f32.mrb[0].mxu0
      %v4935 = vadd.f32 0.0, %v4934
      %v4936 = vpop.f32.mrb[0].mxu0
      %4937 = vmatprep.mubr.bf16.mxu0 0
      %4938 = vmatmul.mubr.bf16.gmra.mrb[0].mxu0 %v4879
      %v4939 = vpop.f32.mrb[0].mxu0
      %v4940 = vadd.f32 0.0, %v4939
      %v4941 = vpop.f32.mrb[0].mxu0
      %v4942 = vpop.f32.mrb[0].mxu0
      %v4943 = vadd.f32 0.0, %v4942
      %v4944 = vpop.f32.mrb[0].mxu0
      %4945 = vdwg.mxu0
      %4946 = vrot.lane.b32.xlu0 %v898, 56
      %v4947 = vpop.permute.xlu0 %4946
      %4948 = vrot.lane.b32.xlu0 %v899, 56
      %v4949 = vpop.permute.xlu0 %4948
      %4950 = vrot.lane.b32.xlu0 %v900, 56
      %v4951 = vpop.permute.xlu0 %4950
      %4952 = vrot.lane.b32.xlu0 %v901, 56
      %v4953 = vpop.permute.xlu0 %4952
      %v4959 = vsel %vm1799, %v4829, 0
      %v4962 = vsel %vm1799, %v4830, 0
      %v4965 = vsel %vm1799, %v4831, 0
      %v4968 = vsel %vm1799, %v4832, 0
      %4970 = vmatprep.subr.bf16.mxu0 0
      %4971 = vmatpush1.bf16.msra.mxu0 %v4947
      %4972 = vmatprep.subr.bf16.mxu0 0
      %4973 = vmatpush1.bf16.msra.mxu0 %v4949
      %4974 = vmatprep.subr.bf16.mxu0 0
      %4975 = vmatpush1.bf16.msra.mxu0 %v4951
      %4976 = vmatprep.subr.bf16.mxu0 0
      %4977 = vmatpush1.bf16.msra.mxu0 %v4953
      %4978 = vmatprep.subr.bf16.mxu0 0
      %4979 = vmatpush1.bf16.msra.mxu0 0
      %4980 = vmatprep.subr.bf16.mxu0 0
      %4981 = vmatpush1.bf16.msra.mxu0 0
      %4982 = vmatprep.subr.bf16.mxu0 0
      %4983 = vmatpush1.bf16.msra.mxu0 0
      %4984 = vmatprep.subr.bf16.mxu0 0
      %4985 = vmatpush1.bf16.msra.mxu0 0
      %4986 = vmatprep.subr.bf16.mxu0 0
      %4987 = vmatpush1.bf16.msra.mxu0 0
      %4988 = vmatprep.subr.bf16.mxu0 0
      %4989 = vmatpush1.bf16.msra.mxu0 0
      %4990 = vmatprep.subr.bf16.mxu0 0
      %4991 = vmatpush1.bf16.msra.mxu0 0
      %4992 = vmatprep.subr.bf16.mxu0 0
      %4993 = vmatpush1.bf16.msra.mxu0 0
      %4994 = vmatprep.subr.bf16.mxu0 0
      %4995 = vmatpush1.bf16.msra.mxu0 0
      %4996 = vmatprep.subr.bf16.mxu0 0
      %4997 = vmatpush1.bf16.msra.mxu0 0
      %4998 = vmatprep.subr.bf16.mxu0 0
      %4999 = vmatpush1.bf16.msra.mxu0 0
      %5000 = vmatprep.subr.bf16.mxu0 0
      %5001 = vmatpush1.bf16.msra.mxu0 0
      %5002 = vmatprep.mubr.bf16.mxu0 0
      %5003 = vmatmul.mubr.bf16.gmra.mrb[0].mxu0 %v4959
      %v5004 = vpop.f32.mrb[0].mxu0
      %v5005 = vadd.f32 0.0, %v5004
      %v5006 = vpop.f32.mrb[0].mxu0
      %v5007 = vpop.f32.mrb[0].mxu0
      %v5008 = vadd.f32 0.0, %v5007
      %v5009 = vpop.f32.mrb[0].mxu0
      %5010 = vmatprep.mubr.bf16.mxu0 0
      %5011 = vmatmul.mubr.bf16.gmra.mrb[0].mxu0 %v4962
      %v5012 = vpop.f32.mrb[0].mxu0
      %v5013 = vadd.f32 0.0, %v5012
      %v5014 = vpop.f32.mrb[0].mxu0
      %v5015 = vpop.f32.mrb[0].mxu0
      %v5016 = vadd.f32 0.0, %v5015
      %v5017 = vpop.f32.mrb[0].mxu0
      %5018 = vmatprep.mubr.bf16.mxu0 0
      %5019 = vmatmul.mubr.bf16.gmra.mrb[0].mxu0 %v4965
      %v5020 = vpop.f32.mrb[0].mxu0
      %v5021 = vadd.f32 0.0, %v5020
      %v5022 = vpop.f32.mrb[0].mxu0
      %v5023 = vpop.f32.mrb[0].mxu0
      %v5024 = vadd.f32 0.0, %v5023
      %v5025 = vpop.f32.mrb[0].mxu0
      %5026 = vmatprep.mubr.bf16.mxu0 0
      %5027 = vmatmul.mubr.bf16.gmra.mrb[0].mxu0 %v4968
      %v5028 = vpop.f32.mrb[0].mxu0
      %v5029 = vadd.f32 0.0, %v5028
      %v5030 = vpop.f32.mrb[0].mxu0
      %v5031 = vpop.f32.mrb[0].mxu0
      %v5032 = vadd.f32 0.0, %v5031
      %v5033 = vpop.f32.mrb[0].mxu0
      %5034 = vdwg.mxu0
      %5035 = vrot.lane.b32.xlu0 %v902, 56
      %v5036 = vpop.permute.xlu0 %5035
      %5037 = vrot.lane.b32.xlu0 %v903, 56
      %v5038 = vpop.permute.xlu0 %5037
      %5039 = vrot.lane.b32.xlu0 %v904, 56
      %v5040 = vpop.permute.xlu0 %5039
      %5041 = vrot.lane.b32.xlu0 %v905, 56
      %v5042 = vpop.permute.xlu0 %5041
      %v5048 = vsel %vm1799, %v4833, 0
      %v5051 = vsel %vm1799, %v4834, 0
      %v5054 = vsel %vm1799, %v4835, 0
      %v5057 = vsel %vm1799, %v4836, 0
      %5059 = vmatprep.subr.bf16.mxu0 0
      %5060 = vmatpush1.bf16.msra.mxu0 %v5036
      %5061 = vmatprep.subr.bf16.mxu0 0
      %5062 = vmatpush1.bf16.msra.mxu0 %v5038
      %5063 = vmatprep.subr.bf16.mxu0 0
      %5064 = vmatpush1.bf16.msra.mxu0 %v5040
      %5065 = vmatprep.subr.bf16.mxu0 0
      %5066 = vmatpush1.bf16.msra.mxu0 %v5042
      %5067 = vmatprep.subr.bf16.mxu0 0
      %5068 = vmatpush1.bf16.msra.mxu0 0
      %5069 = vmatprep.subr.bf16.mxu0 0
      %5070 = vmatpush1.bf16.msra.mxu0 0
      %5071 = vmatprep.subr.bf16.mxu0 0
      %5072 = vmatpush1.bf16.msra.mxu0 0
      %5073 = vmatprep.subr.bf16.mxu0 0
      %5074 = vmatpush1.bf16.msra.mxu0 0
      %5075 = vmatprep.subr.bf16.mxu0 0
      %5076 = vmatpush1.bf16.msra.mxu0 0
      %5077 = vmatprep.subr.bf16.mxu0 0
      %5078 = vmatpush1.bf16.msra.mxu0 0
      %5079 = vmatprep.subr.bf16.mxu0 0
      %5080 = vmatpush1.bf16.msra.mxu0 0
      %5081 = vmatprep.subr.bf16.mxu0 0
      %5082 = vmatpush1.bf16.msra.mxu0 0
      %5083 = vmatprep.subr.bf16.mxu0 0
      %5084 = vmatpush1.bf16.msra.mxu0 0
      %5085 = vmatprep.subr.bf16.mxu0 0
      %5086 = vmatpush1.bf16.msra.mxu0 0
      %5087 = vmatprep.subr.bf16.mxu0 0
      %5088 = vmatpush1.bf16.msra.mxu0 0
      %5089 = vmatprep.subr.bf16.mxu0 0
      %5090 = vmatpush1.bf16.msra.mxu0 0
      %5091 = vmatprep.mubr.bf16.mxu0 0
      %5092 = vmatmul.mubr.bf16.gmra.mrb[0].mxu0 %v5048
      %v5093 = vpop.f32.mrb[0].mxu0
      %v5094 = vadd.f32 0.0, %v5093
      %v5095 = vpop.f32.mrb[0].mxu0
      %v5096 = vpop.f32.mrb[0].mxu0
      %v5097 = vadd.f32 0.0, %v5096
      %v5098 = vpop.f32.mrb[0].mxu0
      %5099 = vmatprep.mubr.bf16.mxu0 0
      %5100 = vmatmul.mubr.bf16.gmra.mrb[0].mxu0 %v5051
      %v5101 = vpop.f32.mrb[0].mxu0
      %v5102 = vadd.f32 0.0, %v5101
      %v5103 = vpop.f32.mrb[0].mxu0
      %v5104 = vpop.f32.mrb[0].mxu0
      %v5105 = vadd.f32 0.0, %v5104
      %v5106 = vpop.f32.mrb[0].mxu0
      %5107 = vmatprep.mubr.bf16.mxu0 0
      %5108 = vmatmul.mubr.bf16.gmra.mrb[0].mxu0 %v5054
      %v5109 = vpop.f32.mrb[0].mxu0
      %v5110 = vadd.f32 0.0, %v5109
      %v5111 = vpop.f32.mrb[0].mxu0
      %v5112 = vpop.f32.mrb[0].mxu0
      %v5113 = vadd.f32 0.0, %v5112
      %v5114 = vpop.f32.mrb[0].mxu0
      %5115 = vmatprep.mubr.bf16.mxu0 0
      %5116 = vmatmul.mubr.bf16.gmra.mrb[0].mxu0 %v5057
      %v5117 = vpop.f32.mrb[0].mxu0
      %v5118 = vadd.f32 0.0, %v5117
      %v5119 = vpop.f32.mrb[0].mxu0
      %v5120 = vpop.f32.mrb[0].mxu0
      %v5121 = vadd.f32 0.0, %v5120
      %v5122 = vpop.f32.mrb[0].mxu0
      %5123 = vdwg.mxu0
      %5124 = vrot.lane.b32.xlu0 %v906, 56
      %v5125 = vpop.permute.xlu0 %5124
      %5126 = vrot.lane.b32.xlu0 %v907, 56
      %v5127 = vpop.permute.xlu0 %5126
      %5128 = vrot.lane.b32.xlu0 %v908, 56
      %v5129 = vpop.permute.xlu0 %5128
      %5130 = vrot.lane.b32.xlu0 %v909, 56
      %v5131 = vpop.permute.xlu0 %5130
      %v5137 = vsel %vm1799, %v4837, 0
      %v5140 = vsel %vm1799, %v4838, 0
      %v5143 = vsel %vm1799, %v4839, 0
      %v5146 = vsel %vm1799, %v4840, 0
      %5148 = vmatprep.subr.bf16.mxu0 0
      %5149 = vmatpush1.bf16.msra.mxu0 %v5125
      %5150 = vmatprep.subr.bf16.mxu0 0
      %5151 = vmatpush1.bf16.msra.mxu0 %v5127
      %5152 = vmatprep.subr.bf16.mxu0 0
      %5153 = vmatpush1.bf16.msra.mxu0 %v5129
      %5154 = vmatprep.subr.bf16.mxu0 0
      %5155 = vmatpush1.bf16.msra.mxu0 %v5131
      %5156 = vmatprep.subr.bf16.mxu0 0
      %5157 = vmatpush1.bf16.msra.mxu0 0
      %5158 = vmatprep.subr.bf16.mxu0 0
      %5159 = vmatpush1.bf16.msra.mxu0 0
      %5160 = vmatprep.subr.bf16.mxu0 0
      %5161 = vmatpush1.bf16.msra.mxu0 0
      %5162 = vmatprep.subr.bf16.mxu0 0
      %5163 = vmatpush1.bf16.msra.mxu0 0
      %5164 = vmatprep.subr.bf16.mxu0 0
      %5165 = vmatpush1.bf16.msra.mxu0 0
      %5166 = vmatprep.subr.bf16.mxu0 0
      %5167 = vmatpush1.bf16.msra.mxu0 0
      %5168 = vmatprep.subr.bf16.mxu0 0
      %5169 = vmatpush1.bf16.msra.mxu0 0
      %5170 = vmatprep.subr.bf16.mxu0 0
      %5171 = vmatpush1.bf16.msra.mxu0 0
      %5172 = vmatprep.subr.bf16.mxu0 0
      %5173 = vmatpush1.bf16.msra.mxu0 0
      %5174 = vmatprep.subr.bf16.mxu0 0
      %5175 = vmatpush1.bf16.msra.mxu0 0
      %5176 = vmatprep.subr.bf16.mxu0 0
      %5177 = vmatpush1.bf16.msra.mxu0 0
      %5178 = vmatprep.subr.bf16.mxu0 0
      %5179 = vmatpush1.bf16.msra.mxu0 0
      %5180 = vmatprep.mubr.bf16.mxu0 0
      %5181 = vmatmul.mubr.bf16.gmra.mrb[0].mxu0 %v5137
      %v5182 = vpop.f32.mrb[0].mxu0
      %v5183 = vadd.f32 0.0, %v5182
      %v5184 = vpop.f32.mrb[0].mxu0
      %v5185 = vpop.f32.mrb[0].mxu0
      %v5186 = vadd.f32 0.0, %v5185
      %v5187 = vpop.f32.mrb[0].mxu0
      %5188 = vmatprep.mubr.bf16.mxu0 0
      %5189 = vmatmul.mubr.bf16.gmra.mrb[0].mxu0 %v5140
      %v5190 = vpop.f32.mrb[0].mxu0
      %v5191 = vadd.f32 0.0, %v5190
      %v5192 = vpop.f32.mrb[0].mxu0
      %v5193 = vpop.f32.mrb[0].mxu0
      %v5194 = vadd.f32 0.0, %v5193
      %v5195 = vpop.f32.mrb[0].mxu0
      %5196 = vmatprep.mubr.bf16.mxu0 0
      %5197 = vmatmul.mubr.bf16.gmra.mrb[0].mxu0 %v5143
      %v5198 = vpop.f32.mrb[0].mxu0
      %v5199 = vadd.f32 0.0, %v5198
      %v5200 = vpop.f32.mrb[0].mxu0
      %v5201 = vpop.f32.mrb[0].mxu0
      %v5202 = vadd.f32 0.0, %v5201
      %v5203 = vpop.f32.mrb[0].mxu0
      %5204 = vmatprep.mubr.bf16.mxu0 0
      %5205 = vmatmul.mubr.bf16.gmra.mrb[0].mxu0 %v5146
      %v5206 = vpop.f32.mrb[0].mxu0
      %v5207 = vadd.f32 0.0, %v5206
      %v5208 = vpop.f32.mrb[0].mxu0
      %v5209 = vpop.f32.mrb[0].mxu0
      %v5210 = vadd.f32 0.0, %v5209
      %v5211 = vpop.f32.mrb[0].mxu0
      %5212 = vdwg.mxu0
      %5213 = vrot.lane.b32.xlu0 %v910, 56
      %v5214 = vpop.permute.xlu0 %5213
      %5215 = vrot.lane.b32.xlu0 %v911, 56
      %v5216 = vpop.permute.xlu0 %5215
      %5217 = vrot.lane.b32.xlu0 %v912, 56
      %v5218 = vpop.permute.xlu0 %5217
      %5219 = vrot.lane.b32.xlu0 %v913, 56
      %v5220 = vpop.permute.xlu0 %5219
      %v5226 = vsel %vm1799, %v4841, 0
      %v5229 = vsel %vm1799, %v4842, 0
      %v5232 = vsel %vm1799, %v4843, 0
      %v5235 = vsel %vm1799, %v4844, 0
      %5237 = vmatprep.subr.bf16.mxu0 0
      %5238 = vmatpush1.bf16.msra.mxu0 %v5214
      %5239 = vmatprep.subr.bf16.mxu0 0
      %5240 = vmatpush1.bf16.msra.mxu0 %v5216
      %5241 = vmatprep.subr.bf16.mxu0 0
      %5242 = vmatpush1.bf16.msra.mxu0 %v5218
      %5243 = vmatprep.subr.bf16.mxu0 0
      %5244 = vmatpush1.bf16.msra.mxu0 %v5220
      %5245 = vmatprep.subr.bf16.mxu0 0
      %5246 = vmatpush1.bf16.msra.mxu0 0
      %5247 = vmatprep.subr.bf16.mxu0 0
      %5248 = vmatpush1.bf16.msra.mxu0 0
      %5249 = vmatprep.subr.bf16.mxu0 0
      %5250 = vmatpush1.bf16.msra.mxu0 0
      %5251 = vmatprep.subr.bf16.mxu0 0
      %5252 = vmatpush1.bf16.msra.mxu0 0
      %5253 = vmatprep.subr.bf16.mxu0 0
      %5254 = vmatpush1.bf16.msra.mxu0 0
      %5255 = vmatprep.subr.bf16.mxu0 0
      %5256 = vmatpush1.bf16.msra.mxu0 0
      %5257 = vmatprep.subr.bf16.mxu0 0
      %5258 = vmatpush1.bf16.msra.mxu0 0
      %5259 = vmatprep.subr.bf16.mxu0 0
      %5260 = vmatpush1.bf16.msra.mxu0 0
      %5261 = vmatprep.subr.bf16.mxu0 0
      %5262 = vmatpush1.bf16.msra.mxu0 0
      %5263 = vmatprep.subr.bf16.mxu0 0
      %5264 = vmatpush1.bf16.msra.mxu0 0
      %5265 = vmatprep.subr.bf16.mxu0 0
      %5266 = vmatpush1.bf16.msra.mxu0 0
      %5267 = vmatprep.subr.bf16.mxu0 0
      %5268 = vmatpush1.bf16.msra.mxu0 0
      %5269 = vmatprep.mubr.bf16.mxu0 0
      %5270 = vmatmul.mubr.bf16.gmra.mrb[0].mxu0 %v5226
      %v5271 = vpop.f32.mrb[0].mxu0
      %v5272 = vadd.f32 0.0, %v5271
      %v5273 = vpop.f32.mrb[0].mxu0
      %v5274 = vpop.f32.mrb[0].mxu0
      %v5275 = vadd.f32 0.0, %v5274
      %v5276 = vpop.f32.mrb[0].mxu0
      %5277 = vmatprep.mubr.bf16.mxu0 0
      %5278 = vmatmul.mubr.bf16.gmra.mrb[0].mxu0 %v5229
      %v5279 = vpop.f32.mrb[0].mxu0
      %v5280 = vadd.f32 0.0, %v5279
      %v5281 = vpop.f32.mrb[0].mxu0
      %v5282 = vpop.f32.mrb[0].mxu0
      %v5283 = vadd.f32 0.0, %v5282
      %v5284 = vpop.f32.mrb[0].mxu0
      %5285 = vmatprep.mubr.bf16.mxu0 0
      %5286 = vmatmul.mubr.bf16.gmra.mrb[0].mxu0 %v5232
      %v5287 = vpop.f32.mrb[0].mxu0
      %v5288 = vadd.f32 0.0, %v5287
      %v5289 = vpop.f32.mrb[0].mxu0
      %v5290 = vpop.f32.mrb[0].mxu0
      %v5291 = vadd.f32 0.0, %v5290
      %v5292 = vpop.f32.mrb[0].mxu0
      %5293 = vmatprep.mubr.bf16.mxu0 0
      %5294 = vmatmul.mubr.bf16.gmra.mrb[0].mxu0 %v5235
      %v5295 = vpop.f32.mrb[0].mxu0
      %v5296 = vadd.f32 0.0, %v5295
      %v5297 = vpop.f32.mrb[0].mxu0
      %v5298 = vpop.f32.mrb[0].mxu0
      %v5299 = vadd.f32 0.0, %v5298
      %v5300 = vpop.f32.mrb[0].mxu0
      %5301 = vdwg.mxu0
      %5302 = vrot.lane.b32.xlu0 %v914, 56
      %v5303 = vpop.permute.xlu0 %5302
      %5304 = vrot.lane.b32.xlu0 %v915, 56
      %v5305 = vpop.permute.xlu0 %5304
      %5306 = vrot.lane.b32.xlu0 %v916, 56
      %v5307 = vpop.permute.xlu0 %5306
      %5308 = vrot.lane.b32.xlu0 %v917, 56
      %v5309 = vpop.permute.xlu0 %5308
      %v5315 = vsel %vm1799, %v4845, 0
      %v5318 = vsel %vm1799, %v4846, 0
      %v5321 = vsel %vm1799, %v4847, 0
      %v5324 = vsel %vm1799, %v4848, 0
      %5326 = vmatprep.subr.bf16.mxu0 0
      %5327 = vmatpush1.bf16.msra.mxu0 %v5303
      %5328 = vmatprep.subr.bf16.mxu0 0
      %5329 = vmatpush1.bf16.msra.mxu0 %v5305
      %5330 = vmatprep.subr.bf16.mxu0 0
      %5331 = vmatpush1.bf16.msra.mxu0 %v5307
      %5332 = vmatprep.subr.bf16.mxu0 0
      %5333 = vmatpush1.bf16.msra.mxu0 %v5309
      %5334 = vmatprep.subr.bf16.mxu0 0
      %5335 = vmatpush1.bf16.msra.mxu0 0
      %5336 = vmatprep.subr.bf16.mxu0 0
      %5337 = vmatpush1.bf16.msra.mxu0 0
      %5338 = vmatprep.subr.bf16.mxu0 0
      %5339 = vmatpush1.bf16.msra.mxu0 0
      %5340 = vmatprep.subr.bf16.mxu0 0
      %5341 = vmatpush1.bf16.msra.mxu0 0
      %5342 = vmatprep.subr.bf16.mxu0 0
      %5343 = vmatpush1.bf16.msra.mxu0 0
      %5344 = vmatprep.subr.bf16.mxu0 0
      %5345 = vmatpush1.bf16.msra.mxu0 0
      %5346 = vmatprep.subr.bf16.mxu0 0
      %5347 = vmatpush1.bf16.msra.mxu0 0
      %5348 = vmatprep.subr.bf16.mxu0 0
      %5349 = vmatpush1.bf16.msra.mxu0 0
      %5350 = vmatprep.subr.bf16.mxu0 0
      %5351 = vmatpush1.bf16.msra.mxu0 0
      %5352 = vmatprep.subr.bf16.mxu0 0
      %5353 = vmatpush1.bf16.msra.mxu0 0
      %5354 = vmatprep.subr.bf16.mxu0 0
      %5355 = vmatpush1.bf16.msra.mxu0 0
      %5356 = vmatprep.subr.bf16.mxu0 0
      %5357 = vmatpush1.bf16.msra.mxu0 0
      %5358 = vmatprep.mubr.bf16.mxu0 0
      %5359 = vmatmul.mubr.bf16.gmra.mrb[0].mxu0 %v5315
      %v5360 = vpop.f32.mrb[0].mxu0
      %v5361 = vadd.f32 0.0, %v5360
      %v5362 = vpop.f32.mrb[0].mxu0
      %v5363 = vpop.f32.mrb[0].mxu0
      %v5364 = vadd.f32 0.0, %v5363
      %v5365 = vpop.f32.mrb[0].mxu0
      %5366 = vmatprep.mubr.bf16.mxu0 0
      %5367 = vmatmul.mubr.bf16.gmra.mrb[0].mxu0 %v5318
      %v5368 = vpop.f32.mrb[0].mxu0
      %v5369 = vadd.f32 0.0, %v5368
      %v5370 = vpop.f32.mrb[0].mxu0
      %v5371 = vpop.f32.mrb[0].mxu0
      %v5372 = vadd.f32 0.0, %v5371
      %v5373 = vpop.f32.mrb[0].mxu0
      %5374 = vmatprep.mubr.bf16.mxu0 0
      %5375 = vmatmul.mubr.bf16.gmra.mrb[0].mxu0 %v5321
      %v5376 = vpop.f32.mrb[0].mxu0
      %v5377 = vadd.f32 0.0, %v5376
      %v5378 = vpop.f32.mrb[0].mxu0
      %v5379 = vpop.f32.mrb[0].mxu0
      %v5380 = vadd.f32 0.0, %v5379
      %v5381 = vpop.f32.mrb[0].mxu0
      %5382 = vmatprep.mubr.bf16.mxu0 0
      %5383 = vmatmul.mubr.bf16.gmra.mrb[0].mxu0 %v5324
      %v5384 = vpop.f32.mrb[0].mxu0
      %v5385 = vadd.f32 0.0, %v5384
      %v5386 = vpop.f32.mrb[0].mxu0
      %v5387 = vpop.f32.mrb[0].mxu0
      %v5388 = vadd.f32 0.0, %v5387
      %v5389 = vpop.f32.mrb[0].mxu0
      %5390 = vdwg.mxu0
      %5391 = vrot.lane.b32.xlu0 %v918, 56
      %v5392 = vpop.permute.xlu0 %5391
      %5393 = vrot.lane.b32.xlu0 %v919, 56
      %v5394 = vpop.permute.xlu0 %5393
      %5395 = vrot.lane.b32.xlu0 %v920, 56
      %v5396 = vpop.permute.xlu0 %5395
      %5397 = vrot.lane.b32.xlu0 %v921, 56
      %v5398 = vpop.permute.xlu0 %5397
      %v5404 = vsel %vm1799, %v4849, 0
      %v5407 = vsel %vm1799, %v4850, 0
      %v5410 = vsel %vm1799, %v4851, 0
      %v5413 = vsel %vm1799, %v4852, 0
      %5415 = vmatprep.subr.bf16.mxu0 0
      %5416 = vmatpush1.bf16.msra.mxu0 %v5392
      %5417 = vmatprep.subr.bf16.mxu0 0
      %5418 = vmatpush1.bf16.msra.mxu0 %v5394
      %5419 = vmatprep.subr.bf16.mxu0 0
      %5420 = vmatpush1.bf16.msra.mxu0 %v5396
      %5421 = vmatprep.subr.bf16.mxu0 0
      %5422 = vmatpush1.bf16.msra.mxu0 %v5398
      %5423 = vmatprep.subr.bf16.mxu0 0
      %5424 = vmatpush1.bf16.msra.mxu0 0
      %5425 = vmatprep.subr.bf16.mxu0 0
      %5426 = vmatpush1.bf16.msra.mxu0 0
      %5427 = vmatprep.subr.bf16.mxu0 0
      %5428 = vmatpush1.bf16.msra.mxu0 0
      %5429 = vmatprep.subr.bf16.mxu0 0
      %5430 = vmatpush1.bf16.msra.mxu0 0
      %5431 = vmatprep.subr.bf16.mxu0 0
      %5432 = vmatpush1.bf16.msra.mxu0 0
      %5433 = vmatprep.subr.bf16.mxu0 0
      %5434 = vmatpush1.bf16.msra.mxu0 0
      %5435 = vmatprep.subr.bf16.mxu0 0
      %5436 = vmatpush1.bf16.msra.mxu0 0
      %5437 = vmatprep.subr.bf16.mxu0 0
      %5438 = vmatpush1.bf16.msra.mxu0 0
      %5439 = vmatprep.subr.bf16.mxu0 0
      %5440 = vmatpush1.bf16.msra.mxu0 0
      %5441 = vmatprep.subr.bf16.mxu0 0
      %5442 = vmatpush1.bf16.msra.mxu0 0
      %5443 = vmatprep.subr.bf16.mxu0 0
      %5444 = vmatpush1.bf16.msra.mxu0 0
      %5445 = vmatprep.subr.bf16.mxu0 0
      %5446 = vmatpush1.bf16.msra.mxu0 0
      %5447 = vmatprep.mubr.bf16.mxu0 0
      %5448 = vmatmul.mubr.bf16.gmra.mrb[0].mxu0 %v5404
      %v5449 = vpop.f32.mrb[0].mxu0
      %v5450 = vadd.f32 0.0, %v5449
      %v5451 = vpop.f32.mrb[0].mxu0
      %v5452 = vpop.f32.mrb[0].mxu0
      %v5453 = vadd.f32 0.0, %v5452
      %v5454 = vpop.f32.mrb[0].mxu0
      %5455 = vmatprep.mubr.bf16.mxu0 0
      %5456 = vmatmul.mubr.bf16.gmra.mrb[0].mxu0 %v5407
      %v5457 = vpop.f32.mrb[0].mxu0
      %v5458 = vadd.f32 0.0, %v5457
      %v5459 = vpop.f32.mrb[0].mxu0
      %v5460 = vpop.f32.mrb[0].mxu0
      %v5461 = vadd.f32 0.0, %v5460
      %v5462 = vpop.f32.mrb[0].mxu0
      %5463 = vmatprep.mubr.bf16.mxu0 0
      %5464 = vmatmul.mubr.bf16.gmra.mrb[0].mxu0 %v5410
      %v5465 = vpop.f32.mrb[0].mxu0
      %v5466 = vadd.f32 0.0, %v5465
      %v5467 = vpop.f32.mrb[0].mxu0
      %v5468 = vpop.f32.mrb[0].mxu0
      %v5469 = vadd.f32 0.0, %v5468
      %v5470 = vpop.f32.mrb[0].mxu0
      %5471 = vmatprep.mubr.bf16.mxu0 0
      %5472 = vmatmul.mubr.bf16.gmra.mrb[0].mxu0 %v5413
      %v5473 = vpop.f32.mrb[0].mxu0
      %v5474 = vadd.f32 0.0, %v5473
      %v5475 = vpop.f32.mrb[0].mxu0
      %v5476 = vpop.f32.mrb[0].mxu0
      %v5477 = vadd.f32 0.0, %v5476
      %v5478 = vpop.f32.mrb[0].mxu0
      %5479 = vdwg.mxu0
      %5480 = vrot.lane.b32.xlu0 %v922, 56
      %v5481 = vpop.permute.xlu0 %5480
      %5482 = vrot.lane.b32.xlu0 %v923, 56
      %v5483 = vpop.permute.xlu0 %5482
      %5484 = vrot.lane.b32.xlu0 %v924, 56
      %v5485 = vpop.permute.xlu0 %5484
      %5486 = vrot.lane.b32.xlu0 %v925, 56
      %v5487 = vpop.permute.xlu0 %5486
      %v5493 = vsel %vm1799, %v4853, 0
      %v5496 = vsel %vm1799, %v4854, 0
      %v5499 = vsel %vm1799, %v4855, 0
      %v5502 = vsel %vm1799, %v4856, 0
      %5504 = vmatprep.subr.bf16.mxu0 0
      %5505 = vmatpush1.bf16.msra.mxu0 %v5481
      %5506 = vmatprep.subr.bf16.mxu0 0
      %5507 = vmatpush1.bf16.msra.mxu0 %v5483
      %5508 = vmatprep.subr.bf16.mxu0 0
      %5509 = vmatpush1.bf16.msra.mxu0 %v5485
      %5510 = vmatprep.subr.bf16.mxu0 0
      %5511 = vmatpush1.bf16.msra.mxu0 %v5487
      %5512 = vmatprep.subr.bf16.mxu0 0
      %5513 = vmatpush1.bf16.msra.mxu0 0
      %5514 = vmatprep.subr.bf16.mxu0 0
      %5515 = vmatpush1.bf16.msra.mxu0 0
      %5516 = vmatprep.subr.bf16.mxu0 0
      %5517 = vmatpush1.bf16.msra.mxu0 0
      %5518 = vmatprep.subr.bf16.mxu0 0
      %5519 = vmatpush1.bf16.msra.mxu0 0
      %5520 = vmatprep.subr.bf16.mxu0 0
      %5521 = vmatpush1.bf16.msra.mxu0 0
      %5522 = vmatprep.subr.bf16.mxu0 0
      %5523 = vmatpush1.bf16.msra.mxu0 0
      %5524 = vmatprep.subr.bf16.mxu0 0
      %5525 = vmatpush1.bf16.msra.mxu0 0
      %5526 = vmatprep.subr.bf16.mxu0 0
      %5527 = vmatpush1.bf16.msra.mxu0 0
      %5528 = vmatprep.subr.bf16.mxu0 0
      %5529 = vmatpush1.bf16.msra.mxu0 0
      %5530 = vmatprep.subr.bf16.mxu0 0
      %5531 = vmatpush1.bf16.msra.mxu0 0
      %5532 = vmatprep.subr.bf16.mxu0 0
      %5533 = vmatpush1.bf16.msra.mxu0 0
      %5534 = vmatprep.subr.bf16.mxu0 0
      %5535 = vmatpush1.bf16.msra.mxu0 0
      %5536 = vmatprep.mubr.bf16.mxu0 0
      %5537 = vmatmul.mubr.bf16.gmra.mrb[0].mxu0 %v5493
      %v5538 = vpop.f32.mrb[0].mxu0
      %v5539 = vadd.f32 0.0, %v5538
      %v5540 = vpop.f32.mrb[0].mxu0
      %v5541 = vpop.f32.mrb[0].mxu0
      %v5542 = vadd.f32 0.0, %v5541
      %v5543 = vpop.f32.mrb[0].mxu0
      %5544 = vmatprep.mubr.bf16.mxu0 0
      %5545 = vmatmul.mubr.bf16.gmra.mrb[0].mxu0 %v5496
      %v5546 = vpop.f32.mrb[0].mxu0
      %v5547 = vadd.f32 0.0, %v5546
      %v5548 = vpop.f32.mrb[0].mxu0
      %v5549 = vpop.f32.mrb[0].mxu0
      %v5550 = vadd.f32 0.0, %v5549
      %v5551 = vpop.f32.mrb[0].mxu0
      %5552 = vmatprep.mubr.bf16.mxu0 0
      %5553 = vmatmul.mubr.bf16.gmra.mrb[0].mxu0 %v5499
      %v5554 = vpop.f32.mrb[0].mxu0
      %v5555 = vadd.f32 0.0, %v5554
      %v5556 = vpop.f32.mrb[0].mxu0
      %v5557 = vpop.f32.mrb[0].mxu0
      %v5558 = vadd.f32 0.0, %v5557
      %v5559 = vpop.f32.mrb[0].mxu0
      %5560 = vmatprep.mubr.bf16.mxu0 0
      %5561 = vmatmul.mubr.bf16.gmra.mrb[0].mxu0 %v5502
      %v5562 = vpop.f32.mrb[0].mxu0
      %v5563 = vadd.f32 0.0, %v5562
      %v5564 = vpop.f32.mrb[0].mxu0
      %v5565 = vpop.f32.mrb[0].mxu0
      %v5566 = vadd.f32 0.0, %v5565
      %v5567 = vpop.f32.mrb[0].mxu0
      %5568 = vdwg.mxu0
      %v5569 = vpack.c.bf16 %v4919, %v4916
      %v5570 = vpack.c.bf16 %v4927, %v4924
      %v5571 = vpack.c.bf16 %v4935, %v4932
      %v5572 = vpack.c.bf16 %v4943, %v4940
      %v5573 = vpack.c.bf16 %v5008, %v5005
      %v5574 = vpack.c.bf16 %v5016, %v5013
      %v5575 = vpack.c.bf16 %v5024, %v5021
      %v5576 = vpack.c.bf16 %v5032, %v5029
      %v5577 = vpack.c.bf16 %v5097, %v5094
      %v5578 = vpack.c.bf16 %v5105, %v5102
      %v5579 = vpack.c.bf16 %v5113, %v5110
      %v5580 = vpack.c.bf16 %v5121, %v5118
      %v5581 = vpack.c.bf16 %v5186, %v5183
      %v5582 = vpack.c.bf16 %v5194, %v5191
      %v5583 = vpack.c.bf16 %v5202, %v5199
      %v5584 = vpack.c.bf16 %v5210, %v5207
      %v5585 = vpack.c.bf16 %v5275, %v5272
      %v5586 = vpack.c.bf16 %v5283, %v5280
      %v5587 = vpack.c.bf16 %v5291, %v5288
      %v5588 = vpack.c.bf16 %v5299, %v5296
      %v5589 = vpack.c.bf16 %v5364, %v5361
      %v5590 = vpack.c.bf16 %v5372, %v5369
      %v5591 = vpack.c.bf16 %v5380, %v5377
      %v5592 = vpack.c.bf16 %v5388, %v5385
      %v5593 = vpack.c.bf16 %v5453, %v5450
      %v5594 = vpack.c.bf16 %v5461, %v5458
      %v5595 = vpack.c.bf16 %v5469, %v5466
      %v5596 = vpack.c.bf16 %v5477, %v5474
      %v5597 = vpack.c.bf16 %v5542, %v5539
      %v5598 = vpack.c.bf16 %v5550, %v5547
      %v5599 = vpack.c.bf16 %v5558, %v5555
      %v5600 = vpack.c.bf16 %v5566, %v5563
      %s5601 = scalar_lea.vmem %s4, 4
      %v5602 = vld [vmem:[%s5601] sm:$0xf]
      %v5604 = vsel %vm1002, %v5569, 0
      %v5607 = vsel %vm1002, %v5570, 0
      %v5610 = vsel %vm1002, %v5571, 0
      %v5613 = vsel %vm1002, %v5572, 0
      %v5616 = vsel %vm1002, %v5573, 0
      %v5619 = vsel %vm1002, %v5574, 0
      %v5622 = vsel %vm1002, %v5575, 0
      %v5625 = vsel %vm1002, %v5576, 0
      %v5628 = vsel %vm1002, %v5577, 0
      %v5631 = vsel %vm1002, %v5578, 0
      %v5634 = vsel %vm1002, %v5579, 0
      %v5637 = vsel %vm1002, %v5580, 0
      %v5640 = vsel %vm1002, %v5581, 0
      %v5643 = vsel %vm1002, %v5582, 0
      %v5646 = vsel %vm1002, %v5583, 0
      %v5649 = vsel %vm1002, %v5584, 0
      %v5652 = vsel %vm1002, %v5585, 0
      %v5655 = vsel %vm1002, %v5586, 0
      %v5658 = vsel %vm1002, %v5587, 0
      %v5661 = vsel %vm1002, %v5588, 0
      %v5664 = vsel %vm1002, %v5589, 0
      %v5667 = vsel %vm1002, %v5590, 0
      %v5670 = vsel %vm1002, %v5591, 0
      %v5673 = vsel %vm1002, %v5592, 0
      %v5676 = vsel %vm1002, %v5593, 0
      %v5679 = vsel %vm1002, %v5594, 0
      %v5682 = vsel %vm1002, %v5595, 0
      %v5685 = vsel %vm1002, %v5596, 0
      %v5688 = vsel %vm1002, %v5597, 0
      %v5691 = vsel %vm1002, %v5598, 0
      %v5694 = vsel %vm1002, %v5599, 0
      %v5697 = vsel %vm1002, %v5600, 0
      %vm5699 = vcmask 1043456
      %v5701 = vsel %vm5699, %v5602, 0
      %5703 = vmatprep.subr.bf16.mxu0 0
      %5704 = vmatpush1.bf16.msra.mxu0 %v5701
      %5705 = vmatprep.subr.bf16.mxu0 0
      %5706 = vmatpush1.bf16.msra.mxu0 0
      %5707 = vmatprep.subr.bf16.mxu0 0
      %5708 = vmatpush1.bf16.msra.mxu0 0
      %5709 = vmatprep.subr.bf16.mxu0 0
      %5710 = vmatpush1.bf16.msra.mxu0 0
      %5711 = vmatprep.subr.bf16.mxu0 0
      %5712 = vmatpush1.bf16.msra.mxu0 0
      %5713 = vmatprep.subr.bf16.mxu0 0
      %5714 = vmatpush1.bf16.msra.mxu0 0
      %5715 = vmatprep.subr.bf16.mxu0 0
      %5716 = vmatpush1.bf16.msra.mxu0 0
      %5717 = vmatprep.subr.bf16.mxu0 0
      %5718 = vmatpush1.bf16.msra.mxu0 0
      %5719 = vmatprep.subr.bf16.mxu0 0
      %5720 = vmatpush1.bf16.msra.mxu0 0
      %5721 = vmatprep.subr.bf16.mxu0 0
      %5722 = vmatpush1.bf16.msra.mxu0 0
      %5723 = vmatprep.subr.bf16.mxu0 0
      %5724 = vmatpush1.bf16.msra.mxu0 0
      %5725 = vmatprep.subr.bf16.mxu0 0
      %5726 = vmatpush1.bf16.msra.mxu0 0
      %5727 = vmatprep.subr.bf16.mxu0 0
      %5728 = vmatpush1.bf16.msra.mxu0 0
      %5729 = vmatprep.subr.bf16.mxu0 0
      %5730 = vmatpush1.bf16.msra.mxu0 0
      %5731 = vmatprep.subr.bf16.mxu0 0
      %5732 = vmatpush1.bf16.msra.mxu0 0
      %5733 = vmatprep.subr.bf16.mxu0 0
      %5734 = vmatpush1.bf16.msra.mxu0 0
      %5735 = vmatprep.mubr.bf16.mxu0 0
      %5736 = vmatmul.mubr.bf16.gmra.mrb[0].mxu0 %v5604
      %v5737 = vpop.f32.mrb[0].mxu0
      %v5738 = vadd.f32 0.0, %v5737
      %v5739 = vpop.f32.mrb[0].mxu0
      %v5740 = vpop.f32.mrb[0].mxu0
      %v5741 = vadd.f32 0.0, %v5740
      %v5742 = vpop.f32.mrb[0].mxu0
      %5743 = vmatprep.mubr.bf16.mxu0 0
      %5744 = vmatmul.mubr.bf16.gmra.mrb[0].mxu0 %v5607
      %v5745 = vpop.f32.mrb[0].mxu0
      %v5746 = vadd.f32 0.0, %v5745
      %v5747 = vpop.f32.mrb[0].mxu0
      %v5748 = vpop.f32.mrb[0].mxu0
      %v5749 = vadd.f32 0.0, %v5748
      %v5750 = vpop.f32.mrb[0].mxu0
      %5751 = vmatprep.mubr.bf16.mxu0 0
      %5752 = vmatmul.mubr.bf16.gmra.mrb[0].mxu0 %v5610
      %v5753 = vpop.f32.mrb[0].mxu0
      %v5754 = vadd.f32 0.0, %v5753
      %v5755 = vpop.f32.mrb[0].mxu0
      %v5756 = vpop.f32.mrb[0].mxu0
      %v5757 = vadd.f32 0.0, %v5756
      %v5758 = vpop.f32.mrb[0].mxu0
      %5759 = vmatprep.mubr.bf16.mxu0 0
      %5760 = vmatmul.mubr.bf16.gmra.mrb[0].mxu0 %v5613
      %v5761 = vpop.f32.mrb[0].mxu0
      %v5762 = vadd.f32 0.0, %v5761
      %v5763 = vpop.f32.mrb[0].mxu0
      %v5764 = vpop.f32.mrb[0].mxu0
      %v5765 = vadd.f32 0.0, %v5764
      %v5766 = vpop.f32.mrb[0].mxu0
      %5767 = vmatprep.mubr.bf16.mxu0 0
      %5768 = vmatmul.mubr.bf16.gmra.mrb[0].mxu0 %v5616
      %v5769 = vpop.f32.mrb[0].mxu0
      %v5770 = vadd.f32 0.0, %v5769
      %v5771 = vpop.f32.mrb[0].mxu0
      %v5772 = vpop.f32.mrb[0].mxu0
      %v5773 = vadd.f32 0.0, %v5772
      %v5774 = vpop.f32.mrb[0].mxu0
      %5775 = vmatprep.mubr.bf16.mxu0 0
      %5776 = vmatmul.mubr.bf16.gmra.mrb[0].mxu0 %v5619
      %v5777 = vpop.f32.mrb[0].mxu0
      %v5778 = vadd.f32 0.0, %v5777
      %v5779 = vpop.f32.mrb[0].mxu0
      %v5780 = vpop.f32.mrb[0].mxu0
      %v5781 = vadd.f32 0.0, %v5780
      %v5782 = vpop.f32.mrb[0].mxu0
      %5783 = vmatprep.mubr.bf16.mxu0 0
      %5784 = vmatmul.mubr.bf16.gmra.mrb[0].mxu0 %v5622
      %v5785 = vpop.f32.mrb[0].mxu0
      %v5786 = vadd.f32 0.0, %v5785
      %v5787 = vpop.f32.mrb[0].mxu0
      %v5788 = vpop.f32.mrb[0].mxu0
      %v5789 = vadd.f32 0.0, %v5788
      %v5790 = vpop.f32.mrb[0].mxu0
      %5791 = vmatprep.mubr.bf16.mxu0 0
      %5792 = vmatmul.mubr.bf16.gmra.mrb[0].mxu0 %v5625
      %v5793 = vpop.f32.mrb[0].mxu0
      %v5794 = vadd.f32 0.0, %v5793
      %v5795 = vpop.f32.mrb[0].mxu0
      %v5796 = vpop.f32.mrb[0].mxu0
      %v5797 = vadd.f32 0.0, %v5796
      %v5798 = vpop.f32.mrb[0].mxu0
      %5799 = vmatprep.mubr.bf16.mxu0 0
      %5800 = vmatmul.mubr.bf16.gmra.mrb[0].mxu0 %v5628
      %v5801 = vpop.f32.mrb[0].mxu0
      %v5802 = vadd.f32 0.0, %v5801
      %v5803 = vpop.f32.mrb[0].mxu0
      %v5804 = vpop.f32.mrb[0].mxu0
      %v5805 = vadd.f32 0.0, %v5804
      %v5806 = vpop.f32.mrb[0].mxu0
      %5807 = vmatprep.mubr.bf16.mxu0 0
      %5808 = vmatmul.mubr.bf16.gmra.mrb[0].mxu0 %v5631
      %v5809 = vpop.f32.mrb[0].mxu0
      %v5810 = vadd.f32 0.0, %v5809
      %v5811 = vpop.f32.mrb[0].mxu0
      %v5812 = vpop.f32.mrb[0].mxu0
      %v5813 = vadd.f32 0.0, %v5812
      %v5814 = vpop.f32.mrb[0].mxu0
      %5815 = vmatprep.mubr.bf16.mxu0 0
      %5816 = vmatmul.mubr.bf16.gmra.mrb[0].mxu0 %v5634
      %v5817 = vpop.f32.mrb[0].mxu0
      %v5818 = vadd.f32 0.0, %v5817
      %v5819 = vpop.f32.mrb[0].mxu0
      %v5820 = vpop.f32.mrb[0].mxu0
      %v5821 = vadd.f32 0.0, %v5820
      %v5822 = vpop.f32.mrb[0].mxu0
      %5823 = vmatprep.mubr.bf16.mxu0 0
      %5824 = vmatmul.mubr.bf16.gmra.mrb[0].mxu0 %v5637
      %v5825 = vpop.f32.mrb[0].mxu0
      %v5826 = vadd.f32 0.0, %v5825
      %v5827 = vpop.f32.mrb[0].mxu0
      %v5828 = vpop.f32.mrb[0].mxu0
      %v5829 = vadd.f32 0.0, %v5828
      %v5830 = vpop.f32.mrb[0].mxu0
      %5831 = vmatprep.mubr.bf16.mxu0 0
      %5832 = vmatmul.mubr.bf16.gmra.mrb[0].mxu0 %v5640
      %v5833 = vpop.f32.mrb[0].mxu0
      %v5834 = vadd.f32 0.0, %v5833
      %v5835 = vpop.f32.mrb[0].mxu0
      %v5836 = vpop.f32.mrb[0].mxu0
      %v5837 = vadd.f32 0.0, %v5836
      %v5838 = vpop.f32.mrb[0].mxu0
      %5839 = vmatprep.mubr.bf16.mxu0 0
      %5840 = vmatmul.mubr.bf16.gmra.mrb[0].mxu0 %v5643
      %v5841 = vpop.f32.mrb[0].mxu0
      %v5842 = vadd.f32 0.0, %v5841
      %v5843 = vpop.f32.mrb[0].mxu0
      %v5844 = vpop.f32.mrb[0].mxu0
      %v5845 = vadd.f32 0.0, %v5844
      %v5846 = vpop.f32.mrb[0].mxu0
      %5847 = vmatprep.mubr.bf16.mxu0 0
      %5848 = vmatmul.mubr.bf16.gmra.mrb[0].mxu0 %v5646
      %v5849 = vpop.f32.mrb[0].mxu0
      %v5850 = vadd.f32 0.0, %v5849
      %v5851 = vpop.f32.mrb[0].mxu0
      %v5852 = vpop.f32.mrb[0].mxu0
      %v5853 = vadd.f32 0.0, %v5852
      %v5854 = vpop.f32.mrb[0].mxu0
      %5855 = vmatprep.mubr.bf16.mxu0 0
      %5856 = vmatmul.mubr.bf16.gmra.mrb[0].mxu0 %v5649
      %v5857 = vpop.f32.mrb[0].mxu0
      %v5858 = vadd.f32 0.0, %v5857
      %v5859 = vpop.f32.mrb[0].mxu0
      %v5860 = vpop.f32.mrb[0].mxu0
      %v5861 = vadd.f32 0.0, %v5860
      %v5862 = vpop.f32.mrb[0].mxu0
      %5863 = vmatprep.mubr.bf16.mxu0 0
      %5864 = vmatmul.mubr.bf16.gmra.mrb[0].mxu0 %v5652
      %v5865 = vpop.f32.mrb[0].mxu0
      %v5866 = vadd.f32 0.0, %v5865
      %v5867 = vpop.f32.mrb[0].mxu0
      %v5868 = vpop.f32.mrb[0].mxu0
      %v5869 = vadd.f32 0.0, %v5868
      %v5870 = vpop.f32.mrb[0].mxu0
      %5871 = vmatprep.mubr.bf16.mxu0 0
      %5872 = vmatmul.mubr.bf16.gmra.mrb[0].mxu0 %v5655
      %v5873 = vpop.f32.mrb[0].mxu0
      %v5874 = vadd.f32 0.0, %v5873
      %v5875 = vpop.f32.mrb[0].mxu0
      %v5876 = vpop.f32.mrb[0].mxu0
      %v5877 = vadd.f32 0.0, %v5876
      %v5878 = vpop.f32.mrb[0].mxu0
      %5879 = vmatprep.mubr.bf16.mxu0 0
      %5880 = vmatmul.mubr.bf16.gmra.mrb[0].mxu0 %v5658
      %v5881 = vpop.f32.mrb[0].mxu0
      %v5882 = vadd.f32 0.0, %v5881
      %v5883 = vpop.f32.mrb[0].mxu0
      %v5884 = vpop.f32.mrb[0].mxu0
      %v5885 = vadd.f32 0.0, %v5884
      %v5886 = vpop.f32.mrb[0].mxu0
      %5887 = vmatprep.mubr.bf16.mxu0 0
      %5888 = vmatmul.mubr.bf16.gmra.mrb[0].mxu0 %v5661
      %v5889 = vpop.f32.mrb[0].mxu0
      %v5890 = vadd.f32 0.0, %v5889
      %v5891 = vpop.f32.mrb[0].mxu0
      %v5892 = vpop.f32.mrb[0].mxu0
      %v5893 = vadd.f32 0.0, %v5892
      %v5894 = vpop.f32.mrb[0].mxu0
      %5895 = vmatprep.mubr.bf16.mxu0 0
      %5896 = vmatmul.mubr.bf16.gmra.mrb[0].mxu0 %v5664
      %v5897 = vpop.f32.mrb[0].mxu0
      %v5898 = vadd.f32 0.0, %v5897
      %v5899 = vpop.f32.mrb[0].mxu0
      %v5900 = vpop.f32.mrb[0].mxu0
      %v5901 = vadd.f32 0.0, %v5900
      %v5902 = vpop.f32.mrb[0].mxu0
      %5903 = vmatprep.mubr.bf16.mxu0 0
      %5904 = vmatmul.mubr.bf16.gmra.mrb[0].mxu0 %v5667
      %v5905 = vpop.f32.mrb[0].mxu0
      %v5906 = vadd.f32 0.0, %v5905
      %v5907 = vpop.f32.mrb[0].mxu0
      %v5908 = vpop.f32.mrb[0].mxu0
      %v5909 = vadd.f32 0.0, %v5908
      %v5910 = vpop.f32.mrb[0].mxu0
      %5911 = vmatprep.mubr.bf16.mxu0 0
      %5912 = vmatmul.mubr.bf16.gmra.mrb[0].mxu0 %v5670
      %v5913 = vpop.f32.mrb[0].mxu0
      %v5914 = vadd.f32 0.0, %v5913
      %v5915 = vpop.f32.mrb[0].mxu0
      %v5916 = vpop.f32.mrb[0].mxu0
      %v5917 = vadd.f32 0.0, %v5916
      %v5918 = vpop.f32.mrb[0].mxu0
      %5919 = vmatprep.mubr.bf16.mxu0 0
      %5920 = vmatmul.mubr.bf16.gmra.mrb[0].mxu0 %v5673
      %v5921 = vpop.f32.mrb[0].mxu0
      %v5922 = vadd.f32 0.0, %v5921
      %v5923 = vpop.f32.mrb[0].mxu0
      %v5924 = vpop.f32.mrb[0].mxu0
      %v5925 = vadd.f32 0.0, %v5924
      %v5926 = vpop.f32.mrb[0].mxu0
      %5927 = vmatprep.mubr.bf16.mxu0 0
      %5928 = vmatmul.mubr.bf16.gmra.mrb[0].mxu0 %v5676
      %v5929 = vpop.f32.mrb[0].mxu0
      %v5930 = vadd.f32 0.0, %v5929
      %v5931 = vpop.f32.mrb[0].mxu0
      %v5932 = vpop.f32.mrb[0].mxu0
      %v5933 = vadd.f32 0.0, %v5932
      %v5934 = vpop.f32.mrb[0].mxu0
      %5935 = vmatprep.mubr.bf16.mxu0 0
      %5936 = vmatmul.mubr.bf16.gmra.mrb[0].mxu0 %v5679
      %v5937 = vpop.f32.mrb[0].mxu0
      %v5938 = vadd.f32 0.0, %v5937
      %v5939 = vpop.f32.mrb[0].mxu0
      %v5940 = vpop.f32.mrb[0].mxu0
      %v5941 = vadd.f32 0.0, %v5940
      %v5942 = vpop.f32.mrb[0].mxu0
      %5943 = vmatprep.mubr.bf16.mxu0 0
      %5944 = vmatmul.mubr.bf16.gmra.mrb[0].mxu0 %v5682
      %v5945 = vpop.f32.mrb[0].mxu0
      %v5946 = vadd.f32 0.0, %v5945
      %v5947 = vpop.f32.mrb[0].mxu0
      %v5948 = vpop.f32.mrb[0].mxu0
      %v5949 = vadd.f32 0.0, %v5948
      %v5950 = vpop.f32.mrb[0].mxu0
      %5951 = vmatprep.mubr.bf16.mxu0 0
      %5952 = vmatmul.mubr.bf16.gmra.mrb[0].mxu0 %v5685
      %v5953 = vpop.f32.mrb[0].mxu0
      %v5954 = vadd.f32 0.0, %v5953
      %v5955 = vpop.f32.mrb[0].mxu0
      %v5956 = vpop.f32.mrb[0].mxu0
      %v5957 = vadd.f32 0.0, %v5956
      %v5958 = vpop.f32.mrb[0].mxu0
      %5959 = vmatprep.mubr.bf16.mxu0 0
      %5960 = vmatmul.mubr.bf16.gmra.mrb[0].mxu0 %v5688
      %v5961 = vpop.f32.mrb[0].mxu0
      %v5962 = vadd.f32 0.0, %v5961
      %v5963 = vpop.f32.mrb[0].mxu0
      %v5964 = vpop.f32.mrb[0].mxu0
      %v5965 = vadd.f32 0.0, %v5964
      %v5966 = vpop.f32.mrb[0].mxu0
      %5967 = vmatprep.mubr.bf16.mxu0 0
      %5968 = vmatmul.mubr.bf16.gmra.mrb[0].mxu0 %v5691
      %v5969 = vpop.f32.mrb[0].mxu0
      %v5970 = vadd.f32 0.0, %v5969
      %v5971 = vpop.f32.mrb[0].mxu0
      %v5972 = vpop.f32.mrb[0].mxu0
      %v5973 = vadd.f32 0.0, %v5972
      %v5974 = vpop.f32.mrb[0].mxu0
      %5975 = vmatprep.mubr.bf16.mxu0 0
      %5976 = vmatmul.mubr.bf16.gmra.mrb[0].mxu0 %v5694
      %v5977 = vpop.f32.mrb[0].mxu0
      %v5978 = vadd.f32 0.0, %v5977
      %v5979 = vpop.f32.mrb[0].mxu0
      %v5980 = vpop.f32.mrb[0].mxu0
      %v5981 = vadd.f32 0.0, %v5980
      %v5982 = vpop.f32.mrb[0].mxu0
      %5983 = vmatprep.mubr.bf16.mxu0 0
      %5984 = vmatmul.mubr.bf16.gmra.mrb[0].mxu0 %v5697
      %v5985 = vpop.f32.mrb[0].mxu0
      %v5986 = vadd.f32 0.0, %v5985
      %v5987 = vpop.f32.mrb[0].mxu0
      %v5988 = vpop.f32.mrb[0].mxu0
      %v5989 = vadd.f32 0.0, %v5988
      %v5990 = vpop.f32.mrb[0].mxu0
      %5991 = vdwg.mxu0
      %v5993 = vsel %vm1002, %v3248, 0
      %v5996 = vsel %vm1002, %v3249, 0
      %v5999 = vsel %vm1002, %v3250, 0
      %v6002 = vsel %vm1002, %v3251, 0
      %v6005 = vsel %vm1002, %v3252, 0
      %v6008 = vsel %vm1002, %v3253, 0
      %v6011 = vsel %vm1002, %v3254, 0
      %v6014 = vsel %vm1002, %v3255, 0
      %v6017 = vsel %vm1002, %v3256, 0
      %v6020 = vsel %vm1002, %v3257, 0
      %v6023 = vsel %vm1002, %v3258, 0
      %v6026 = vsel %vm1002, %v3259, 0
      %v6029 = vsel %vm1002, %v3260, 0
      %v6032 = vsel %vm1002, %v3261, 0
      %v6035 = vsel %vm1002, %v3262, 0
      %v6038 = vsel %vm1002, %v3263, 0
      %v6041 = vsel %vm1002, %v3264, 0
      %v6044 = vsel %vm1002, %v3265, 0
      %v6047 = vsel %vm1002, %v3266, 0
      %v6050 = vsel %vm1002, %v3267, 0
      %v6053 = vsel %vm1002, %v3268, 0
      %v6056 = vsel %vm1002, %v3269, 0
      %v6059 = vsel %vm1002, %v3270, 0
      %v6062 = vsel %vm1002, %v3271, 0
      %v6065 = vsel %vm1002, %v3272, 0
      %v6068 = vsel %vm1002, %v3273, 0
      %v6071 = vsel %vm1002, %v3274, 0
      %v6074 = vsel %vm1002, %v3275, 0
      %v6077 = vsel %vm1002, %v3276, 0
      %v6080 = vsel %vm1002, %v3277, 0
      %v6083 = vsel %vm1002, %v3278, 0
      %v6086 = vsel %vm1002, %v3279, 0
      %v6089 = vsel %vm5699, %v3280, 0
      %6091 = vmatprep.subr.bf16.mxu0 0
      %6092 = vmatpush1.bf16.msra.mxu0 %v6089
      %6093 = vmatprep.subr.bf16.mxu0 0
      %6094 = vmatpush1.bf16.msra.mxu0 0
      %6095 = vmatprep.subr.bf16.mxu0 0
      %6096 = vmatpush1.bf16.msra.mxu0 0
      %6097 = vmatprep.subr.bf16.mxu0 0
      %6098 = vmatpush1.bf16.msra.mxu0 0
      %6099 = vmatprep.subr.bf16.mxu0 0
      %6100 = vmatpush1.bf16.msra.mxu0 0
      %6101 = vmatprep.subr.bf16.mxu0 0
      %6102 = vmatpush1.bf16.msra.mxu0 0
      %6103 = vmatprep.subr.bf16.mxu0 0
      %6104 = vmatpush1.bf16.msra.mxu0 0
      %6105 = vmatprep.subr.bf16.mxu0 0
      %6106 = vmatpush1.bf16.msra.mxu0 0
      %6107 = vmatprep.subr.bf16.mxu0 0
      %6108 = vmatpush1.bf16.msra.mxu0 0
      %6109 = vmatprep.subr.bf16.mxu0 0
      %6110 = vmatpush1.bf16.msra.mxu0 0
      %6111 = vmatprep.subr.bf16.mxu0 0
      %6112 = vmatpush1.bf16.msra.mxu0 0
      %6113 = vmatprep.subr.bf16.mxu0 0
      %6114 = vmatpush1.bf16.msra.mxu0 0
      %6115 = vmatprep.subr.bf16.mxu0 0
      %6116 = vmatpush1.bf16.msra.mxu0 0
      %6117 = vmatprep.subr.bf16.mxu0 0
      %6118 = vmatpush1.bf16.msra.mxu0 0
      %6119 = vmatprep.subr.bf16.mxu0 0
      %6120 = vmatpush1.bf16.msra.mxu0 0
      %6121 = vmatprep.subr.bf16.mxu0 0
      %6122 = vmatpush1.bf16.msra.mxu0 0
      %6123 = vmatprep.mubr.bf16.mxu0 0
      %6124 = vmatmul.mubr.bf16.gmra.mrb[0].mxu0 %v5993
      %v6125 = vpop.f32.mrb[0].mxu0
      %v6126 = vadd.f32 %v5738, %v6125
      %v6127 = vpop.f32.mrb[0].mxu0
      %v6128 = vpop.f32.mrb[0].mxu0
      %v6129 = vadd.f32 %v5741, %v6128
      %v6130 = vpop.f32.mrb[0].mxu0
      %6131 = vmatprep.mubr.bf16.mxu0 0
      %6132 = vmatmul.mubr.bf16.gmra.mrb[0].mxu0 %v5996
      %v6133 = vpop.f32.mrb[0].mxu0
      %v6134 = vadd.f32 %v5746, %v6133
      %v6135 = vpop.f32.mrb[0].mxu0
      %v6136 = vpop.f32.mrb[0].mxu0
      %v6137 = vadd.f32 %v5749, %v6136
      %v6138 = vpop.f32.mrb[0].mxu0
      %6139 = vmatprep.mubr.bf16.mxu0 0
      %6140 = vmatmul.mubr.bf16.gmra.mrb[0].mxu0 %v5999
      %v6141 = vpop.f32.mrb[0].mxu0
      %v6142 = vadd.f32 %v5754, %v6141
      %v6143 = vpop.f32.mrb[0].mxu0
      %v6144 = vpop.f32.mrb[0].mxu0
      %v6145 = vadd.f32 %v5757, %v6144
      %v6146 = vpop.f32.mrb[0].mxu0
      %6147 = vmatprep.mubr.bf16.mxu0 0
      %6148 = vmatmul.mubr.bf16.gmra.mrb[0].mxu0 %v6002
      %v6149 = vpop.f32.mrb[0].mxu0
      %v6150 = vadd.f32 %v5762, %v6149
      %v6151 = vpop.f32.mrb[0].mxu0
      %v6152 = vpop.f32.mrb[0].mxu0
      %v6153 = vadd.f32 %v5765, %v6152
      %v6154 = vpop.f32.mrb[0].mxu0
      %6155 = vmatprep.mubr.bf16.mxu0 0
      %6156 = vmatmul.mubr.bf16.gmra.mrb[0].mxu0 %v6005
      %v6157 = vpop.f32.mrb[0].mxu0
      %v6158 = vadd.f32 %v5770, %v6157
      %v6159 = vpop.f32.mrb[0].mxu0
      %v6160 = vpop.f32.mrb[0].mxu0
      %v6161 = vadd.f32 %v5773, %v6160
      %v6162 = vpop.f32.mrb[0].mxu0
      %6163 = vmatprep.mubr.bf16.mxu0 0
      %6164 = vmatmul.mubr.bf16.gmra.mrb[0].mxu0 %v6008
      %v6165 = vpop.f32.mrb[0].mxu0
      %v6166 = vadd.f32 %v5778, %v6165
      %v6167 = vpop.f32.mrb[0].mxu0
      %v6168 = vpop.f32.mrb[0].mxu0
      %v6169 = vadd.f32 %v5781, %v6168
      %v6170 = vpop.f32.mrb[0].mxu0
      %6171 = vmatprep.mubr.bf16.mxu0 0
      %6172 = vmatmul.mubr.bf16.gmra.mrb[0].mxu0 %v6011
      %v6173 = vpop.f32.mrb[0].mxu0
      %v6174 = vadd.f32 %v5786, %v6173
      %v6175 = vpop.f32.mrb[0].mxu0
      %v6176 = vpop.f32.mrb[0].mxu0
      %v6177 = vadd.f32 %v5789, %v6176
      %v6178 = vpop.f32.mrb[0].mxu0
      %6179 = vmatprep.mubr.bf16.mxu0 0
      %6180 = vmatmul.mubr.bf16.gmra.mrb[0].mxu0 %v6014
      %v6181 = vpop.f32.mrb[0].mxu0
      %v6182 = vadd.f32 %v5794, %v6181
      %v6183 = vpop.f32.mrb[0].mxu0
      %v6184 = vpop.f32.mrb[0].mxu0
      %v6185 = vadd.f32 %v5797, %v6184
      %v6186 = vpop.f32.mrb[0].mxu0
      %6187 = vmatprep.mubr.bf16.mxu0 0
      %6188 = vmatmul.mubr.bf16.gmra.mrb[0].mxu0 %v6017
      %v6189 = vpop.f32.mrb[0].mxu0
      %v6190 = vadd.f32 %v5802, %v6189
      %v6191 = vpop.f32.mrb[0].mxu0
      %v6192 = vpop.f32.mrb[0].mxu0
      %v6193 = vadd.f32 %v5805, %v6192
      %v6194 = vpop.f32.mrb[0].mxu0
      %6195 = vmatprep.mubr.bf16.mxu0 0
      %6196 = vmatmul.mubr.bf16.gmra.mrb[0].mxu0 %v6020
      %v6197 = vpop.f32.mrb[0].mxu0
      %v6198 = vadd.f32 %v5810, %v6197
      %v6199 = vpop.f32.mrb[0].mxu0
      %v6200 = vpop.f32.mrb[0].mxu0
      %v6201 = vadd.f32 %v5813, %v6200
      %v6202 = vpop.f32.mrb[0].mxu0
      %6203 = vmatprep.mubr.bf16.mxu0 0
      %6204 = vmatmul.mubr.bf16.gmra.mrb[0].mxu0 %v6023
      %v6205 = vpop.f32.mrb[0].mxu0
      %v6206 = vadd.f32 %v5818, %v6205
      %v6207 = vpop.f32.mrb[0].mxu0
      %v6208 = vpop.f32.mrb[0].mxu0
      %v6209 = vadd.f32 %v5821, %v6208
      %v6210 = vpop.f32.mrb[0].mxu0
      %6211 = vmatprep.mubr.bf16.mxu0 0
      %6212 = vmatmul.mubr.bf16.gmra.mrb[0].mxu0 %v6026
      %v6213 = vpop.f32.mrb[0].mxu0
      %v6214 = vadd.f32 %v5826, %v6213
      %v6215 = vpop.f32.mrb[0].mxu0
      %v6216 = vpop.f32.mrb[0].mxu0
      %v6217 = vadd.f32 %v5829, %v6216
      %v6218 = vpop.f32.mrb[0].mxu0
      %6219 = vmatprep.mubr.bf16.mxu0 0
      %6220 = vmatmul.mubr.bf16.gmra.mrb[0].mxu0 %v6029
      %v6221 = vpop.f32.mrb[0].mxu0
      %v6222 = vadd.f32 %v5834, %v6221
      %v6223 = vpop.f32.mrb[0].mxu0
      %v6224 = vpop.f32.mrb[0].mxu0
      %v6225 = vadd.f32 %v5837, %v6224
      %v6226 = vpop.f32.mrb[0].mxu0
      %6227 = vmatprep.mubr.bf16.mxu0 0
      %6228 = vmatmul.mubr.bf16.gmra.mrb[0].mxu0 %v6032
      %v6229 = vpop.f32.mrb[0].mxu0
      %v6230 = vadd.f32 %v5842, %v6229
      %v6231 = vpop.f32.mrb[0].mxu0
      %v6232 = vpop.f32.mrb[0].mxu0
      %v6233 = vadd.f32 %v5845, %v6232
      %v6234 = vpop.f32.mrb[0].mxu0
      %6235 = vmatprep.mubr.bf16.mxu0 0
      %6236 = vmatmul.mubr.bf16.gmra.mrb[0].mxu0 %v6035
      %v6237 = vpop.f32.mrb[0].mxu0
      %v6238 = vadd.f32 %v5850, %v6237
      %v6239 = vpop.f32.mrb[0].mxu0
      %v6240 = vpop.f32.mrb[0].mxu0
      %v6241 = vadd.f32 %v5853, %v6240
      %v6242 = vpop.f32.mrb[0].mxu0
      %6243 = vmatprep.mubr.bf16.mxu0 0
      %6244 = vmatmul.mubr.bf16.gmra.mrb[0].mxu0 %v6038
      %v6245 = vpop.f32.mrb[0].mxu0
      %v6246 = vadd.f32 %v5858, %v6245
      %v6247 = vpop.f32.mrb[0].mxu0
      %v6248 = vpop.f32.mrb[0].mxu0
      %v6249 = vadd.f32 %v5861, %v6248
      %v6250 = vpop.f32.mrb[0].mxu0
      %6251 = vmatprep.mubr.bf16.mxu0 0
      %6252 = vmatmul.mubr.bf16.gmra.mrb[0].mxu0 %v6041
      %v6253 = vpop.f32.mrb[0].mxu0
      %v6254 = vadd.f32 %v5866, %v6253
      %v6255 = vpop.f32.mrb[0].mxu0
      %v6256 = vpop.f32.mrb[0].mxu0
      %v6257 = vadd.f32 %v5869, %v6256
      %v6258 = vpop.f32.mrb[0].mxu0
      %6259 = vmatprep.mubr.bf16.mxu0 0
      %6260 = vmatmul.mubr.bf16.gmra.mrb[0].mxu0 %v6044
      %v6261 = vpop.f32.mrb[0].mxu0
      %v6262 = vadd.f32 %v5874, %v6261
      %v6263 = vpop.f32.mrb[0].mxu0
      %v6264 = vpop.f32.mrb[0].mxu0
      %v6265 = vadd.f32 %v5877, %v6264
      %v6266 = vpop.f32.mrb[0].mxu0
      %6267 = vmatprep.mubr.bf16.mxu0 0
      %6268 = vmatmul.mubr.bf16.gmra.mrb[0].mxu0 %v6047
      %v6269 = vpop.f32.mrb[0].mxu0
      %v6270 = vadd.f32 %v5882, %v6269
      %v6271 = vpop.f32.mrb[0].mxu0
      %v6272 = vpop.f32.mrb[0].mxu0
      %v6273 = vadd.f32 %v5885, %v6272
      %v6274 = vpop.f32.mrb[0].mxu0
      %6275 = vmatprep.mubr.bf16.mxu0 0
      %6276 = vmatmul.mubr.bf16.gmra.mrb[0].mxu0 %v6050
      %v6277 = vpop.f32.mrb[0].mxu0
      %v6278 = vadd.f32 %v5890, %v6277
      %v6279 = vpop.f32.mrb[0].mxu0
      %v6280 = vpop.f32.mrb[0].mxu0
      %v6281 = vadd.f32 %v5893, %v6280
      %v6282 = vpop.f32.mrb[0].mxu0
      %6283 = vmatprep.mubr.bf16.mxu0 0
      %6284 = vmatmul.mubr.bf16.gmra.mrb[0].mxu0 %v6053
      %v6285 = vpop.f32.mrb[0].mxu0
      %v6286 = vadd.f32 %v5898, %v6285
      %v6287 = vpop.f32.mrb[0].mxu0
      %v6288 = vpop.f32.mrb[0].mxu0
      %v6289 = vadd.f32 %v5901, %v6288
      %v6290 = vpop.f32.mrb[0].mxu0
      %6291 = vmatprep.mubr.bf16.mxu0 0
      %6292 = vmatmul.mubr.bf16.gmra.mrb[0].mxu0 %v6056
      %v6293 = vpop.f32.mrb[0].mxu0
      %v6294 = vadd.f32 %v5906, %v6293
      %v6295 = vpop.f32.mrb[0].mxu0
      %v6296 = vpop.f32.mrb[0].mxu0
      %v6297 = vadd.f32 %v5909, %v6296
      %v6298 = vpop.f32.mrb[0].mxu0
      %6299 = vmatprep.mubr.bf16.mxu0 0
      %6300 = vmatmul.mubr.bf16.gmra.mrb[0].mxu0 %v6059
      %v6301 = vpop.f32.mrb[0].mxu0
      %v6302 = vadd.f32 %v5914, %v6301
      %v6303 = vpop.f32.mrb[0].mxu0
      %v6304 = vpop.f32.mrb[0].mxu0
      %v6305 = vadd.f32 %v5917, %v6304
      %v6306 = vpop.f32.mrb[0].mxu0
      %6307 = vmatprep.mubr.bf16.mxu0 0
      %6308 = vmatmul.mubr.bf16.gmra.mrb[0].mxu0 %v6062
      %v6309 = vpop.f32.mrb[0].mxu0
      %v6310 = vadd.f32 %v5922, %v6309
      %v6311 = vpop.f32.mrb[0].mxu0
      %v6312 = vpop.f32.mrb[0].mxu0
      %v6313 = vadd.f32 %v5925, %v6312
      %v6314 = vpop.f32.mrb[0].mxu0
      %6315 = vmatprep.mubr.bf16.mxu0 0
      %6316 = vmatmul.mubr.bf16.gmra.mrb[0].mxu0 %v6065
      %v6317 = vpop.f32.mrb[0].mxu0
      %v6318 = vadd.f32 %v5930, %v6317
      %v6319 = vpop.f32.mrb[0].mxu0
      %v6320 = vpop.f32.mrb[0].mxu0
      %v6321 = vadd.f32 %v5933, %v6320
      %v6322 = vpop.f32.mrb[0].mxu0
      %6323 = vmatprep.mubr.bf16.mxu0 0
      %6324 = vmatmul.mubr.bf16.gmra.mrb[0].mxu0 %v6068
      %v6325 = vpop.f32.mrb[0].mxu0
      %v6326 = vadd.f32 %v5938, %v6325
      %v6327 = vpop.f32.mrb[0].mxu0
      %v6328 = vpop.f32.mrb[0].mxu0
      %v6329 = vadd.f32 %v5941, %v6328
      %v6330 = vpop.f32.mrb[0].mxu0
      %6331 = vmatprep.mubr.bf16.mxu0 0
      %6332 = vmatmul.mubr.bf16.gmra.mrb[0].mxu0 %v6071
      %v6333 = vpop.f32.mrb[0].mxu0
      %v6334 = vadd.f32 %v5946, %v6333
      %v6335 = vpop.f32.mrb[0].mxu0
      %v6336 = vpop.f32.mrb[0].mxu0
      %v6337 = vadd.f32 %v5949, %v6336
      %v6338 = vpop.f32.mrb[0].mxu0
      %6339 = vmatprep.mubr.bf16.mxu0 0
      %6340 = vmatmul.mubr.bf16.gmra.mrb[0].mxu0 %v6074
      %v6341 = vpop.f32.mrb[0].mxu0
      %v6342 = vadd.f32 %v5954, %v6341
      %v6343 = vpop.f32.mrb[0].mxu0
      %v6344 = vpop.f32.mrb[0].mxu0
      %v6345 = vadd.f32 %v5957, %v6344
      %v6346 = vpop.f32.mrb[0].mxu0
      %6347 = vmatprep.mubr.bf16.mxu0 0
      %6348 = vmatmul.mubr.bf16.gmra.mrb[0].mxu0 %v6077
      %v6349 = vpop.f32.mrb[0].mxu0
      %v6350 = vadd.f32 %v5962, %v6349
      %v6351 = vpop.f32.mrb[0].mxu0
      %v6352 = vpop.f32.mrb[0].mxu0
      %v6353 = vadd.f32 %v5965, %v6352
      %v6354 = vpop.f32.mrb[0].mxu0
      %6355 = vmatprep.mubr.bf16.mxu0 0
      %6356 = vmatmul.mubr.bf16.gmra.mrb[0].mxu0 %v6080
      %v6357 = vpop.f32.mrb[0].mxu0
      %v6358 = vadd.f32 %v5970, %v6357
      %v6359 = vpop.f32.mrb[0].mxu0
      %v6360 = vpop.f32.mrb[0].mxu0
      %v6361 = vadd.f32 %v5973, %v6360
      %v6362 = vpop.f32.mrb[0].mxu0
      %6363 = vmatprep.mubr.bf16.mxu0 0
      %6364 = vmatmul.mubr.bf16.gmra.mrb[0].mxu0 %v6083
      %v6365 = vpop.f32.mrb[0].mxu0
      %v6366 = vadd.f32 %v5978, %v6365
      %v6367 = vpop.f32.mrb[0].mxu0
      %v6368 = vpop.f32.mrb[0].mxu0
      %v6369 = vadd.f32 %v5981, %v6368
      %v6370 = vpop.f32.mrb[0].mxu0
      %6371 = vmatprep.mubr.bf16.mxu0 0
      %6372 = vmatmul.mubr.bf16.gmra.mrb[0].mxu0 %v6086
      %v6373 = vpop.f32.mrb[0].mxu0
      %v6374 = vadd.f32 %v5986, %v6373
      %v6375 = vpop.f32.mrb[0].mxu0
      %v6376 = vpop.f32.mrb[0].mxu0
      %v6377 = vadd.f32 %v5989, %v6376
      %v6378 = vpop.f32.mrb[0].mxu0
      %6379 = vdwg.mxu0
      %6380 = vrot.lane.b32.xlu0 %v894, 112
      %v6381 = vpop.permute.xlu0 %6380
      %6382 = vrot.lane.b32.xlu0 %v895, 112
      %v6383 = vpop.permute.xlu0 %6382
      %6384 = vrot.lane.b32.xlu0 %v896, 112
      %v6385 = vpop.permute.xlu0 %6384
      %6386 = vrot.lane.b32.xlu0 %v897, 112
      %v6387 = vpop.permute.xlu0 %6386
      %6388 = vrot.lane.b32.xlu0 %v894, 80
      %v6389 = vpop.permute.xlu0 %6388
      %6390 = vrot.lane.b32.xlu0 %v895, 80
      %v6391 = vpop.permute.xlu0 %6390
      %6392 = vrot.lane.b32.xlu0 %v896, 80
      %v6393 = vpop.permute.xlu0 %6392
      %6394 = vrot.lane.b32.xlu0 %v897, 80
      %v6395 = vpop.permute.xlu0 %6394
      %v6397 = vsel %vm1002, %v6381, 0
      %v6400 = vsel %vm1002, %v6383, 0
      %v6403 = vsel %vm1002, %v6385, 0
      %v6406 = vsel %vm1002, %v6387, 0
      %v6409 = vsel %vm1002, %v6389, 0
      %v6412 = vsel %vm1002, %v6391, 0
      %v6415 = vsel %vm1002, %v6393, 0
      %v6418 = vsel %vm1002, %v6395, 0
      %6420 = vmatprep.subr.bf16.mxu0 0
      %6421 = vmatpush1.bf16.xpose.msra.mxu0 %v6409
      %6422 = vmatprep.subr.bf16.mxu0 0
      %6423 = vmatpush1.bf16.xpose.msra.mxu0 %v6412
      %6424 = vmatprep.subr.bf16.mxu0 0
      %6425 = vmatpush1.bf16.xpose.msra.mxu0 %v6415
      %6426 = vmatprep.subr.bf16.mxu0 0
      %6427 = vmatpush1.bf16.xpose.msra.mxu0 %v6418
      %6428 = vmatprep.subr.bf16.mxu0 0
      %6429 = vmatpush1.bf16.xpose.msra.mxu0 0
      %6430 = vmatprep.subr.bf16.mxu0 0
      %6431 = vmatpush1.bf16.xpose.msra.mxu0 0
      %6432 = vmatprep.subr.bf16.mxu0 0
      %6433 = vmatpush1.bf16.xpose.msra.mxu0 0
      %6434 = vmatprep.subr.bf16.mxu0 0
      %6435 = vmatpush1.bf16.xpose.msra.mxu0 0
      %6436 = vmatprep.subr.bf16.mxu0 0
      %6437 = vmatpush1.bf16.xpose.msra.mxu0 0
      %6438 = vmatprep.subr.bf16.mxu0 0
      %6439 = vmatpush1.bf16.xpose.msra.mxu0 0
      %6440 = vmatprep.subr.bf16.mxu0 0
      %6441 = vmatpush1.bf16.xpose.msra.mxu0 0
      %6442 = vmatprep.subr.bf16.mxu0 0
      %6443 = vmatpush1.bf16.xpose.msra.mxu0 0
      %6444 = vmatprep.subr.bf16.mxu0 0
      %6445 = vmatpush1.bf16.xpose.msra.mxu0 0
      %6446 = vmatprep.subr.bf16.mxu0 0
      %6447 = vmatpush1.bf16.xpose.msra.mxu0 0
      %6448 = vmatprep.subr.bf16.mxu0 0
      %6449 = vmatpush1.bf16.xpose.msra.mxu0 0
      %6450 = vmatprep.subr.bf16.mxu0 0
      %6451 = vmatpush1.bf16.xpose.msra.mxu0 0
      %6452 = vmatprep.mubr.bf16.mxu0 0
      %6453 = vmatmul.mubr.bf16.gmra.mrb[0].mxu0 %v6397
      %v6454 = vpop.f32.mrb[0].mxu0
      %v6455 = vadd.f32 %v974, %v6454
      %v6456 = vpop.f32.mrb[0].mxu0
      %v6457 = vpop.f32.mrb[0].mxu0
      %v6458 = vadd.f32 %v975, %v6457
      %v6459 = vpop.f32.mrb[0].mxu0
      %6460 = vmatprep.mubr.bf16.mxu0 0
      %6461 = vmatmul.mubr.bf16.gmra.mrb[0].mxu0 %v6400
      %v6462 = vpop.f32.mrb[0].mxu0
      %v6463 = vadd.f32 %v976, %v6462
      %v6464 = vpop.f32.mrb[0].mxu0
      %v6465 = vpop.f32.mrb[0].mxu0
      %v6466 = vadd.f32 %v977, %v6465
      %v6467 = vpop.f32.mrb[0].mxu0
      %6468 = vmatprep.mubr.bf16.mxu0 0
      %6469 = vmatmul.mubr.bf16.gmra.mrb[0].mxu0 %v6403
      %v6470 = vpop.f32.mrb[0].mxu0
      %v6471 = vadd.f32 %v978, %v6470
      %v6472 = vpop.f32.mrb[0].mxu0
      %v6473 = vpop.f32.mrb[0].mxu0
      %v6474 = vadd.f32 %v979, %v6473
      %v6475 = vpop.f32.mrb[0].mxu0
      %6476 = vmatprep.mubr.bf16.mxu0 0
      %6477 = vmatmul.mubr.bf16.gmra.mrb[0].mxu0 %v6406
      %v6478 = vpop.f32.mrb[0].mxu0
      %v6479 = vadd.f32 %v980, %v6478
      %v6480 = vpop.f32.mrb[0].mxu0
      %v6481 = vpop.f32.mrb[0].mxu0
      %v6482 = vadd.f32 %v981, %v6481
      %v6483 = vpop.f32.mrb[0].mxu0
      %6484 = vdwg.mxu0
      %6485 = vrot.lane.b32.xlu0 %v898, 112
      %v6486 = vpop.permute.xlu0 %6485
      %6487 = vrot.lane.b32.xlu0 %v899, 112
      %v6488 = vpop.permute.xlu0 %6487
      %6489 = vrot.lane.b32.xlu0 %v900, 112
      %v6490 = vpop.permute.xlu0 %6489
      %6491 = vrot.lane.b32.xlu0 %v901, 112
      %v6492 = vpop.permute.xlu0 %6491
      %6493 = vrot.lane.b32.xlu0 %v898, 80
      %v6494 = vpop.permute.xlu0 %6493
      %6495 = vrot.lane.b32.xlu0 %v899, 80
      %v6496 = vpop.permute.xlu0 %6495
      %6497 = vrot.lane.b32.xlu0 %v900, 80
      %v6498 = vpop.permute.xlu0 %6497
      %6499 = vrot.lane.b32.xlu0 %v901, 80
      %v6500 = vpop.permute.xlu0 %6499
      %v6502 = vsel %vm1002, %v6486, 0
      %v6505 = vsel %vm1002, %v6488, 0
      %v6508 = vsel %vm1002, %v6490, 0
      %v6511 = vsel %vm1002, %v6492, 0
      %v6514 = vsel %vm1002, %v6494, 0
      %v6517 = vsel %vm1002, %v6496, 0
      %v6520 = vsel %vm1002, %v6498, 0
      %v6523 = vsel %vm1002, %v6500, 0
      %6525 = vmatprep.subr.bf16.mxu0 0
      %6526 = vmatpush1.bf16.xpose.msra.mxu0 %v6514
      %6527 = vmatprep.subr.bf16.mxu0 0
      %6528 = vmatpush1.bf16.xpose.msra.mxu0 %v6517
      %6529 = vmatprep.subr.bf16.mxu0 0
      %6530 = vmatpush1.bf16.xpose.msra.mxu0 %v6520
      %6531 = vmatprep.subr.bf16.mxu0 0
      %6532 = vmatpush1.bf16.xpose.msra.mxu0 %v6523
      %6533 = vmatprep.subr.bf16.mxu0 0
      %6534 = vmatpush1.bf16.xpose.msra.mxu0 0
      %6535 = vmatprep.subr.bf16.mxu0 0
      %6536 = vmatpush1.bf16.xpose.msra.mxu0 0
      %6537 = vmatprep.subr.bf16.mxu0 0
      %6538 = vmatpush1.bf16.xpose.msra.mxu0 0
      %6539 = vmatprep.subr.bf16.mxu0 0
      %6540 = vmatpush1.bf16.xpose.msra.mxu0 0
      %6541 = vmatprep.subr.bf16.mxu0 0
      %6542 = vmatpush1.bf16.xpose.msra.mxu0 0
      %6543 = vmatprep.subr.bf16.mxu0 0
      %6544 = vmatpush1.bf16.xpose.msra.mxu0 0
      %6545 = vmatprep.subr.bf16.mxu0 0
      %6546 = vmatpush1.bf16.xpose.msra.mxu0 0
      %6547 = vmatprep.subr.bf16.mxu0 0
      %6548 = vmatpush1.bf16.xpose.msra.mxu0 0
      %6549 = vmatprep.subr.bf16.mxu0 0
      %6550 = vmatpush1.bf16.xpose.msra.mxu0 0
      %6551 = vmatprep.subr.bf16.mxu0 0
      %6552 = vmatpush1.bf16.xpose.msra.mxu0 0
      %6553 = vmatprep.subr.bf16.mxu0 0
      %6554 = vmatpush1.bf16.xpose.msra.mxu0 0
      %6555 = vmatprep.subr.bf16.mxu0 0
      %6556 = vmatpush1.bf16.xpose.msra.mxu0 0
      %6557 = vmatprep.mubr.bf16.mxu0 0
      %6558 = vmatmul.mubr.bf16.gmra.mrb[0].mxu0 %v6502
      %v6559 = vpop.f32.mrb[0].mxu0
      %v6560 = vadd.f32 %v974, %v6559
      %v6561 = vpop.f32.mrb[0].mxu0
      %v6562 = vpop.f32.mrb[0].mxu0
      %v6563 = vadd.f32 %v975, %v6562
      %v6564 = vpop.f32.mrb[0].mxu0
      %6565 = vmatprep.mubr.bf16.mxu0 0
      %6566 = vmatmul.mubr.bf16.gmra.mrb[0].mxu0 %v6505
      %v6567 = vpop.f32.mrb[0].mxu0
      %v6568 = vadd.f32 %v976, %v6567
      %v6569 = vpop.f32.mrb[0].mxu0
      %v6570 = vpop.f32.mrb[0].mxu0
      %v6571 = vadd.f32 %v977, %v6570
      %v6572 = vpop.f32.mrb[0].mxu0
      %6573 = vmatprep.mubr.bf16.mxu0 0
      %6574 = vmatmul.mubr.bf16.gmra.mrb[0].mxu0 %v6508
      %v6575 = vpop.f32.mrb[0].mxu0
      %v6576 = vadd.f32 %v978, %v6575
      %v6577 = vpop.f32.mrb[0].mxu0
      %v6578 = vpop.f32.mrb[0].mxu0
      %v6579 = vadd.f32 %v979, %v6578
      %v6580 = vpop.f32.mrb[0].mxu0
      %6581 = vmatprep.mubr.bf16.mxu0 0
      %6582 = vmatmul.mubr.bf16.gmra.mrb[0].mxu0 %v6511
      %v6583 = vpop.f32.mrb[0].mxu0
      %v6584 = vadd.f32 %v980, %v6583
      %v6585 = vpop.f32.mrb[0].mxu0
      %v6586 = vpop.f32.mrb[0].mxu0
      %v6587 = vadd.f32 %v981, %v6586
      %v6588 = vpop.f32.mrb[0].mxu0
      %6589 = vdwg.mxu0
      %6590 = vrot.lane.b32.xlu0 %v902, 112
      %v6591 = vpop.permute.xlu0 %6590
      %6592 = vrot.lane.b32.xlu0 %v903, 112
      %v6593 = vpop.permute.xlu0 %6592
      %6594 = vrot.lane.b32.xlu0 %v904, 112
      %v6595 = vpop.permute.xlu0 %6594
      %6596 = vrot.lane.b32.xlu0 %v905, 112
      %v6597 = vpop.permute.xlu0 %6596
      %6598 = vrot.lane.b32.xlu0 %v902, 80
      %v6599 = vpop.permute.xlu0 %6598
      %6600 = vrot.lane.b32.xlu0 %v903, 80
      %v6601 = vpop.permute.xlu0 %6600
      %6602 = vrot.lane.b32.xlu0 %v904, 80
      %v6603 = vpop.permute.xlu0 %6602
      %6604 = vrot.lane.b32.xlu0 %v905, 80
      %v6605 = vpop.permute.xlu0 %6604
      %v6607 = vsel %vm1002, %v6591, 0
      %v6610 = vsel %vm1002, %v6593, 0
      %v6613 = vsel %vm1002, %v6595, 0
      %v6616 = vsel %vm1002, %v6597, 0
      %v6619 = vsel %vm1002, %v6599, 0
      %v6622 = vsel %vm1002, %v6601, 0
      %v6625 = vsel %vm1002, %v6603, 0
      %v6628 = vsel %vm1002, %v6605, 0
      %6630 = vmatprep.subr.bf16.mxu0 0
      %6631 = vmatpush1.bf16.xpose.msra.mxu0 %v6619
      %6632 = vmatprep.subr.bf16.mxu0 0
      %6633 = vmatpush1.bf16.xpose.msra.mxu0 %v6622
      %6634 = vmatprep.subr.bf16.mxu0 0
      %6635 = vmatpush1.bf16.xpose.msra.mxu0 %v6625
      %6636 = vmatprep.subr.bf16.mxu0 0
      %6637 = vmatpush1.bf16.xpose.msra.mxu0 %v6628
      %6638 = vmatprep.subr.bf16.mxu0 0
      %6639 = vmatpush1.bf16.xpose.msra.mxu0 0
      %6640 = vmatprep.subr.bf16.mxu0 0
      %6641 = vmatpush1.bf16.xpose.msra.mxu0 0
      %6642 = vmatprep.subr.bf16.mxu0 0
      %6643 = vmatpush1.bf16.xpose.msra.mxu0 0
      %6644 = vmatprep.subr.bf16.mxu0 0
      %6645 = vmatpush1.bf16.xpose.msra.mxu0 0
      %6646 = vmatprep.subr.bf16.mxu0 0
      %6647 = vmatpush1.bf16.xpose.msra.mxu0 0
      %6648 = vmatprep.subr.bf16.mxu0 0
      %6649 = vmatpush1.bf16.xpose.msra.mxu0 0
      %6650 = vmatprep.subr.bf16.mxu0 0
      %6651 = vmatpush1.bf16.xpose.msra.mxu0 0
      %6652 = vmatprep.subr.bf16.mxu0 0
      %6653 = vmatpush1.bf16.xpose.msra.mxu0 0
      %6654 = vmatprep.subr.bf16.mxu0 0
      %6655 = vmatpush1.bf16.xpose.msra.mxu0 0
      %6656 = vmatprep.subr.bf16.mxu0 0
      %6657 = vmatpush1.bf16.xpose.msra.mxu0 0
      %6658 = vmatprep.subr.bf16.mxu0 0
      %6659 = vmatpush1.bf16.xpose.msra.mxu0 0
      %6660 = vmatprep.subr.bf16.mxu0 0
      %6661 = vmatpush1.bf16.xpose.msra.mxu0 0
      %6662 = vmatprep.mubr.bf16.mxu0 0
      %6663 = vmatmul.mubr.bf16.gmra.mrb[0].mxu0 %v6607
      %v6664 = vpop.f32.mrb[0].mxu0
      %v6665 = vadd.f32 %v974, %v6664
      %v6666 = vpop.f32.mrb[0].mxu0
      %v6667 = vpop.f32.mrb[0].mxu0
      %v6668 = vadd.f32 %v975, %v6667
      %v6669 = vpop.f32.mrb[0].mxu0
      %6670 = vmatprep.mubr.bf16.mxu0 0
      %6671 = vmatmul.mubr.bf16.gmra.mrb[0].mxu0 %v6610
      %v6672 = vpop.f32.mrb[0].mxu0
      %v6673 = vadd.f32 %v976, %v6672
      %v6674 = vpop.f32.mrb[0].mxu0
      %v6675 = vpop.f32.mrb[0].mxu0
      %v6676 = vadd.f32 %v977, %v6675
      %v6677 = vpop.f32.mrb[0].mxu0
      %6678 = vmatprep.mubr.bf16.mxu0 0
      %6679 = vmatmul.mubr.bf16.gmra.mrb[0].mxu0 %v6613
      %v6680 = vpop.f32.mrb[0].mxu0
      %v6681 = vadd.f32 %v978, %v6680
      %v6682 = vpop.f32.mrb[0].mxu0
      %v6683 = vpop.f32.mrb[0].mxu0
      %v6684 = vadd.f32 %v979, %v6683
      %v6685 = vpop.f32.mrb[0].mxu0
      %6686 = vmatprep.mubr.bf16.mxu0 0
      %6687 = vmatmul.mubr.bf16.gmra.mrb[0].mxu0 %v6616
      %v6688 = vpop.f32.mrb[0].mxu0
      %v6689 = vadd.f32 %v980, %v6688
      %v6690 = vpop.f32.mrb[0].mxu0
      %v6691 = vpop.f32.mrb[0].mxu0
      %v6692 = vadd.f32 %v981, %v6691
      %v6693 = vpop.f32.mrb[0].mxu0
      %6694 = vdwg.mxu0
      %6695 = vrot.lane.b32.xlu0 %v906, 112
      %v6696 = vpop.permute.xlu0 %6695
      %6697 = vrot.lane.b32.xlu0 %v907, 112
      %v6698 = vpop.permute.xlu0 %6697
      %6699 = vrot.lane.b32.xlu0 %v908, 112
      %v6700 = vpop.permute.xlu0 %6699
      %6701 = vrot.lane.b32.xlu0 %v909, 112
      %v6702 = vpop.permute.xlu0 %6701
      %6703 = vrot.lane.b32.xlu0 %v906, 80
      %v6704 = vpop.permute.xlu0 %6703
      %6705 = vrot.lane.b32.xlu0 %v907, 80
      %v6706 = vpop.permute.xlu0 %6705
      %6707 = vrot.lane.b32.xlu0 %v908, 80
      %v6708 = vpop.permute.xlu0 %6707
      %6709 = vrot.lane.b32.xlu0 %v909, 80
      %v6710 = vpop.permute.xlu0 %6709
      %v6712 = vsel %vm1002, %v6696, 0
      %v6715 = vsel %vm1002, %v6698, 0
      %v6718 = vsel %vm1002, %v6700, 0
      %v6721 = vsel %vm1002, %v6702, 0
      %v6724 = vsel %vm1002, %v6704, 0
      %v6727 = vsel %vm1002, %v6706, 0
      %v6730 = vsel %vm1002, %v6708, 0
      %v6733 = vsel %vm1002, %v6710, 0
      %6735 = vmatprep.subr.bf16.mxu0 0
      %6736 = vmatpush1.bf16.xpose.msra.mxu0 %v6724
      %6737 = vmatprep.subr.bf16.mxu0 0
      %6738 = vmatpush1.bf16.xpose.msra.mxu0 %v6727
      %6739 = vmatprep.subr.bf16.mxu0 0
      %6740 = vmatpush1.bf16.xpose.msra.mxu0 %v6730
      %6741 = vmatprep.subr.bf16.mxu0 0
      %6742 = vmatpush1.bf16.xpose.msra.mxu0 %v6733
      %6743 = vmatprep.subr.bf16.mxu0 0
      %6744 = vmatpush1.bf16.xpose.msra.mxu0 0
      %6745 = vmatprep.subr.bf16.mxu0 0
      %6746 = vmatpush1.bf16.xpose.msra.mxu0 0
      %6747 = vmatprep.subr.bf16.mxu0 0
      %6748 = vmatpush1.bf16.xpose.msra.mxu0 0
      %6749 = vmatprep.subr.bf16.mxu0 0
      %6750 = vmatpush1.bf16.xpose.msra.mxu0 0
      %6751 = vmatprep.subr.bf16.mxu0 0
      %6752 = vmatpush1.bf16.xpose.msra.mxu0 0
      %6753 = vmatprep.subr.bf16.mxu0 0
      %6754 = vmatpush1.bf16.xpose.msra.mxu0 0
      %6755 = vmatprep.subr.bf16.mxu0 0
      %6756 = vmatpush1.bf16.xpose.msra.mxu0 0
      %6757 = vmatprep.subr.bf16.mxu0 0
      %6758 = vmatpush1.bf16.xpose.msra.mxu0 0
      %6759 = vmatprep.subr.bf16.mxu0 0
      %6760 = vmatpush1.bf16.xpose.msra.mxu0 0
      %6761 = vmatprep.subr.bf16.mxu0 0
      %6762 = vmatpush1.bf16.xpose.msra.mxu0 0
      %6763 = vmatprep.subr.bf16.mxu0 0
      %6764 = vmatpush1.bf16.xpose.msra.mxu0 0
      %6765 = vmatprep.subr.bf16.mxu0 0
      %6766 = vmatpush1.bf16.xpose.msra.mxu0 0
      %6767 = vmatprep.mubr.bf16.mxu0 0
      %6768 = vmatmul.mubr.bf16.gmra.mrb[0].mxu0 %v6712
      %v6769 = vpop.f32.mrb[0].mxu0
      %v6770 = vadd.f32 %v974, %v6769
      %v6771 = vpop.f32.mrb[0].mxu0
      %v6772 = vpop.f32.mrb[0].mxu0
      %v6773 = vadd.f32 %v975, %v6772
      %v6774 = vpop.f32.mrb[0].mxu0
      %6775 = vmatprep.mubr.bf16.mxu0 0
      %6776 = vmatmul.mubr.bf16.gmra.mrb[0].mxu0 %v6715
      %v6777 = vpop.f32.mrb[0].mxu0
      %v6778 = vadd.f32 %v976, %v6777
      %v6779 = vpop.f32.mrb[0].mxu0
      %v6780 = vpop.f32.mrb[0].mxu0
      %v6781 = vadd.f32 %v977, %v6780
      %v6782 = vpop.f32.mrb[0].mxu0
      %6783 = vmatprep.mubr.bf16.mxu0 0
      %6784 = vmatmul.mubr.bf16.gmra.mrb[0].mxu0 %v6718
      %v6785 = vpop.f32.mrb[0].mxu0
      %v6786 = vadd.f32 %v978, %v6785
      %v6787 = vpop.f32.mrb[0].mxu0
      %v6788 = vpop.f32.mrb[0].mxu0
      %v6789 = vadd.f32 %v979, %v6788
      %v6790 = vpop.f32.mrb[0].mxu0
      %6791 = vmatprep.mubr.bf16.mxu0 0
      %6792 = vmatmul.mubr.bf16.gmra.mrb[0].mxu0 %v6721
      %v6793 = vpop.f32.mrb[0].mxu0
      %v6794 = vadd.f32 %v980, %v6793
      %v6795 = vpop.f32.mrb[0].mxu0
      %v6796 = vpop.f32.mrb[0].mxu0
      %v6797 = vadd.f32 %v981, %v6796
      %v6798 = vpop.f32.mrb[0].mxu0
      %6799 = vdwg.mxu0
      %6800 = vrot.lane.b32.xlu0 %v910, 112
      %v6801 = vpop.permute.xlu0 %6800
      %6802 = vrot.lane.b32.xlu0 %v911, 112
      %v6803 = vpop.permute.xlu0 %6802
      %6804 = vrot.lane.b32.xlu0 %v912, 112
      %v6805 = vpop.permute.xlu0 %6804
      %6806 = vrot.lane.b32.xlu0 %v913, 112
      %v6807 = vpop.permute.xlu0 %6806
      %6808 = vrot.lane.b32.xlu0 %v910, 80
      %v6809 = vpop.permute.xlu0 %6808
      %6810 = vrot.lane.b32.xlu0 %v911, 80
      %v6811 = vpop.permute.xlu0 %6810
      %6812 = vrot.lane.b32.xlu0 %v912, 80
      %v6813 = vpop.permute.xlu0 %6812
      %6814 = vrot.lane.b32.xlu0 %v913, 80
      %v6815 = vpop.permute.xlu0 %6814
      %v6817 = vsel %vm1002, %v6801, 0
      %v6820 = vsel %vm1002, %v6803, 0
      %v6823 = vsel %vm1002, %v6805, 0
      %v6826 = vsel %vm1002, %v6807, 0
      %v6829 = vsel %vm1002, %v6809, 0
      %v6832 = vsel %vm1002, %v6811, 0
      %v6835 = vsel %vm1002, %v6813, 0
      %v6838 = vsel %vm1002, %v6815, 0
      %6840 = vmatprep.subr.bf16.mxu0 0
      %6841 = vmatpush1.bf16.xpose.msra.mxu0 %v6829
      %6842 = vmatprep.subr.bf16.mxu0 0
      %6843 = vmatpush1.bf16.xpose.msra.mxu0 %v6832
      %6844 = vmatprep.subr.bf16.mxu0 0
      %6845 = vmatpush1.bf16.xpose.msra.mxu0 %v6835
      %6846 = vmatprep.subr.bf16.mxu0 0
      %6847 = vmatpush1.bf16.xpose.msra.mxu0 %v6838
      %6848 = vmatprep.subr.bf16.mxu0 0
      %6849 = vmatpush1.bf16.xpose.msra.mxu0 0
      %6850 = vmatprep.subr.bf16.mxu0 0
      %6851 = vmatpush1.bf16.xpose.msra.mxu0 0
      %6852 = vmatprep.subr.bf16.mxu0 0
      %6853 = vmatpush1.bf16.xpose.msra.mxu0 0
      %6854 = vmatprep.subr.bf16.mxu0 0
      %6855 = vmatpush1.bf16.xpose.msra.mxu0 0
      %6856 = vmatprep.subr.bf16.mxu0 0
      %6857 = vmatpush1.bf16.xpose.msra.mxu0 0
      %6858 = vmatprep.subr.bf16.mxu0 0
      %6859 = vmatpush1.bf16.xpose.msra.mxu0 0
      %6860 = vmatprep.subr.bf16.mxu0 0
      %6861 = vmatpush1.bf16.xpose.msra.mxu0 0
      %6862 = vmatprep.subr.bf16.mxu0 0
      %6863 = vmatpush1.bf16.xpose.msra.mxu0 0
      %6864 = vmatprep.subr.bf16.mxu0 0
      %6865 = vmatpush1.bf16.xpose.msra.mxu0 0
      %6866 = vmatprep.subr.bf16.mxu0 0
      %6867 = vmatpush1.bf16.xpose.msra.mxu0 0
      %6868 = vmatprep.subr.bf16.mxu0 0
      %6869 = vmatpush1.bf16.xpose.msra.mxu0 0
      %6870 = vmatprep.subr.bf16.mxu0 0
      %6871 = vmatpush1.bf16.xpose.msra.mxu0 0
      %6872 = vmatprep.mubr.bf16.mxu0 0
      %6873 = vmatmul.mubr.bf16.gmra.mrb[0].mxu0 %v6817
      %v6874 = vpop.f32.mrb[0].mxu0
      %v6875 = vadd.f32 %v974, %v6874
      %v6876 = vpop.f32.mrb[0].mxu0
      %v6877 = vpop.f32.mrb[0].mxu0
      %v6878 = vadd.f32 %v975, %v6877
      %v6879 = vpop.f32.mrb[0].mxu0
      %6880 = vmatprep.mubr.bf16.mxu0 0
      %6881 = vmatmul.mubr.bf16.gmra.mrb[0].mxu0 %v6820
      %v6882 = vpop.f32.mrb[0].mxu0
      %v6883 = vadd.f32 %v976, %v6882
      %v6884 = vpop.f32.mrb[0].mxu0
      %v6885 = vpop.f32.mrb[0].mxu0
      %v6886 = vadd.f32 %v977, %v6885
      %v6887 = vpop.f32.mrb[0].mxu0
      %6888 = vmatprep.mubr.bf16.mxu0 0
      %6889 = vmatmul.mubr.bf16.gmra.mrb[0].mxu0 %v6823
      %v6890 = vpop.f32.mrb[0].mxu0
      %v6891 = vadd.f32 %v978, %v6890
      %v6892 = vpop.f32.mrb[0].mxu0
      %v6893 = vpop.f32.mrb[0].mxu0
      %v6894 = vadd.f32 %v979, %v6893
      %v6895 = vpop.f32.mrb[0].mxu0
      %6896 = vmatprep.mubr.bf16.mxu0 0
      %6897 = vmatmul.mubr.bf16.gmra.mrb[0].mxu0 %v6826
      %v6898 = vpop.f32.mrb[0].mxu0
      %v6899 = vadd.f32 %v980, %v6898
      %v6900 = vpop.f32.mrb[0].mxu0
      %v6901 = vpop.f32.mrb[0].mxu0
      %v6902 = vadd.f32 %v981, %v6901
      %v6903 = vpop.f32.mrb[0].mxu0
      %6904 = vdwg.mxu0
      %6905 = vrot.lane.b32.xlu0 %v914, 112
      %v6906 = vpop.permute.xlu0 %6905
      %6907 = vrot.lane.b32.xlu0 %v915, 112
      %v6908 = vpop.permute.xlu0 %6907
      %6909 = vrot.lane.b32.xlu0 %v916, 112
      %v6910 = vpop.permute.xlu0 %6909
      %6911 = vrot.lane.b32.xlu0 %v917, 112
      %v6912 = vpop.permute.xlu0 %6911
      %6913 = vrot.lane.b32.xlu0 %v914, 80
      %v6914 = vpop.permute.xlu0 %6913
      %6915 = vrot.lane.b32.xlu0 %v915, 80
      %v6916 = vpop.permute.xlu0 %6915
      %6917 = vrot.lane.b32.xlu0 %v916, 80
      %v6918 = vpop.permute.xlu0 %6917
      %6919 = vrot.lane.b32.xlu0 %v917, 80
      %v6920 = vpop.permute.xlu0 %6919
      %v6922 = vsel %vm1002, %v6906, 0
      %v6925 = vsel %vm1002, %v6908, 0
      %v6928 = vsel %vm1002, %v6910, 0
      %v6931 = vsel %vm1002, %v6912, 0
      %v6934 = vsel %vm1002, %v6914, 0
      %v6937 = vsel %vm1002, %v6916, 0
      %v6940 = vsel %vm1002, %v6918, 0
      %v6943 = vsel %vm1002, %v6920, 0
      %6945 = vmatprep.subr.bf16.mxu0 0
      %6946 = vmatpush1.bf16.xpose.msra.mxu0 %v6934
      %6947 = vmatprep.subr.bf16.mxu0 0
      %6948 = vmatpush1.bf16.xpose.msra.mxu0 %v6937
      %6949 = vmatprep.subr.bf16.mxu0 0
      %6950 = vmatpush1.bf16.xpose.msra.mxu0 %v6940
      %6951 = vmatprep.subr.bf16.mxu0 0
      %6952 = vmatpush1.bf16.xpose.msra.mxu0 %v6943
      %6953 = vmatprep.subr.bf16.mxu0 0
      %6954 = vmatpush1.bf16.xpose.msra.mxu0 0
      %6955 = vmatprep.subr.bf16.mxu0 0
      %6956 = vmatpush1.bf16.xpose.msra.mxu0 0
      %6957 = vmatprep.subr.bf16.mxu0 0
      %6958 = vmatpush1.bf16.xpose.msra.mxu0 0
      %6959 = vmatprep.subr.bf16.mxu0 0
      %6960 = vmatpush1.bf16.xpose.msra.mxu0 0
      %6961 = vmatprep.subr.bf16.mxu0 0
      %6962 = vmatpush1.bf16.xpose.msra.mxu0 0
      %6963 = vmatprep.subr.bf16.mxu0 0
      %6964 = vmatpush1.bf16.xpose.msra.mxu0 0
      %6965 = vmatprep.subr.bf16.mxu0 0
      %6966 = vmatpush1.bf16.xpose.msra.mxu0 0
      %6967 = vmatprep.subr.bf16.mxu0 0
      %6968 = vmatpush1.bf16.xpose.msra.mxu0 0
      %6969 = vmatprep.subr.bf16.mxu0 0
      %6970 = vmatpush1.bf16.xpose.msra.mxu0 0
      %6971 = vmatprep.subr.bf16.mxu0 0
      %6972 = vmatpush1.bf16.xpose.msra.mxu0 0
      %6973 = vmatprep.subr.bf16.mxu0 0
      %6974 = vmatpush1.bf16.xpose.msra.mxu0 0
      %6975 = vmatprep.subr.bf16.mxu0 0
      %6976 = vmatpush1.bf16.xpose.msra.mxu0 0
      %6977 = vmatprep.mubr.bf16.mxu0 0
      %6978 = vmatmul.mubr.bf16.gmra.mrb[0].mxu0 %v6922
      %v6979 = vpop.f32.mrb[0].mxu0
      %v6980 = vadd.f32 %v974, %v6979
      %v6981 = vpop.f32.mrb[0].mxu0
      %v6982 = vpop.f32.mrb[0].mxu0
      %v6983 = vadd.f32 %v975, %v6982
      %v6984 = vpop.f32.mrb[0].mxu0
      %6985 = vmatprep.mubr.bf16.mxu0 0
      %6986 = vmatmul.mubr.bf16.gmra.mrb[0].mxu0 %v6925
      %v6987 = vpop.f32.mrb[0].mxu0
      %v6988 = vadd.f32 %v976, %v6987
      %v6989 = vpop.f32.mrb[0].mxu0
      %v6990 = vpop.f32.mrb[0].mxu0
      %v6991 = vadd.f32 %v977, %v6990
      %v6992 = vpop.f32.mrb[0].mxu0
      %6993 = vmatprep.mubr.bf16.mxu0 0
      %6994 = vmatmul.mubr.bf16.gmra.mrb[0].mxu0 %v6928
      %v6995 = vpop.f32.mrb[0].mxu0
      %v6996 = vadd.f32 %v978, %v6995
      %v6997 = vpop.f32.mrb[0].mxu0
      %v6998 = vpop.f32.mrb[0].mxu0
      %v6999 = vadd.f32 %v979, %v6998
      %v7000 = vpop.f32.mrb[0].mxu0
      %7001 = vmatprep.mubr.bf16.mxu0 0
      %7002 = vmatmul.mubr.bf16.gmra.mrb[0].mxu0 %v6931
      %v7003 = vpop.f32.mrb[0].mxu0
      %v7004 = vadd.f32 %v980, %v7003
      %v7005 = vpop.f32.mrb[0].mxu0
      %v7006 = vpop.f32.mrb[0].mxu0
      %v7007 = vadd.f32 %v981, %v7006
      %v7008 = vpop.f32.mrb[0].mxu0
      %7009 = vdwg.mxu0
      %7010 = vrot.lane.b32.xlu0 %v918, 112
      %v7011 = vpop.permute.xlu0 %7010
      %7012 = vrot.lane.b32.xlu0 %v919, 112
      %v7013 = vpop.permute.xlu0 %7012
      %7014 = vrot.lane.b32.xlu0 %v920, 112
      %v7015 = vpop.permute.xlu0 %7014
      %7016 = vrot.lane.b32.xlu0 %v921, 112
      %v7017 = vpop.permute.xlu0 %7016
      %7018 = vrot.lane.b32.xlu0 %v918, 80
      %v7019 = vpop.permute.xlu0 %7018
      %7020 = vrot.lane.b32.xlu0 %v919, 80
      %v7021 = vpop.permute.xlu0 %7020
      %7022 = vrot.lane.b32.xlu0 %v920, 80
      %v7023 = vpop.permute.xlu0 %7022
      %7024 = vrot.lane.b32.xlu0 %v921, 80
      %v7025 = vpop.permute.xlu0 %7024
      %v7027 = vsel %vm1002, %v7011, 0
      %v7030 = vsel %vm1002, %v7013, 0
      %v7033 = vsel %vm1002, %v7015, 0
      %v7036 = vsel %vm1002, %v7017, 0
      %v7039 = vsel %vm1002, %v7019, 0
      %v7042 = vsel %vm1002, %v7021, 0
      %v7045 = vsel %vm1002, %v7023, 0
      %v7048 = vsel %vm1002, %v7025, 0
      %7050 = vmatprep.subr.bf16.mxu0 0
      %7051 = vmatpush1.bf16.xpose.msra.mxu0 %v7039
      %7052 = vmatprep.subr.bf16.mxu0 0
      %7053 = vmatpush1.bf16.xpose.msra.mxu0 %v7042
      %7054 = vmatprep.subr.bf16.mxu0 0
      %7055 = vmatpush1.bf16.xpose.msra.mxu0 %v7045
      %7056 = vmatprep.subr.bf16.mxu0 0
      %7057 = vmatpush1.bf16.xpose.msra.mxu0 %v7048
      %7058 = vmatprep.subr.bf16.mxu0 0
      %7059 = vmatpush1.bf16.xpose.msra.mxu0 0
      %7060 = vmatprep.subr.bf16.mxu0 0
      %7061 = vmatpush1.bf16.xpose.msra.mxu0 0
      %7062 = vmatprep.subr.bf16.mxu0 0
      %7063 = vmatpush1.bf16.xpose.msra.mxu0 0
      %7064 = vmatprep.subr.bf16.mxu0 0
      %7065 = vmatpush1.bf16.xpose.msra.mxu0 0
      %7066 = vmatprep.subr.bf16.mxu0 0
      %7067 = vmatpush1.bf16.xpose.msra.mxu0 0
      %7068 = vmatprep.subr.bf16.mxu0 0
      %7069 = vmatpush1.bf16.xpose.msra.mxu0 0
      %7070 = vmatprep.subr.bf16.mxu0 0
      %7071 = vmatpush1.bf16.xpose.msra.mxu0 0
      %7072 = vmatprep.subr.bf16.mxu0 0
      %7073 = vmatpush1.bf16.xpose.msra.mxu0 0
      %7074 = vmatprep.subr.bf16.mxu0 0
      %7075 = vmatpush1.bf16.xpose.msra.mxu0 0
      %7076 = vmatprep.subr.bf16.mxu0 0
      %7077 = vmatpush1.bf16.xpose.msra.mxu0 0
      %7078 = vmatprep.subr.bf16.mxu0 0
      %7079 = vmatpush1.bf16.xpose.msra.mxu0 0
      %7080 = vmatprep.subr.bf16.mxu0 0
      %7081 = vmatpush1.bf16.xpose.msra.mxu0 0
      %7082 = vmatprep.mubr.bf16.mxu0 0
      %7083 = vmatmul.mubr.bf16.gmra.mrb[0].mxu0 %v7027
      %v7084 = vpop.f32.mrb[0].mxu0
      %v7085 = vadd.f32 %v974, %v7084
      %v7086 = vpop.f32.mrb[0].mxu0
      %v7087 = vpop.f32.mrb[0].mxu0
      %v7088 = vadd.f32 %v975, %v7087
      %v7089 = vpop.f32.mrb[0].mxu0
      %7090 = vmatprep.mubr.bf16.mxu0 0
      %7091 = vmatmul.mubr.bf16.gmra.mrb[0].mxu0 %v7030
      %v7092 = vpop.f32.mrb[0].mxu0
      %v7093 = vadd.f32 %v976, %v7092
      %v7094 = vpop.f32.mrb[0].mxu0
      %v7095 = vpop.f32.mrb[0].mxu0
      %v7096 = vadd.f32 %v977, %v7095
      %v7097 = vpop.f32.mrb[0].mxu0
      %7098 = vmatprep.mubr.bf16.mxu0 0
      %7099 = vmatmul.mubr.bf16.gmra.mrb[0].mxu0 %v7033
      %v7100 = vpop.f32.mrb[0].mxu0
      %v7101 = vadd.f32 %v978, %v7100
      %v7102 = vpop.f32.mrb[0].mxu0
      %v7103 = vpop.f32.mrb[0].mxu0
      %v7104 = vadd.f32 %v979, %v7103
      %v7105 = vpop.f32.mrb[0].mxu0
      %7106 = vmatprep.mubr.bf16.mxu0 0
      %7107 = vmatmul.mubr.bf16.gmra.mrb[0].mxu0 %v7036
      %v7108 = vpop.f32.mrb[0].mxu0
      %v7109 = vadd.f32 %v980, %v7108
      %v7110 = vpop.f32.mrb[0].mxu0
      %v7111 = vpop.f32.mrb[0].mxu0
      %v7112 = vadd.f32 %v981, %v7111
      %v7113 = vpop.f32.mrb[0].mxu0
      %7114 = vdwg.mxu0
      %7115 = vrot.lane.b32.xlu0 %v922, 112
      %v7116 = vpop.permute.xlu0 %7115
      %7117 = vrot.lane.b32.xlu0 %v923, 112
      %v7118 = vpop.permute.xlu0 %7117
      %7119 = vrot.lane.b32.xlu0 %v924, 112
      %v7120 = vpop.permute.xlu0 %7119
      %7121 = vrot.lane.b32.xlu0 %v925, 112
      %v7122 = vpop.permute.xlu0 %7121
      %7123 = vrot.lane.b32.xlu0 %v922, 80
      %v7124 = vpop.permute.xlu0 %7123
      %7125 = vrot.lane.b32.xlu0 %v923, 80
      %v7126 = vpop.permute.xlu0 %7125
      %7127 = vrot.lane.b32.xlu0 %v924, 80
      %v7128 = vpop.permute.xlu0 %7127
      %7129 = vrot.lane.b32.xlu0 %v925, 80
      %v7130 = vpop.permute.xlu0 %7129
      %v7132 = vsel %vm1002, %v7116, 0
      %v7135 = vsel %vm1002, %v7118, 0
      %v7138 = vsel %vm1002, %v7120, 0
      %v7141 = vsel %vm1002, %v7122, 0
      %v7144 = vsel %vm1002, %v7124, 0
      %v7147 = vsel %vm1002, %v7126, 0
      %v7150 = vsel %vm1002, %v7128, 0
      %v7153 = vsel %vm1002, %v7130, 0
      %7155 = vmatprep.subr.bf16.mxu0 0
      %7156 = vmatpush1.bf16.xpose.msra.mxu0 %v7144
      %7157 = vmatprep.subr.bf16.mxu0 0
      %7158 = vmatpush1.bf16.xpose.msra.mxu0 %v7147
      %7159 = vmatprep.subr.bf16.mxu0 0
      %7160 = vmatpush1.bf16.xpose.msra.mxu0 %v7150
      %7161 = vmatprep.subr.bf16.mxu0 0
      %7162 = vmatpush1.bf16.xpose.msra.mxu0 %v7153
      %7163 = vmatprep.subr.bf16.mxu0 0
      %7164 = vmatpush1.bf16.xpose.msra.mxu0 0
      %7165 = vmatprep.subr.bf16.mxu0 0
      %7166 = vmatpush1.bf16.xpose.msra.mxu0 0
      %7167 = vmatprep.subr.bf16.mxu0 0
      %7168 = vmatpush1.bf16.xpose.msra.mxu0 0
      %7169 = vmatprep.subr.bf16.mxu0 0
      %7170 = vmatpush1.bf16.xpose.msra.mxu0 0
      %7171 = vmatprep.subr.bf16.mxu0 0
      %7172 = vmatpush1.bf16.xpose.msra.mxu0 0
      %7173 = vmatprep.subr.bf16.mxu0 0
      %7174 = vmatpush1.bf16.xpose.msra.mxu0 0
      %7175 = vmatprep.subr.bf16.mxu0 0
      %7176 = vmatpush1.bf16.xpose.msra.mxu0 0
      %7177 = vmatprep.subr.bf16.mxu0 0
      %7178 = vmatpush1.bf16.xpose.msra.mxu0 0
      %7179 = vmatprep.subr.bf16.mxu0 0
      %7180 = vmatpush1.bf16.xpose.msra.mxu0 0
      %7181 = vmatprep.subr.bf16.mxu0 0
      %7182 = vmatpush1.bf16.xpose.msra.mxu0 0
      %7183 = vmatprep.subr.bf16.mxu0 0
      %7184 = vmatpush1.bf16.xpose.msra.mxu0 0
      %7185 = vmatprep.subr.bf16.mxu0 0
      %7186 = vmatpush1.bf16.xpose.msra.mxu0 0
      %7187 = vmatprep.mubr.bf16.mxu0 0
      %7188 = vmatmul.mubr.bf16.gmra.mrb[0].mxu0 %v7132
      %v7189 = vpop.f32.mrb[0].mxu0
      %v7190 = vadd.f32 %v974, %v7189
      %v7191 = vpop.f32.mrb[0].mxu0
      %v7192 = vpop.f32.mrb[0].mxu0
      %v7193 = vadd.f32 %v975, %v7192
      %v7194 = vpop.f32.mrb[0].mxu0
      %7195 = vmatprep.mubr.bf16.mxu0 0
      %7196 = vmatmul.mubr.bf16.gmra.mrb[0].mxu0 %v7135
      %v7197 = vpop.f32.mrb[0].mxu0
      %v7198 = vadd.f32 %v976, %v7197
      %v7199 = vpop.f32.mrb[0].mxu0
      %v7200 = vpop.f32.mrb[0].mxu0
      %v7201 = vadd.f32 %v977, %v7200
      %v7202 = vpop.f32.mrb[0].mxu0
      %7203 = vmatprep.mubr.bf16.mxu0 0
      %7204 = vmatmul.mubr.bf16.gmra.mrb[0].mxu0 %v7138
      %v7205 = vpop.f32.mrb[0].mxu0
      %v7206 = vadd.f32 %v978, %v7205
      %v7207 = vpop.f32.mrb[0].mxu0
      %v7208 = vpop.f32.mrb[0].mxu0
      %v7209 = vadd.f32 %v979, %v7208
      %v7210 = vpop.f32.mrb[0].mxu0
      %7211 = vmatprep.mubr.bf16.mxu0 0
      %7212 = vmatmul.mubr.bf16.gmra.mrb[0].mxu0 %v7141
      %v7213 = vpop.f32.mrb[0].mxu0
      %v7214 = vadd.f32 %v980, %v7213
      %v7215 = vpop.f32.mrb[0].mxu0
      %v7216 = vpop.f32.mrb[0].mxu0
      %v7217 = vadd.f32 %v981, %v7216
      %v7218 = vpop.f32.mrb[0].mxu0
      %7219 = vdwg.mxu0
      %v7220 = vsel %vm1799, %v6455, -inf
      %7221 = vmax.xlane.f32.xlu0 %v7220
      %v7222 = vpop.xlane.xlu0 %7221
      %v7223 = vsel %vm1799, %v6458, -inf
      %7224 = vmax.xlane.f32.xlu0 %v7223
      %v7225 = vpop.xlane.xlu0 %7224
      %v7226 = vsel %vm1799, %v6463, -inf
      %7227 = vmax.xlane.f32.xlu0 %v7226
      %v7228 = vpop.xlane.xlu0 %7227
      %v7229 = vsel %vm1799, %v6466, -inf
      %7230 = vmax.xlane.f32.xlu0 %v7229
      %v7231 = vpop.xlane.xlu0 %7230
      %v7232 = vsel %vm1799, %v6471, -inf
      %7233 = vmax.xlane.f32.xlu0 %v7232
      %v7234 = vpop.xlane.xlu0 %7233
      %v7235 = vsel %vm1799, %v6474, -inf
      %7236 = vmax.xlane.f32.xlu0 %v7235
      %v7237 = vpop.xlane.xlu0 %7236
      %v7238 = vsel %vm1799, %v6479, -inf
      %7239 = vmax.xlane.f32.xlu0 %v7238
      %v7240 = vpop.xlane.xlu0 %7239
      %v7241 = vsel %vm1799, %v6482, -inf
      %7242 = vmax.xlane.f32.xlu0 %v7241
      %v7243 = vpop.xlane.xlu0 %7242
      %v7244 = vsel %vm1799, %v6560, -inf
      %7245 = vmax.xlane.f32.xlu0 %v7244
      %v7246 = vpop.xlane.xlu0 %7245
      %v7247 = vsel %vm1799, %v6563, -inf
      %7248 = vmax.xlane.f32.xlu0 %v7247
      %v7249 = vpop.xlane.xlu0 %7248
      %v7250 = vsel %vm1799, %v6568, -inf
      %7251 = vmax.xlane.f32.xlu0 %v7250
      %v7252 = vpop.xlane.xlu0 %7251
      %v7253 = vsel %vm1799, %v6571, -inf
      %7254 = vmax.xlane.f32.xlu0 %v7253
      %v7255 = vpop.xlane.xlu0 %7254
      %v7256 = vsel %vm1799, %v6576, -inf
      %7257 = vmax.xlane.f32.xlu0 %v7256
      %v7258 = vpop.xlane.xlu0 %7257
      %v7259 = vsel %vm1799, %v6579, -inf
      %7260 = vmax.xlane.f32.xlu0 %v7259
      %v7261 = vpop.xlane.xlu0 %7260
      %v7262 = vsel %vm1799, %v6584, -inf
      %7263 = vmax.xlane.f32.xlu0 %v7262
      %v7264 = vpop.xlane.xlu0 %7263
      %v7265 = vsel %vm1799, %v6587, -inf
      %7266 = vmax.xlane.f32.xlu0 %v7265
      %v7267 = vpop.xlane.xlu0 %7266
      %v7268 = vsel %vm1799, %v6665, -inf
      %7269 = vmax.xlane.f32.xlu0 %v7268
      %v7270 = vpop.xlane.xlu0 %7269
      %v7271 = vsel %vm1799, %v6668, -inf
      %7272 = vmax.xlane.f32.xlu0 %v7271
      %v7273 = vpop.xlane.xlu0 %7272
      %v7274 = vsel %vm1799, %v6673, -inf
      %7275 = vmax.xlane.f32.xlu0 %v7274
      %v7276 = vpop.xlane.xlu0 %7275
      %v7277 = vsel %vm1799, %v6676, -inf
      %7278 = vmax.xlane.f32.xlu0 %v7277
      %v7279 = vpop.xlane.xlu0 %7278
      %v7280 = vsel %vm1799, %v6681, -inf
      %7281 = vmax.xlane.f32.xlu0 %v7280
      %v7282 = vpop.xlane.xlu0 %7281
      %v7283 = vsel %vm1799, %v6684, -inf
      %7284 = vmax.xlane.f32.xlu0 %v7283
      %v7285 = vpop.xlane.xlu0 %7284
      %v7286 = vsel %vm1799, %v6689, -inf
      %7287 = vmax.xlane.f32.xlu0 %v7286
      %v7288 = vpop.xlane.xlu0 %7287
      %v7289 = vsel %vm1799, %v6692, -inf
      %7290 = vmax.xlane.f32.xlu0 %v7289
      %v7291 = vpop.xlane.xlu0 %7290
      %v7292 = vsel %vm1799, %v6770, -inf
      %7293 = vmax.xlane.f32.xlu0 %v7292
      %v7294 = vpop.xlane.xlu0 %7293
      %v7295 = vsel %vm1799, %v6773, -inf
      %7296 = vmax.xlane.f32.xlu0 %v7295
      %v7297 = vpop.xlane.xlu0 %7296
      %v7298 = vsel %vm1799, %v6778, -inf
      %7299 = vmax.xlane.f32.xlu0 %v7298
      %v7300 = vpop.xlane.xlu0 %7299
      %v7301 = vsel %vm1799, %v6781, -inf
      %7302 = vmax.xlane.f32.xlu0 %v7301
      %v7303 = vpop.xlane.xlu0 %7302
      %v7304 = vsel %vm1799, %v6786, -inf
      %7305 = vmax.xlane.f32.xlu0 %v7304
      %v7306 = vpop.xlane.xlu0 %7305
      %v7307 = vsel %vm1799, %v6789, -inf
      %7308 = vmax.xlane.f32.xlu0 %v7307
      %v7309 = vpop.xlane.xlu0 %7308
      %v7310 = vsel %vm1799, %v6794, -inf
      %7311 = vmax.xlane.f32.xlu0 %v7310
      %v7312 = vpop.xlane.xlu0 %7311
      %v7313 = vsel %vm1799, %v6797, -inf
      %7314 = vmax.xlane.f32.xlu0 %v7313
      %v7315 = vpop.xlane.xlu0 %7314
      %v7316 = vsel %vm1799, %v6875, -inf
      %7317 = vmax.xlane.f32.xlu0 %v7316
      %v7318 = vpop.xlane.xlu0 %7317
      %v7319 = vsel %vm1799, %v6878, -inf
      %7320 = vmax.xlane.f32.xlu0 %v7319
      %v7321 = vpop.xlane.xlu0 %7320
      %v7322 = vsel %vm1799, %v6883, -inf
      %7323 = vmax.xlane.f32.xlu0 %v7322
      %v7324 = vpop.xlane.xlu0 %7323
      %v7325 = vsel %vm1799, %v6886, -inf
      %7326 = vmax.xlane.f32.xlu0 %v7325
      %v7327 = vpop.xlane.xlu0 %7326
      %v7328 = vsel %vm1799, %v6891, -inf
      %7329 = vmax.xlane.f32.xlu0 %v7328
      %v7330 = vpop.xlane.xlu0 %7329
      %v7331 = vsel %vm1799, %v6894, -inf
      %7332 = vmax.xlane.f32.xlu0 %v7331
      %v7333 = vpop.xlane.xlu0 %7332
      %v7334 = vsel %vm1799, %v6899, -inf
      %7335 = vmax.xlane.f32.xlu0 %v7334
      %v7336 = vpop.xlane.xlu0 %7335
      %v7337 = vsel %vm1799, %v6902, -inf
      %7338 = vmax.xlane.f32.xlu0 %v7337
      %v7339 = vpop.xlane.xlu0 %7338
      %v7340 = vsel %vm1799, %v6980, -inf
      %7341 = vmax.xlane.f32.xlu0 %v7340
      %v7342 = vpop.xlane.xlu0 %7341
      %v7343 = vsel %vm1799, %v6983, -inf
      %7344 = vmax.xlane.f32.xlu0 %v7343
      %v7345 = vpop.xlane.xlu0 %7344
      %v7346 = vsel %vm1799, %v6988, -inf
      %7347 = vmax.xlane.f32.xlu0 %v7346
      %v7348 = vpop.xlane.xlu0 %7347
      %v7349 = vsel %vm1799, %v6991, -inf
      %7350 = vmax.xlane.f32.xlu0 %v7349
      %v7351 = vpop.xlane.xlu0 %7350
      %v7352 = vsel %vm1799, %v6996, -inf
      %7353 = vmax.xlane.f32.xlu0 %v7352
      %v7354 = vpop.xlane.xlu0 %7353
      %v7355 = vsel %vm1799, %v6999, -inf
      %7356 = vmax.xlane.f32.xlu0 %v7355
      %v7357 = vpop.xlane.xlu0 %7356
      %v7358 = vsel %vm1799, %v7004, -inf
      %7359 = vmax.xlane.f32.xlu0 %v7358
      %v7360 = vpop.xlane.xlu0 %7359
      %v7361 = vsel %vm1799, %v7007, -inf
      %7362 = vmax.xlane.f32.xlu0 %v7361
      %v7363 = vpop.xlane.xlu0 %7362
      %v7364 = vsel %vm1799, %v7085, -inf
      %7365 = vmax.xlane.f32.xlu0 %v7364
      %v7366 = vpop.xlane.xlu0 %7365
      %v7367 = vsel %vm1799, %v7088, -inf
      %7368 = vmax.xlane.f32.xlu0 %v7367
      %v7369 = vpop.xlane.xlu0 %7368
      %v7370 = vsel %vm1799, %v7093, -inf
      %7371 = vmax.xlane.f32.xlu0 %v7370
      %v7372 = vpop.xlane.xlu0 %7371
      %v7373 = vsel %vm1799, %v7096, -inf
      %7374 = vmax.xlane.f32.xlu0 %v7373
      %v7375 = vpop.xlane.xlu0 %7374
      %v7376 = vsel %vm1799, %v7101, -inf
      %7377 = vmax.xlane.f32.xlu0 %v7376
      %v7378 = vpop.xlane.xlu0 %7377
      %v7379 = vsel %vm1799, %v7104, -inf
      %7380 = vmax.xlane.f32.xlu0 %v7379
      %v7381 = vpop.xlane.xlu0 %7380
      %v7382 = vsel %vm1799, %v7109, -inf
      %7383 = vmax.xlane.f32.xlu0 %v7382
      %v7384 = vpop.xlane.xlu0 %7383
      %v7385 = vsel %vm1799, %v7112, -inf
      %7386 = vmax.xlane.f32.xlu0 %v7385
      %v7387 = vpop.xlane.xlu0 %7386
      %v7388 = vsel %vm1799, %v7190, -inf
      %7389 = vmax.xlane.f32.xlu0 %v7388
      %v7390 = vpop.xlane.xlu0 %7389
      %v7391 = vsel %vm1799, %v7193, -inf
      %7392 = vmax.xlane.f32.xlu0 %v7391
      %v7393 = vpop.xlane.xlu0 %7392
      %v7394 = vsel %vm1799, %v7198, -inf
      %7395 = vmax.xlane.f32.xlu0 %v7394
      %v7396 = vpop.xlane.xlu0 %7395
      %v7397 = vsel %vm1799, %v7201, -inf
      %7398 = vmax.xlane.f32.xlu0 %v7397
      %v7399 = vpop.xlane.xlu0 %7398
      %v7400 = vsel %vm1799, %v7206, -inf
      %7401 = vmax.xlane.f32.xlu0 %v7400
      %v7402 = vpop.xlane.xlu0 %7401
      %v7403 = vsel %vm1799, %v7209, -inf
      %7404 = vmax.xlane.f32.xlu0 %v7403
      %v7405 = vpop.xlane.xlu0 %7404
      %v7406 = vsel %vm1799, %v7214, -inf
      %7407 = vmax.xlane.f32.xlu0 %v7406
      %v7408 = vpop.xlane.xlu0 %7407
      %v7409 = vsel %vm1799, %v7217, -inf
      %7410 = vmax.xlane.f32.xlu0 %v7409
      %v7411 = vpop.xlane.xlu0 %7410
      %v7412 = vsub.f32 %v6455, %v7222
      %v7413 = vsub.f32 %v6458, %v7225
      %v7414 = vsub.f32 %v6463, %v7228
      %v7415 = vsub.f32 %v6466, %v7231
      %v7416 = vsub.f32 %v6471, %v7234
      %v7417 = vsub.f32 %v6474, %v7237
      %v7418 = vsub.f32 %v6479, %v7240
      %v7419 = vsub.f32 %v6482, %v7243
      %v7420 = vsub.f32 %v6560, %v7246
      %v7421 = vsub.f32 %v6563, %v7249
      %v7422 = vsub.f32 %v6568, %v7252
      %v7423 = vsub.f32 %v6571, %v7255
      %v7424 = vsub.f32 %v6576, %v7258
      %v7425 = vsub.f32 %v6579, %v7261
      %v7426 = vsub.f32 %v6584, %v7264
      %v7427 = vsub.f32 %v6587, %v7267
      %v7428 = vsub.f32 %v6665, %v7270
      %v7429 = vsub.f32 %v6668, %v7273
      %v7430 = vsub.f32 %v6673, %v7276
      %v7431 = vsub.f32 %v6676, %v7279
      %v7432 = vsub.f32 %v6681, %v7282
      %v7433 = vsub.f32 %v6684, %v7285
      %v7434 = vsub.f32 %v6689, %v7288
      %v7435 = vsub.f32 %v6692, %v7291
      %v7436 = vsub.f32 %v6770, %v7294
      %v7437 = vsub.f32 %v6773, %v7297
      %v7438 = vsub.f32 %v6778, %v7300
      %v7439 = vsub.f32 %v6781, %v7303
      %v7440 = vsub.f32 %v6786, %v7306
      %v7441 = vsub.f32 %v6789, %v7309
      %v7442 = vsub.f32 %v6794, %v7312
      %v7443 = vsub.f32 %v6797, %v7315
      %v7444 = vsub.f32 %v6875, %v7318
      %v7445 = vsub.f32 %v6878, %v7321
      %v7446 = vsub.f32 %v6883, %v7324
      %v7447 = vsub.f32 %v6886, %v7327
      %v7448 = vsub.f32 %v6891, %v7330
      %v7449 = vsub.f32 %v6894, %v7333
      %v7450 = vsub.f32 %v6899, %v7336
      %v7451 = vsub.f32 %v6902, %v7339
      %v7452 = vsub.f32 %v6980, %v7342
      %v7453 = vsub.f32 %v6983, %v7345
      %v7454 = vsub.f32 %v6988, %v7348
      %v7455 = vsub.f32 %v6991, %v7351
      %v7456 = vsub.f32 %v6996, %v7354
      %v7457 = vsub.f32 %v6999, %v7357
      %v7458 = vsub.f32 %v7004, %v7360
      %v7459 = vsub.f32 %v7007, %v7363
      %v7460 = vsub.f32 %v7085, %v7366
      %v7461 = vsub.f32 %v7088, %v7369
      %v7462 = vsub.f32 %v7093, %v7372
      %v7463 = vsub.f32 %v7096, %v7375
      %v7464 = vsub.f32 %v7101, %v7378
      %v7465 = vsub.f32 %v7104, %v7381
      %v7466 = vsub.f32 %v7109, %v7384
      %v7467 = vsub.f32 %v7112, %v7387
      %v7468 = vsub.f32 %v7190, %v7390
      %v7469 = vsub.f32 %v7193, %v7393
      %v7470 = vsub.f32 %v7198, %v7396
      %v7471 = vsub.f32 %v7201, %v7399
      %v7472 = vsub.f32 %v7206, %v7402
      %v7473 = vsub.f32 %v7209, %v7405
      %v7474 = vsub.f32 %v7214, %v7408
      %v7475 = vsub.f32 %v7217, %v7411
      %v7476 = vmul.f32 %v7412, 1.442695
      %v7477 = vpow.pop %v7476
      %v7478 = vmul.f32 %v7413, 1.442695
      %v7479 = vpow.pop %v7478
      %v7480 = vmul.f32 %v7414, 1.442695
      %v7481 = vpow.pop %v7480
      %v7482 = vmul.f32 %v7415, 1.442695
      %v7483 = vpow.pop %v7482
      %v7484 = vmul.f32 %v7416, 1.442695
      %v7485 = vpow.pop %v7484
      %v7486 = vmul.f32 %v7417, 1.442695
      %v7487 = vpow.pop %v7486
      %v7488 = vmul.f32 %v7418, 1.442695
      %v7489 = vpow.pop %v7488
      %v7490 = vmul.f32 %v7419, 1.442695
      %v7491 = vpow.pop %v7490
      %v7492 = vmul.f32 %v7420, 1.442695
      %v7493 = vpow.pop %v7492
      %v7494 = vmul.f32 %v7421, 1.442695
      %v7495 = vpow.pop %v7494
      %v7496 = vmul.f32 %v7422, 1.442695
      %v7497 = vpow.pop %v7496
      %v7498 = vmul.f32 %v7423, 1.442695
      %v7499 = vpow.pop %v7498
      %v7500 = vmul.f32 %v7424, 1.442695
      %v7501 = vpow.pop %v7500
      %v7502 = vmul.f32 %v7425, 1.442695
      %v7503 = vpow.pop %v7502
      %v7504 = vmul.f32 %v7426, 1.442695
      %v7505 = vpow.pop %v7504
      %v7506 = vmul.f32 %v7427, 1.442695
      %v7507 = vpow.pop %v7506
      %v7508 = vmul.f32 %v7428, 1.442695
      %v7509 = vpow.pop %v7508
      %v7510 = vmul.f32 %v7429, 1.442695
      %v7511 = vpow.pop %v7510
      %v7512 = vmul.f32 %v7430, 1.442695
      %v7513 = vpow.pop %v7512
      %v7514 = vmul.f32 %v7431, 1.442695
      %v7515 = vpow.pop %v7514
      %v7516 = vmul.f32 %v7432, 1.442695
      %v7517 = vpow.pop %v7516
      %v7518 = vmul.f32 %v7433, 1.442695
      %v7519 = vpow.pop %v7518
      %v7520 = vmul.f32 %v7434, 1.442695
      %v7521 = vpow.pop %v7520
      %v7522 = vmul.f32 %v7435, 1.442695
      %v7523 = vpow.pop %v7522
      %v7524 = vmul.f32 %v7436, 1.442695
      %v7525 = vpow.pop %v7524
      %v7526 = vmul.f32 %v7437, 1.442695
      %v7527 = vpow.pop %v7526
      %v7528 = vmul.f32 %v7438, 1.442695
      %v7529 = vpow.pop %v7528
      %v7530 = vmul.f32 %v7439, 1.442695
      %v7531 = vpow.pop %v7530
      %v7532 = vmul.f32 %v7440, 1.442695
      %v7533 = vpow.pop %v7532
      %v7534 = vmul.f32 %v7441, 1.442695
      %v7535 = vpow.pop %v7534
      %v7536 = vmul.f32 %v7442, 1.442695
      %v7537 = vpow.pop %v7536
      %v7538 = vmul.f32 %v7443, 1.442695
      %v7539 = vpow.pop %v7538
      %v7540 = vmul.f32 %v7444, 1.442695
      %v7541 = vpow.pop %v7540
      %v7542 = vmul.f32 %v7445, 1.442695
      %v7543 = vpow.pop %v7542
      %v7544 = vmul.f32 %v7446, 1.442695
      %v7545 = vpow.pop %v7544
      %v7546 = vmul.f32 %v7447, 1.442695
      %v7547 = vpow.pop %v7546
      %v7548 = vmul.f32 %v7448, 1.442695
      %v7549 = vpow.pop %v7548
      %v7550 = vmul.f32 %v7449, 1.442695
      %v7551 = vpow.pop %v7550
      %v7552 = vmul.f32 %v7450, 1.442695
      %v7553 = vpow.pop %v7552
      %v7554 = vmul.f32 %v7451, 1.442695
      %v7555 = vpow.pop %v7554
      %v7556 = vmul.f32 %v7452, 1.442695
      %v7557 = vpow.pop %v7556
      %v7558 = vmul.f32 %v7453, 1.442695
      %v7559 = vpow.pop %v7558
      %v7560 = vmul.f32 %v7454, 1.442695
      %v7561 = vpow.pop %v7560
      %v7562 = vmul.f32 %v7455, 1.442695
      %v7563 = vpow.pop %v7562
      %v7564 = vmul.f32 %v7456, 1.442695
      %v7565 = vpow.pop %v7564
      %v7566 = vmul.f32 %v7457, 1.442695
      %v7567 = vpow.pop %v7566
      %v7568 = vmul.f32 %v7458, 1.442695
      %v7569 = vpow.pop %v7568
      %v7570 = vmul.f32 %v7459, 1.442695
      %v7571 = vpow.pop %v7570
      %v7572 = vmul.f32 %v7460, 1.442695
      %v7573 = vpow.pop %v7572
      %v7574 = vmul.f32 %v7461, 1.442695
      %v7575 = vpow.pop %v7574
      %v7576 = vmul.f32 %v7462, 1.442695
      %v7577 = vpow.pop %v7576
      %v7578 = vmul.f32 %v7463, 1.442695
      %v7579 = vpow.pop %v7578
      %v7580 = vmul.f32 %v7464, 1.442695
      %v7581 = vpow.pop %v7580
      %v7582 = vmul.f32 %v7465, 1.442695
      %v7583 = vpow.pop %v7582
      %v7584 = vmul.f32 %v7466, 1.442695
      %v7585 = vpow.pop %v7584
      %v7586 = vmul.f32 %v7467, 1.442695
      %v7587 = vpow.pop %v7586
      %v7588 = vmul.f32 %v7468, 1.442695
      %v7589 = vpow.pop %v7588
      %v7590 = vmul.f32 %v7469, 1.442695
      %v7591 = vpow.pop %v7590
      %v7592 = vmul.f32 %v7470, 1.442695
      %v7593 = vpow.pop %v7592
      %v7594 = vmul.f32 %v7471, 1.442695
      %v7595 = vpow.pop %v7594
      %v7596 = vmul.f32 %v7472, 1.442695
      %v7597 = vpow.pop %v7596
      %v7598 = vmul.f32 %v7473, 1.442695
      %v7599 = vpow.pop %v7598
      %v7600 = vmul.f32 %v7474, 1.442695
      %v7601 = vpow.pop %v7600
      %v7602 = vmul.f32 %v7475, 1.442695
      %v7603 = vpow.pop %v7602
      %v7604 = vsel %vm1799, %v7477, 0.0
      %7605 = vadd.xlane.f32.xlu0 %v7604
      %v7606 = vpop.xlane.xlu0 %7605
      %v7607 = vsel %vm1799, %v7479, 0.0
      %7608 = vadd.xlane.f32.xlu0 %v7607
      %v7609 = vpop.xlane.xlu0 %7608
      %v7610 = vsel %vm1799, %v7481, 0.0
      %7611 = vadd.xlane.f32.xlu0 %v7610
      %v7612 = vpop.xlane.xlu0 %7611
      %v7613 = vsel %vm1799, %v7483, 0.0
      %7614 = vadd.xlane.f32.xlu0 %v7613
      %v7615 = vpop.xlane.xlu0 %7614
      %v7616 = vsel %vm1799, %v7485, 0.0
      %7617 = vadd.xlane.f32.xlu0 %v7616
      %v7618 = vpop.xlane.xlu0 %7617
      %v7619 = vsel %vm1799, %v7487, 0.0
      %7620 = vadd.xlane.f32.xlu0 %v7619
      %v7621 = vpop.xlane.xlu0 %7620
      %v7622 = vsel %vm1799, %v7489, 0.0
      %7623 = vadd.xlane.f32.xlu0 %v7622
      %v7624 = vpop.xlane.xlu0 %7623
      %v7625 = vsel %vm1799, %v7491, 0.0
      %7626 = vadd.xlane.f32.xlu0 %v7625
      %v7627 = vpop.xlane.xlu0 %7626
      %v7628 = vsel %vm1799, %v7493, 0.0
      %7629 = vadd.xlane.f32.xlu0 %v7628
      %v7630 = vpop.xlane.xlu0 %7629
      %v7631 = vsel %vm1799, %v7495, 0.0
      %7632 = vadd.xlane.f32.xlu0 %v7631
      %v7633 = vpop.xlane.xlu0 %7632
      %v7634 = vsel %vm1799, %v7497, 0.0
      %7635 = vadd.xlane.f32.xlu0 %v7634
      %v7636 = vpop.xlane.xlu0 %7635
      %v7637 = vsel %vm1799, %v7499, 0.0
      %7638 = vadd.xlane.f32.xlu0 %v7637
      %v7639 = vpop.xlane.xlu0 %7638
      %v7640 = vsel %vm1799, %v7501, 0.0
      %7641 = vadd.xlane.f32.xlu0 %v7640
      %v7642 = vpop.xlane.xlu0 %7641
      %v7643 = vsel %vm1799, %v7503, 0.0
      %7644 = vadd.xlane.f32.xlu0 %v7643
      %v7645 = vpop.xlane.xlu0 %7644
      %v7646 = vsel %vm1799, %v7505, 0.0
      %7647 = vadd.xlane.f32.xlu0 %v7646
      %v7648 = vpop.xlane.xlu0 %7647
      %v7649 = vsel %vm1799, %v7507, 0.0
      %7650 = vadd.xlane.f32.xlu0 %v7649
      %v7651 = vpop.xlane.xlu0 %7650
      %v7652 = vsel %vm1799, %v7509, 0.0
      %7653 = vadd.xlane.f32.xlu0 %v7652
      %v7654 = vpop.xlane.xlu0 %7653
      %v7655 = vsel %vm1799, %v7511, 0.0
      %7656 = vadd.xlane.f32.xlu0 %v7655
      %v7657 = vpop.xlane.xlu0 %7656
      %v7658 = vsel %vm1799, %v7513, 0.0
      %7659 = vadd.xlane.f32.xlu0 %v7658
      %v7660 = vpop.xlane.xlu0 %7659
      %v7661 = vsel %vm1799, %v7515, 0.0
      %7662 = vadd.xlane.f32.xlu0 %v7661
      %v7663 = vpop.xlane.xlu0 %7662
      %v7664 = vsel %vm1799, %v7517, 0.0
      %7665 = vadd.xlane.f32.xlu0 %v7664
      %v7666 = vpop.xlane.xlu0 %7665
      %v7667 = vsel %vm1799, %v7519, 0.0
      %7668 = vadd.xlane.f32.xlu0 %v7667
      %v7669 = vpop.xlane.xlu0 %7668
      %v7670 = vsel %vm1799, %v7521, 0.0
      %7671 = vadd.xlane.f32.xlu0 %v7670
      %v7672 = vpop.xlane.xlu0 %7671
      %v7673 = vsel %vm1799, %v7523, 0.0
      %7674 = vadd.xlane.f32.xlu0 %v7673
      %v7675 = vpop.xlane.xlu0 %7674
      %v7676 = vsel %vm1799, %v7525, 0.0
      %7677 = vadd.xlane.f32.xlu0 %v7676
      %v7678 = vpop.xlane.xlu0 %7677
      %v7679 = vsel %vm1799, %v7527, 0.0
      %7680 = vadd.xlane.f32.xlu0 %v7679
      %v7681 = vpop.xlane.xlu0 %7680
      %v7682 = vsel %vm1799, %v7529, 0.0
      %7683 = vadd.xlane.f32.xlu0 %v7682
      %v7684 = vpop.xlane.xlu0 %7683
      %v7685 = vsel %vm1799, %v7531, 0.0
      %7686 = vadd.xlane.f32.xlu0 %v7685
      %v7687 = vpop.xlane.xlu0 %7686
      %v7688 = vsel %vm1799, %v7533, 0.0
      %7689 = vadd.xlane.f32.xlu0 %v7688
      %v7690 = vpop.xlane.xlu0 %7689
      %v7691 = vsel %vm1799, %v7535, 0.0
      %7692 = vadd.xlane.f32.xlu0 %v7691
      %v7693 = vpop.xlane.xlu0 %7692
      %v7694 = vsel %vm1799, %v7537, 0.0
      %7695 = vadd.xlane.f32.xlu0 %v7694
      %v7696 = vpop.xlane.xlu0 %7695
      %v7697 = vsel %vm1799, %v7539, 0.0
      %7698 = vadd.xlane.f32.xlu0 %v7697
      %v7699 = vpop.xlane.xlu0 %7698
      %v7700 = vsel %vm1799, %v7541, 0.0
      %7701 = vadd.xlane.f32.xlu0 %v7700
      %v7702 = vpop.xlane.xlu0 %7701
      %v7703 = vsel %vm1799, %v7543, 0.0
      %7704 = vadd.xlane.f32.xlu0 %v7703
      %v7705 = vpop.xlane.xlu0 %7704
      %v7706 = vsel %vm1799, %v7545, 0.0
      %7707 = vadd.xlane.f32.xlu0 %v7706
      %v7708 = vpop.xlane.xlu0 %7707
      %v7709 = vsel %vm1799, %v7547, 0.0
      %7710 = vadd.xlane.f32.xlu0 %v7709
      %v7711 = vpop.xlane.xlu0 %7710
      %v7712 = vsel %vm1799, %v7549, 0.0
      %7713 = vadd.xlane.f32.xlu0 %v7712
      %v7714 = vpop.xlane.xlu0 %7713
      %v7715 = vsel %vm1799, %v7551, 0.0
      %7716 = vadd.xlane.f32.xlu0 %v7715
      %v7717 = vpop.xlane.xlu0 %7716
      %v7718 = vsel %vm1799, %v7553, 0.0
      %7719 = vadd.xlane.f32.xlu0 %v7718
      %v7720 = vpop.xlane.xlu0 %7719
      %v7721 = vsel %vm1799, %v7555, 0.0
      %7722 = vadd.xlane.f32.xlu0 %v7721
      %v7723 = vpop.xlane.xlu0 %7722
      %v7724 = vsel %vm1799, %v7557, 0.0
      %7725 = vadd.xlane.f32.xlu0 %v7724
      %v7726 = vpop.xlane.xlu0 %7725
      %v7727 = vsel %vm1799, %v7559, 0.0
      %7728 = vadd.xlane.f32.xlu0 %v7727
      %v7729 = vpop.xlane.xlu0 %7728
      %v7730 = vsel %vm1799, %v7561, 0.0
      %7731 = vadd.xlane.f32.xlu0 %v7730
      %v7732 = vpop.xlane.xlu0 %7731
      %v7733 = vsel %vm1799, %v7563, 0.0
      %7734 = vadd.xlane.f32.xlu0 %v7733
      %v7735 = vpop.xlane.xlu0 %7734
      %v7736 = vsel %vm1799, %v7565, 0.0
      %7737 = vadd.xlane.f32.xlu0 %v7736
      %v7738 = vpop.xlane.xlu0 %7737
      %v7739 = vsel %vm1799, %v7567, 0.0
      %7740 = vadd.xlane.f32.xlu0 %v7739
      %v7741 = vpop.xlane.xlu0 %7740
      %v7742 = vsel %vm1799, %v7569, 0.0
      %7743 = vadd.xlane.f32.xlu0 %v7742
      %v7744 = vpop.xlane.xlu0 %7743
      %v7745 = vsel %vm1799, %v7571, 0.0
      %7746 = vadd.xlane.f32.xlu0 %v7745
      %v7747 = vpop.xlane.xlu0 %7746
      %v7748 = vsel %vm1799, %v7573, 0.0
      %7749 = vadd.xlane.f32.xlu0 %v7748
      %v7750 = vpop.xlane.xlu0 %7749
      %v7751 = vsel %vm1799, %v7575, 0.0
      %7752 = vadd.xlane.f32.xlu0 %v7751
      %v7753 = vpop.xlane.xlu0 %7752
      %v7754 = vsel %vm1799, %v7577, 0.0
      %7755 = vadd.xlane.f32.xlu0 %v7754
      %v7756 = vpop.xlane.xlu0 %7755
      %v7757 = vsel %vm1799, %v7579, 0.0
      %7758 = vadd.xlane.f32.xlu0 %v7757
      %v7759 = vpop.xlane.xlu0 %7758
      %v7760 = vsel %vm1799, %v7581, 0.0
      %7761 = vadd.xlane.f32.xlu0 %v7760
      %v7762 = vpop.xlane.xlu0 %7761
      %v7763 = vsel %vm1799, %v7583, 0.0
      %7764 = vadd.xlane.f32.xlu0 %v7763
      %v7765 = vpop.xlane.xlu0 %7764
      %v7766 = vsel %vm1799, %v7585, 0.0
      %7767 = vadd.xlane.f32.xlu0 %v7766
      %v7768 = vpop.xlane.xlu0 %7767
      %v7769 = vsel %vm1799, %v7587, 0.0
      %7770 = vadd.xlane.f32.xlu0 %v7769
      %v7771 = vpop.xlane.xlu0 %7770
      %v7772 = vsel %vm1799, %v7589, 0.0
      %7773 = vadd.xlane.f32.xlu0 %v7772
      %v7774 = vpop.xlane.xlu0 %7773
      %v7775 = vsel %vm1799, %v7591, 0.0
      %7776 = vadd.xlane.f32.xlu0 %v7775
      %v7777 = vpop.xlane.xlu0 %7776
      %v7778 = vsel %vm1799, %v7593, 0.0
      %7779 = vadd.xlane.f32.xlu0 %v7778
      %v7780 = vpop.xlane.xlu0 %7779
      %v7781 = vsel %vm1799, %v7595, 0.0
      %7782 = vadd.xlane.f32.xlu0 %v7781
      %v7783 = vpop.xlane.xlu0 %7782
      %v7784 = vsel %vm1799, %v7597, 0.0
      %7785 = vadd.xlane.f32.xlu0 %v7784
      %v7786 = vpop.xlane.xlu0 %7785
      %v7787 = vsel %vm1799, %v7599, 0.0
      %7788 = vadd.xlane.f32.xlu0 %v7787
      %v7789 = vpop.xlane.xlu0 %7788
      %v7790 = vsel %vm1799, %v7601, 0.0
      %7791 = vadd.xlane.f32.xlu0 %v7790
      %v7792 = vpop.xlane.xlu0 %7791
      %v7793 = vsel %vm1799, %v7603, 0.0
      %7794 = vadd.xlane.f32.xlu0 %v7793
      %v7795 = vpop.xlane.xlu0 %7794
      %v7796 = vrcp.pop %v7606
      %v7797 = vrcp.pop %v7609
      %v7798 = vrcp.pop %v7612
      %v7799 = vrcp.pop %v7615
      %v7800 = vrcp.pop %v7618
      %v7801 = vrcp.pop %v7621
      %v7802 = vrcp.pop %v7624
      %v7803 = vrcp.pop %v7627
      %v7804 = vrcp.pop %v7630
      %v7805 = vrcp.pop %v7633
      %v7806 = vrcp.pop %v7636
      %v7807 = vrcp.pop %v7639
      %v7808 = vrcp.pop %v7642
      %v7809 = vrcp.pop %v7645
      %v7810 = vrcp.pop %v7648
      %v7811 = vrcp.pop %v7651
      %v7812 = vrcp.pop %v7654
      %v7813 = vrcp.pop %v7657
      %v7814 = vrcp.pop %v7660
      %v7815 = vrcp.pop %v7663
      %v7816 = vrcp.pop %v7666
      %v7817 = vrcp.pop %v7669
      %v7818 = vrcp.pop %v7672
      %v7819 = vrcp.pop %v7675
      %v7820 = vrcp.pop %v7678
      %v7821 = vrcp.pop %v7681
      %v7822 = vrcp.pop %v7684
      %v7823 = vrcp.pop %v7687
      %v7824 = vrcp.pop %v7690
      %v7825 = vrcp.pop %v7693
      %v7826 = vrcp.pop %v7696
      %v7827 = vrcp.pop %v7699
      %v7828 = vrcp.pop %v7702
      %v7829 = vrcp.pop %v7705
      %v7830 = vrcp.pop %v7708
      %v7831 = vrcp.pop %v7711
      %v7832 = vrcp.pop %v7714
      %v7833 = vrcp.pop %v7717
      %v7834 = vrcp.pop %v7720
      %v7835 = vrcp.pop %v7723
      %v7836 = vrcp.pop %v7726
      %v7837 = vrcp.pop %v7729
      %v7838 = vrcp.pop %v7732
      %v7839 = vrcp.pop %v7735
      %v7840 = vrcp.pop %v7738
      %v7841 = vrcp.pop %v7741
      %v7842 = vrcp.pop %v7744
      %v7843 = vrcp.pop %v7747
      %v7844 = vrcp.pop %v7750
      %v7845 = vrcp.pop %v7753
      %v7846 = vrcp.pop %v7756
      %v7847 = vrcp.pop %v7759
      %v7848 = vrcp.pop %v7762
      %v7849 = vrcp.pop %v7765
      %v7850 = vrcp.pop %v7768
      %v7851 = vrcp.pop %v7771
      %v7852 = vrcp.pop %v7774
      %v7853 = vrcp.pop %v7777
      %v7854 = vrcp.pop %v7780
      %v7855 = vrcp.pop %v7783
      %v7856 = vrcp.pop %v7786
      %v7857 = vrcp.pop %v7789
      %v7858 = vrcp.pop %v7792
      %v7859 = vrcp.pop %v7795
      %v7860 = vmul.f32 %v7477, %v7796
      %v7861 = vmul.f32 %v7479, %v7797
      %v7862 = vmul.f32 %v7481, %v7798
      %v7863 = vmul.f32 %v7483, %v7799
      %v7864 = vmul.f32 %v7485, %v7800
      %v7865 = vmul.f32 %v7487, %v7801
      %v7866 = vmul.f32 %v7489, %v7802
      %v7867 = vmul.f32 %v7491, %v7803
      %v7868 = vmul.f32 %v7493, %v7804
      %v7869 = vmul.f32 %v7495, %v7805
      %v7870 = vmul.f32 %v7497, %v7806
      %v7871 = vmul.f32 %v7499, %v7807
      %v7872 = vmul.f32 %v7501, %v7808
      %v7873 = vmul.f32 %v7503, %v7809
      %v7874 = vmul.f32 %v7505, %v7810
      %v7875 = vmul.f32 %v7507, %v7811
      %v7876 = vmul.f32 %v7509, %v7812
      %v7877 = vmul.f32 %v7511, %v7813
      %v7878 = vmul.f32 %v7513, %v7814
      %v7879 = vmul.f32 %v7515, %v7815
      %v7880 = vmul.f32 %v7517, %v7816
      %v7881 = vmul.f32 %v7519, %v7817
      %v7882 = vmul.f32 %v7521, %v7818
      %v7883 = vmul.f32 %v7523, %v7819
      %v7884 = vmul.f32 %v7525, %v7820
      %v7885 = vmul.f32 %v7527, %v7821
      %v7886 = vmul.f32 %v7529, %v7822
      %v7887 = vmul.f32 %v7531, %v7823
      %v7888 = vmul.f32 %v7533, %v7824
      %v7889 = vmul.f32 %v7535, %v7825
      %v7890 = vmul.f32 %v7537, %v7826
      %v7891 = vmul.f32 %v7539, %v7827
      %v7892 = vmul.f32 %v7541, %v7828
      %v7893 = vmul.f32 %v7543, %v7829
      %v7894 = vmul.f32 %v7545, %v7830
      %v7895 = vmul.f32 %v7547, %v7831
      %v7896 = vmul.f32 %v7549, %v7832
      %v7897 = vmul.f32 %v7551, %v7833
      %v7898 = vmul.f32 %v7553, %v7834
      %v7899 = vmul.f32 %v7555, %v7835
      %v7900 = vmul.f32 %v7557, %v7836
      %v7901 = vmul.f32 %v7559, %v7837
      %v7902 = vmul.f32 %v7561, %v7838
      %v7903 = vmul.f32 %v7563, %v7839
      %v7904 = vmul.f32 %v7565, %v7840
      %v7905 = vmul.f32 %v7567, %v7841
      %v7906 = vmul.f32 %v7569, %v7842
      %v7907 = vmul.f32 %v7571, %v7843
      %v7908 = vmul.f32 %v7573, %v7844
      %v7909 = vmul.f32 %v7575, %v7845
      %v7910 = vmul.f32 %v7577, %v7846
      %v7911 = vmul.f32 %v7579, %v7847
      %v7912 = vmul.f32 %v7581, %v7848
      %v7913 = vmul.f32 %v7583, %v7849
      %v7914 = vmul.f32 %v7585, %v7850
      %v7915 = vmul.f32 %v7587, %v7851
      %v7916 = vmul.f32 %v7589, %v7852
      %v7917 = vmul.f32 %v7591, %v7853
      %v7918 = vmul.f32 %v7593, %v7854
      %v7919 = vmul.f32 %v7595, %v7855
      %v7920 = vmul.f32 %v7597, %v7856
      %v7921 = vmul.f32 %v7599, %v7857
      %v7922 = vmul.f32 %v7601, %v7858
      %v7923 = vmul.f32 %v7603, %v7859
      %v7924 = vpack.c.bf16 %v7861, %v7860
      %v7925 = vpack.c.bf16 %v7863, %v7862
      %v7926 = vpack.c.bf16 %v7865, %v7864
      %v7927 = vpack.c.bf16 %v7867, %v7866
      %v7928 = vpack.c.bf16 %v7869, %v7868
      %v7929 = vpack.c.bf16 %v7871, %v7870
      %v7930 = vpack.c.bf16 %v7873, %v7872
      %v7931 = vpack.c.bf16 %v7875, %v7874
      %v7932 = vpack.c.bf16 %v7877, %v7876
      %v7933 = vpack.c.bf16 %v7879, %v7878
      %v7934 = vpack.c.bf16 %v7881, %v7880
      %v7935 = vpack.c.bf16 %v7883, %v7882
      %v7936 = vpack.c.bf16 %v7885, %v7884
      %v7937 = vpack.c.bf16 %v7887, %v7886
      %v7938 = vpack.c.bf16 %v7889, %v7888
      %v7939 = vpack.c.bf16 %v7891, %v7890
      %v7940 = vpack.c.bf16 %v7893, %v7892
      %v7941 = vpack.c.bf16 %v7895, %v7894
      %v7942 = vpack.c.bf16 %v7897, %v7896
      %v7943 = vpack.c.bf16 %v7899, %v7898
      %v7944 = vpack.c.bf16 %v7901, %v7900
      %v7945 = vpack.c.bf16 %v7903, %v7902
      %v7946 = vpack.c.bf16 %v7905, %v7904
      %v7947 = vpack.c.bf16 %v7907, %v7906
      %v7948 = vpack.c.bf16 %v7909, %v7908
      %v7949 = vpack.c.bf16 %v7911, %v7910
      %v7950 = vpack.c.bf16 %v7913, %v7912
      %v7951 = vpack.c.bf16 %v7915, %v7914
      %v7952 = vpack.c.bf16 %v7917, %v7916
      %v7953 = vpack.c.bf16 %v7919, %v7918
      %v7954 = vpack.c.bf16 %v7921, %v7920
      %v7955 = vpack.c.bf16 %v7923, %v7922
      %7956 = vrot.lane.b32.xlu0 %v894, 48
      %v7957 = vpop.permute.xlu0 %7956
      %7958 = vrot.lane.b32.xlu0 %v895, 48
      %v7959 = vpop.permute.xlu0 %7958
      %7960 = vrot.lane.b32.xlu0 %v896, 48
      %v7961 = vpop.permute.xlu0 %7960
      %7962 = vrot.lane.b32.xlu0 %v897, 48
      %v7963 = vpop.permute.xlu0 %7962
      %v7969 = vsel %vm1799, %v7924, 0
      %v7972 = vsel %vm1799, %v7925, 0
      %v7975 = vsel %vm1799, %v7926, 0
      %v7978 = vsel %vm1799, %v7927, 0
      %7980 = vmatprep.subr.bf16.mxu0 0
      %7981 = vmatpush1.bf16.msra.mxu0 %v7957
      %7982 = vmatprep.subr.bf16.mxu0 0
      %7983 = vmatpush1.bf16.msra.mxu0 %v7959
      %7984 = vmatprep.subr.bf16.mxu0 0
      %7985 = vmatpush1.bf16.msra.mxu0 %v7961
      %7986 = vmatprep.subr.bf16.mxu0 0
      %7987 = vmatpush1.bf16.msra.mxu0 %v7963
      %7988 = vmatprep.subr.bf16.mxu0 0
      %7989 = vmatpush1.bf16.msra.mxu0 0
      %7990 = vmatprep.subr.bf16.mxu0 0
      %7991 = vmatpush1.bf16.msra.mxu0 0
      %7992 = vmatprep.subr.bf16.mxu0 0
      %7993 = vmatpush1.bf16.msra.mxu0 0
      %7994 = vmatprep.subr.bf16.mxu0 0
      %7995 = vmatpush1.bf16.msra.mxu0 0
      %7996 = vmatprep.subr.bf16.mxu0 0
      %7997 = vmatpush1.bf16.msra.mxu0 0
      %7998 = vmatprep.subr.bf16.mxu0 0
      %7999 = vmatpush1.bf16.msra.mxu0 0
      %8000 = vmatprep.subr.bf16.mxu0 0
      %8001 = vmatpush1.bf16.msra.mxu0 0
      %8002 = vmatprep.subr.bf16.mxu0 0
      %8003 = vmatpush1.bf16.msra.mxu0 0
      %8004 = vmatprep.subr.bf16.mxu0 0
      %8005 = vmatpush1.bf16.msra.mxu0 0
      %8006 = vmatprep.subr.bf16.mxu0 0
      %8007 = vmatpush1.bf16.msra.mxu0 0
      %8008 = vmatprep.subr.bf16.mxu0 0
      %8009 = vmatpush1.bf16.msra.mxu0 0
      %8010 = vmatprep.subr.bf16.mxu0 0
      %8011 = vmatpush1.bf16.msra.mxu0 0
      %8012 = vmatprep.mubr.bf16.mxu0 0
      %8013 = vmatmul.mubr.bf16.gmra.mrb[0].mxu0 %v7969
      %v8014 = vpop.f32.mrb[0].mxu0
      %v8015 = vadd.f32 0.0, %v8014
      %v8016 = vpop.f32.mrb[0].mxu0
      %v8017 = vpop.f32.mrb[0].mxu0
      %v8018 = vadd.f32 0.0, %v8017
      %v8019 = vpop.f32.mrb[0].mxu0
      %8020 = vmatprep.mubr.bf16.mxu0 0
      %8021 = vmatmul.mubr.bf16.gmra.mrb[0].mxu0 %v7972
      %v8022 = vpop.f32.mrb[0].mxu0
      %v8023 = vadd.f32 0.0, %v8022
      %v8024 = vpop.f32.mrb[0].mxu0
      %v8025 = vpop.f32.mrb[0].mxu0
      %v8026 = vadd.f32 0.0, %v8025
      %v8027 = vpop.f32.mrb[0].mxu0
      %8028 = vmatprep.mubr.bf16.mxu0 0
      %8029 = vmatmul.mubr.bf16.gmra.mrb[0].mxu0 %v7975
      %v8030 = vpop.f32.mrb[0].mxu0
      %v8031 = vadd.f32 0.0, %v8030
      %v8032 = vpop.f32.mrb[0].mxu0
      %v8033 = vpop.f32.mrb[0].mxu0
      %v8034 = vadd.f32 0.0, %v8033
      %v8035 = vpop.f32.mrb[0].mxu0
      %8036 = vmatprep.mubr.bf16.mxu0 0
      %8037 = vmatmul.mubr.bf16.gmra.mrb[0].mxu0 %v7978
      %v8038 = vpop.f32.mrb[0].mxu0
      %v8039 = vadd.f32 0.0, %v8038
      %v8040 = vpop.f32.mrb[0].mxu0
      %v8041 = vpop.f32.mrb[0].mxu0
      %v8042 = vadd.f32 0.0, %v8041
      %v8043 = vpop.f32.mrb[0].mxu0
      %8044 = vdwg.mxu0
      %8045 = vrot.lane.b32.xlu0 %v898, 48
      %v8046 = vpop.permute.xlu0 %8045
      %8047 = vrot.lane.b32.xlu0 %v899, 48
      %v8048 = vpop.permute.xlu0 %8047
      %8049 = vrot.lane.b32.xlu0 %v900, 48
      %v8050 = vpop.permute.xlu0 %8049
      %8051 = vrot.lane.b32.xlu0 %v901, 48
      %v8052 = vpop.permute.xlu0 %8051
      %v8058 = vsel %vm1799, %v7928, 0
      %v8061 = vsel %vm1799, %v7929, 0
      %v8064 = vsel %vm1799, %v7930, 0
      %v8067 = vsel %vm1799, %v7931, 0
      %8069 = vmatprep.subr.bf16.mxu0 0
      %8070 = vmatpush1.bf16.msra.mxu0 %v8046
      %8071 = vmatprep.subr.bf16.mxu0 0
      %8072 = vmatpush1.bf16.msra.mxu0 %v8048
      %8073 = vmatprep.subr.bf16.mxu0 0
      %8074 = vmatpush1.bf16.msra.mxu0 %v8050
      %8075 = vmatprep.subr.bf16.mxu0 0
      %8076 = vmatpush1.bf16.msra.mxu0 %v8052
      %8077 = vmatprep.subr.bf16.mxu0 0
      %8078 = vmatpush1.bf16.msra.mxu0 0
      %8079 = vmatprep.subr.bf16.mxu0 0
      %8080 = vmatpush1.bf16.msra.mxu0 0
      %8081 = vmatprep.subr.bf16.mxu0 0
      %8082 = vmatpush1.bf16.msra.mxu0 0
      %8083 = vmatprep.subr.bf16.mxu0 0
      %8084 = vmatpush1.bf16.msra.mxu0 0
      %8085 = vmatprep.subr.bf16.mxu0 0
      %8086 = vmatpush1.bf16.msra.mxu0 0
      %8087 = vmatprep.subr.bf16.mxu0 0
      %8088 = vmatpush1.bf16.msra.mxu0 0
      %8089 = vmatprep.subr.bf16.mxu0 0
      %8090 = vmatpush1.bf16.msra.mxu0 0
      %8091 = vmatprep.subr.bf16.mxu0 0
      %8092 = vmatpush1.bf16.msra.mxu0 0
      %8093 = vmatprep.subr.bf16.mxu0 0
      %8094 = vmatpush1.bf16.msra.mxu0 0
      %8095 = vmatprep.subr.bf16.mxu0 0
      %8096 = vmatpush1.bf16.msra.mxu0 0
      %8097 = vmatprep.subr.bf16.mxu0 0
      %8098 = vmatpush1.bf16.msra.mxu0 0
      %8099 = vmatprep.subr.bf16.mxu0 0
      %8100 = vmatpush1.bf16.msra.mxu0 0
      %8101 = vmatprep.mubr.bf16.mxu0 0
      %8102 = vmatmul.mubr.bf16.gmra.mrb[0].mxu0 %v8058
      %v8103 = vpop.f32.mrb[0].mxu0
      %v8104 = vadd.f32 0.0, %v8103
      %v8105 = vpop.f32.mrb[0].mxu0
      %v8106 = vpop.f32.mrb[0].mxu0
      %v8107 = vadd.f32 0.0, %v8106
      %v8108 = vpop.f32.mrb[0].mxu0
      %8109 = vmatprep.mubr.bf16.mxu0 0
      %8110 = vmatmul.mubr.bf16.gmra.mrb[0].mxu0 %v8061
      %v8111 = vpop.f32.mrb[0].mxu0
      %v8112 = vadd.f32 0.0, %v8111
      %v8113 = vpop.f32.mrb[0].mxu0
      %v8114 = vpop.f32.mrb[0].mxu0
      %v8115 = vadd.f32 0.0, %v8114
      %v8116 = vpop.f32.mrb[0].mxu0
      %8117 = vmatprep.mubr.bf16.mxu0 0
      %8118 = vmatmul.mubr.bf16.gmra.mrb[0].mxu0 %v8064
      %v8119 = vpop.f32.mrb[0].mxu0
      %v8120 = vadd.f32 0.0, %v8119
      %v8121 = vpop.f32.mrb[0].mxu0
      %v8122 = vpop.f32.mrb[0].mxu0
      %v8123 = vadd.f32 0.0, %v8122
      %v8124 = vpop.f32.mrb[0].mxu0
      %8125 = vmatprep.mubr.bf16.mxu0 0
      %8126 = vmatmul.mubr.bf16.gmra.mrb[0].mxu0 %v8067
      %v8127 = vpop.f32.mrb[0].mxu0
      %v8128 = vadd.f32 0.0, %v8127
      %v8129 = vpop.f32.mrb[0].mxu0
      %v8130 = vpop.f32.mrb[0].mxu0
      %v8131 = vadd.f32 0.0, %v8130
      %v8132 = vpop.f32.mrb[0].mxu0
      %8133 = vdwg.mxu0
      %8134 = vrot.lane.b32.xlu0 %v902, 48
      %v8135 = vpop.permute.xlu0 %8134
      %8136 = vrot.lane.b32.xlu0 %v903, 48
      %v8137 = vpop.permute.xlu0 %8136
      %8138 = vrot.lane.b32.xlu0 %v904, 48
      %v8139 = vpop.permute.xlu0 %8138
      %8140 = vrot.lane.b32.xlu0 %v905, 48
      %v8141 = vpop.permute.xlu0 %8140
      %v8147 = vsel %vm1799, %v7932, 0
      %v8150 = vsel %vm1799, %v7933, 0
      %v8153 = vsel %vm1799, %v7934, 0
      %v8156 = vsel %vm1799, %v7935, 0
      %8158 = vmatprep.subr.bf16.mxu0 0
      %8159 = vmatpush1.bf16.msra.mxu0 %v8135
      %8160 = vmatprep.subr.bf16.mxu0 0
      %8161 = vmatpush1.bf16.msra.mxu0 %v8137
      %8162 = vmatprep.subr.bf16.mxu0 0
      %8163 = vmatpush1.bf16.msra.mxu0 %v8139
      %8164 = vmatprep.subr.bf16.mxu0 0
      %8165 = vmatpush1.bf16.msra.mxu0 %v8141
      %8166 = vmatprep.subr.bf16.mxu0 0
      %8167 = vmatpush1.bf16.msra.mxu0 0
      %8168 = vmatprep.subr.bf16.mxu0 0
      %8169 = vmatpush1.bf16.msra.mxu0 0
      %8170 = vmatprep.subr.bf16.mxu0 0
      %8171 = vmatpush1.bf16.msra.mxu0 0
      %8172 = vmatprep.subr.bf16.mxu0 0
      %8173 = vmatpush1.bf16.msra.mxu0 0
      %8174 = vmatprep.subr.bf16.mxu0 0
      %8175 = vmatpush1.bf16.msra.mxu0 0
      %8176 = vmatprep.subr.bf16.mxu0 0
      %8177 = vmatpush1.bf16.msra.mxu0 0
      %8178 = vmatprep.subr.bf16.mxu0 0
      %8179 = vmatpush1.bf16.msra.mxu0 0
      %8180 = vmatprep.subr.bf16.mxu0 0
      %8181 = vmatpush1.bf16.msra.mxu0 0
      %8182 = vmatprep.subr.bf16.mxu0 0
      %8183 = vmatpush1.bf16.msra.mxu0 0
      %8184 = vmatprep.subr.bf16.mxu0 0
      %8185 = vmatpush1.bf16.msra.mxu0 0
      %8186 = vmatprep.subr.bf16.mxu0 0
      %8187 = vmatpush1.bf16.msra.mxu0 0
      %8188 = vmatprep.subr.bf16.mxu0 0
      %8189 = vmatpush1.bf16.msra.mxu0 0
      %8190 = vmatprep.mubr.bf16.mxu0 0
      %8191 = vmatmul.mubr.bf16.gmra.mrb[0].mxu0 %v8147
      %v8192 = vpop.f32.mrb[0].mxu0
      %v8193 = vadd.f32 0.0, %v8192
      %v8194 = vpop.f32.mrb[0].mxu0
      %v8195 = vpop.f32.mrb[0].mxu0
      %v8196 = vadd.f32 0.0, %v8195
      %v8197 = vpop.f32.mrb[0].mxu0
      %8198 = vmatprep.mubr.bf16.mxu0 0
      %8199 = vmatmul.mubr.bf16.gmra.mrb[0].mxu0 %v8150
      %v8200 = vpop.f32.mrb[0].mxu0
      %v8201 = vadd.f32 0.0, %v8200
      %v8202 = vpop.f32.mrb[0].mxu0
      %v8203 = vpop.f32.mrb[0].mxu0
      %v8204 = vadd.f32 0.0, %v8203
      %v8205 = vpop.f32.mrb[0].mxu0
      %8206 = vmatprep.mubr.bf16.mxu0 0
      %8207 = vmatmul.mubr.bf16.gmra.mrb[0].mxu0 %v8153
      %v8208 = vpop.f32.mrb[0].mxu0
      %v8209 = vadd.f32 0.0, %v8208
      %v8210 = vpop.f32.mrb[0].mxu0
      %v8211 = vpop.f32.mrb[0].mxu0
      %v8212 = vadd.f32 0.0, %v8211
      %v8213 = vpop.f32.mrb[0].mxu0
      %8214 = vmatprep.mubr.bf16.mxu0 0
      %8215 = vmatmul.mubr.bf16.gmra.mrb[0].mxu0 %v8156
      %v8216 = vpop.f32.mrb[0].mxu0
      %v8217 = vadd.f32 0.0, %v8216
      %v8218 = vpop.f32.mrb[0].mxu0
      %v8219 = vpop.f32.mrb[0].mxu0
      %v8220 = vadd.f32 0.0, %v8219
      %v8221 = vpop.f32.mrb[0].mxu0
      %8222 = vdwg.mxu0
      %8223 = vrot.lane.b32.xlu0 %v906, 48
      %v8224 = vpop.permute.xlu0 %8223
      %8225 = vrot.lane.b32.xlu0 %v907, 48
      %v8226 = vpop.permute.xlu0 %8225
      %8227 = vrot.lane.b32.xlu0 %v908, 48
      %v8228 = vpop.permute.xlu0 %8227
      %8229 = vrot.lane.b32.xlu0 %v909, 48
      %v8230 = vpop.permute.xlu0 %8229
      %v8236 = vsel %vm1799, %v7936, 0
      %v8239 = vsel %vm1799, %v7937, 0
      %v8242 = vsel %vm1799, %v7938, 0
      %v8245 = vsel %vm1799, %v7939, 0
      %8247 = vmatprep.subr.bf16.mxu0 0
      %8248 = vmatpush1.bf16.msra.mxu0 %v8224
      %8249 = vmatprep.subr.bf16.mxu0 0
      %8250 = vmatpush1.bf16.msra.mxu0 %v8226
      %8251 = vmatprep.subr.bf16.mxu0 0
      %8252 = vmatpush1.bf16.msra.mxu0 %v8228
      %8253 = vmatprep.subr.bf16.mxu0 0
      %8254 = vmatpush1.bf16.msra.mxu0 %v8230
      %8255 = vmatprep.subr.bf16.mxu0 0
      %8256 = vmatpush1.bf16.msra.mxu0 0
      %8257 = vmatprep.subr.bf16.mxu0 0
      %8258 = vmatpush1.bf16.msra.mxu0 0
      %8259 = vmatprep.subr.bf16.mxu0 0
      %8260 = vmatpush1.bf16.msra.mxu0 0
      %8261 = vmatprep.subr.bf16.mxu0 0
      %8262 = vmatpush1.bf16.msra.mxu0 0
      %8263 = vmatprep.subr.bf16.mxu0 0
      %8264 = vmatpush1.bf16.msra.mxu0 0
      %8265 = vmatprep.subr.bf16.mxu0 0
      %8266 = vmatpush1.bf16.msra.mxu0 0
      %8267 = vmatprep.subr.bf16.mxu0 0
      %8268 = vmatpush1.bf16.msra.mxu0 0
      %8269 = vmatprep.subr.bf16.mxu0 0
      %8270 = vmatpush1.bf16.msra.mxu0 0
      %8271 = vmatprep.subr.bf16.mxu0 0
      %8272 = vmatpush1.bf16.msra.mxu0 0
      %8273 = vmatprep.subr.bf16.mxu0 0
      %8274 = vmatpush1.bf16.msra.mxu0 0
      %8275 = vmatprep.subr.bf16.mxu0 0
      %8276 = vmatpush1.bf16.msra.mxu0 0
      %8277 = vmatprep.subr.bf16.mxu0 0
      %8278 = vmatpush1.bf16.msra.mxu0 0
      %8279 = vmatprep.mubr.bf16.mxu0 0
      %8280 = vmatmul.mubr.bf16.gmra.mrb[0].mxu0 %v8236
      %v8281 = vpop.f32.mrb[0].mxu0
      %v8282 = vadd.f32 0.0, %v8281
      %v8283 = vpop.f32.mrb[0].mxu0
      %v8284 = vpop.f32.mrb[0].mxu0
      %v8285 = vadd.f32 0.0, %v8284
      %v8286 = vpop.f32.mrb[0].mxu0
      %8287 = vmatprep.mubr.bf16.mxu0 0
      %8288 = vmatmul.mubr.bf16.gmra.mrb[0].mxu0 %v8239
      %v8289 = vpop.f32.mrb[0].mxu0
      %v8290 = vadd.f32 0.0, %v8289
      %v8291 = vpop.f32.mrb[0].mxu0
      %v8292 = vpop.f32.mrb[0].mxu0
      %v8293 = vadd.f32 0.0, %v8292
      %v8294 = vpop.f32.mrb[0].mxu0
      %8295 = vmatprep.mubr.bf16.mxu0 0
      %8296 = vmatmul.mubr.bf16.gmra.mrb[0].mxu0 %v8242
      %v8297 = vpop.f32.mrb[0].mxu0
      %v8298 = vadd.f32 0.0, %v8297
      %v8299 = vpop.f32.mrb[0].mxu0
      %v8300 = vpop.f32.mrb[0].mxu0
      %v8301 = vadd.f32 0.0, %v8300
      %v8302 = vpop.f32.mrb[0].mxu0
      %8303 = vmatprep.mubr.bf16.mxu0 0
      %8304 = vmatmul.mubr.bf16.gmra.mrb[0].mxu0 %v8245
      %v8305 = vpop.f32.mrb[0].mxu0
      %v8306 = vadd.f32 0.0, %v8305
      %v8307 = vpop.f32.mrb[0].mxu0
      %v8308 = vpop.f32.mrb[0].mxu0
      %v8309 = vadd.f32 0.0, %v8308
      %v8310 = vpop.f32.mrb[0].mxu0
      %8311 = vdwg.mxu0
      %8312 = vrot.lane.b32.xlu0 %v910, 48
      %v8313 = vpop.permute.xlu0 %8312
      %8314 = vrot.lane.b32.xlu0 %v911, 48
      %v8315 = vpop.permute.xlu0 %8314
      %8316 = vrot.lane.b32.xlu0 %v912, 48
      %v8317 = vpop.permute.xlu0 %8316
      %8318 = vrot.lane.b32.xlu0 %v913, 48
      %v8319 = vpop.permute.xlu0 %8318
      %v8325 = vsel %vm1799, %v7940, 0
      %v8328 = vsel %vm1799, %v7941, 0
      %v8331 = vsel %vm1799, %v7942, 0
      %v8334 = vsel %vm1799, %v7943, 0
      %8336 = vmatprep.subr.bf16.mxu0 0
      %8337 = vmatpush1.bf16.msra.mxu0 %v8313
      %8338 = vmatprep.subr.bf16.mxu0 0
      %8339 = vmatpush1.bf16.msra.mxu0 %v8315
      %8340 = vmatprep.subr.bf16.mxu0 0
      %8341 = vmatpush1.bf16.msra.mxu0 %v8317
      %8342 = vmatprep.subr.bf16.mxu0 0
      %8343 = vmatpush1.bf16.msra.mxu0 %v8319
      %8344 = vmatprep.subr.bf16.mxu0 0
      %8345 = vmatpush1.bf16.msra.mxu0 0
      %8346 = vmatprep.subr.bf16.mxu0 0
      %8347 = vmatpush1.bf16.msra.mxu0 0
      %8348 = vmatprep.subr.bf16.mxu0 0
      %8349 = vmatpush1.bf16.msra.mxu0 0
      %8350 = vmatprep.subr.bf16.mxu0 0
      %8351 = vmatpush1.bf16.msra.mxu0 0
      %8352 = vmatprep.subr.bf16.mxu0 0
      %8353 = vmatpush1.bf16.msra.mxu0 0
      %8354 = vmatprep.subr.bf16.mxu0 0
      %8355 = vmatpush1.bf16.msra.mxu0 0
      %8356 = vmatprep.subr.bf16.mxu0 0
      %8357 = vmatpush1.bf16.msra.mxu0 0
      %8358 = vmatprep.subr.bf16.mxu0 0
      %8359 = vmatpush1.bf16.msra.mxu0 0
      %8360 = vmatprep.subr.bf16.mxu0 0
      %8361 = vmatpush1.bf16.msra.mxu0 0
      %8362 = vmatprep.subr.bf16.mxu0 0
      %8363 = vmatpush1.bf16.msra.mxu0 0
      %8364 = vmatprep.subr.bf16.mxu0 0
      %8365 = vmatpush1.bf16.msra.mxu0 0
      %8366 = vmatprep.subr.bf16.mxu0 0
      %8367 = vmatpush1.bf16.msra.mxu0 0
      %8368 = vmatprep.mubr.bf16.mxu0 0
      %8369 = vmatmul.mubr.bf16.gmra.mrb[0].mxu0 %v8325
      %v8370 = vpop.f32.mrb[0].mxu0
      %v8371 = vadd.f32 0.0, %v8370
      %v8372 = vpop.f32.mrb[0].mxu0
      %v8373 = vpop.f32.mrb[0].mxu0
      %v8374 = vadd.f32 0.0, %v8373
      %v8375 = vpop.f32.mrb[0].mxu0
      %8376 = vmatprep.mubr.bf16.mxu0 0
      %8377 = vmatmul.mubr.bf16.gmra.mrb[0].mxu0 %v8328
      %v8378 = vpop.f32.mrb[0].mxu0
      %v8379 = vadd.f32 0.0, %v8378
      %v8380 = vpop.f32.mrb[0].mxu0
      %v8381 = vpop.f32.mrb[0].mxu0
      %v8382 = vadd.f32 0.0, %v8381
      %v8383 = vpop.f32.mrb[0].mxu0
      %8384 = vmatprep.mubr.bf16.mxu0 0
      %8385 = vmatmul.mubr.bf16.gmra.mrb[0].mxu0 %v8331
      %v8386 = vpop.f32.mrb[0].mxu0
      %v8387 = vadd.f32 0.0, %v8386
      %v8388 = vpop.f32.mrb[0].mxu0
      %v8389 = vpop.f32.mrb[0].mxu0
      %v8390 = vadd.f32 0.0, %v8389
      %v8391 = vpop.f32.mrb[0].mxu0
      %8392 = vmatprep.mubr.bf16.mxu0 0
      %8393 = vmatmul.mubr.bf16.gmra.mrb[0].mxu0 %v8334
      %v8394 = vpop.f32.mrb[0].mxu0
      %v8395 = vadd.f32 0.0, %v8394
      %v8396 = vpop.f32.mrb[0].mxu0
      %v8397 = vpop.f32.mrb[0].mxu0
      %v8398 = vadd.f32 0.0, %v8397
      %v8399 = vpop.f32.mrb[0].mxu0
      %8400 = vdwg.mxu0
      %8401 = vrot.lane.b32.xlu0 %v914, 48
      %v8402 = vpop.permute.xlu0 %8401
      %8403 = vrot.lane.b32.xlu0 %v915, 48
      %v8404 = vpop.permute.xlu0 %8403
      %8405 = vrot.lane.b32.xlu0 %v916, 48
      %v8406 = vpop.permute.xlu0 %8405
      %8407 = vrot.lane.b32.xlu0 %v917, 48
      %v8408 = vpop.permute.xlu0 %8407
      %v8414 = vsel %vm1799, %v7944, 0
      %v8417 = vsel %vm1799, %v7945, 0
      %v8420 = vsel %vm1799, %v7946, 0
      %v8423 = vsel %vm1799, %v7947, 0
      %8425 = vmatprep.subr.bf16.mxu0 0
      %8426 = vmatpush1.bf16.msra.mxu0 %v8402
      %8427 = vmatprep.subr.bf16.mxu0 0
      %8428 = vmatpush1.bf16.msra.mxu0 %v8404
      %8429 = vmatprep.subr.bf16.mxu0 0
      %8430 = vmatpush1.bf16.msra.mxu0 %v8406
      %8431 = vmatprep.subr.bf16.mxu0 0
      %8432 = vmatpush1.bf16.msra.mxu0 %v8408
      %8433 = vmatprep.subr.bf16.mxu0 0
      %8434 = vmatpush1.bf16.msra.mxu0 0
      %8435 = vmatprep.subr.bf16.mxu0 0
      %8436 = vmatpush1.bf16.msra.mxu0 0
      %8437 = vmatprep.subr.bf16.mxu0 0
      %8438 = vmatpush1.bf16.msra.mxu0 0
      %8439 = vmatprep.subr.bf16.mxu0 0
      %8440 = vmatpush1.bf16.msra.mxu0 0
      %8441 = vmatprep.subr.bf16.mxu0 0
      %8442 = vmatpush1.bf16.msra.mxu0 0
      %8443 = vmatprep.subr.bf16.mxu0 0
      %8444 = vmatpush1.bf16.msra.mxu0 0
      %8445 = vmatprep.subr.bf16.mxu0 0
      %8446 = vmatpush1.bf16.msra.mxu0 0
      %8447 = vmatprep.subr.bf16.mxu0 0
      %8448 = vmatpush1.bf16.msra.mxu0 0
      %8449 = vmatprep.subr.bf16.mxu0 0
      %8450 = vmatpush1.bf16.msra.mxu0 0
      %8451 = vmatprep.subr.bf16.mxu0 0
      %8452 = vmatpush1.bf16.msra.mxu0 0
      %8453 = vmatprep.subr.bf16.mxu0 0
      %8454 = vmatpush1.bf16.msra.mxu0 0
      %8455 = vmatprep.subr.bf16.mxu0 0
      %8456 = vmatpush1.bf16.msra.mxu0 0
      %8457 = vmatprep.mubr.bf16.mxu0 0
      %8458 = vmatmul.mubr.bf16.gmra.mrb[0].mxu0 %v8414
      %v8459 = vpop.f32.mrb[0].mxu0
      %v8460 = vadd.f32 0.0, %v8459
      %v8461 = vpop.f32.mrb[0].mxu0
      %v8462 = vpop.f32.mrb[0].mxu0
      %v8463 = vadd.f32 0.0, %v8462
      %v8464 = vpop.f32.mrb[0].mxu0
      %8465 = vmatprep.mubr.bf16.mxu0 0
      %8466 = vmatmul.mubr.bf16.gmra.mrb[0].mxu0 %v8417
      %v8467 = vpop.f32.mrb[0].mxu0
      %v8468 = vadd.f32 0.0, %v8467
      %v8469 = vpop.f32.mrb[0].mxu0
      %v8470 = vpop.f32.mrb[0].mxu0
      %v8471 = vadd.f32 0.0, %v8470
      %v8472 = vpop.f32.mrb[0].mxu0
      %8473 = vmatprep.mubr.bf16.mxu0 0
      %8474 = vmatmul.mubr.bf16.gmra.mrb[0].mxu0 %v8420
      %v8475 = vpop.f32.mrb[0].mxu0
      %v8476 = vadd.f32 0.0, %v8475
      %v8477 = vpop.f32.mrb[0].mxu0
      %v8478 = vpop.f32.mrb[0].mxu0
      %v8479 = vadd.f32 0.0, %v8478
      %v8480 = vpop.f32.mrb[0].mxu0
      %8481 = vmatprep.mubr.bf16.mxu0 0
      %8482 = vmatmul.mubr.bf16.gmra.mrb[0].mxu0 %v8423
      %v8483 = vpop.f32.mrb[0].mxu0
      %v8484 = vadd.f32 0.0, %v8483
      %v8485 = vpop.f32.mrb[0].mxu0
      %v8486 = vpop.f32.mrb[0].mxu0
      %v8487 = vadd.f32 0.0, %v8486
      %v8488 = vpop.f32.mrb[0].mxu0
      %8489 = vdwg.mxu0
      %8490 = vrot.lane.b32.xlu0 %v918, 48
      %v8491 = vpop.permute.xlu0 %8490
      %8492 = vrot.lane.b32.xlu0 %v919, 48
      %v8493 = vpop.permute.xlu0 %8492
      %8494 = vrot.lane.b32.xlu0 %v920, 48
      %v8495 = vpop.permute.xlu0 %8494
      %8496 = vrot.lane.b32.xlu0 %v921, 48
      %v8497 = vpop.permute.xlu0 %8496
      %v8503 = vsel %vm1799, %v7948, 0
      %v8506 = vsel %vm1799, %v7949, 0
      %v8509 = vsel %vm1799, %v7950, 0
      %v8512 = vsel %vm1799, %v7951, 0
      %8514 = vmatprep.subr.bf16.mxu0 0
      %8515 = vmatpush1.bf16.msra.mxu0 %v8491
      %8516 = vmatprep.subr.bf16.mxu0 0
      %8517 = vmatpush1.bf16.msra.mxu0 %v8493
      %8518 = vmatprep.subr.bf16.mxu0 0
      %8519 = vmatpush1.bf16.msra.mxu0 %v8495
      %8520 = vmatprep.subr.bf16.mxu0 0
      %8521 = vmatpush1.bf16.msra.mxu0 %v8497
      %8522 = vmatprep.subr.bf16.mxu0 0
      %8523 = vmatpush1.bf16.msra.mxu0 0
      %8524 = vmatprep.subr.bf16.mxu0 0
      %8525 = vmatpush1.bf16.msra.mxu0 0
      %8526 = vmatprep.subr.bf16.mxu0 0
      %8527 = vmatpush1.bf16.msra.mxu0 0
      %8528 = vmatprep.subr.bf16.mxu0 0
      %8529 = vmatpush1.bf16.msra.mxu0 0
      %8530 = vmatprep.subr.bf16.mxu0 0
      %8531 = vmatpush1.bf16.msra.mxu0 0
      %8532 = vmatprep.subr.bf16.mxu0 0
      %8533 = vmatpush1.bf16.msra.mxu0 0
      %8534 = vmatprep.subr.bf16.mxu0 0
      %8535 = vmatpush1.bf16.msra.mxu0 0
      %8536 = vmatprep.subr.bf16.mxu0 0
      %8537 = vmatpush1.bf16.msra.mxu0 0
      %8538 = vmatprep.subr.bf16.mxu0 0
      %8539 = vmatpush1.bf16.msra.mxu0 0
      %8540 = vmatprep.subr.bf16.mxu0 0
      %8541 = vmatpush1.bf16.msra.mxu0 0
      %8542 = vmatprep.subr.bf16.mxu0 0
      %8543 = vmatpush1.bf16.msra.mxu0 0
      %8544 = vmatprep.subr.bf16.mxu0 0
      %8545 = vmatpush1.bf16.msra.mxu0 0
      %8546 = vmatprep.mubr.bf16.mxu0 0
      %8547 = vmatmul.mubr.bf16.gmra.mrb[0].mxu0 %v8503
      %v8548 = vpop.f32.mrb[0].mxu0
      %v8549 = vadd.f32 0.0, %v8548
      %v8550 = vpop.f32.mrb[0].mxu0
      %v8551 = vpop.f32.mrb[0].mxu0
      %v8552 = vadd.f32 0.0, %v8551
      %v8553 = vpop.f32.mrb[0].mxu0
      %8554 = vmatprep.mubr.bf16.mxu0 0
      %8555 = vmatmul.mubr.bf16.gmra.mrb[0].mxu0 %v8506
      %v8556 = vpop.f32.mrb[0].mxu0
      %v8557 = vadd.f32 0.0, %v8556
      %v8558 = vpop.f32.mrb[0].mxu0
      %v8559 = vpop.f32.mrb[0].mxu0
      %v8560 = vadd.f32 0.0, %v8559
      %v8561 = vpop.f32.mrb[0].mxu0
      %8562 = vmatprep.mubr.bf16.mxu0 0
      %8563 = vmatmul.mubr.bf16.gmra.mrb[0].mxu0 %v8509
      %v8564 = vpop.f32.mrb[0].mxu0
      %v8565 = vadd.f32 0.0, %v8564
      %v8566 = vpop.f32.mrb[0].mxu0
      %v8567 = vpop.f32.mrb[0].mxu0
      %v8568 = vadd.f32 0.0, %v8567
      %v8569 = vpop.f32.mrb[0].mxu0
      %8570 = vmatprep.mubr.bf16.mxu0 0
      %8571 = vmatmul.mubr.bf16.gmra.mrb[0].mxu0 %v8512
      %v8572 = vpop.f32.mrb[0].mxu0
      %v8573 = vadd.f32 0.0, %v8572
      %v8574 = vpop.f32.mrb[0].mxu0
      %v8575 = vpop.f32.mrb[0].mxu0
      %v8576 = vadd.f32 0.0, %v8575
      %v8577 = vpop.f32.mrb[0].mxu0
      %8578 = vdwg.mxu0
      %8579 = vrot.lane.b32.xlu0 %v922, 48
      %v8580 = vpop.permute.xlu0 %8579
      %8581 = vrot.lane.b32.xlu0 %v923, 48
      %v8582 = vpop.permute.xlu0 %8581
      %8583 = vrot.lane.b32.xlu0 %v924, 48
      %v8584 = vpop.permute.xlu0 %8583
      %8585 = vrot.lane.b32.xlu0 %v925, 48
      %v8586 = vpop.permute.xlu0 %8585
      %v8592 = vsel %vm1799, %v7952, 0
      %v8595 = vsel %vm1799, %v7953, 0
      %v8598 = vsel %vm1799, %v7954, 0
      %v8601 = vsel %vm1799, %v7955, 0
      %8603 = vmatprep.subr.bf16.mxu0 0
      %8604 = vmatpush1.bf16.msra.mxu0 %v8580
      %8605 = vmatprep.subr.bf16.mxu0 0
      %8606 = vmatpush1.bf16.msra.mxu0 %v8582
      %8607 = vmatprep.subr.bf16.mxu0 0
      %8608 = vmatpush1.bf16.msra.mxu0 %v8584
      %8609 = vmatprep.subr.bf16.mxu0 0
      %8610 = vmatpush1.bf16.msra.mxu0 %v8586
      %8611 = vmatprep.subr.bf16.mxu0 0
      %8612 = vmatpush1.bf16.msra.mxu0 0
      %8613 = vmatprep.subr.bf16.mxu0 0
      %8614 = vmatpush1.bf16.msra.mxu0 0
      %8615 = vmatprep.subr.bf16.mxu0 0
      %8616 = vmatpush1.bf16.msra.mxu0 0
      %8617 = vmatprep.subr.bf16.mxu0 0
      %8618 = vmatpush1.bf16.msra.mxu0 0
      %8619 = vmatprep.subr.bf16.mxu0 0
      %8620 = vmatpush1.bf16.msra.mxu0 0
      %8621 = vmatprep.subr.bf16.mxu0 0
      %8622 = vmatpush1.bf16.msra.mxu0 0
      %8623 = vmatprep.subr.bf16.mxu0 0
      %8624 = vmatpush1.bf16.msra.mxu0 0
      %8625 = vmatprep.subr.bf16.mxu0 0
      %8626 = vmatpush1.bf16.msra.mxu0 0
      %8627 = vmatprep.subr.bf16.mxu0 0
      %8628 = vmatpush1.bf16.msra.mxu0 0
      %8629 = vmatprep.subr.bf16.mxu0 0
      %8630 = vmatpush1.bf16.msra.mxu0 0
      %8631 = vmatprep.subr.bf16.mxu0 0
      %8632 = vmatpush1.bf16.msra.mxu0 0
      %8633 = vmatprep.subr.bf16.mxu0 0
      %8634 = vmatpush1.bf16.msra.mxu0 0
      %8635 = vmatprep.mubr.bf16.mxu0 0
      %8636 = vmatmul.mubr.bf16.gmra.mrb[0].mxu0 %v8592
      %v8637 = vpop.f32.mrb[0].mxu0
      %v8638 = vadd.f32 0.0, %v8637
      %v8639 = vpop.f32.mrb[0].mxu0
      %v8640 = vpop.f32.mrb[0].mxu0
      %v8641 = vadd.f32 0.0, %v8640
      %v8642 = vpop.f32.mrb[0].mxu0
      %8643 = vmatprep.mubr.bf16.mxu0 0
      %8644 = vmatmul.mubr.bf16.gmra.mrb[0].mxu0 %v8595
      %v8645 = vpop.f32.mrb[0].mxu0
      %v8646 = vadd.f32 0.0, %v8645
      %v8647 = vpop.f32.mrb[0].mxu0
      %v8648 = vpop.f32.mrb[0].mxu0
      %v8649 = vadd.f32 0.0, %v8648
      %v8650 = vpop.f32.mrb[0].mxu0
      %8651 = vmatprep.mubr.bf16.mxu0 0
      %8652 = vmatmul.mubr.bf16.gmra.mrb[0].mxu0 %v8598
      %v8653 = vpop.f32.mrb[0].mxu0
      %v8654 = vadd.f32 0.0, %v8653
      %v8655 = vpop.f32.mrb[0].mxu0
      %v8656 = vpop.f32.mrb[0].mxu0
      %v8657 = vadd.f32 0.0, %v8656
      %v8658 = vpop.f32.mrb[0].mxu0
      %8659 = vmatprep.mubr.bf16.mxu0 0
      %8660 = vmatmul.mubr.bf16.gmra.mrb[0].mxu0 %v8601
      %v8661 = vpop.f32.mrb[0].mxu0
      %v8662 = vadd.f32 0.0, %v8661
      %v8663 = vpop.f32.mrb[0].mxu0
      %v8664 = vpop.f32.mrb[0].mxu0
      %v8665 = vadd.f32 0.0, %v8664
      %v8666 = vpop.f32.mrb[0].mxu0
      %8667 = vdwg.mxu0
      %v8668 = vpack.c.bf16 %v8018, %v8015
      %v8669 = vpack.c.bf16 %v8026, %v8023
      %v8670 = vpack.c.bf16 %v8034, %v8031
      %v8671 = vpack.c.bf16 %v8042, %v8039
      %v8672 = vpack.c.bf16 %v8107, %v8104
      %v8673 = vpack.c.bf16 %v8115, %v8112
      %v8674 = vpack.c.bf16 %v8123, %v8120
      %v8675 = vpack.c.bf16 %v8131, %v8128
      %v8676 = vpack.c.bf16 %v8196, %v8193
      %v8677 = vpack.c.bf16 %v8204, %v8201
      %v8678 = vpack.c.bf16 %v8212, %v8209
      %v8679 = vpack.c.bf16 %v8220, %v8217
      %v8680 = vpack.c.bf16 %v8285, %v8282
      %v8681 = vpack.c.bf16 %v8293, %v8290
      %v8682 = vpack.c.bf16 %v8301, %v8298
      %v8683 = vpack.c.bf16 %v8309, %v8306
      %v8684 = vpack.c.bf16 %v8374, %v8371
      %v8685 = vpack.c.bf16 %v8382, %v8379
      %v8686 = vpack.c.bf16 %v8390, %v8387
      %v8687 = vpack.c.bf16 %v8398, %v8395
      %v8688 = vpack.c.bf16 %v8463, %v8460
      %v8689 = vpack.c.bf16 %v8471, %v8468
      %v8690 = vpack.c.bf16 %v8479, %v8476
      %v8691 = vpack.c.bf16 %v8487, %v8484
      %v8692 = vpack.c.bf16 %v8552, %v8549
      %v8693 = vpack.c.bf16 %v8560, %v8557
      %v8694 = vpack.c.bf16 %v8568, %v8565
      %v8695 = vpack.c.bf16 %v8576, %v8573
      %v8696 = vpack.c.bf16 %v8641, %v8638
      %v8697 = vpack.c.bf16 %v8649, %v8646
      %v8698 = vpack.c.bf16 %v8657, %v8654
      %v8699 = vpack.c.bf16 %v8665, %v8662
      %s8700 = scalar_lea.vmem %s4, 8
      %v8701 = vld [vmem:[%s8700] sm:$0xf]
      %v8703 = vsel %vm1002, %v8668, 0
      %v8706 = vsel %vm1002, %v8669, 0
      %v8709 = vsel %vm1002, %v8670, 0
      %v8712 = vsel %vm1002, %v8671, 0
      %v8715 = vsel %vm1002, %v8672, 0
      %v8718 = vsel %vm1002, %v8673, 0
      %v8721 = vsel %vm1002, %v8674, 0
      %v8724 = vsel %vm1002, %v8675, 0
      %v8727 = vsel %vm1002, %v8676, 0
      %v8730 = vsel %vm1002, %v8677, 0
      %v8733 = vsel %vm1002, %v8678, 0
      %v8736 = vsel %vm1002, %v8679, 0
      %v8739 = vsel %vm1002, %v8680, 0
      %v8742 = vsel %vm1002, %v8681, 0
      %v8745 = vsel %vm1002, %v8682, 0
      %v8748 = vsel %vm1002, %v8683, 0
      %v8751 = vsel %vm1002, %v8684, 0
      %v8754 = vsel %vm1002, %v8685, 0
      %v8757 = vsel %vm1002, %v8686, 0
      %v8760 = vsel %vm1002, %v8687, 0
      %v8763 = vsel %vm1002, %v8688, 0
      %v8766 = vsel %vm1002, %v8689, 0
      %v8769 = vsel %vm1002, %v8690, 0
      %v8772 = vsel %vm1002, %v8691, 0
      %v8775 = vsel %vm1002, %v8692, 0
      %v8778 = vsel %vm1002, %v8693, 0
      %v8781 = vsel %vm1002, %v8694, 0
      %v8784 = vsel %vm1002, %v8695, 0
      %v8787 = vsel %vm1002, %v8696, 0
      %v8790 = vsel %vm1002, %v8697, 0
      %v8793 = vsel %vm1002, %v8698, 0
      %v8796 = vsel %vm1002, %v8699, 0
      %v8799 = vsel %vm5699, %v8701, 0
      %8801 = vmatprep.subr.bf16.mxu0 0
      %8802 = vmatpush1.bf16.msra.mxu0 %v8799
      %8803 = vmatprep.subr.bf16.mxu0 0
      %8804 = vmatpush1.bf16.msra.mxu0 0
      %8805 = vmatprep.subr.bf16.mxu0 0
      %8806 = vmatpush1.bf16.msra.mxu0 0
      %8807 = vmatprep.subr.bf16.mxu0 0
      %8808 = vmatpush1.bf16.msra.mxu0 0
      %8809 = vmatprep.subr.bf16.mxu0 0
      %8810 = vmatpush1.bf16.msra.mxu0 0
      %8811 = vmatprep.subr.bf16.mxu0 0
      %8812 = vmatpush1.bf16.msra.mxu0 0
      %8813 = vmatprep.subr.bf16.mxu0 0
      %8814 = vmatpush1.bf16.msra.mxu0 0
      %8815 = vmatprep.subr.bf16.mxu0 0
      %8816 = vmatpush1.bf16.msra.mxu0 0
      %8817 = vmatprep.subr.bf16.mxu0 0
      %8818 = vmatpush1.bf16.msra.mxu0 0
      %8819 = vmatprep.subr.bf16.mxu0 0
      %8820 = vmatpush1.bf16.msra.mxu0 0
      %8821 = vmatprep.subr.bf16.mxu0 0
      %8822 = vmatpush1.bf16.msra.mxu0 0
      %8823 = vmatprep.subr.bf16.mxu0 0
      %8824 = vmatpush1.bf16.msra.mxu0 0
      %8825 = vmatprep.subr.bf16.mxu0 0
      %8826 = vmatpush1.bf16.msra.mxu0 0
      %8827 = vmatprep.subr.bf16.mxu0 0
      %8828 = vmatpush1.bf16.msra.mxu0 0
      %8829 = vmatprep.subr.bf16.mxu0 0
      %8830 = vmatpush1.bf16.msra.mxu0 0
      %8831 = vmatprep.subr.bf16.mxu0 0
      %8832 = vmatpush1.bf16.msra.mxu0 0
      %8833 = vmatprep.mubr.bf16.mxu0 0
      %8834 = vmatmul.mubr.bf16.gmra.mrb[0].mxu0 %v8703
      %v8835 = vpop.f32.mrb[0].mxu0
      %v8836 = vadd.f32 0.0, %v8835
      %v8837 = vpop.f32.mrb[0].mxu0
      %v8838 = vpop.f32.mrb[0].mxu0
      %v8839 = vadd.f32 0.0, %v8838
      %v8840 = vpop.f32.mrb[0].mxu0
      %8841 = vmatprep.mubr.bf16.mxu0 0
      %8842 = vmatmul.mubr.bf16.gmra.mrb[0].mxu0 %v8706
      %v8843 = vpop.f32.mrb[0].mxu0
      %v8844 = vadd.f32 0.0, %v8843
      %v8845 = vpop.f32.mrb[0].mxu0
      %v8846 = vpop.f32.mrb[0].mxu0
      %v8847 = vadd.f32 0.0, %v8846
      %v8848 = vpop.f32.mrb[0].mxu0
      %8849 = vmatprep.mubr.bf16.mxu0 0
      %8850 = vmatmul.mubr.bf16.gmra.mrb[0].mxu0 %v8709
      %v8851 = vpop.f32.mrb[0].mxu0
      %v8852 = vadd.f32 0.0, %v8851
      %v8853 = vpop.f32.mrb[0].mxu0
      %v8854 = vpop.f32.mrb[0].mxu0
      %v8855 = vadd.f32 0.0, %v8854
      %v8856 = vpop.f32.mrb[0].mxu0
      %8857 = vmatprep.mubr.bf16.mxu0 0
      %8858 = vmatmul.mubr.bf16.gmra.mrb[0].mxu0 %v8712
      %v8859 = vpop.f32.mrb[0].mxu0
      %v8860 = vadd.f32 0.0, %v8859
      %v8861 = vpop.f32.mrb[0].mxu0
      %v8862 = vpop.f32.mrb[0].mxu0
      %v8863 = vadd.f32 0.0, %v8862
      %v8864 = vpop.f32.mrb[0].mxu0
      %8865 = vmatprep.mubr.bf16.mxu0 0
      %8866 = vmatmul.mubr.bf16.gmra.mrb[0].mxu0 %v8715
      %v8867 = vpop.f32.mrb[0].mxu0
      %v8868 = vadd.f32 0.0, %v8867
      %v8869 = vpop.f32.mrb[0].mxu0
      %v8870 = vpop.f32.mrb[0].mxu0
      %v8871 = vadd.f32 0.0, %v8870
      %v8872 = vpop.f32.mrb[0].mxu0
      %8873 = vmatprep.mubr.bf16.mxu0 0
      %8874 = vmatmul.mubr.bf16.gmra.mrb[0].mxu0 %v8718
      %v8875 = vpop.f32.mrb[0].mxu0
      %v8876 = vadd.f32 0.0, %v8875
      %v8877 = vpop.f32.mrb[0].mxu0
      %v8878 = vpop.f32.mrb[0].mxu0
      %v8879 = vadd.f32 0.0, %v8878
      %v8880 = vpop.f32.mrb[0].mxu0
      %8881 = vmatprep.mubr.bf16.mxu0 0
      %8882 = vmatmul.mubr.bf16.gmra.mrb[0].mxu0 %v8721
      %v8883 = vpop.f32.mrb[0].mxu0
      %v8884 = vadd.f32 0.0, %v8883
      %v8885 = vpop.f32.mrb[0].mxu0
      %v8886 = vpop.f32.mrb[0].mxu0
      %v8887 = vadd.f32 0.0, %v8886
      %v8888 = vpop.f32.mrb[0].mxu0
      %8889 = vmatprep.mubr.bf16.mxu0 0
      %8890 = vmatmul.mubr.bf16.gmra.mrb[0].mxu0 %v8724
      %v8891 = vpop.f32.mrb[0].mxu0
      %v8892 = vadd.f32 0.0, %v8891
      %v8893 = vpop.f32.mrb[0].mxu0
      %v8894 = vpop.f32.mrb[0].mxu0
      %v8895 = vadd.f32 0.0, %v8894
      %v8896 = vpop.f32.mrb[0].mxu0
      %8897 = vmatprep.mubr.bf16.mxu0 0
      %8898 = vmatmul.mubr.bf16.gmra.mrb[0].mxu0 %v8727
      %v8899 = vpop.f32.mrb[0].mxu0
      %v8900 = vadd.f32 0.0, %v8899
      %v8901 = vpop.f32.mrb[0].mxu0
      %v8902 = vpop.f32.mrb[0].mxu0
      %v8903 = vadd.f32 0.0, %v8902
      %v8904 = vpop.f32.mrb[0].mxu0
      %8905 = vmatprep.mubr.bf16.mxu0 0
      %8906 = vmatmul.mubr.bf16.gmra.mrb[0].mxu0 %v8730
      %v8907 = vpop.f32.mrb[0].mxu0
      %v8908 = vadd.f32 0.0, %v8907
      %v8909 = vpop.f32.mrb[0].mxu0
      %v8910 = vpop.f32.mrb[0].mxu0
      %v8911 = vadd.f32 0.0, %v8910
      %v8912 = vpop.f32.mrb[0].mxu0
      %8913 = vmatprep.mubr.bf16.mxu0 0
      %8914 = vmatmul.mubr.bf16.gmra.mrb[0].mxu0 %v8733
      %v8915 = vpop.f32.mrb[0].mxu0
      %v8916 = vadd.f32 0.0, %v8915
      %v8917 = vpop.f32.mrb[0].mxu0
      %v8918 = vpop.f32.mrb[0].mxu0
      %v8919 = vadd.f32 0.0, %v8918
      %v8920 = vpop.f32.mrb[0].mxu0
      %8921 = vmatprep.mubr.bf16.mxu0 0
      %8922 = vmatmul.mubr.bf16.gmra.mrb[0].mxu0 %v8736
      %v8923 = vpop.f32.mrb[0].mxu0
      %v8924 = vadd.f32 0.0, %v8923
      %v8925 = vpop.f32.mrb[0].mxu0
      %v8926 = vpop.f32.mrb[0].mxu0
      %v8927 = vadd.f32 0.0, %v8926
      %v8928 = vpop.f32.mrb[0].mxu0
      %8929 = vmatprep.mubr.bf16.mxu0 0
      %8930 = vmatmul.mubr.bf16.gmra.mrb[0].mxu0 %v8739
      %v8931 = vpop.f32.mrb[0].mxu0
      %v8932 = vadd.f32 0.0, %v8931
      %v8933 = vpop.f32.mrb[0].mxu0
      %v8934 = vpop.f32.mrb[0].mxu0
      %v8935 = vadd.f32 0.0, %v8934
      %v8936 = vpop.f32.mrb[0].mxu0
      %8937 = vmatprep.mubr.bf16.mxu0 0
      %8938 = vmatmul.mubr.bf16.gmra.mrb[0].mxu0 %v8742
      %v8939 = vpop.f32.mrb[0].mxu0
      %v8940 = vadd.f32 0.0, %v8939
      %v8941 = vpop.f32.mrb[0].mxu0
      %v8942 = vpop.f32.mrb[0].mxu0
      %v8943 = vadd.f32 0.0, %v8942
      %v8944 = vpop.f32.mrb[0].mxu0
      %8945 = vmatprep.mubr.bf16.mxu0 0
      %8946 = vmatmul.mubr.bf16.gmra.mrb[0].mxu0 %v8745
      %v8947 = vpop.f32.mrb[0].mxu0
      %v8948 = vadd.f32 0.0, %v8947
      %v8949 = vpop.f32.mrb[0].mxu0
      %v8950 = vpop.f32.mrb[0].mxu0
      %v8951 = vadd.f32 0.0, %v8950
      %v8952 = vpop.f32.mrb[0].mxu0
      %8953 = vmatprep.mubr.bf16.mxu0 0
      %8954 = vmatmul.mubr.bf16.gmra.mrb[0].mxu0 %v8748
      %v8955 = vpop.f32.mrb[0].mxu0
      %v8956 = vadd.f32 0.0, %v8955
      %v8957 = vpop.f32.mrb[0].mxu0
      %v8958 = vpop.f32.mrb[0].mxu0
      %v8959 = vadd.f32 0.0, %v8958
      %v8960 = vpop.f32.mrb[0].mxu0
      %8961 = vmatprep.mubr.bf16.mxu0 0
      %8962 = vmatmul.mubr.bf16.gmra.mrb[0].mxu0 %v8751
      %v8963 = vpop.f32.mrb[0].mxu0
      %v8964 = vadd.f32 0.0, %v8963
      %v8965 = vpop.f32.mrb[0].mxu0
      %v8966 = vpop.f32.mrb[0].mxu0
      %v8967 = vadd.f32 0.0, %v8966
      %v8968 = vpop.f32.mrb[0].mxu0
      %8969 = vmatprep.mubr.bf16.mxu0 0
      %8970 = vmatmul.mubr.bf16.gmra.mrb[0].mxu0 %v8754
      %v8971 = vpop.f32.mrb[0].mxu0
      %v8972 = vadd.f32 0.0, %v8971
      %v8973 = vpop.f32.mrb[0].mxu0
      %v8974 = vpop.f32.mrb[0].mxu0
      %v8975 = vadd.f32 0.0, %v8974
      %v8976 = vpop.f32.mrb[0].mxu0
      %8977 = vmatprep.mubr.bf16.mxu0 0
      %8978 = vmatmul.mubr.bf16.gmra.mrb[0].mxu0 %v8757
      %v8979 = vpop.f32.mrb[0].mxu0
      %v8980 = vadd.f32 0.0, %v8979
      %v8981 = vpop.f32.mrb[0].mxu0
      %v8982 = vpop.f32.mrb[0].mxu0
      %v8983 = vadd.f32 0.0, %v8982
      %v8984 = vpop.f32.mrb[0].mxu0
      %8985 = vmatprep.mubr.bf16.mxu0 0
      %8986 = vmatmul.mubr.bf16.gmra.mrb[0].mxu0 %v8760
      %v8987 = vpop.f32.mrb[0].mxu0
      %v8988 = vadd.f32 0.0, %v8987
      %v8989 = vpop.f32.mrb[0].mxu0
      %v8990 = vpop.f32.mrb[0].mxu0
      %v8991 = vadd.f32 0.0, %v8990
      %v8992 = vpop.f32.mrb[0].mxu0
      %8993 = vmatprep.mubr.bf16.mxu0 0
      %8994 = vmatmul.mubr.bf16.gmra.mrb[0].mxu0 %v8763
      %v8995 = vpop.f32.mrb[0].mxu0
      %v8996 = vadd.f32 0.0, %v8995
      %v8997 = vpop.f32.mrb[0].mxu0
      %v8998 = vpop.f32.mrb[0].mxu0
      %v8999 = vadd.f32 0.0, %v8998
      %v9000 = vpop.f32.mrb[0].mxu0
      %9001 = vmatprep.mubr.bf16.mxu0 0
      %9002 = vmatmul.mubr.bf16.gmra.mrb[0].mxu0 %v8766
      %v9003 = vpop.f32.mrb[0].mxu0
      %v9004 = vadd.f32 0.0, %v9003
      %v9005 = vpop.f32.mrb[0].mxu0
      %v9006 = vpop.f32.mrb[0].mxu0
      %v9007 = vadd.f32 0.0, %v9006
      %v9008 = vpop.f32.mrb[0].mxu0
      %9009 = vmatprep.mubr.bf16.mxu0 0
      %9010 = vmatmul.mubr.bf16.gmra.mrb[0].mxu0 %v8769
      %v9011 = vpop.f32.mrb[0].mxu0
      %v9012 = vadd.f32 0.0, %v9011
      %v9013 = vpop.f32.mrb[0].mxu0
      %v9014 = vpop.f32.mrb[0].mxu0
      %v9015 = vadd.f32 0.0, %v9014
      %v9016 = vpop.f32.mrb[0].mxu0
      %9017 = vmatprep.mubr.bf16.mxu0 0
      %9018 = vmatmul.mubr.bf16.gmra.mrb[0].mxu0 %v8772
      %v9019 = vpop.f32.mrb[0].mxu0
      %v9020 = vadd.f32 0.0, %v9019
      %v9021 = vpop.f32.mrb[0].mxu0
      %v9022 = vpop.f32.mrb[0].mxu0
      %v9023 = vadd.f32 0.0, %v9022
      %v9024 = vpop.f32.mrb[0].mxu0
      %9025 = vmatprep.mubr.bf16.mxu0 0
      %9026 = vmatmul.mubr.bf16.gmra.mrb[0].mxu0 %v8775
      %v9027 = vpop.f32.mrb[0].mxu0
      %v9028 = vadd.f32 0.0, %v9027
      %v9029 = vpop.f32.mrb[0].mxu0
      %v9030 = vpop.f32.mrb[0].mxu0
      %v9031 = vadd.f32 0.0, %v9030
      %v9032 = vpop.f32.mrb[0].mxu0
      %9033 = vmatprep.mubr.bf16.mxu0 0
      %9034 = vmatmul.mubr.bf16.gmra.mrb[0].mxu0 %v8778
      %v9035 = vpop.f32.mrb[0].mxu0
      %v9036 = vadd.f32 0.0, %v9035
      %v9037 = vpop.f32.mrb[0].mxu0
      %v9038 = vpop.f32.mrb[0].mxu0
      %v9039 = vadd.f32 0.0, %v9038
      %v9040 = vpop.f32.mrb[0].mxu0
      %9041 = vmatprep.mubr.bf16.mxu0 0
      %9042 = vmatmul.mubr.bf16.gmra.mrb[0].mxu0 %v8781
      %v9043 = vpop.f32.mrb[0].mxu0
      %v9044 = vadd.f32 0.0, %v9043
      %v9045 = vpop.f32.mrb[0].mxu0
      %v9046 = vpop.f32.mrb[0].mxu0
      %v9047 = vadd.f32 0.0, %v9046
      %v9048 = vpop.f32.mrb[0].mxu0
      %9049 = vmatprep.mubr.bf16.mxu0 0
      %9050 = vmatmul.mubr.bf16.gmra.mrb[0].mxu0 %v8784
      %v9051 = vpop.f32.mrb[0].mxu0
      %v9052 = vadd.f32 0.0, %v9051
      %v9053 = vpop.f32.mrb[0].mxu0
      %v9054 = vpop.f32.mrb[0].mxu0
      %v9055 = vadd.f32 0.0, %v9054
      %v9056 = vpop.f32.mrb[0].mxu0
      %9057 = vmatprep.mubr.bf16.mxu0 0
      %9058 = vmatmul.mubr.bf16.gmra.mrb[0].mxu0 %v8787
      %v9059 = vpop.f32.mrb[0].mxu0
      %v9060 = vadd.f32 0.0, %v9059
      %v9061 = vpop.f32.mrb[0].mxu0
      %v9062 = vpop.f32.mrb[0].mxu0
      %v9063 = vadd.f32 0.0, %v9062
      %v9064 = vpop.f32.mrb[0].mxu0
      %9065 = vmatprep.mubr.bf16.mxu0 0
      %9066 = vmatmul.mubr.bf16.gmra.mrb[0].mxu0 %v8790
      %v9067 = vpop.f32.mrb[0].mxu0
      %v9068 = vadd.f32 0.0, %v9067
      %v9069 = vpop.f32.mrb[0].mxu0
      %v9070 = vpop.f32.mrb[0].mxu0
      %v9071 = vadd.f32 0.0, %v9070
      %v9072 = vpop.f32.mrb[0].mxu0
      %9073 = vmatprep.mubr.bf16.mxu0 0
      %9074 = vmatmul.mubr.bf16.gmra.mrb[0].mxu0 %v8793
      %v9075 = vpop.f32.mrb[0].mxu0
      %v9076 = vadd.f32 0.0, %v9075
      %v9077 = vpop.f32.mrb[0].mxu0
      %v9078 = vpop.f32.mrb[0].mxu0
      %v9079 = vadd.f32 0.0, %v9078
      %v9080 = vpop.f32.mrb[0].mxu0
      %9081 = vmatprep.mubr.bf16.mxu0 0
      %9082 = vmatmul.mubr.bf16.gmra.mrb[0].mxu0 %v8796
      %v9083 = vpop.f32.mrb[0].mxu0
      %v9084 = vadd.f32 0.0, %v9083
      %v9085 = vpop.f32.mrb[0].mxu0
      %v9086 = vpop.f32.mrb[0].mxu0
      %v9087 = vadd.f32 0.0, %v9086
      %v9088 = vpop.f32.mrb[0].mxu0
      %9089 = vdwg.mxu0
      %v9090 = vadd.f32 %v6126, %v8836
      %v9091 = vadd.f32 %v6129, %v8839
      %v9092 = vadd.f32 %v6134, %v8844
      %v9093 = vadd.f32 %v6137, %v8847
      %v9094 = vadd.f32 %v6142, %v8852
      %v9095 = vadd.f32 %v6145, %v8855
      %v9096 = vadd.f32 %v6150, %v8860
      %v9097 = vadd.f32 %v6153, %v8863
      %v9098 = vadd.f32 %v6158, %v8868
      %v9099 = vadd.f32 %v6161, %v8871
      %v9100 = vadd.f32 %v6166, %v8876
      %v9101 = vadd.f32 %v6169, %v8879
      %v9102 = vadd.f32 %v6174, %v8884
      %v9103 = vadd.f32 %v6177, %v8887
      %v9104 = vadd.f32 %v6182, %v8892
      %v9105 = vadd.f32 %v6185, %v8895
      %v9106 = vadd.f32 %v6190, %v8900
      %v9107 = vadd.f32 %v6193, %v8903
      %v9108 = vadd.f32 %v6198, %v8908
      %v9109 = vadd.f32 %v6201, %v8911
      %v9110 = vadd.f32 %v6206, %v8916
      %v9111 = vadd.f32 %v6209, %v8919
      %v9112 = vadd.f32 %v6214, %v8924
      %v9113 = vadd.f32 %v6217, %v8927
      %v9114 = vadd.f32 %v6222, %v8932
      %v9115 = vadd.f32 %v6225, %v8935
      %v9116 = vadd.f32 %v6230, %v8940
      %v9117 = vadd.f32 %v6233, %v8943
      %v9118 = vadd.f32 %v6238, %v8948
      %v9119 = vadd.f32 %v6241, %v8951
      %v9120 = vadd.f32 %v6246, %v8956
      %v9121 = vadd.f32 %v6249, %v8959
      %v9122 = vadd.f32 %v6254, %v8964
      %v9123 = vadd.f32 %v6257, %v8967
      %v9124 = vadd.f32 %v6262, %v8972
      %v9125 = vadd.f32 %v6265, %v8975
      %v9126 = vadd.f32 %v6270, %v8980
      %v9127 = vadd.f32 %v6273, %v8983
      %v9128 = vadd.f32 %v6278, %v8988
      %v9129 = vadd.f32 %v6281, %v8991
      %v9130 = vadd.f32 %v6286, %v8996
      %v9131 = vadd.f32 %v6289, %v8999
      %v9132 = vadd.f32 %v6294, %v9004
      %v9133 = vadd.f32 %v6297, %v9007
      %v9134 = vadd.f32 %v6302, %v9012
      %v9135 = vadd.f32 %v6305, %v9015
      %v9136 = vadd.f32 %v6310, %v9020
      %v9137 = vadd.f32 %v6313, %v9023
      %v9138 = vadd.f32 %v6318, %v9028
      %v9139 = vadd.f32 %v6321, %v9031
      %v9140 = vadd.f32 %v6326, %v9036
      %v9141 = vadd.f32 %v6329, %v9039
      %v9142 = vadd.f32 %v6334, %v9044
      %v9143 = vadd.f32 %v6337, %v9047
      %v9144 = vadd.f32 %v6342, %v9052
      %v9145 = vadd.f32 %v6345, %v9055
      %v9146 = vadd.f32 %v6350, %v9060
      %v9147 = vadd.f32 %v6353, %v9063
      %v9148 = vadd.f32 %v6358, %v9068
      %v9149 = vadd.f32 %v6361, %v9071
      %v9150 = vadd.f32 %v6366, %v9076
      %v9151 = vadd.f32 %v6369, %v9079
      %v9152 = vadd.f32 %v6374, %v9084
      %v9153 = vadd.f32 %v6377, %v9087
      %9154 = vrot.lane.b32.xlu0 %v894, 104
      %v9155 = vpop.permute.xlu0 %9154
      %9156 = vrot.lane.b32.xlu0 %v895, 104
      %v9157 = vpop.permute.xlu0 %9156
      %9158 = vrot.lane.b32.xlu0 %v896, 104
      %v9159 = vpop.permute.xlu0 %9158
      %9160 = vrot.lane.b32.xlu0 %v897, 104
      %v9161 = vpop.permute.xlu0 %9160
      %9162 = vrot.lane.b32.xlu0 %v894, 72
      %v9163 = vpop.permute.xlu0 %9162
      %9164 = vrot.lane.b32.xlu0 %v895, 72
      %v9165 = vpop.permute.xlu0 %9164
      %9166 = vrot.lane.b32.xlu0 %v896, 72
      %v9167 = vpop.permute.xlu0 %9166
      %9168 = vrot.lane.b32.xlu0 %v897, 72
      %v9169 = vpop.permute.xlu0 %9168
      %v9171 = vsel %vm1002, %v9155, 0
      %v9174 = vsel %vm1002, %v9157, 0
      %v9177 = vsel %vm1002, %v9159, 0
      %v9180 = vsel %vm1002, %v9161, 0
      %v9183 = vsel %vm1002, %v9163, 0
      %v9186 = vsel %vm1002, %v9165, 0
      %v9189 = vsel %vm1002, %v9167, 0
      %v9192 = vsel %vm1002, %v9169, 0
      %9194 = vmatprep.subr.bf16.mxu0 0
      %9195 = vmatpush1.bf16.xpose.msra.mxu0 %v9183
      %9196 = vmatprep.subr.bf16.mxu0 0
      %9197 = vmatpush1.bf16.xpose.msra.mxu0 %v9186
      %9198 = vmatprep.subr.bf16.mxu0 0
      %9199 = vmatpush1.bf16.xpose.msra.mxu0 %v9189
      %9200 = vmatprep.subr.bf16.mxu0 0
      %9201 = vmatpush1.bf16.xpose.msra.mxu0 %v9192
      %9202 = vmatprep.subr.bf16.mxu0 0
      %9203 = vmatpush1.bf16.xpose.msra.mxu0 0
      %9204 = vmatprep.subr.bf16.mxu0 0
      %9205 = vmatpush1.bf16.xpose.msra.mxu0 0
      %9206 = vmatprep.subr.bf16.mxu0 0
      %9207 = vmatpush1.bf16.xpose.msra.mxu0 0
      %9208 = vmatprep.subr.bf16.mxu0 0
      %9209 = vmatpush1.bf16.xpose.msra.mxu0 0
      %9210 = vmatprep.subr.bf16.mxu0 0
      %9211 = vmatpush1.bf16.xpose.msra.mxu0 0
      %9212 = vmatprep.subr.bf16.mxu0 0
      %9213 = vmatpush1.bf16.xpose.msra.mxu0 0
      %9214 = vmatprep.subr.bf16.mxu0 0
      %9215 = vmatpush1.bf16.xpose.msra.mxu0 0
      %9216 = vmatprep.subr.bf16.mxu0 0
      %9217 = vmatpush1.bf16.xpose.msra.mxu0 0
      %9218 = vmatprep.subr.bf16.mxu0 0
      %9219 = vmatpush1.bf16.xpose.msra.mxu0 0
      %9220 = vmatprep.subr.bf16.mxu0 0
      %9221 = vmatpush1.bf16.xpose.msra.mxu0 0
      %9222 = vmatprep.subr.bf16.mxu0 0
      %9223 = vmatpush1.bf16.xpose.msra.mxu0 0
      %9224 = vmatprep.subr.bf16.mxu0 0
      %9225 = vmatpush1.bf16.xpose.msra.mxu0 0
      %9226 = vmatprep.mubr.bf16.mxu0 0
      %9227 = vmatmul.mubr.bf16.gmra.mrb[0].mxu0 %v9171
      %v9228 = vpop.f32.mrb[0].mxu0
      %v9229 = vadd.f32 %v982, %v9228
      %v9230 = vpop.f32.mrb[0].mxu0
      %v9231 = vpop.f32.mrb[0].mxu0
      %v9232 = vadd.f32 %v983, %v9231
      %v9233 = vpop.f32.mrb[0].mxu0
      %9234 = vmatprep.mubr.bf16.mxu0 0
      %9235 = vmatmul.mubr.bf16.gmra.mrb[0].mxu0 %v9174
      %v9236 = vpop.f32.mrb[0].mxu0
      %v9237 = vadd.f32 %v984, %v9236
      %v9238 = vpop.f32.mrb[0].mxu0
      %v9239 = vpop.f32.mrb[0].mxu0
      %v9240 = vadd.f32 %v985, %v9239
      %v9241 = vpop.f32.mrb[0].mxu0
      %9242 = vmatprep.mubr.bf16.mxu0 0
      %9243 = vmatmul.mubr.bf16.gmra.mrb[0].mxu0 %v9177
      %v9244 = vpop.f32.mrb[0].mxu0
      %v9245 = vadd.f32 %v986, %v9244
      %v9246 = vpop.f32.mrb[0].mxu0
      %v9247 = vpop.f32.mrb[0].mxu0
      %v9248 = vadd.f32 %v987, %v9247
      %v9249 = vpop.f32.mrb[0].mxu0
      %9250 = vmatprep.mubr.bf16.mxu0 0
      %9251 = vmatmul.mubr.bf16.gmra.mrb[0].mxu0 %v9180
      %v9252 = vpop.f32.mrb[0].mxu0
      %v9253 = vadd.f32 %v988, %v9252
      %v9254 = vpop.f32.mrb[0].mxu0
      %v9255 = vpop.f32.mrb[0].mxu0
      %v9256 = vadd.f32 %v989, %v9255
      %v9257 = vpop.f32.mrb[0].mxu0
      %9258 = vdwg.mxu0
      %9259 = vrot.lane.b32.xlu0 %v898, 104
      %v9260 = vpop.permute.xlu0 %9259
      %9261 = vrot.lane.b32.xlu0 %v899, 104
      %v9262 = vpop.permute.xlu0 %9261
      %9263 = vrot.lane.b32.xlu0 %v900, 104
      %v9264 = vpop.permute.xlu0 %9263
      %9265 = vrot.lane.b32.xlu0 %v901, 104
      %v9266 = vpop.permute.xlu0 %9265
      %9267 = vrot.lane.b32.xlu0 %v898, 72
      %v9268 = vpop.permute.xlu0 %9267
      %9269 = vrot.lane.b32.xlu0 %v899, 72
      %v9270 = vpop.permute.xlu0 %9269
      %9271 = vrot.lane.b32.xlu0 %v900, 72
      %v9272 = vpop.permute.xlu0 %9271
      %9273 = vrot.lane.b32.xlu0 %v901, 72
      %v9274 = vpop.permute.xlu0 %9273
      %v9276 = vsel %vm1002, %v9260, 0
      %v9279 = vsel %vm1002, %v9262, 0
      %v9282 = vsel %vm1002, %v9264, 0
      %v9285 = vsel %vm1002, %v9266, 0
      %v9288 = vsel %vm1002, %v9268, 0
      %v9291 = vsel %vm1002, %v9270, 0
      %v9294 = vsel %vm1002, %v9272, 0
      %v9297 = vsel %vm1002, %v9274, 0
      %9299 = vmatprep.subr.bf16.mxu0 0
      %9300 = vmatpush1.bf16.xpose.msra.mxu0 %v9288
      %9301 = vmatprep.subr.bf16.mxu0 0
      %9302 = vmatpush1.bf16.xpose.msra.mxu0 %v9291
      %9303 = vmatprep.subr.bf16.mxu0 0
      %9304 = vmatpush1.bf16.xpose.msra.mxu0 %v9294
      %9305 = vmatprep.subr.bf16.mxu0 0
      %9306 = vmatpush1.bf16.xpose.msra.mxu0 %v9297
      %9307 = vmatprep.subr.bf16.mxu0 0
      %9308 = vmatpush1.bf16.xpose.msra.mxu0 0
      %9309 = vmatprep.subr.bf16.mxu0 0
      %9310 = vmatpush1.bf16.xpose.msra.mxu0 0
      %9311 = vmatprep.subr.bf16.mxu0 0
      %9312 = vmatpush1.bf16.xpose.msra.mxu0 0
      %9313 = vmatprep.subr.bf16.mxu0 0
      %9314 = vmatpush1.bf16.xpose.msra.mxu0 0
      %9315 = vmatprep.subr.bf16.mxu0 0
      %9316 = vmatpush1.bf16.xpose.msra.mxu0 0
      %9317 = vmatprep.subr.bf16.mxu0 0
      %9318 = vmatpush1.bf16.xpose.msra.mxu0 0
      %9319 = vmatprep.subr.bf16.mxu0 0
      %9320 = vmatpush1.bf16.xpose.msra.mxu0 0
      %9321 = vmatprep.subr.bf16.mxu0 0
      %9322 = vmatpush1.bf16.xpose.msra.mxu0 0
      %9323 = vmatprep.subr.bf16.mxu0 0
      %9324 = vmatpush1.bf16.xpose.msra.mxu0 0
      %9325 = vmatprep.subr.bf16.mxu0 0
      %9326 = vmatpush1.bf16.xpose.msra.mxu0 0
      %9327 = vmatprep.subr.bf16.mxu0 0
      %9328 = vmatpush1.bf16.xpose.msra.mxu0 0
      %9329 = vmatprep.subr.bf16.mxu0 0
      %9330 = vmatpush1.bf16.xpose.msra.mxu0 0
      %9331 = vmatprep.mubr.bf16.mxu0 0
      %9332 = vmatmul.mubr.bf16.gmra.mrb[0].mxu0 %v9276
      %v9333 = vpop.f32.mrb[0].mxu0
      %v9334 = vadd.f32 %v982, %v9333
      %v9335 = vpop.f32.mrb[0].mxu0
      %v9336 = vpop.f32.mrb[0].mxu0
      %v9337 = vadd.f32 %v983, %v9336
      %v9338 = vpop.f32.mrb[0].mxu0
      %9339 = vmatprep.mubr.bf16.mxu0 0
      %9340 = vmatmul.mubr.bf16.gmra.mrb[0].mxu0 %v9279
      %v9341 = vpop.f32.mrb[0].mxu0
      %v9342 = vadd.f32 %v984, %v9341
      %v9343 = vpop.f32.mrb[0].mxu0
      %v9344 = vpop.f32.mrb[0].mxu0
      %v9345 = vadd.f32 %v985, %v9344
      %v9346 = vpop.f32.mrb[0].mxu0
      %9347 = vmatprep.mubr.bf16.mxu0 0
      %9348 = vmatmul.mubr.bf16.gmra.mrb[0].mxu0 %v9282
      %v9349 = vpop.f32.mrb[0].mxu0
      %v9350 = vadd.f32 %v986, %v9349
      %v9351 = vpop.f32.mrb[0].mxu0
      %v9352 = vpop.f32.mrb[0].mxu0
      %v9353 = vadd.f32 %v987, %v9352
      %v9354 = vpop.f32.mrb[0].mxu0
      %9355 = vmatprep.mubr.bf16.mxu0 0
      %9356 = vmatmul.mubr.bf16.gmra.mrb[0].mxu0 %v9285
      %v9357 = vpop.f32.mrb[0].mxu0
      %v9358 = vadd.f32 %v988, %v9357
      %v9359 = vpop.f32.mrb[0].mxu0
      %v9360 = vpop.f32.mrb[0].mxu0
      %v9361 = vadd.f32 %v989, %v9360
      %v9362 = vpop.f32.mrb[0].mxu0
      %9363 = vdwg.mxu0
      %9364 = vrot.lane.b32.xlu0 %v902, 104
      %v9365 = vpop.permute.xlu0 %9364
      %9366 = vrot.lane.b32.xlu0 %v903, 104
      %v9367 = vpop.permute.xlu0 %9366
      %9368 = vrot.lane.b32.xlu0 %v904, 104
      %v9369 = vpop.permute.xlu0 %9368
      %9370 = vrot.lane.b32.xlu0 %v905, 104
      %v9371 = vpop.permute.xlu0 %9370
      %9372 = vrot.lane.b32.xlu0 %v902, 72
      %v9373 = vpop.permute.xlu0 %9372
      %9374 = vrot.lane.b32.xlu0 %v903, 72
      %v9375 = vpop.permute.xlu0 %9374
      %9376 = vrot.lane.b32.xlu0 %v904, 72
      %v9377 = vpop.permute.xlu0 %9376
      %9378 = vrot.lane.b32.xlu0 %v905, 72
      %v9379 = vpop.permute.xlu0 %9378
      %v9381 = vsel %vm1002, %v9365, 0
      %v9384 = vsel %vm1002, %v9367, 0
      %v9387 = vsel %vm1002, %v9369, 0
      %v9390 = vsel %vm1002, %v9371, 0
      %v9393 = vsel %vm1002, %v9373, 0
      %v9396 = vsel %vm1002, %v9375, 0
      %v9399 = vsel %vm1002, %v9377, 0
      %v9402 = vsel %vm1002, %v9379, 0
      %9404 = vmatprep.subr.bf16.mxu0 0
      %9405 = vmatpush1.bf16.xpose.msra.mxu0 %v9393
      %9406 = vmatprep.subr.bf16.mxu0 0
      %9407 = vmatpush1.bf16.xpose.msra.mxu0 %v9396
      %9408 = vmatprep.subr.bf16.mxu0 0
      %9409 = vmatpush1.bf16.xpose.msra.mxu0 %v9399
      %9410 = vmatprep.subr.bf16.mxu0 0
      %9411 = vmatpush1.bf16.xpose.msra.mxu0 %v9402
      %9412 = vmatprep.subr.bf16.mxu0 0
      %9413 = vmatpush1.bf16.xpose.msra.mxu0 0
      %9414 = vmatprep.subr.bf16.mxu0 0
      %9415 = vmatpush1.bf16.xpose.msra.mxu0 0
      %9416 = vmatprep.subr.bf16.mxu0 0
      %9417 = vmatpush1.bf16.xpose.msra.mxu0 0
      %9418 = vmatprep.subr.bf16.mxu0 0
      %9419 = vmatpush1.bf16.xpose.msra.mxu0 0
      %9420 = vmatprep.subr.bf16.mxu0 0
      %9421 = vmatpush1.bf16.xpose.msra.mxu0 0
      %9422 = vmatprep.subr.bf16.mxu0 0
      %9423 = vmatpush1.bf16.xpose.msra.mxu0 0
      %9424 = vmatprep.subr.bf16.mxu0 0
      %9425 = vmatpush1.bf16.xpose.msra.mxu0 0
      %9426 = vmatprep.subr.bf16.mxu0 0
      %9427 = vmatpush1.bf16.xpose.msra.mxu0 0
      %9428 = vmatprep.subr.bf16.mxu0 0
      %9429 = vmatpush1.bf16.xpose.msra.mxu0 0
      %9430 = vmatprep.subr.bf16.mxu0 0
      %9431 = vmatpush1.bf16.xpose.msra.mxu0 0
      %9432 = vmatprep.subr.bf16.mxu0 0
      %9433 = vmatpush1.bf16.xpose.msra.mxu0 0
      %9434 = vmatprep.subr.bf16.mxu0 0
      %9435 = vmatpush1.bf16.xpose.msra.mxu0 0
      %9436 = vmatprep.mubr.bf16.mxu0 0
      %9437 = vmatmul.mubr.bf16.gmra.mrb[0].mxu0 %v9381
      %v9438 = vpop.f32.mrb[0].mxu0
      %v9439 = vadd.f32 %v982, %v9438
      %v9440 = vpop.f32.mrb[0].mxu0
      %v9441 = vpop.f32.mrb[0].mxu0
      %v9442 = vadd.f32 %v983, %v9441
      %v9443 = vpop.f32.mrb[0].mxu0
      %9444 = vmatprep.mubr.bf16.mxu0 0
      %9445 = vmatmul.mubr.bf16.gmra.mrb[0].mxu0 %v9384
      %v9446 = vpop.f32.mrb[0].mxu0
      %v9447 = vadd.f32 %v984, %v9446
      %v9448 = vpop.f32.mrb[0].mxu0
      %v9449 = vpop.f32.mrb[0].mxu0
      %v9450 = vadd.f32 %v985, %v9449
      %v9451 = vpop.f32.mrb[0].mxu0
      %9452 = vmatprep.mubr.bf16.mxu0 0
      %9453 = vmatmul.mubr.bf16.gmra.mrb[0].mxu0 %v9387
      %v9454 = vpop.f32.mrb[0].mxu0
      %v9455 = vadd.f32 %v986, %v9454
      %v9456 = vpop.f32.mrb[0].mxu0
      %v9457 = vpop.f32.mrb[0].mxu0
      %v9458 = vadd.f32 %v987, %v9457
      %v9459 = vpop.f32.mrb[0].mxu0
      %9460 = vmatprep.mubr.bf16.mxu0 0
      %9461 = vmatmul.mubr.bf16.gmra.mrb[0].mxu0 %v9390
      %v9462 = vpop.f32.mrb[0].mxu0
      %v9463 = vadd.f32 %v988, %v9462
      %v9464 = vpop.f32.mrb[0].mxu0
      %v9465 = vpop.f32.mrb[0].mxu0
      %v9466 = vadd.f32 %v989, %v9465
      %v9467 = vpop.f32.mrb[0].mxu0
      %9468 = vdwg.mxu0
      %9469 = vrot.lane.b32.xlu0 %v906, 104
      %v9470 = vpop.permute.xlu0 %9469
      %9471 = vrot.lane.b32.xlu0 %v907, 104
      %v9472 = vpop.permute.xlu0 %9471
      %9473 = vrot.lane.b32.xlu0 %v908, 104
      %v9474 = vpop.permute.xlu0 %9473
      %9475 = vrot.lane.b32.xlu0 %v909, 104
      %v9476 = vpop.permute.xlu0 %9475
      %9477 = vrot.lane.b32.xlu0 %v906, 72
      %v9478 = vpop.permute.xlu0 %9477
      %9479 = vrot.lane.b32.xlu0 %v907, 72
      %v9480 = vpop.permute.xlu0 %9479
      %9481 = vrot.lane.b32.xlu0 %v908, 72
      %v9482 = vpop.permute.xlu0 %9481
      %9483 = vrot.lane.b32.xlu0 %v909, 72
      %v9484 = vpop.permute.xlu0 %9483
      %v9486 = vsel %vm1002, %v9470, 0
      %v9489 = vsel %vm1002, %v9472, 0
      %v9492 = vsel %vm1002, %v9474, 0
      %v9495 = vsel %vm1002, %v9476, 0
      %v9498 = vsel %vm1002, %v9478, 0
      %v9501 = vsel %vm1002, %v9480, 0
      %v9504 = vsel %vm1002, %v9482, 0
      %v9507 = vsel %vm1002, %v9484, 0
      %9509 = vmatprep.subr.bf16.mxu0 0
      %9510 = vmatpush1.bf16.xpose.msra.mxu0 %v9498
      %9511 = vmatprep.subr.bf16.mxu0 0
      %9512 = vmatpush1.bf16.xpose.msra.mxu0 %v9501
      %9513 = vmatprep.subr.bf16.mxu0 0
      %9514 = vmatpush1.bf16.xpose.msra.mxu0 %v9504
      %9515 = vmatprep.subr.bf16.mxu0 0
      %9516 = vmatpush1.bf16.xpose.msra.mxu0 %v9507
      %9517 = vmatprep.subr.bf16.mxu0 0
      %9518 = vmatpush1.bf16.xpose.msra.mxu0 0
      %9519 = vmatprep.subr.bf16.mxu0 0
      %9520 = vmatpush1.bf16.xpose.msra.mxu0 0
      %9521 = vmatprep.subr.bf16.mxu0 0
      %9522 = vmatpush1.bf16.xpose.msra.mxu0 0
      %9523 = vmatprep.subr.bf16.mxu0 0
      %9524 = vmatpush1.bf16.xpose.msra.mxu0 0
      %9525 = vmatprep.subr.bf16.mxu0 0
      %9526 = vmatpush1.bf16.xpose.msra.mxu0 0
      %9527 = vmatprep.subr.bf16.mxu0 0
      %9528 = vmatpush1.bf16.xpose.msra.mxu0 0
      %9529 = vmatprep.subr.bf16.mxu0 0
      %9530 = vmatpush1.bf16.xpose.msra.mxu0 0
      %9531 = vmatprep.subr.bf16.mxu0 0
      %9532 = vmatpush1.bf16.xpose.msra.mxu0 0
      %9533 = vmatprep.subr.bf16.mxu0 0
      %9534 = vmatpush1.bf16.xpose.msra.mxu0 0
      %9535 = vmatprep.subr.bf16.mxu0 0
      %9536 = vmatpush1.bf16.xpose.msra.mxu0 0
      %9537 = vmatprep.subr.bf16.mxu0 0
      %9538 = vmatpush1.bf16.xpose.msra.mxu0 0
      %9539 = vmatprep.subr.bf16.mxu0 0
      %9540 = vmatpush1.bf16.xpose.msra.mxu0 0
      %9541 = vmatprep.mubr.bf16.mxu0 0
      %9542 = vmatmul.mubr.bf16.gmra.mrb[0].mxu0 %v9486
      %v9543 = vpop.f32.mrb[0].mxu0
      %v9544 = vadd.f32 %v982, %v9543
      %v9545 = vpop.f32.mrb[0].mxu0
      %v9546 = vpop.f32.mrb[0].mxu0
      %v9547 = vadd.f32 %v983, %v9546
      %v9548 = vpop.f32.mrb[0].mxu0
      %9549 = vmatprep.mubr.bf16.mxu0 0
      %9550 = vmatmul.mubr.bf16.gmra.mrb[0].mxu0 %v9489
      %v9551 = vpop.f32.mrb[0].mxu0
      %v9552 = vadd.f32 %v984, %v9551
      %v9553 = vpop.f32.mrb[0].mxu0
      %v9554 = vpop.f32.mrb[0].mxu0
      %v9555 = vadd.f32 %v985, %v9554
      %v9556 = vpop.f32.mrb[0].mxu0
      %9557 = vmatprep.mubr.bf16.mxu0 0
      %9558 = vmatmul.mubr.bf16.gmra.mrb[0].mxu0 %v9492
      %v9559 = vpop.f32.mrb[0].mxu0
      %v9560 = vadd.f32 %v986, %v9559
      %v9561 = vpop.f32.mrb[0].mxu0
      %v9562 = vpop.f32.mrb[0].mxu0
      %v9563 = vadd.f32 %v987, %v9562
      %v9564 = vpop.f32.mrb[0].mxu0
      %9565 = vmatprep.mubr.bf16.mxu0 0
      %9566 = vmatmul.mubr.bf16.gmra.mrb[0].mxu0 %v9495
      %v9567 = vpop.f32.mrb[0].mxu0
      %v9568 = vadd.f32 %v988, %v9567
      %v9569 = vpop.f32.mrb[0].mxu0
      %v9570 = vpop.f32.mrb[0].mxu0
      %v9571 = vadd.f32 %v989, %v9570
      %v9572 = vpop.f32.mrb[0].mxu0
      %9573 = vdwg.mxu0
      %9574 = vrot.lane.b32.xlu0 %v910, 104
      %v9575 = vpop.permute.xlu0 %9574
      %9576 = vrot.lane.b32.xlu0 %v911, 104
      %v9577 = vpop.permute.xlu0 %9576
      %9578 = vrot.lane.b32.xlu0 %v912, 104
      %v9579 = vpop.permute.xlu0 %9578
      %9580 = vrot.lane.b32.xlu0 %v913, 104
      %v9581 = vpop.permute.xlu0 %9580
      %9582 = vrot.lane.b32.xlu0 %v910, 72
      %v9583 = vpop.permute.xlu0 %9582
      %9584 = vrot.lane.b32.xlu0 %v911, 72
      %v9585 = vpop.permute.xlu0 %9584
      %9586 = vrot.lane.b32.xlu0 %v912, 72
      %v9587 = vpop.permute.xlu0 %9586
      %9588 = vrot.lane.b32.xlu0 %v913, 72
      %v9589 = vpop.permute.xlu0 %9588
      %v9591 = vsel %vm1002, %v9575, 0
      %v9594 = vsel %vm1002, %v9577, 0
      %v9597 = vsel %vm1002, %v9579, 0
      %v9600 = vsel %vm1002, %v9581, 0
      %v9603 = vsel %vm1002, %v9583, 0
      %v9606 = vsel %vm1002, %v9585, 0
      %v9609 = vsel %vm1002, %v9587, 0
      %v9612 = vsel %vm1002, %v9589, 0
      %9614 = vmatprep.subr.bf16.mxu0 0
      %9615 = vmatpush1.bf16.xpose.msra.mxu0 %v9603
      %9616 = vmatprep.subr.bf16.mxu0 0
      %9617 = vmatpush1.bf16.xpose.msra.mxu0 %v9606
      %9618 = vmatprep.subr.bf16.mxu0 0
      %9619 = vmatpush1.bf16.xpose.msra.mxu0 %v9609
      %9620 = vmatprep.subr.bf16.mxu0 0
      %9621 = vmatpush1.bf16.xpose.msra.mxu0 %v9612
      %9622 = vmatprep.subr.bf16.mxu0 0
      %9623 = vmatpush1.bf16.xpose.msra.mxu0 0
      %9624 = vmatprep.subr.bf16.mxu0 0
      %9625 = vmatpush1.bf16.xpose.msra.mxu0 0
      %9626 = vmatprep.subr.bf16.mxu0 0
      %9627 = vmatpush1.bf16.xpose.msra.mxu0 0
      %9628 = vmatprep.subr.bf16.mxu0 0
      %9629 = vmatpush1.bf16.xpose.msra.mxu0 0
      %9630 = vmatprep.subr.bf16.mxu0 0
      %9631 = vmatpush1.bf16.xpose.msra.mxu0 0
      %9632 = vmatprep.subr.bf16.mxu0 0
      %9633 = vmatpush1.bf16.xpose.msra.mxu0 0
      %9634 = vmatprep.subr.bf16.mxu0 0
      %9635 = vmatpush1.bf16.xpose.msra.mxu0 0
      %9636 = vmatprep.subr.bf16.mxu0 0
      %9637 = vmatpush1.bf16.xpose.msra.mxu0 0
      %9638 = vmatprep.subr.bf16.mxu0 0
      %9639 = vmatpush1.bf16.xpose.msra.mxu0 0
      %9640 = vmatprep.subr.bf16.mxu0 0
      %9641 = vmatpush1.bf16.xpose.msra.mxu0 0
      %9642 = vmatprep.subr.bf16.mxu0 0
      %9643 = vmatpush1.bf16.xpose.msra.mxu0 0
      %9644 = vmatprep.subr.bf16.mxu0 0
      %9645 = vmatpush1.bf16.xpose.msra.mxu0 0
      %9646 = vmatprep.mubr.bf16.mxu0 0
      %9647 = vmatmul.mubr.bf16.gmra.mrb[0].mxu0 %v9591
      %v9648 = vpop.f32.mrb[0].mxu0
      %v9649 = vadd.f32 %v982, %v9648
      %v9650 = vpop.f32.mrb[0].mxu0
      %v9651 = vpop.f32.mrb[0].mxu0
      %v9652 = vadd.f32 %v983, %v9651
      %v9653 = vpop.f32.mrb[0].mxu0
      %9654 = vmatprep.mubr.bf16.mxu0 0
      %9655 = vmatmul.mubr.bf16.gmra.mrb[0].mxu0 %v9594
      %v9656 = vpop.f32.mrb[0].mxu0
      %v9657 = vadd.f32 %v984, %v9656
      %v9658 = vpop.f32.mrb[0].mxu0
      %v9659 = vpop.f32.mrb[0].mxu0
      %v9660 = vadd.f32 %v985, %v9659
      %v9661 = vpop.f32.mrb[0].mxu0
      %9662 = vmatprep.mubr.bf16.mxu0 0
      %9663 = vmatmul.mubr.bf16.gmra.mrb[0].mxu0 %v9597
      %v9664 = vpop.f32.mrb[0].mxu0
      %v9665 = vadd.f32 %v986, %v9664
      %v9666 = vpop.f32.mrb[0].mxu0
      %v9667 = vpop.f32.mrb[0].mxu0
      %v9668 = vadd.f32 %v987, %v9667
      %v9669 = vpop.f32.mrb[0].mxu0
      %9670 = vmatprep.mubr.bf16.mxu0 0
      %9671 = vmatmul.mubr.bf16.gmra.mrb[0].mxu0 %v9600
      %v9672 = vpop.f32.mrb[0].mxu0
      %v9673 = vadd.f32 %v988, %v9672
      %v9674 = vpop.f32.mrb[0].mxu0
      %v9675 = vpop.f32.mrb[0].mxu0
      %v9676 = vadd.f32 %v989, %v9675
      %v9677 = vpop.f32.mrb[0].mxu0
      %9678 = vdwg.mxu0
      %9679 = vrot.lane.b32.xlu0 %v914, 104
      %v9680 = vpop.permute.xlu0 %9679
      %9681 = vrot.lane.b32.xlu0 %v915, 104
      %v9682 = vpop.permute.xlu0 %9681
      %9683 = vrot.lane.b32.xlu0 %v916, 104
      %v9684 = vpop.permute.xlu0 %9683
      %9685 = vrot.lane.b32.xlu0 %v917, 104
      %v9686 = vpop.permute.xlu0 %9685
      %9687 = vrot.lane.b32.xlu0 %v914, 72
      %v9688 = vpop.permute.xlu0 %9687
      %9689 = vrot.lane.b32.xlu0 %v915, 72
      %v9690 = vpop.permute.xlu0 %9689
      %9691 = vrot.lane.b32.xlu0 %v916, 72
      %v9692 = vpop.permute.xlu0 %9691
      %9693 = vrot.lane.b32.xlu0 %v917, 72
      %v9694 = vpop.permute.xlu0 %9693
      %v9696 = vsel %vm1002, %v9680, 0
      %v9699 = vsel %vm1002, %v9682, 0
      %v9702 = vsel %vm1002, %v9684, 0
      %v9705 = vsel %vm1002, %v9686, 0
      %v9708 = vsel %vm1002, %v9688, 0
      %v9711 = vsel %vm1002, %v9690, 0
      %v9714 = vsel %vm1002, %v9692, 0
      %v9717 = vsel %vm1002, %v9694, 0
      %9719 = vmatprep.subr.bf16.mxu0 0
      %9720 = vmatpush1.bf16.xpose.msra.mxu0 %v9708
      %9721 = vmatprep.subr.bf16.mxu0 0
      %9722 = vmatpush1.bf16.xpose.msra.mxu0 %v9711
      %9723 = vmatprep.subr.bf16.mxu0 0
      %9724 = vmatpush1.bf16.xpose.msra.mxu0 %v9714
      %9725 = vmatprep.subr.bf16.mxu0 0
      %9726 = vmatpush1.bf16.xpose.msra.mxu0 %v9717
      %9727 = vmatprep.subr.bf16.mxu0 0
      %9728 = vmatpush1.bf16.xpose.msra.mxu0 0
      %9729 = vmatprep.subr.bf16.mxu0 0
      %9730 = vmatpush1.bf16.xpose.msra.mxu0 0
      %9731 = vmatprep.subr.bf16.mxu0 0
      %9732 = vmatpush1.bf16.xpose.msra.mxu0 0
      %9733 = vmatprep.subr.bf16.mxu0 0
      %9734 = vmatpush1.bf16.xpose.msra.mxu0 0
      %9735 = vmatprep.subr.bf16.mxu0 0
      %9736 = vmatpush1.bf16.xpose.msra.mxu0 0
      %9737 = vmatprep.subr.bf16.mxu0 0
      %9738 = vmatpush1.bf16.xpose.msra.mxu0 0
      %9739 = vmatprep.subr.bf16.mxu0 0
      %9740 = vmatpush1.bf16.xpose.msra.mxu0 0
      %9741 = vmatprep.subr.bf16.mxu0 0
      %9742 = vmatpush1.bf16.xpose.msra.mxu0 0
      %9743 = vmatprep.subr.bf16.mxu0 0
      %9744 = vmatpush1.bf16.xpose.msra.mxu0 0
      %9745 = vmatprep.subr.bf16.mxu0 0
      %9746 = vmatpush1.bf16.xpose.msra.mxu0 0
      %9747 = vmatprep.subr.bf16.mxu0 0
      %9748 = vmatpush1.bf16.xpose.msra.mxu0 0
      %9749 = vmatprep.subr.bf16.mxu0 0
      %9750 = vmatpush1.bf16.xpose.msra.mxu0 0
      %9751 = vmatprep.mubr.bf16.mxu0 0
      %9752 = vmatmul.mubr.bf16.gmra.mrb[0].mxu0 %v9696
      %v9753 = vpop.f32.mrb[0].mxu0
      %v9754 = vadd.f32 %v982, %v9753
      %v9755 = vpop.f32.mrb[0].mxu0
      %v9756 = vpop.f32.mrb[0].mxu0
      %v9757 = vadd.f32 %v983, %v9756
      %v9758 = vpop.f32.mrb[0].mxu0
      %9759 = vmatprep.mubr.bf16.mxu0 0
      %9760 = vmatmul.mubr.bf16.gmra.mrb[0].mxu0 %v9699
      %v9761 = vpop.f32.mrb[0].mxu0
      %v9762 = vadd.f32 %v984, %v9761
      %v9763 = vpop.f32.mrb[0].mxu0
      %v9764 = vpop.f32.mrb[0].mxu0
      %v9765 = vadd.f32 %v985, %v9764
      %v9766 = vpop.f32.mrb[0].mxu0
      %9767 = vmatprep.mubr.bf16.mxu0 0
      %9768 = vmatmul.mubr.bf16.gmra.mrb[0].mxu0 %v9702
      %v9769 = vpop.f32.mrb[0].mxu0
      %v9770 = vadd.f32 %v986, %v9769
      %v9771 = vpop.f32.mrb[0].mxu0
      %v9772 = vpop.f32.mrb[0].mxu0
      %v9773 = vadd.f32 %v987, %v9772
      %v9774 = vpop.f32.mrb[0].mxu0
      %9775 = vmatprep.mubr.bf16.mxu0 0
      %9776 = vmatmul.mubr.bf16.gmra.mrb[0].mxu0 %v9705
      %v9777 = vpop.f32.mrb[0].mxu0
      %v9778 = vadd.f32 %v988, %v9777
      %v9779 = vpop.f32.mrb[0].mxu0
      %v9780 = vpop.f32.mrb[0].mxu0
      %v9781 = vadd.f32 %v989, %v9780
      %v9782 = vpop.f32.mrb[0].mxu0
      %9783 = vdwg.mxu0
      %9784 = vrot.lane.b32.xlu0 %v918, 104
      %v9785 = vpop.permute.xlu0 %9784
      %9786 = vrot.lane.b32.xlu0 %v919, 104
      %v9787 = vpop.permute.xlu0 %9786
      %9788 = vrot.lane.b32.xlu0 %v920, 104
      %v9789 = vpop.permute.xlu0 %9788
      %9790 = vrot.lane.b32.xlu0 %v921, 104
      %v9791 = vpop.permute.xlu0 %9790
      %9792 = vrot.lane.b32.xlu0 %v918, 72
      %v9793 = vpop.permute.xlu0 %9792
      %9794 = vrot.lane.b32.xlu0 %v919, 72
      %v9795 = vpop.permute.xlu0 %9794
      %9796 = vrot.lane.b32.xlu0 %v920, 72
      %v9797 = vpop.permute.xlu0 %9796
      %9798 = vrot.lane.b32.xlu0 %v921, 72
      %v9799 = vpop.permute.xlu0 %9798
      %v9801 = vsel %vm1002, %v9785, 0
      %v9804 = vsel %vm1002, %v9787, 0
      %v9807 = vsel %vm1002, %v9789, 0
      %v9810 = vsel %vm1002, %v9791, 0
      %v9813 = vsel %vm1002, %v9793, 0
      %v9816 = vsel %vm1002, %v9795, 0
      %v9819 = vsel %vm1002, %v9797, 0
      %v9822 = vsel %vm1002, %v9799, 0
      %9824 = vmatprep.subr.bf16.mxu0 0
      %9825 = vmatpush1.bf16.xpose.msra.mxu0 %v9813
      %9826 = vmatprep.subr.bf16.mxu0 0
      %9827 = vmatpush1.bf16.xpose.msra.mxu0 %v9816
      %9828 = vmatprep.subr.bf16.mxu0 0
      %9829 = vmatpush1.bf16.xpose.msra.mxu0 %v9819
      %9830 = vmatprep.subr.bf16.mxu0 0
      %9831 = vmatpush1.bf16.xpose.msra.mxu0 %v9822
      %9832 = vmatprep.subr.bf16.mxu0 0
      %9833 = vmatpush1.bf16.xpose.msra.mxu0 0
      %9834 = vmatprep.subr.bf16.mxu0 0
      %9835 = vmatpush1.bf16.xpose.msra.mxu0 0
      %9836 = vmatprep.subr.bf16.mxu0 0
      %9837 = vmatpush1.bf16.xpose.msra.mxu0 0
      %9838 = vmatprep.subr.bf16.mxu0 0
      %9839 = vmatpush1.bf16.xpose.msra.mxu0 0
      %9840 = vmatprep.subr.bf16.mxu0 0
      %9841 = vmatpush1.bf16.xpose.msra.mxu0 0
      %9842 = vmatprep.subr.bf16.mxu0 0
      %9843 = vmatpush1.bf16.xpose.msra.mxu0 0
      %9844 = vmatprep.subr.bf16.mxu0 0
      %9845 = vmatpush1.bf16.xpose.msra.mxu0 0
      %9846 = vmatprep.subr.bf16.mxu0 0
      %9847 = vmatpush1.bf16.xpose.msra.mxu0 0
      %9848 = vmatprep.subr.bf16.mxu0 0
      %9849 = vmatpush1.bf16.xpose.msra.mxu0 0
      %9850 = vmatprep.subr.bf16.mxu0 0
      %9851 = vmatpush1.bf16.xpose.msra.mxu0 0
      %9852 = vmatprep.subr.bf16.mxu0 0
      %9853 = vmatpush1.bf16.xpose.msra.mxu0 0
      %9854 = vmatprep.subr.bf16.mxu0 0
      %9855 = vmatpush1.bf16.xpose.msra.mxu0 0
      %9856 = vmatprep.mubr.bf16.mxu0 0
      %9857 = vmatmul.mubr.bf16.gmra.mrb[0].mxu0 %v9801
      %v9858 = vpop.f32.mrb[0].mxu0
      %v9859 = vadd.f32 %v982, %v9858
      %v9860 = vpop.f32.mrb[0].mxu0
      %v9861 = vpop.f32.mrb[0].mxu0
      %v9862 = vadd.f32 %v983, %v9861
      %v9863 = vpop.f32.mrb[0].mxu0
      %9864 = vmatprep.mubr.bf16.mxu0 0
      %9865 = vmatmul.mubr.bf16.gmra.mrb[0].mxu0 %v9804
      %v9866 = vpop.f32.mrb[0].mxu0
      %v9867 = vadd.f32 %v984, %v9866
      %v9868 = vpop.f32.mrb[0].mxu0
      %v9869 = vpop.f32.mrb[0].mxu0
      %v9870 = vadd.f32 %v985, %v9869
      %v9871 = vpop.f32.mrb[0].mxu0
      %9872 = vmatprep.mubr.bf16.mxu0 0
      %9873 = vmatmul.mubr.bf16.gmra.mrb[0].mxu0 %v9807
      %v9874 = vpop.f32.mrb[0].mxu0
      %v9875 = vadd.f32 %v986, %v9874
      %v9876 = vpop.f32.mrb[0].mxu0
      %v9877 = vpop.f32.mrb[0].mxu0
      %v9878 = vadd.f32 %v987, %v9877
      %v9879 = vpop.f32.mrb[0].mxu0
      %9880 = vmatprep.mubr.bf16.mxu0 0
      %9881 = vmatmul.mubr.bf16.gmra.mrb[0].mxu0 %v9810
      %v9882 = vpop.f32.mrb[0].mxu0
      %v9883 = vadd.f32 %v988, %v9882
      %v9884 = vpop.f32.mrb[0].mxu0
      %v9885 = vpop.f32.mrb[0].mxu0
      %v9886 = vadd.f32 %v989, %v9885
      %v9887 = vpop.f32.mrb[0].mxu0
      %9888 = vdwg.mxu0
      %9889 = vrot.lane.b32.xlu0 %v922, 104
      %v9890 = vpop.permute.xlu0 %9889
      %9891 = vrot.lane.b32.xlu0 %v923, 104
      %v9892 = vpop.permute.xlu0 %9891
      %9893 = vrot.lane.b32.xlu0 %v924, 104
      %v9894 = vpop.permute.xlu0 %9893
      %9895 = vrot.lane.b32.xlu0 %v925, 104
      %v9896 = vpop.permute.xlu0 %9895
      %9897 = vrot.lane.b32.xlu0 %v922, 72
      %v9898 = vpop.permute.xlu0 %9897
      %9899 = vrot.lane.b32.xlu0 %v923, 72
      %v9900 = vpop.permute.xlu0 %9899
      %9901 = vrot.lane.b32.xlu0 %v924, 72
      %v9902 = vpop.permute.xlu0 %9901
      %9903 = vrot.lane.b32.xlu0 %v925, 72
      %v9904 = vpop.permute.xlu0 %9903
      %v9906 = vsel %vm1002, %v9890, 0
      %v9909 = vsel %vm1002, %v9892, 0
      %v9912 = vsel %vm1002, %v9894, 0
      %v9915 = vsel %vm1002, %v9896, 0
      %v9918 = vsel %vm1002, %v9898, 0
      %v9921 = vsel %vm1002, %v9900, 0
      %v9924 = vsel %vm1002, %v9902, 0
      %v9927 = vsel %vm1002, %v9904, 0
      %9929 = vmatprep.subr.bf16.mxu0 0
      %9930 = vmatpush1.bf16.xpose.msra.mxu0 %v9918
      %9931 = vmatprep.subr.bf16.mxu0 0
      %9932 = vmatpush1.bf16.xpose.msra.mxu0 %v9921
      %9933 = vmatprep.subr.bf16.mxu0 0
      %9934 = vmatpush1.bf16.xpose.msra.mxu0 %v9924
      %9935 = vmatprep.subr.bf16.mxu0 0
      %9936 = vmatpush1.bf16.xpose.msra.mxu0 %v9927
      %9937 = vmatprep.subr.bf16.mxu0 0
      %9938 = vmatpush1.bf16.xpose.msra.mxu0 0
      %9939 = vmatprep.subr.bf16.mxu0 0
      %9940 = vmatpush1.bf16.xpose.msra.mxu0 0
      %9941 = vmatprep.subr.bf16.mxu0 0
      %9942 = vmatpush1.bf16.xpose.msra.mxu0 0
      %9943 = vmatprep.subr.bf16.mxu0 0
      %9944 = vmatpush1.bf16.xpose.msra.mxu0 0
      %9945 = vmatprep.subr.bf16.mxu0 0
      %9946 = vmatpush1.bf16.xpose.msra.mxu0 0
      %9947 = vmatprep.subr.bf16.mxu0 0
      %9948 = vmatpush1.bf16.xpose.msra.mxu0 0
      %9949 = vmatprep.subr.bf16.mxu0 0
      %9950 = vmatpush1.bf16.xpose.msra.mxu0 0
      %9951 = vmatprep.subr.bf16.mxu0 0
      %9952 = vmatpush1.bf16.xpose.msra.mxu0 0
      %9953 = vmatprep.subr.bf16.mxu0 0
      %9954 = vmatpush1.bf16.xpose.msra.mxu0 0
      %9955 = vmatprep.subr.bf16.mxu0 0
      %9956 = vmatpush1.bf16.xpose.msra.mxu0 0
      %9957 = vmatprep.subr.bf16.mxu0 0
      %9958 = vmatpush1.bf16.xpose.msra.mxu0 0
      %9959 = vmatprep.subr.bf16.mxu0 0
      %9960 = vmatpush1.bf16.xpose.msra.mxu0 0
      %9961 = vmatprep.mubr.bf16.mxu0 0
      %9962 = vmatmul.mubr.bf16.gmra.mrb[0].mxu0 %v9906
      %v9963 = vpop.f32.mrb[0].mxu0
      %v9964 = vadd.f32 %v982, %v9963
      %v9965 = vpop.f32.mrb[0].mxu0
      %v9966 = vpop.f32.mrb[0].mxu0
      %v9967 = vadd.f32 %v983, %v9966
      %v9968 = vpop.f32.mrb[0].mxu0
      %9969 = vmatprep.mubr.bf16.mxu0 0
      %9970 = vmatmul.mubr.bf16.gmra.mrb[0].mxu0 %v9909
      %v9971 = vpop.f32.mrb[0].mxu0
      %v9972 = vadd.f32 %v984, %v9971
      %v9973 = vpop.f32.mrb[0].mxu0
      %v9974 = vpop.f32.mrb[0].mxu0
      %v9975 = vadd.f32 %v985, %v9974
      %v9976 = vpop.f32.mrb[0].mxu0
      %9977 = vmatprep.mubr.bf16.mxu0 0
      %9978 = vmatmul.mubr.bf16.gmra.mrb[0].mxu0 %v9912
      %v9979 = vpop.f32.mrb[0].mxu0
      %v9980 = vadd.f32 %v986, %v9979
      %v9981 = vpop.f32.mrb[0].mxu0
      %v9982 = vpop.f32.mrb[0].mxu0
      %v9983 = vadd.f32 %v987, %v9982
      %v9984 = vpop.f32.mrb[0].mxu0
      %9985 = vmatprep.mubr.bf16.mxu0 0
      %9986 = vmatmul.mubr.bf16.gmra.mrb[0].mxu0 %v9915
      %v9987 = vpop.f32.mrb[0].mxu0
      %v9988 = vadd.f32 %v988, %v9987
      %v9989 = vpop.f32.mrb[0].mxu0
      %v9990 = vpop.f32.mrb[0].mxu0
      %v9991 = vadd.f32 %v989, %v9990
      %v9992 = vpop.f32.mrb[0].mxu0
      %9993 = vdwg.mxu0
      %v9994 = vsel %vm1799, %v9229, -inf
      %9995 = vmax.xlane.f32.xlu0 %v9994
      %v9996 = vpop.xlane.xlu0 %9995
      %v9997 = vsel %vm1799, %v9232, -inf
      %9998 = vmax.xlane.f32.xlu0 %v9997
      %v9999 = vpop.xlane.xlu0 %9998
      %v10000 = vsel %vm1799, %v9237, -inf
      %10001 = vmax.xlane.f32.xlu0 %v10000
      %v10002 = vpop.xlane.xlu0 %10001
      %v10003 = vsel %vm1799, %v9240, -inf
      %10004 = vmax.xlane.f32.xlu0 %v10003
      %v10005 = vpop.xlane.xlu0 %10004
      %v10006 = vsel %vm1799, %v9245, -inf
      %10007 = vmax.xlane.f32.xlu0 %v10006
      %v10008 = vpop.xlane.xlu0 %10007
      %v10009 = vsel %vm1799, %v9248, -inf
      %10010 = vmax.xlane.f32.xlu0 %v10009
      %v10011 = vpop.xlane.xlu0 %10010
      %v10012 = vsel %vm1799, %v9253, -inf
      %10013 = vmax.xlane.f32.xlu0 %v10012
      %v10014 = vpop.xlane.xlu0 %10013
      %v10015 = vsel %vm1799, %v9256, -inf
      %10016 = vmax.xlane.f32.xlu0 %v10015
      %v10017 = vpop.xlane.xlu0 %10016
      %v10018 = vsel %vm1799, %v9334, -inf
      %10019 = vmax.xlane.f32.xlu0 %v10018
      %v10020 = vpop.xlane.xlu0 %10019
      %v10021 = vsel %vm1799, %v9337, -inf
      %10022 = vmax.xlane.f32.xlu0 %v10021
      %v10023 = vpop.xlane.xlu0 %10022
      %v10024 = vsel %vm1799, %v9342, -inf
      %10025 = vmax.xlane.f32.xlu0 %v10024
      %v10026 = vpop.xlane.xlu0 %10025
      %v10027 = vsel %vm1799, %v9345, -inf
      %10028 = vmax.xlane.f32.xlu0 %v10027
      %v10029 = vpop.xlane.xlu0 %10028
      %v10030 = vsel %vm1799, %v9350, -inf
      %10031 = vmax.xlane.f32.xlu0 %v10030
      %v10032 = vpop.xlane.xlu0 %10031
      %v10033 = vsel %vm1799, %v9353, -inf
      %10034 = vmax.xlane.f32.xlu0 %v10033
      %v10035 = vpop.xlane.xlu0 %10034
      %v10036 = vsel %vm1799, %v9358, -inf
      %10037 = vmax.xlane.f32.xlu0 %v10036
      %v10038 = vpop.xlane.xlu0 %10037
      %v10039 = vsel %vm1799, %v9361, -inf
      %10040 = vmax.xlane.f32.xlu0 %v10039
      %v10041 = vpop.xlane.xlu0 %10040
      %v10042 = vsel %vm1799, %v9439, -inf
      %10043 = vmax.xlane.f32.xlu0 %v10042
      %v10044 = vpop.xlane.xlu0 %10043
      %v10045 = vsel %vm1799, %v9442, -inf
      %10046 = vmax.xlane.f32.xlu0 %v10045
      %v10047 = vpop.xlane.xlu0 %10046
      %v10048 = vsel %vm1799, %v9447, -inf
      %10049 = vmax.xlane.f32.xlu0 %v10048
      %v10050 = vpop.xlane.xlu0 %10049
      %v10051 = vsel %vm1799, %v9450, -inf
      %10052 = vmax.xlane.f32.xlu0 %v10051
      %v10053 = vpop.xlane.xlu0 %10052
      %v10054 = vsel %vm1799, %v9455, -inf
      %10055 = vmax.xlane.f32.xlu0 %v10054
      %v10056 = vpop.xlane.xlu0 %10055
      %v10057 = vsel %vm1799, %v9458, -inf
      %10058 = vmax.xlane.f32.xlu0 %v10057
      %v10059 = vpop.xlane.xlu0 %10058
      %v10060 = vsel %vm1799, %v9463, -inf
      %10061 = vmax.xlane.f32.xlu0 %v10060
      %v10062 = vpop.xlane.xlu0 %10061
      %v10063 = vsel %vm1799, %v9466, -inf
      %10064 = vmax.xlane.f32.xlu0 %v10063
      %v10065 = vpop.xlane.xlu0 %10064
      %v10066 = vsel %vm1799, %v9544, -inf
      %10067 = vmax.xlane.f32.xlu0 %v10066
      %v10068 = vpop.xlane.xlu0 %10067
      %v10069 = vsel %vm1799, %v9547, -inf
      %10070 = vmax.xlane.f32.xlu0 %v10069
      %v10071 = vpop.xlane.xlu0 %10070
      %v10072 = vsel %vm1799, %v9552, -inf
      %10073 = vmax.xlane.f32.xlu0 %v10072
      %v10074 = vpop.xlane.xlu0 %10073
      %v10075 = vsel %vm1799, %v9555, -inf
      %10076 = vmax.xlane.f32.xlu0 %v10075
      %v10077 = vpop.xlane.xlu0 %10076
      %v10078 = vsel %vm1799, %v9560, -inf
      %10079 = vmax.xlane.f32.xlu0 %v10078
      %v10080 = vpop.xlane.xlu0 %10079
      %v10081 = vsel %vm1799, %v9563, -inf
      %10082 = vmax.xlane.f32.xlu0 %v10081
      %v10083 = vpop.xlane.xlu0 %10082
      %v10084 = vsel %vm1799, %v9568, -inf
      %10085 = vmax.xlane.f32.xlu0 %v10084
      %v10086 = vpop.xlane.xlu0 %10085
      %v10087 = vsel %vm1799, %v9571, -inf
      %10088 = vmax.xlane.f32.xlu0 %v10087
      %v10089 = vpop.xlane.xlu0 %10088
      %v10090 = vsel %vm1799, %v9649, -inf
      %10091 = vmax.xlane.f32.xlu0 %v10090
      %v10092 = vpop.xlane.xlu0 %10091
      %v10093 = vsel %vm1799, %v9652, -inf
      %10094 = vmax.xlane.f32.xlu0 %v10093
      %v10095 = vpop.xlane.xlu0 %10094
      %v10096 = vsel %vm1799, %v9657, -inf
      %10097 = vmax.xlane.f32.xlu0 %v10096
      %v10098 = vpop.xlane.xlu0 %10097
      %v10099 = vsel %vm1799, %v9660, -inf
      %10100 = vmax.xlane.f32.xlu0 %v10099
      %v10101 = vpop.xlane.xlu0 %10100
      %v10102 = vsel %vm1799, %v9665, -inf
      %10103 = vmax.xlane.f32.xlu0 %v10102
      %v10104 = vpop.xlane.xlu0 %10103
      %v10105 = vsel %vm1799, %v9668, -inf
      %10106 = vmax.xlane.f32.xlu0 %v10105
      %v10107 = vpop.xlane.xlu0 %10106
      %v10108 = vsel %vm1799, %v9673, -inf
      %10109 = vmax.xlane.f32.xlu0 %v10108
      %v10110 = vpop.xlane.xlu0 %10109
      %v10111 = vsel %vm1799, %v9676, -inf
      %10112 = vmax.xlane.f32.xlu0 %v10111
      %v10113 = vpop.xlane.xlu0 %10112
      %v10114 = vsel %vm1799, %v9754, -inf
      %10115 = vmax.xlane.f32.xlu0 %v10114
      %v10116 = vpop.xlane.xlu0 %10115
      %v10117 = vsel %vm1799, %v9757, -inf
      %10118 = vmax.xlane.f32.xlu0 %v10117
      %v10119 = vpop.xlane.xlu0 %10118
      %v10120 = vsel %vm1799, %v9762, -inf
      %10121 = vmax.xlane.f32.xlu0 %v10120
      %v10122 = vpop.xlane.xlu0 %10121
      %v10123 = vsel %vm1799, %v9765, -inf
      %10124 = vmax.xlane.f32.xlu0 %v10123
      %v10125 = vpop.xlane.xlu0 %10124
      %v10126 = vsel %vm1799, %v9770, -inf
      %10127 = vmax.xlane.f32.xlu0 %v10126
      %v10128 = vpop.xlane.xlu0 %10127
      %v10129 = vsel %vm1799, %v9773, -inf
      %10130 = vmax.xlane.f32.xlu0 %v10129
      %v10131 = vpop.xlane.xlu0 %10130
      %v10132 = vsel %vm1799, %v9778, -inf
      %10133 = vmax.xlane.f32.xlu0 %v10132
      %v10134 = vpop.xlane.xlu0 %10133
      %v10135 = vsel %vm1799, %v9781, -inf
      %10136 = vmax.xlane.f32.xlu0 %v10135
      %v10137 = vpop.xlane.xlu0 %10136
      %v10138 = vsel %vm1799, %v9859, -inf
      %10139 = vmax.xlane.f32.xlu0 %v10138
      %v10140 = vpop.xlane.xlu0 %10139
      %v10141 = vsel %vm1799, %v9862, -inf
      %10142 = vmax.xlane.f32.xlu0 %v10141
      %v10143 = vpop.xlane.xlu0 %10142
      %v10144 = vsel %vm1799, %v9867, -inf
      %10145 = vmax.xlane.f32.xlu0 %v10144
      %v10146 = vpop.xlane.xlu0 %10145
      %v10147 = vsel %vm1799, %v9870, -inf
      %10148 = vmax.xlane.f32.xlu0 %v10147
      %v10149 = vpop.xlane.xlu0 %10148
      %v10150 = vsel %vm1799, %v9875, -inf
      %10151 = vmax.xlane.f32.xlu0 %v10150
      %v10152 = vpop.xlane.xlu0 %10151
      %v10153 = vsel %vm1799, %v9878, -inf
      %10154 = vmax.xlane.f32.xlu0 %v10153
      %v10155 = vpop.xlane.xlu0 %10154
      %v10156 = vsel %vm1799, %v9883, -inf
      %10157 = vmax.xlane.f32.xlu0 %v10156
      %v10158 = vpop.xlane.xlu0 %10157
      %v10159 = vsel %vm1799, %v9886, -inf
      %10160 = vmax.xlane.f32.xlu0 %v10159
      %v10161 = vpop.xlane.xlu0 %10160
      %v10162 = vsel %vm1799, %v9964, -inf
      %10163 = vmax.xlane.f32.xlu0 %v10162
      %v10164 = vpop.xlane.xlu0 %10163
      %v10165 = vsel %vm1799, %v9967, -inf
      %10166 = vmax.xlane.f32.xlu0 %v10165
      %v10167 = vpop.xlane.xlu0 %10166
      %v10168 = vsel %vm1799, %v9972, -inf
      %10169 = vmax.xlane.f32.xlu0 %v10168
      %v10170 = vpop.xlane.xlu0 %10169
      %v10171 = vsel %vm1799, %v9975, -inf
      %10172 = vmax.xlane.f32.xlu0 %v10171
      %v10173 = vpop.xlane.xlu0 %10172
      %v10174 = vsel %vm1799, %v9980, -inf
      %10175 = vmax.xlane.f32.xlu0 %v10174
      %v10176 = vpop.xlane.xlu0 %10175
      %v10177 = vsel %vm1799, %v9983, -inf
      %10178 = vmax.xlane.f32.xlu0 %v10177
      %v10179 = vpop.xlane.xlu0 %10178
      %v10180 = vsel %vm1799, %v9988, -inf
      %10181 = vmax.xlane.f32.xlu0 %v10180
      %v10182 = vpop.xlane.xlu0 %10181
      %v10183 = vsel %vm1799, %v9991, -inf
      %10184 = vmax.xlane.f32.xlu0 %v10183
      %v10185 = vpop.xlane.xlu0 %10184
      %v10186 = vsub.f32 %v9229, %v9996
      %v10187 = vsub.f32 %v9232, %v9999
      %v10188 = vsub.f32 %v9237, %v10002
      %v10189 = vsub.f32 %v9240, %v10005
      %v10190 = vsub.f32 %v9245, %v10008
      %v10191 = vsub.f32 %v9248, %v10011
      %v10192 = vsub.f32 %v9253, %v10014
      %v10193 = vsub.f32 %v9256, %v10017
      %v10194 = vsub.f32 %v9334, %v10020
      %v10195 = vsub.f32 %v9337, %v10023
      %v10196 = vsub.f32 %v9342, %v10026
      %v10197 = vsub.f32 %v9345, %v10029
      %v10198 = vsub.f32 %v9350, %v10032
      %v10199 = vsub.f32 %v9353, %v10035
      %v10200 = vsub.f32 %v9358, %v10038
      %v10201 = vsub.f32 %v9361, %v10041
      %v10202 = vsub.f32 %v9439, %v10044
      %v10203 = vsub.f32 %v9442, %v10047
      %v10204 = vsub.f32 %v9447, %v10050
      %v10205 = vsub.f32 %v9450, %v10053
      %v10206 = vsub.f32 %v9455, %v10056
      %v10207 = vsub.f32 %v9458, %v10059
      %v10208 = vsub.f32 %v9463, %v10062
      %v10209 = vsub.f32 %v9466, %v10065
      %v10210 = vsub.f32 %v9544, %v10068
      %v10211 = vsub.f32 %v9547, %v10071
      %v10212 = vsub.f32 %v9552, %v10074
      %v10213 = vsub.f32 %v9555, %v10077
      %v10214 = vsub.f32 %v9560, %v10080
      %v10215 = vsub.f32 %v9563, %v10083
      %v10216 = vsub.f32 %v9568, %v10086
      %v10217 = vsub.f32 %v9571, %v10089
      %v10218 = vsub.f32 %v9649, %v10092
      %v10219 = vsub.f32 %v9652, %v10095
      %v10220 = vsub.f32 %v9657, %v10098
      %v10221 = vsub.f32 %v9660, %v10101
      %v10222 = vsub.f32 %v9665, %v10104
      %v10223 = vsub.f32 %v9668, %v10107
      %v10224 = vsub.f32 %v9673, %v10110
      %v10225 = vsub.f32 %v9676, %v10113
      %v10226 = vsub.f32 %v9754, %v10116
      %v10227 = vsub.f32 %v9757, %v10119
      %v10228 = vsub.f32 %v9762, %v10122
      %v10229 = vsub.f32 %v9765, %v10125
      %v10230 = vsub.f32 %v9770, %v10128
      %v10231 = vsub.f32 %v9773, %v10131
      %v10232 = vsub.f32 %v9778, %v10134
      %v10233 = vsub.f32 %v9781, %v10137
      %v10234 = vsub.f32 %v9859, %v10140
      %v10235 = vsub.f32 %v9862, %v10143
      %v10236 = vsub.f32 %v9867, %v10146
      %v10237 = vsub.f32 %v9870, %v10149
      %v10238 = vsub.f32 %v9875, %v10152
      %v10239 = vsub.f32 %v9878, %v10155
      %v10240 = vsub.f32 %v9883, %v10158
      %v10241 = vsub.f32 %v9886, %v10161
      %v10242 = vsub.f32 %v9964, %v10164
      %v10243 = vsub.f32 %v9967, %v10167
      %v10244 = vsub.f32 %v9972, %v10170
      %v10245 = vsub.f32 %v9975, %v10173
      %v10246 = vsub.f32 %v9980, %v10176
      %v10247 = vsub.f32 %v9983, %v10179
      %v10248 = vsub.f32 %v9988, %v10182
      %v10249 = vsub.f32 %v9991, %v10185
      %v10250 = vmul.f32 %v10186, 1.442695
      %v10251 = vpow.pop %v10250
      %v10252 = vmul.f32 %v10187, 1.442695
      %v10253 = vpow.pop %v10252
      %v10254 = vmul.f32 %v10188, 1.442695
      %v10255 = vpow.pop %v10254
      %v10256 = vmul.f32 %v10189, 1.442695
      %v10257 = vpow.pop %v10256
      %v10258 = vmul.f32 %v10190, 1.442695
      %v10259 = vpow.pop %v10258
      %v10260 = vmul.f32 %v10191, 1.442695
      %v10261 = vpow.pop %v10260
      %v10262 = vmul.f32 %v10192, 1.442695
      %v10263 = vpow.pop %v10262
      %v10264 = vmul.f32 %v10193, 1.442695
      %v10265 = vpow.pop %v10264
      %v10266 = vmul.f32 %v10194, 1.442695
      %v10267 = vpow.pop %v10266
      %v10268 = vmul.f32 %v10195, 1.442695
      %v10269 = vpow.pop %v10268
      %v10270 = vmul.f32 %v10196, 1.442695
      %v10271 = vpow.pop %v10270
      %v10272 = vmul.f32 %v10197, 1.442695
      %v10273 = vpow.pop %v10272
      %v10274 = vmul.f32 %v10198, 1.442695
      %v10275 = vpow.pop %v10274
      %v10276 = vmul.f32 %v10199, 1.442695
      %v10277 = vpow.pop %v10276
      %v10278 = vmul.f32 %v10200, 1.442695
      %v10279 = vpow.pop %v10278
      %v10280 = vmul.f32 %v10201, 1.442695
      %v10281 = vpow.pop %v10280
      %v10282 = vmul.f32 %v10202, 1.442695
      %v10283 = vpow.pop %v10282
      %v10284 = vmul.f32 %v10203, 1.442695
      %v10285 = vpow.pop %v10284
      %v10286 = vmul.f32 %v10204, 1.442695
      %v10287 = vpow.pop %v10286
      %v10288 = vmul.f32 %v10205, 1.442695
      %v10289 = vpow.pop %v10288
      %v10290 = vmul.f32 %v10206, 1.442695
      %v10291 = vpow.pop %v10290
      %v10292 = vmul.f32 %v10207, 1.442695
      %v10293 = vpow.pop %v10292
      %v10294 = vmul.f32 %v10208, 1.442695
      %v10295 = vpow.pop %v10294
      %v10296 = vmul.f32 %v10209, 1.442695
      %v10297 = vpow.pop %v10296
      %v10298 = vmul.f32 %v10210, 1.442695
      %v10299 = vpow.pop %v10298
      %v10300 = vmul.f32 %v10211, 1.442695
      %v10301 = vpow.pop %v10300
      %v10302 = vmul.f32 %v10212, 1.442695
      %v10303 = vpow.pop %v10302
      %v10304 = vmul.f32 %v10213, 1.442695
      %v10305 = vpow.pop %v10304
      %v10306 = vmul.f32 %v10214, 1.442695
      %v10307 = vpow.pop %v10306
      %v10308 = vmul.f32 %v10215, 1.442695
      %v10309 = vpow.pop %v10308
      %v10310 = vmul.f32 %v10216, 1.442695
      %v10311 = vpow.pop %v10310
      %v10312 = vmul.f32 %v10217, 1.442695
      %v10313 = vpow.pop %v10312
      %v10314 = vmul.f32 %v10218, 1.442695
      %v10315 = vpow.pop %v10314
      %v10316 = vmul.f32 %v10219, 1.442695
      %v10317 = vpow.pop %v10316
      %v10318 = vmul.f32 %v10220, 1.442695
      %v10319 = vpow.pop %v10318
      %v10320 = vmul.f32 %v10221, 1.442695
      %v10321 = vpow.pop %v10320
      %v10322 = vmul.f32 %v10222, 1.442695
      %v10323 = vpow.pop %v10322
      %v10324 = vmul.f32 %v10223, 1.442695
      %v10325 = vpow.pop %v10324
      %v10326 = vmul.f32 %v10224, 1.442695
      %v10327 = vpow.pop %v10326
      %v10328 = vmul.f32 %v10225, 1.442695
      %v10329 = vpow.pop %v10328
      %v10330 = vmul.f32 %v10226, 1.442695
      %v10331 = vpow.pop %v10330
      %v10332 = vmul.f32 %v10227, 1.442695
      %v10333 = vpow.pop %v10332
      %v10334 = vmul.f32 %v10228, 1.442695
      %v10335 = vpow.pop %v10334
      %v10336 = vmul.f32 %v10229, 1.442695
      %v10337 = vpow.pop %v10336
      %v10338 = vmul.f32 %v10230, 1.442695
      %v10339 = vpow.pop %v10338
      %v10340 = vmul.f32 %v10231, 1.442695
      %v10341 = vpow.pop %v10340
      %v10342 = vmul.f32 %v10232, 1.442695
      %v10343 = vpow.pop %v10342
      %v10344 = vmul.f32 %v10233, 1.442695
      %v10345 = vpow.pop %v10344
      %v10346 = vmul.f32 %v10234, 1.442695
      %v10347 = vpow.pop %v10346
      %v10348 = vmul.f32 %v10235, 1.442695
      %v10349 = vpow.pop %v10348
      %v10350 = vmul.f32 %v10236, 1.442695
      %v10351 = vpow.pop %v10350
      %v10352 = vmul.f32 %v10237, 1.442695
      %v10353 = vpow.pop %v10352
      %v10354 = vmul.f32 %v10238, 1.442695
      %v10355 = vpow.pop %v10354
      %v10356 = vmul.f32 %v10239, 1.442695
      %v10357 = vpow.pop %v10356
      %v10358 = vmul.f32 %v10240, 1.442695
      %v10359 = vpow.pop %v10358
      %v10360 = vmul.f32 %v10241, 1.442695
      %v10361 = vpow.pop %v10360
      %v10362 = vmul.f32 %v10242, 1.442695
      %v10363 = vpow.pop %v10362
      %v10364 = vmul.f32 %v10243, 1.442695
      %v10365 = vpow.pop %v10364
      %v10366 = vmul.f32 %v10244, 1.442695
      %v10367 = vpow.pop %v10366
      %v10368 = vmul.f32 %v10245, 1.442695
      %v10369 = vpow.pop %v10368
      %v10370 = vmul.f32 %v10246, 1.442695
      %v10371 = vpow.pop %v10370
      %v10372 = vmul.f32 %v10247, 1.442695
      %v10373 = vpow.pop %v10372
      %v10374 = vmul.f32 %v10248, 1.442695
      %v10375 = vpow.pop %v10374
      %v10376 = vmul.f32 %v10249, 1.442695
      %v10377 = vpow.pop %v10376
      %v10378 = vsel %vm1799, %v10251, 0.0
      %10379 = vadd.xlane.f32.xlu0 %v10378
      %v10380 = vpop.xlane.xlu0 %10379
      %v10381 = vsel %vm1799, %v10253, 0.0
      %10382 = vadd.xlane.f32.xlu0 %v10381
      %v10383 = vpop.xlane.xlu0 %10382
      %v10384 = vsel %vm1799, %v10255, 0.0
      %10385 = vadd.xlane.f32.xlu0 %v10384
      %v10386 = vpop.xlane.xlu0 %10385
      %v10387 = vsel %vm1799, %v10257, 0.0
      %10388 = vadd.xlane.f32.xlu0 %v10387
      %v10389 = vpop.xlane.xlu0 %10388
      %v10390 = vsel %vm1799, %v10259, 0.0
      %10391 = vadd.xlane.f32.xlu0 %v10390
      %v10392 = vpop.xlane.xlu0 %10391
      %v10393 = vsel %vm1799, %v10261, 0.0
      %10394 = vadd.xlane.f32.xlu0 %v10393
      %v10395 = vpop.xlane.xlu0 %10394
      %v10396 = vsel %vm1799, %v10263, 0.0
      %10397 = vadd.xlane.f32.xlu0 %v10396
      %v10398 = vpop.xlane.xlu0 %10397
      %v10399 = vsel %vm1799, %v10265, 0.0
      %10400 = vadd.xlane.f32.xlu0 %v10399
      %v10401 = vpop.xlane.xlu0 %10400
      %v10402 = vsel %vm1799, %v10267, 0.0
      %10403 = vadd.xlane.f32.xlu0 %v10402
      %v10404 = vpop.xlane.xlu0 %10403
      %v10405 = vsel %vm1799, %v10269, 0.0
      %10406 = vadd.xlane.f32.xlu0 %v10405
      %v10407 = vpop.xlane.xlu0 %10406
      %v10408 = vsel %vm1799, %v10271, 0.0
      %10409 = vadd.xlane.f32.xlu0 %v10408
      %v10410 = vpop.xlane.xlu0 %10409
      %v10411 = vsel %vm1799, %v10273, 0.0
      %10412 = vadd.xlane.f32.xlu0 %v10411
      %v10413 = vpop.xlane.xlu0 %10412
      %v10414 = vsel %vm1799, %v10275, 0.0
      %10415 = vadd.xlane.f32.xlu0 %v10414
      %v10416 = vpop.xlane.xlu0 %10415
      %v10417 = vsel %vm1799, %v10277, 0.0
      %10418 = vadd.xlane.f32.xlu0 %v10417
      %v10419 = vpop.xlane.xlu0 %10418
      %v10420 = vsel %vm1799, %v10279, 0.0
      %10421 = vadd.xlane.f32.xlu0 %v10420
      %v10422 = vpop.xlane.xlu0 %10421
      %v10423 = vsel %vm1799, %v10281, 0.0
      %10424 = vadd.xlane.f32.xlu0 %v10423
      %v10425 = vpop.xlane.xlu0 %10424
      %v10426 = vsel %vm1799, %v10283, 0.0
      %10427 = vadd.xlane.f32.xlu0 %v10426
      %v10428 = vpop.xlane.xlu0 %10427
      %v10429 = vsel %vm1799, %v10285, 0.0
      %10430 = vadd.xlane.f32.xlu0 %v10429
      %v10431 = vpop.xlane.xlu0 %10430
      %v10432 = vsel %vm1799, %v10287, 0.0
      %10433 = vadd.xlane.f32.xlu0 %v10432
      %v10434 = vpop.xlane.xlu0 %10433
      %v10435 = vsel %vm1799, %v10289, 0.0
      %10436 = vadd.xlane.f32.xlu0 %v10435
      %v10437 = vpop.xlane.xlu0 %10436
      %v10438 = vsel %vm1799, %v10291, 0.0
      %10439 = vadd.xlane.f32.xlu0 %v10438
      %v10440 = vpop.xlane.xlu0 %10439
      %v10441 = vsel %vm1799, %v10293, 0.0
      %10442 = vadd.xlane.f32.xlu0 %v10441
      %v10443 = vpop.xlane.xlu0 %10442
      %v10444 = vsel %vm1799, %v10295, 0.0
      %10445 = vadd.xlane.f32.xlu0 %v10444
      %v10446 = vpop.xlane.xlu0 %10445
      %v10447 = vsel %vm1799, %v10297, 0.0
      %10448 = vadd.xlane.f32.xlu0 %v10447
      %v10449 = vpop.xlane.xlu0 %10448
      %v10450 = vsel %vm1799, %v10299, 0.0
      %10451 = vadd.xlane.f32.xlu0 %v10450
      %v10452 = vpop.xlane.xlu0 %10451
      %v10453 = vsel %vm1799, %v10301, 0.0
      %10454 = vadd.xlane.f32.xlu0 %v10453
      %v10455 = vpop.xlane.xlu0 %10454
      %v10456 = vsel %vm1799, %v10303, 0.0
      %10457 = vadd.xlane.f32.xlu0 %v10456
      %v10458 = vpop.xlane.xlu0 %10457
      %v10459 = vsel %vm1799, %v10305, 0.0
      %10460 = vadd.xlane.f32.xlu0 %v10459
      %v10461 = vpop.xlane.xlu0 %10460
      %v10462 = vsel %vm1799, %v10307, 0.0
      %10463 = vadd.xlane.f32.xlu0 %v10462
      %v10464 = vpop.xlane.xlu0 %10463
      %v10465 = vsel %vm1799, %v10309, 0.0
      %10466 = vadd.xlane.f32.xlu0 %v10465
      %v10467 = vpop.xlane.xlu0 %10466
      %v10468 = vsel %vm1799, %v10311, 0.0
      %10469 = vadd.xlane.f32.xlu0 %v10468
      %v10470 = vpop.xlane.xlu0 %10469
      %v10471 = vsel %vm1799, %v10313, 0.0
      %10472 = vadd.xlane.f32.xlu0 %v10471
      %v10473 = vpop.xlane.xlu0 %10472
      %v10474 = vsel %vm1799, %v10315, 0.0
      %10475 = vadd.xlane.f32.xlu0 %v10474
      %v10476 = vpop.xlane.xlu0 %10475
      %v10477 = vsel %vm1799, %v10317, 0.0
      %10478 = vadd.xlane.f32.xlu0 %v10477
      %v10479 = vpop.xlane.xlu0 %10478
      %v10480 = vsel %vm1799, %v10319, 0.0
      %10481 = vadd.xlane.f32.xlu0 %v10480
      %v10482 = vpop.xlane.xlu0 %10481
      %v10483 = vsel %vm1799, %v10321, 0.0
      %10484 = vadd.xlane.f32.xlu0 %v10483
      %v10485 = vpop.xlane.xlu0 %10484
      %v10486 = vsel %vm1799, %v10323, 0.0
      %10487 = vadd.xlane.f32.xlu0 %v10486
      %v10488 = vpop.xlane.xlu0 %10487
      %v10489 = vsel %vm1799, %v10325, 0.0
      %10490 = vadd.xlane.f32.xlu0 %v10489
      %v10491 = vpop.xlane.xlu0 %10490
      %v10492 = vsel %vm1799, %v10327, 0.0
      %10493 = vadd.xlane.f32.xlu0 %v10492
      %v10494 = vpop.xlane.xlu0 %10493
      %v10495 = vsel %vm1799, %v10329, 0.0
      %10496 = vadd.xlane.f32.xlu0 %v10495
      %v10497 = vpop.xlane.xlu0 %10496
      %v10498 = vsel %vm1799, %v10331, 0.0
      %10499 = vadd.xlane.f32.xlu0 %v10498
      %v10500 = vpop.xlane.xlu0 %10499
      %v10501 = vsel %vm1799, %v10333, 0.0
      %10502 = vadd.xlane.f32.xlu0 %v10501
      %v10503 = vpop.xlane.xlu0 %10502
      %v10504 = vsel %vm1799, %v10335, 0.0
      %10505 = vadd.xlane.f32.xlu0 %v10504
      %v10506 = vpop.xlane.xlu0 %10505
      %v10507 = vsel %vm1799, %v10337, 0.0
      %10508 = vadd.xlane.f32.xlu0 %v10507
      %v10509 = vpop.xlane.xlu0 %10508
      %v10510 = vsel %vm1799, %v10339, 0.0
      %10511 = vadd.xlane.f32.xlu0 %v10510
      %v10512 = vpop.xlane.xlu0 %10511
      %v10513 = vsel %vm1799, %v10341, 0.0
      %10514 = vadd.xlane.f32.xlu0 %v10513
      %v10515 = vpop.xlane.xlu0 %10514
      %v10516 = vsel %vm1799, %v10343, 0.0
      %10517 = vadd.xlane.f32.xlu0 %v10516
      %v10518 = vpop.xlane.xlu0 %10517
      %v10519 = vsel %vm1799, %v10345, 0.0
      %10520 = vadd.xlane.f32.xlu0 %v10519
      %v10521 = vpop.xlane.xlu0 %10520
      %v10522 = vsel %vm1799, %v10347, 0.0
      %10523 = vadd.xlane.f32.xlu0 %v10522
      %v10524 = vpop.xlane.xlu0 %10523
      %v10525 = vsel %vm1799, %v10349, 0.0
      %10526 = vadd.xlane.f32.xlu0 %v10525
      %v10527 = vpop.xlane.xlu0 %10526
      %v10528 = vsel %vm1799, %v10351, 0.0
      %10529 = vadd.xlane.f32.xlu0 %v10528
      %v10530 = vpop.xlane.xlu0 %10529
      %v10531 = vsel %vm1799, %v10353, 0.0
      %10532 = vadd.xlane.f32.xlu0 %v10531
      %v10533 = vpop.xlane.xlu0 %10532
      %v10534 = vsel %vm1799, %v10355, 0.0
      %10535 = vadd.xlane.f32.xlu0 %v10534
      %v10536 = vpop.xlane.xlu0 %10535
      %v10537 = vsel %vm1799, %v10357, 0.0
      %10538 = vadd.xlane.f32.xlu0 %v10537
      %v10539 = vpop.xlane.xlu0 %10538
      %v10540 = vsel %vm1799, %v10359, 0.0
      %10541 = vadd.xlane.f32.xlu0 %v10540
      %v10542 = vpop.xlane.xlu0 %10541
      %v10543 = vsel %vm1799, %v10361, 0.0
      %10544 = vadd.xlane.f32.xlu0 %v10543
      %v10545 = vpop.xlane.xlu0 %10544
      %v10546 = vsel %vm1799, %v10363, 0.0
      %10547 = vadd.xlane.f32.xlu0 %v10546
      %v10548 = vpop.xlane.xlu0 %10547
      %v10549 = vsel %vm1799, %v10365, 0.0
      %10550 = vadd.xlane.f32.xlu0 %v10549
      %v10551 = vpop.xlane.xlu0 %10550
      %v10552 = vsel %vm1799, %v10367, 0.0
      %10553 = vadd.xlane.f32.xlu0 %v10552
      %v10554 = vpop.xlane.xlu0 %10553
      %v10555 = vsel %vm1799, %v10369, 0.0
      %10556 = vadd.xlane.f32.xlu0 %v10555
      %v10557 = vpop.xlane.xlu0 %10556
      %v10558 = vsel %vm1799, %v10371, 0.0
      %10559 = vadd.xlane.f32.xlu0 %v10558
      %v10560 = vpop.xlane.xlu0 %10559
      %v10561 = vsel %vm1799, %v10373, 0.0
      %10562 = vadd.xlane.f32.xlu0 %v10561
      %v10563 = vpop.xlane.xlu0 %10562
      %v10564 = vsel %vm1799, %v10375, 0.0
      %10565 = vadd.xlane.f32.xlu0 %v10564
      %v10566 = vpop.xlane.xlu0 %10565
      %v10567 = vsel %vm1799, %v10377, 0.0
      %10568 = vadd.xlane.f32.xlu0 %v10567
      %v10569 = vpop.xlane.xlu0 %10568
      %v10570 = vrcp.pop %v10380
      %v10571 = vrcp.pop %v10383
      %v10572 = vrcp.pop %v10386
      %v10573 = vrcp.pop %v10389
      %v10574 = vrcp.pop %v10392
      %v10575 = vrcp.pop %v10395
      %v10576 = vrcp.pop %v10398
      %v10577 = vrcp.pop %v10401
      %v10578 = vrcp.pop %v10404
      %v10579 = vrcp.pop %v10407
      %v10580 = vrcp.pop %v10410
      %v10581 = vrcp.pop %v10413
      %v10582 = vrcp.pop %v10416
      %v10583 = vrcp.pop %v10419
      %v10584 = vrcp.pop %v10422
      %v10585 = vrcp.pop %v10425
      %v10586 = vrcp.pop %v10428
      %v10587 = vrcp.pop %v10431
      %v10588 = vrcp.pop %v10434
      %v10589 = vrcp.pop %v10437
      %v10590 = vrcp.pop %v10440
      %v10591 = vrcp.pop %v10443
      %v10592 = vrcp.pop %v10446
      %v10593 = vrcp.pop %v10449
      %v10594 = vrcp.pop %v10452
      %v10595 = vrcp.pop %v10455
      %v10596 = vrcp.pop %v10458
      %v10597 = vrcp.pop %v10461
      %v10598 = vrcp.pop %v10464
      %v10599 = vrcp.pop %v10467
      %v10600 = vrcp.pop %v10470
      %v10601 = vrcp.pop %v10473
      %v10602 = vrcp.pop %v10476
      %v10603 = vrcp.pop %v10479
      %v10604 = vrcp.pop %v10482
      %v10605 = vrcp.pop %v10485
      %v10606 = vrcp.pop %v10488
      %v10607 = vrcp.pop %v10491
      %v10608 = vrcp.pop %v10494
      %v10609 = vrcp.pop %v10497
      %v10610 = vrcp.pop %v10500
      %v10611 = vrcp.pop %v10503
      %v10612 = vrcp.pop %v10506
      %v10613 = vrcp.pop %v10509
      %v10614 = vrcp.pop %v10512
      %v10615 = vrcp.pop %v10515
      %v10616 = vrcp.pop %v10518
      %v10617 = vrcp.pop %v10521
      %v10618 = vrcp.pop %v10524
      %v10619 = vrcp.pop %v10527
      %v10620 = vrcp.pop %v10530
      %v10621 = vrcp.pop %v10533
      %v10622 = vrcp.pop %v10536
      %v10623 = vrcp.pop %v10539
      %v10624 = vrcp.pop %v10542
      %v10625 = vrcp.pop %v10545
      %v10626 = vrcp.pop %v10548
      %v10627 = vrcp.pop %v10551
      %v10628 = vrcp.pop %v10554
      %v10629 = vrcp.pop %v10557
      %v10630 = vrcp.pop %v10560
      %v10631 = vrcp.pop %v10563
      %v10632 = vrcp.pop %v10566
      %v10633 = vrcp.pop %v10569
      %v10634 = vmul.f32 %v10251, %v10570
      %v10635 = vmul.f32 %v10253, %v10571
      %v10636 = vmul.f32 %v10255, %v10572
      %v10637 = vmul.f32 %v10257, %v10573
      %v10638 = vmul.f32 %v10259, %v10574
      %v10639 = vmul.f32 %v10261, %v10575
      %v10640 = vmul.f32 %v10263, %v10576
      %v10641 = vmul.f32 %v10265, %v10577
      %v10642 = vmul.f32 %v10267, %v10578
      %v10643 = vmul.f32 %v10269, %v10579
      %v10644 = vmul.f32 %v10271, %v10580
      %v10645 = vmul.f32 %v10273, %v10581
      %v10646 = vmul.f32 %v10275, %v10582
      %v10647 = vmul.f32 %v10277, %v10583
      %v10648 = vmul.f32 %v10279, %v10584
      %v10649 = vmul.f32 %v10281, %v10585
      %v10650 = vmul.f32 %v10283, %v10586
      %v10651 = vmul.f32 %v10285, %v10587
      %v10652 = vmul.f32 %v10287, %v10588
      %v10653 = vmul.f32 %v10289, %v10589
      %v10654 = vmul.f32 %v10291, %v10590
      %v10655 = vmul.f32 %v10293, %v10591
      %v10656 = vmul.f32 %v10295, %v10592
      %v10657 = vmul.f32 %v10297, %v10593
      %v10658 = vmul.f32 %v10299, %v10594
      %v10659 = vmul.f32 %v10301, %v10595
      %v10660 = vmul.f32 %v10303, %v10596
      %v10661 = vmul.f32 %v10305, %v10597
      %v10662 = vmul.f32 %v10307, %v10598
      %v10663 = vmul.f32 %v10309, %v10599
      %v10664 = vmul.f32 %v10311, %v10600
      %v10665 = vmul.f32 %v10313, %v10601
      %v10666 = vmul.f32 %v10315, %v10602
      %v10667 = vmul.f32 %v10317, %v10603
      %v10668 = vmul.f32 %v10319, %v10604
      %v10669 = vmul.f32 %v10321, %v10605
      %v10670 = vmul.f32 %v10323, %v10606
      %v10671 = vmul.f32 %v10325, %v10607
      %v10672 = vmul.f32 %v10327, %v10608
      %v10673 = vmul.f32 %v10329, %v10609
      %v10674 = vmul.f32 %v10331, %v10610
      %v10675 = vmul.f32 %v10333, %v10611
      %v10676 = vmul.f32 %v10335, %v10612
      %v10677 = vmul.f32 %v10337, %v10613
      %v10678 = vmul.f32 %v10339, %v10614
      %v10679 = vmul.f32 %v10341, %v10615
      %v10680 = vmul.f32 %v10343, %v10616
      %v10681 = vmul.f32 %v10345, %v10617
      %v10682 = vmul.f32 %v10347, %v10618
      %v10683 = vmul.f32 %v10349, %v10619
      %v10684 = vmul.f32 %v10351, %v10620
      %v10685 = vmul.f32 %v10353, %v10621
      %v10686 = vmul.f32 %v10355, %v10622
      %v10687 = vmul.f32 %v10357, %v10623
      %v10688 = vmul.f32 %v10359, %v10624
      %v10689 = vmul.f32 %v10361, %v10625
      %v10690 = vmul.f32 %v10363, %v10626
      %v10691 = vmul.f32 %v10365, %v10627
      %v10692 = vmul.f32 %v10367, %v10628
      %v10693 = vmul.f32 %v10369, %v10629
      %v10694 = vmul.f32 %v10371, %v10630
      %v10695 = vmul.f32 %v10373, %v10631
      %v10696 = vmul.f32 %v10375, %v10632
      %v10697 = vmul.f32 %v10377, %v10633
      %v10698 = vpack.c.bf16 %v10635, %v10634
      %v10699 = vpack.c.bf16 %v10637, %v10636
      %v10700 = vpack.c.bf16 %v10639, %v10638
      %v10701 = vpack.c.bf16 %v10641, %v10640
      %v10702 = vpack.c.bf16 %v10643, %v10642
      %v10703 = vpack.c.bf16 %v10645, %v10644
      %v10704 = vpack.c.bf16 %v10647, %v10646
      %v10705 = vpack.c.bf16 %v10649, %v10648
      %v10706 = vpack.c.bf16 %v10651, %v10650
      %v10707 = vpack.c.bf16 %v10653, %v10652
      %v10708 = vpack.c.bf16 %v10655, %v10654
      %v10709 = vpack.c.bf16 %v10657, %v10656
      %v10710 = vpack.c.bf16 %v10659, %v10658
      %v10711 = vpack.c.bf16 %v10661, %v10660
      %v10712 = vpack.c.bf16 %v10663, %v10662
      %v10713 = vpack.c.bf16 %v10665, %v10664
      %v10714 = vpack.c.bf16 %v10667, %v10666
      %v10715 = vpack.c.bf16 %v10669, %v10668
      %v10716 = vpack.c.bf16 %v10671, %v10670
      %v10717 = vpack.c.bf16 %v10673, %v10672
      %v10718 = vpack.c.bf16 %v10675, %v10674
      %v10719 = vpack.c.bf16 %v10677, %v10676
      %v10720 = vpack.c.bf16 %v10679, %v10678
      %v10721 = vpack.c.bf16 %v10681, %v10680
      %v10722 = vpack.c.bf16 %v10683, %v10682
      %v10723 = vpack.c.bf16 %v10685, %v10684
      %v10724 = vpack.c.bf16 %v10687, %v10686
      %v10725 = vpack.c.bf16 %v10689, %v10688
      %v10726 = vpack.c.bf16 %v10691, %v10690
      %v10727 = vpack.c.bf16 %v10693, %v10692
      %v10728 = vpack.c.bf16 %v10695, %v10694
      %v10729 = vpack.c.bf16 %v10697, %v10696
      %10730 = vrot.lane.b32.xlu0 %v894, 40
      %v10731 = vpop.permute.xlu0 %10730
      %10732 = vrot.lane.b32.xlu0 %v895, 40
      %v10733 = vpop.permute.xlu0 %10732
      %10734 = vrot.lane.b32.xlu0 %v896, 40
      %v10735 = vpop.permute.xlu0 %10734
      %10736 = vrot.lane.b32.xlu0 %v897, 40
      %v10737 = vpop.permute.xlu0 %10736
      %v10743 = vsel %vm1799, %v10698, 0
      %v10746 = vsel %vm1799, %v10699, 0
      %v10749 = vsel %vm1799, %v10700, 0
      %v10752 = vsel %vm1799, %v10701, 0
      %10754 = vmatprep.subr.bf16.mxu0 0
      %10755 = vmatpush1.bf16.msra.mxu0 %v10731
      %10756 = vmatprep.subr.bf16.mxu0 0
      %10757 = vmatpush1.bf16.msra.mxu0 %v10733
      %10758 = vmatprep.subr.bf16.mxu0 0
      %10759 = vmatpush1.bf16.msra.mxu0 %v10735
      %10760 = vmatprep.subr.bf16.mxu0 0
      %10761 = vmatpush1.bf16.msra.mxu0 %v10737
      %10762 = vmatprep.subr.bf16.mxu0 0
      %10763 = vmatpush1.bf16.msra.mxu0 0
      %10764 = vmatprep.subr.bf16.mxu0 0
      %10765 = vmatpush1.bf16.msra.mxu0 0
      %10766 = vmatprep.subr.bf16.mxu0 0
      %10767 = vmatpush1.bf16.msra.mxu0 0
      %10768 = vmatprep.subr.bf16.mxu0 0
      %10769 = vmatpush1.bf16.msra.mxu0 0
      %10770 = vmatprep.subr.bf16.mxu0 0
      %10771 = vmatpush1.bf16.msra.mxu0 0
      %10772 = vmatprep.subr.bf16.mxu0 0
      %10773 = vmatpush1.bf16.msra.mxu0 0
      %10774 = vmatprep.subr.bf16.mxu0 0
      %10775 = vmatpush1.bf16.msra.mxu0 0
      %10776 = vmatprep.subr.bf16.mxu0 0
      %10777 = vmatpush1.bf16.msra.mxu0 0
      %10778 = vmatprep.subr.bf16.mxu0 0
      %10779 = vmatpush1.bf16.msra.mxu0 0
      %10780 = vmatprep.subr.bf16.mxu0 0
      %10781 = vmatpush1.bf16.msra.mxu0 0
      %10782 = vmatprep.subr.bf16.mxu0 0
      %10783 = vmatpush1.bf16.msra.mxu0 0
      %10784 = vmatprep.subr.bf16.mxu0 0
      %10785 = vmatpush1.bf16.msra.mxu0 0
      %10786 = vmatprep.mubr.bf16.mxu0 0
      %10787 = vmatmul.mubr.bf16.gmra.mrb[0].mxu0 %v10743
      %v10788 = vpop.f32.mrb[0].mxu0
      %v10789 = vadd.f32 0.0, %v10788
      %v10790 = vpop.f32.mrb[0].mxu0
      %v10791 = vpop.f32.mrb[0].mxu0
      %v10792 = vadd.f32 0.0, %v10791
      %v10793 = vpop.f32.mrb[0].mxu0
      %10794 = vmatprep.mubr.bf16.mxu0 0
      %10795 = vmatmul.mubr.bf16.gmra.mrb[0].mxu0 %v10746
      %v10796 = vpop.f32.mrb[0].mxu0
      %v10797 = vadd.f32 0.0, %v10796
      %v10798 = vpop.f32.mrb[0].mxu0
      %v10799 = vpop.f32.mrb[0].mxu0
      %v10800 = vadd.f32 0.0, %v10799
      %v10801 = vpop.f32.mrb[0].mxu0
      %10802 = vmatprep.mubr.bf16.mxu0 0
      %10803 = vmatmul.mubr.bf16.gmra.mrb[0].mxu0 %v10749
      %v10804 = vpop.f32.mrb[0].mxu0
      %v10805 = vadd.f32 0.0, %v10804
      %v10806 = vpop.f32.mrb[0].mxu0
      %v10807 = vpop.f32.mrb[0].mxu0
      %v10808 = vadd.f32 0.0, %v10807
      %v10809 = vpop.f32.mrb[0].mxu0
      %10810 = vmatprep.mubr.bf16.mxu0 0
      %10811 = vmatmul.mubr.bf16.gmra.mrb[0].mxu0 %v10752
      %v10812 = vpop.f32.mrb[0].mxu0
      %v10813 = vadd.f32 0.0, %v10812
      %v10814 = vpop.f32.mrb[0].mxu0
      %v10815 = vpop.f32.mrb[0].mxu0
      %v10816 = vadd.f32 0.0, %v10815
      %v10817 = vpop.f32.mrb[0].mxu0
      %10818 = vdwg.mxu0
      %10819 = vrot.lane.b32.xlu0 %v898, 40
      %v10820 = vpop.permute.xlu0 %10819
      %10821 = vrot.lane.b32.xlu0 %v899, 40
      %v10822 = vpop.permute.xlu0 %10821
      %10823 = vrot.lane.b32.xlu0 %v900, 40
      %v10824 = vpop.permute.xlu0 %10823
      %10825 = vrot.lane.b32.xlu0 %v901, 40
      %v10826 = vpop.permute.xlu0 %10825
      %v10832 = vsel %vm1799, %v10702, 0
      %v10835 = vsel %vm1799, %v10703, 0
      %v10838 = vsel %vm1799, %v10704, 0
      %v10841 = vsel %vm1799, %v10705, 0
      %10843 = vmatprep.subr.bf16.mxu0 0
      %10844 = vmatpush1.bf16.msra.mxu0 %v10820
      %10845 = vmatprep.subr.bf16.mxu0 0
      %10846 = vmatpush1.bf16.msra.mxu0 %v10822
      %10847 = vmatprep.subr.bf16.mxu0 0
      %10848 = vmatpush1.bf16.msra.mxu0 %v10824
      %10849 = vmatprep.subr.bf16.mxu0 0
      %10850 = vmatpush1.bf16.msra.mxu0 %v10826
      %10851 = vmatprep.subr.bf16.mxu0 0
      %10852 = vmatpush1.bf16.msra.mxu0 0
      %10853 = vmatprep.subr.bf16.mxu0 0
      %10854 = vmatpush1.bf16.msra.mxu0 0
      %10855 = vmatprep.subr.bf16.mxu0 0
      %10856 = vmatpush1.bf16.msra.mxu0 0
      %10857 = vmatprep.subr.bf16.mxu0 0
      %10858 = vmatpush1.bf16.msra.mxu0 0
      %10859 = vmatprep.subr.bf16.mxu0 0
      %10860 = vmatpush1.bf16.msra.mxu0 0
      %10861 = vmatprep.subr.bf16.mxu0 0
      %10862 = vmatpush1.bf16.msra.mxu0 0
      %10863 = vmatprep.subr.bf16.mxu0 0
      %10864 = vmatpush1.bf16.msra.mxu0 0
      %10865 = vmatprep.subr.bf16.mxu0 0
      %10866 = vmatpush1.bf16.msra.mxu0 0
      %10867 = vmatprep.subr.bf16.mxu0 0
      %10868 = vmatpush1.bf16.msra.mxu0 0
      %10869 = vmatprep.subr.bf16.mxu0 0
      %10870 = vmatpush1.bf16.msra.mxu0 0
      %10871 = vmatprep.subr.bf16.mxu0 0
      %10872 = vmatpush1.bf16.msra.mxu0 0
      %10873 = vmatprep.subr.bf16.mxu0 0
      %10874 = vmatpush1.bf16.msra.mxu0 0
      %10875 = vmatprep.mubr.bf16.mxu0 0
      %10876 = vmatmul.mubr.bf16.gmra.mrb[0].mxu0 %v10832
      %v10877 = vpop.f32.mrb[0].mxu0
      %v10878 = vadd.f32 0.0, %v10877
      %v10879 = vpop.f32.mrb[0].mxu0
      %v10880 = vpop.f32.mrb[0].mxu0
      %v10881 = vadd.f32 0.0, %v10880
      %v10882 = vpop.f32.mrb[0].mxu0
      %10883 = vmatprep.mubr.bf16.mxu0 0
      %10884 = vmatmul.mubr.bf16.gmra.mrb[0].mxu0 %v10835
      %v10885 = vpop.f32.mrb[0].mxu0
      %v10886 = vadd.f32 0.0, %v10885
      %v10887 = vpop.f32.mrb[0].mxu0
      %v10888 = vpop.f32.mrb[0].mxu0
      %v10889 = vadd.f32 0.0, %v10888
      %v10890 = vpop.f32.mrb[0].mxu0
      %10891 = vmatprep.mubr.bf16.mxu0 0
      %10892 = vmatmul.mubr.bf16.gmra.mrb[0].mxu0 %v10838
      %v10893 = vpop.f32.mrb[0].mxu0
      %v10894 = vadd.f32 0.0, %v10893
      %v10895 = vpop.f32.mrb[0].mxu0
      %v10896 = vpop.f32.mrb[0].mxu0
      %v10897 = vadd.f32 0.0, %v10896
      %v10898 = vpop.f32.mrb[0].mxu0
      %10899 = vmatprep.mubr.bf16.mxu0 0
      %10900 = vmatmul.mubr.bf16.gmra.mrb[0].mxu0 %v10841
      %v10901 = vpop.f32.mrb[0].mxu0
      %v10902 = vadd.f32 0.0, %v10901
      %v10903 = vpop.f32.mrb[0].mxu0
      %v10904 = vpop.f32.mrb[0].mxu0
      %v10905 = vadd.f32 0.0, %v10904
      %v10906 = vpop.f32.mrb[0].mxu0
      %10907 = vdwg.mxu0
      %10908 = vrot.lane.b32.xlu0 %v902, 40
      %v10909 = vpop.permute.xlu0 %10908
      %10910 = vrot.lane.b32.xlu0 %v903, 40
      %v10911 = vpop.permute.xlu0 %10910
      %10912 = vrot.lane.b32.xlu0 %v904, 40
      %v10913 = vpop.permute.xlu0 %10912
      %10914 = vrot.lane.b32.xlu0 %v905, 40
      %v10915 = vpop.permute.xlu0 %10914
      %v10921 = vsel %vm1799, %v10706, 0
      %v10924 = vsel %vm1799, %v10707, 0
      %v10927 = vsel %vm1799, %v10708, 0
      %v10930 = vsel %vm1799, %v10709, 0
      %10932 = vmatprep.subr.bf16.mxu0 0
      %10933 = vmatpush1.bf16.msra.mxu0 %v10909
      %10934 = vmatprep.subr.bf16.mxu0 0
      %10935 = vmatpush1.bf16.msra.mxu0 %v10911
      %10936 = vmatprep.subr.bf16.mxu0 0
      %10937 = vmatpush1.bf16.msra.mxu0 %v10913
      %10938 = vmatprep.subr.bf16.mxu0 0
      %10939 = vmatpush1.bf16.msra.mxu0 %v10915
      %10940 = vmatprep.subr.bf16.mxu0 0
      %10941 = vmatpush1.bf16.msra.mxu0 0
      %10942 = vmatprep.subr.bf16.mxu0 0
      %10943 = vmatpush1.bf16.msra.mxu0 0
      %10944 = vmatprep.subr.bf16.mxu0 0
      %10945 = vmatpush1.bf16.msra.mxu0 0
      %10946 = vmatprep.subr.bf16.mxu0 0
      %10947 = vmatpush1.bf16.msra.mxu0 0
      %10948 = vmatprep.subr.bf16.mxu0 0
      %10949 = vmatpush1.bf16.msra.mxu0 0
      %10950 = vmatprep.subr.bf16.mxu0 0
      %10951 = vmatpush1.bf16.msra.mxu0 0
      %10952 = vmatprep.subr.bf16.mxu0 0
      %10953 = vmatpush1.bf16.msra.mxu0 0
      %10954 = vmatprep.subr.bf16.mxu0 0
      %10955 = vmatpush1.bf16.msra.mxu0 0
      %10956 = vmatprep.subr.bf16.mxu0 0
      %10957 = vmatpush1.bf16.msra.mxu0 0
      %10958 = vmatprep.subr.bf16.mxu0 0
      %10959 = vmatpush1.bf16.msra.mxu0 0
      %10960 = vmatprep.subr.bf16.mxu0 0
      %10961 = vmatpush1.bf16.msra.mxu0 0
      %10962 = vmatprep.subr.bf16.mxu0 0
      %10963 = vmatpush1.bf16.msra.mxu0 0
      %10964 = vmatprep.mubr.bf16.mxu0 0
      %10965 = vmatmul.mubr.bf16.gmra.mrb[0].mxu0 %v10921
      %v10966 = vpop.f32.mrb[0].mxu0
      %v10967 = vadd.f32 0.0, %v10966
      %v10968 = vpop.f32.mrb[0].mxu0
      %v10969 = vpop.f32.mrb[0].mxu0
      %v10970 = vadd.f32 0.0, %v10969
      %v10971 = vpop.f32.mrb[0].mxu0
      %10972 = vmatprep.mubr.bf16.mxu0 0
      %10973 = vmatmul.mubr.bf16.gmra.mrb[0].mxu0 %v10924
      %v10974 = vpop.f32.mrb[0].mxu0
      %v10975 = vadd.f32 0.0, %v10974
      %v10976 = vpop.f32.mrb[0].mxu0
      %v10977 = vpop.f32.mrb[0].mxu0
      %v10978 = vadd.f32 0.0, %v10977
      %v10979 = vpop.f32.mrb[0].mxu0
      %10980 = vmatprep.mubr.bf16.mxu0 0
      %10981 = vmatmul.mubr.bf16.gmra.mrb[0].mxu0 %v10927
      %v10982 = vpop.f32.mrb[0].mxu0
      %v10983 = vadd.f32 0.0, %v10982
      %v10984 = vpop.f32.mrb[0].mxu0
      %v10985 = vpop.f32.mrb[0].mxu0
      %v10986 = vadd.f32 0.0, %v10985
      %v10987 = vpop.f32.mrb[0].mxu0
      %10988 = vmatprep.mubr.bf16.mxu0 0
      %10989 = vmatmul.mubr.bf16.gmra.mrb[0].mxu0 %v10930
      %v10990 = vpop.f32.mrb[0].mxu0
      %v10991 = vadd.f32 0.0, %v10990
      %v10992 = vpop.f32.mrb[0].mxu0
      %v10993 = vpop.f32.mrb[0].mxu0
      %v10994 = vadd.f32 0.0, %v10993
      %v10995 = vpop.f32.mrb[0].mxu0
      %10996 = vdwg.mxu0
      %10997 = vrot.lane.b32.xlu0 %v906, 40
      %v10998 = vpop.permute.xlu0 %10997
      %10999 = vrot.lane.b32.xlu0 %v907, 40
      %v11000 = vpop.permute.xlu0 %10999
      %11001 = vrot.lane.b32.xlu0 %v908, 40
      %v11002 = vpop.permute.xlu0 %11001
      %11003 = vrot.lane.b32.xlu0 %v909, 40
      %v11004 = vpop.permute.xlu0 %11003
      %v11010 = vsel %vm1799, %v10710, 0
      %v11013 = vsel %vm1799, %v10711, 0
      %v11016 = vsel %vm1799, %v10712, 0
      %v11019 = vsel %vm1799, %v10713, 0
      %11021 = vmatprep.subr.bf16.mxu0 0
      %11022 = vmatpush1.bf16.msra.mxu0 %v10998
      %11023 = vmatprep.subr.bf16.mxu0 0
      %11024 = vmatpush1.bf16.msra.mxu0 %v11000
      %11025 = vmatprep.subr.bf16.mxu0 0
      %11026 = vmatpush1.bf16.msra.mxu0 %v11002
      %11027 = vmatprep.subr.bf16.mxu0 0
      %11028 = vmatpush1.bf16.msra.mxu0 %v11004
      %11029 = vmatprep.subr.bf16.mxu0 0
      %11030 = vmatpush1.bf16.msra.mxu0 0
      %11031 = vmatprep.subr.bf16.mxu0 0
      %11032 = vmatpush1.bf16.msra.mxu0 0
      %11033 = vmatprep.subr.bf16.mxu0 0
      %11034 = vmatpush1.bf16.msra.mxu0 0
      %11035 = vmatprep.subr.bf16.mxu0 0
      %11036 = vmatpush1.bf16.msra.mxu0 0
      %11037 = vmatprep.subr.bf16.mxu0 0
      %11038 = vmatpush1.bf16.msra.mxu0 0
      %11039 = vmatprep.subr.bf16.mxu0 0
      %11040 = vmatpush1.bf16.msra.mxu0 0
      %11041 = vmatprep.subr.bf16.mxu0 0
      %11042 = vmatpush1.bf16.msra.mxu0 0
      %11043 = vmatprep.subr.bf16.mxu0 0
      %11044 = vmatpush1.bf16.msra.mxu0 0
      %11045 = vmatprep.subr.bf16.mxu0 0
      %11046 = vmatpush1.bf16.msra.mxu0 0
      %11047 = vmatprep.subr.bf16.mxu0 0
      %11048 = vmatpush1.bf16.msra.mxu0 0
      %11049 = vmatprep.subr.bf16.mxu0 0
      %11050 = vmatpush1.bf16.msra.mxu0 0
      %11051 = vmatprep.subr.bf16.mxu0 0
      %11052 = vmatpush1.bf16.msra.mxu0 0
      %11053 = vmatprep.mubr.bf16.mxu0 0
      %11054 = vmatmul.mubr.bf16.gmra.mrb[0].mxu0 %v11010
      %v11055 = vpop.f32.mrb[0].mxu0
      %v11056 = vadd.f32 0.0, %v11055
      %v11057 = vpop.f32.mrb[0].mxu0
      %v11058 = vpop.f32.mrb[0].mxu0
      %v11059 = vadd.f32 0.0, %v11058
      %v11060 = vpop.f32.mrb[0].mxu0
      %11061 = vmatprep.mubr.bf16.mxu0 0
      %11062 = vmatmul.mubr.bf16.gmra.mrb[0].mxu0 %v11013
      %v11063 = vpop.f32.mrb[0].mxu0
      %v11064 = vadd.f32 0.0, %v11063
      %v11065 = vpop.f32.mrb[0].mxu0
      %v11066 = vpop.f32.mrb[0].mxu0
      %v11067 = vadd.f32 0.0, %v11066
      %v11068 = vpop.f32.mrb[0].mxu0
      %11069 = vmatprep.mubr.bf16.mxu0 0
      %11070 = vmatmul.mubr.bf16.gmra.mrb[0].mxu0 %v11016
      %v11071 = vpop.f32.mrb[0].mxu0
      %v11072 = vadd.f32 0.0, %v11071
      %v11073 = vpop.f32.mrb[0].mxu0
      %v11074 = vpop.f32.mrb[0].mxu0
      %v11075 = vadd.f32 0.0, %v11074
      %v11076 = vpop.f32.mrb[0].mxu0
      %11077 = vmatprep.mubr.bf16.mxu0 0
      %11078 = vmatmul.mubr.bf16.gmra.mrb[0].mxu0 %v11019
      %v11079 = vpop.f32.mrb[0].mxu0
      %v11080 = vadd.f32 0.0, %v11079
      %v11081 = vpop.f32.mrb[0].mxu0
      %v11082 = vpop.f32.mrb[0].mxu0
      %v11083 = vadd.f32 0.0, %v11082
      %v11084 = vpop.f32.mrb[0].mxu0
      %11085 = vdwg.mxu0
      %11086 = vrot.lane.b32.xlu0 %v910, 40
      %v11087 = vpop.permute.xlu0 %11086
      %11088 = vrot.lane.b32.xlu0 %v911, 40
      %v11089 = vpop.permute.xlu0 %11088
      %11090 = vrot.lane.b32.xlu0 %v912, 40
      %v11091 = vpop.permute.xlu0 %11090
      %11092 = vrot.lane.b32.xlu0 %v913, 40
      %v11093 = vpop.permute.xlu0 %11092
      %v11099 = vsel %vm1799, %v10714, 0
      %v11102 = vsel %vm1799, %v10715, 0
      %v11105 = vsel %vm1799, %v10716, 0
      %v11108 = vsel %vm1799, %v10717, 0
      %11110 = vmatprep.subr.bf16.mxu0 0
      %11111 = vmatpush1.bf16.msra.mxu0 %v11087
      %11112 = vmatprep.subr.bf16.mxu0 0
      %11113 = vmatpush1.bf16.msra.mxu0 %v11089
      %11114 = vmatprep.subr.bf16.mxu0 0
      %11115 = vmatpush1.bf16.msra.mxu0 %v11091
      %11116 = vmatprep.subr.bf16.mxu0 0
      %11117 = vmatpush1.bf16.msra.mxu0 %v11093
      %11118 = vmatprep.subr.bf16.mxu0 0
      %11119 = vmatpush1.bf16.msra.mxu0 0
      %11120 = vmatprep.subr.bf16.mxu0 0
      %11121 = vmatpush1.bf16.msra.mxu0 0
      %11122 = vmatprep.subr.bf16.mxu0 0
      %11123 = vmatpush1.bf16.msra.mxu0 0
      %11124 = vmatprep.subr.bf16.mxu0 0
      %11125 = vmatpush1.bf16.msra.mxu0 0
      %11126 = vmatprep.subr.bf16.mxu0 0
      %11127 = vmatpush1.bf16.msra.mxu0 0
      %11128 = vmatprep.subr.bf16.mxu0 0
      %11129 = vmatpush1.bf16.msra.mxu0 0
      %11130 = vmatprep.subr.bf16.mxu0 0
      %11131 = vmatpush1.bf16.msra.mxu0 0
      %11132 = vmatprep.subr.bf16.mxu0 0
      %11133 = vmatpush1.bf16.msra.mxu0 0
      %11134 = vmatprep.subr.bf16.mxu0 0
      %11135 = vmatpush1.bf16.msra.mxu0 0
      %11136 = vmatprep.subr.bf16.mxu0 0
      %11137 = vmatpush1.bf16.msra.mxu0 0
      %11138 = vmatprep.subr.bf16.mxu0 0
      %11139 = vmatpush1.bf16.msra.mxu0 0
      %11140 = vmatprep.subr.bf16.mxu0 0
      %11141 = vmatpush1.bf16.msra.mxu0 0
      %11142 = vmatprep.mubr.bf16.mxu0 0
      %11143 = vmatmul.mubr.bf16.gmra.mrb[0].mxu0 %v11099
      %v11144 = vpop.f32.mrb[0].mxu0
      %v11145 = vadd.f32 0.0, %v11144
      %v11146 = vpop.f32.mrb[0].mxu0
      %v11147 = vpop.f32.mrb[0].mxu0
      %v11148 = vadd.f32 0.0, %v11147
      %v11149 = vpop.f32.mrb[0].mxu0
      %11150 = vmatprep.mubr.bf16.mxu0 0
      %11151 = vmatmul.mubr.bf16.gmra.mrb[0].mxu0 %v11102
      %v11152 = vpop.f32.mrb[0].mxu0
      %v11153 = vadd.f32 0.0, %v11152
      %v11154 = vpop.f32.mrb[0].mxu0
      %v11155 = vpop.f32.mrb[0].mxu0
      %v11156 = vadd.f32 0.0, %v11155
      %v11157 = vpop.f32.mrb[0].mxu0
      %11158 = vmatprep.mubr.bf16.mxu0 0
      %11159 = vmatmul.mubr.bf16.gmra.mrb[0].mxu0 %v11105
      %v11160 = vpop.f32.mrb[0].mxu0
      %v11161 = vadd.f32 0.0, %v11160
      %v11162 = vpop.f32.mrb[0].mxu0
      %v11163 = vpop.f32.mrb[0].mxu0
      %v11164 = vadd.f32 0.0, %v11163
      %v11165 = vpop.f32.mrb[0].mxu0
      %11166 = vmatprep.mubr.bf16.mxu0 0
      %11167 = vmatmul.mubr.bf16.gmra.mrb[0].mxu0 %v11108
      %v11168 = vpop.f32.mrb[0].mxu0
      %v11169 = vadd.f32 0.0, %v11168
      %v11170 = vpop.f32.mrb[0].mxu0
      %v11171 = vpop.f32.mrb[0].mxu0
      %v11172 = vadd.f32 0.0, %v11171
      %v11173 = vpop.f32.mrb[0].mxu0
      %11174 = vdwg.mxu0
      %11175 = vrot.lane.b32.xlu0 %v914, 40
      %v11176 = vpop.permute.xlu0 %11175
      %11177 = vrot.lane.b32.xlu0 %v915, 40
      %v11178 = vpop.permute.xlu0 %11177
      %11179 = vrot.lane.b32.xlu0 %v916, 40
      %v11180 = vpop.permute.xlu0 %11179
      %11181 = vrot.lane.b32.xlu0 %v917, 40
      %v11182 = vpop.permute.xlu0 %11181
      %v11188 = vsel %vm1799, %v10718, 0
      %v11191 = vsel %vm1799, %v10719, 0
      %v11194 = vsel %vm1799, %v10720, 0
      %v11197 = vsel %vm1799, %v10721, 0
      %11199 = vmatprep.subr.bf16.mxu0 0
      %11200 = vmatpush1.bf16.msra.mxu0 %v11176
      %11201 = vmatprep.subr.bf16.mxu0 0
      %11202 = vmatpush1.bf16.msra.mxu0 %v11178
      %11203 = vmatprep.subr.bf16.mxu0 0
      %11204 = vmatpush1.bf16.msra.mxu0 %v11180
      %11205 = vmatprep.subr.bf16.mxu0 0
      %11206 = vmatpush1.bf16.msra.mxu0 %v11182
      %11207 = vmatprep.subr.bf16.mxu0 0
      %11208 = vmatpush1.bf16.msra.mxu0 0
      %11209 = vmatprep.subr.bf16.mxu0 0
      %11210 = vmatpush1.bf16.msra.mxu0 0
      %11211 = vmatprep.subr.bf16.mxu0 0
      %11212 = vmatpush1.bf16.msra.mxu0 0
      %11213 = vmatprep.subr.bf16.mxu0 0
      %11214 = vmatpush1.bf16.msra.mxu0 0
      %11215 = vmatprep.subr.bf16.mxu0 0
      %11216 = vmatpush1.bf16.msra.mxu0 0
      %11217 = vmatprep.subr.bf16.mxu0 0
      %11218 = vmatpush1.bf16.msra.mxu0 0
      %11219 = vmatprep.subr.bf16.mxu0 0
      %11220 = vmatpush1.bf16.msra.mxu0 0
      %11221 = vmatprep.subr.bf16.mxu0 0
      %11222 = vmatpush1.bf16.msra.mxu0 0
      %11223 = vmatprep.subr.bf16.mxu0 0
      %11224 = vmatpush1.bf16.msra.mxu0 0
      %11225 = vmatprep.subr.bf16.mxu0 0
      %11226 = vmatpush1.bf16.msra.mxu0 0
      %11227 = vmatprep.subr.bf16.mxu0 0
      %11228 = vmatpush1.bf16.msra.mxu0 0
      %11229 = vmatprep.subr.bf16.mxu0 0
      %11230 = vmatpush1.bf16.msra.mxu0 0
      %11231 = vmatprep.mubr.bf16.mxu0 0
      %11232 = vmatmul.mubr.bf16.gmra.mrb[0].mxu0 %v11188
      %v11233 = vpop.f32.mrb[0].mxu0
      %v11234 = vadd.f32 0.0, %v11233
      %v11235 = vpop.f32.mrb[0].mxu0
      %v11236 = vpop.f32.mrb[0].mxu0
      %v11237 = vadd.f32 0.0, %v11236
      %v11238 = vpop.f32.mrb[0].mxu0
      %11239 = vmatprep.mubr.bf16.mxu0 0
      %11240 = vmatmul.mubr.bf16.gmra.mrb[0].mxu0 %v11191
      %v11241 = vpop.f32.mrb[0].mxu0
      %v11242 = vadd.f32 0.0, %v11241
      %v11243 = vpop.f32.mrb[0].mxu0
      %v11244 = vpop.f32.mrb[0].mxu0
      %v11245 = vadd.f32 0.0, %v11244
      %v11246 = vpop.f32.mrb[0].mxu0
      %11247 = vmatprep.mubr.bf16.mxu0 0
      %11248 = vmatmul.mubr.bf16.gmra.mrb[0].mxu0 %v11194
      %v11249 = vpop.f32.mrb[0].mxu0
      %v11250 = vadd.f32 0.0, %v11249
      %v11251 = vpop.f32.mrb[0].mxu0
      %v11252 = vpop.f32.mrb[0].mxu0
      %v11253 = vadd.f32 0.0, %v11252
      %v11254 = vpop.f32.mrb[0].mxu0
      %11255 = vmatprep.mubr.bf16.mxu0 0
      %11256 = vmatmul.mubr.bf16.gmra.mrb[0].mxu0 %v11197
      %v11257 = vpop.f32.mrb[0].mxu0
      %v11258 = vadd.f32 0.0, %v11257
      %v11259 = vpop.f32.mrb[0].mxu0
      %v11260 = vpop.f32.mrb[0].mxu0
      %v11261 = vadd.f32 0.0, %v11260
      %v11262 = vpop.f32.mrb[0].mxu0
      %11263 = vdwg.mxu0
      %11264 = vrot.lane.b32.xlu0 %v918, 40
      %v11265 = vpop.permute.xlu0 %11264
      %11266 = vrot.lane.b32.xlu0 %v919, 40
      %v11267 = vpop.permute.xlu0 %11266
      %11268 = vrot.lane.b32.xlu0 %v920, 40
      %v11269 = vpop.permute.xlu0 %11268
      %11270 = vrot.lane.b32.xlu0 %v921, 40
      %v11271 = vpop.permute.xlu0 %11270
      %v11277 = vsel %vm1799, %v10722, 0
      %v11280 = vsel %vm1799, %v10723, 0
      %v11283 = vsel %vm1799, %v10724, 0
      %v11286 = vsel %vm1799, %v10725, 0
      %11288 = vmatprep.subr.bf16.mxu0 0
      %11289 = vmatpush1.bf16.msra.mxu0 %v11265
      %11290 = vmatprep.subr.bf16.mxu0 0
      %11291 = vmatpush1.bf16.msra.mxu0 %v11267
      %11292 = vmatprep.subr.bf16.mxu0 0
      %11293 = vmatpush1.bf16.msra.mxu0 %v11269
      %11294 = vmatprep.subr.bf16.mxu0 0
      %11295 = vmatpush1.bf16.msra.mxu0 %v11271
      %11296 = vmatprep.subr.bf16.mxu0 0
      %11297 = vmatpush1.bf16.msra.mxu0 0
      %11298 = vmatprep.subr.bf16.mxu0 0
      %11299 = vmatpush1.bf16.msra.mxu0 0
      %11300 = vmatprep.subr.bf16.mxu0 0
      %11301 = vmatpush1.bf16.msra.mxu0 0
      %11302 = vmatprep.subr.bf16.mxu0 0
      %11303 = vmatpush1.bf16.msra.mxu0 0
      %11304 = vmatprep.subr.bf16.mxu0 0
      %11305 = vmatpush1.bf16.msra.mxu0 0
      %11306 = vmatprep.subr.bf16.mxu0 0
      %11307 = vmatpush1.bf16.msra.mxu0 0
      %11308 = vmatprep.subr.bf16.mxu0 0
      %11309 = vmatpush1.bf16.msra.mxu0 0
      %11310 = vmatprep.subr.bf16.mxu0 0
      %11311 = vmatpush1.bf16.msra.mxu0 0
      %11312 = vmatprep.subr.bf16.mxu0 0
      %11313 = vmatpush1.bf16.msra.mxu0 0
      %11314 = vmatprep.subr.bf16.mxu0 0
      %11315 = vmatpush1.bf16.msra.mxu0 0
      %11316 = vmatprep.subr.bf16.mxu0 0
      %11317 = vmatpush1.bf16.msra.mxu0 0
      %11318 = vmatprep.subr.bf16.mxu0 0
      %11319 = vmatpush1.bf16.msra.mxu0 0
      %11320 = vmatprep.mubr.bf16.mxu0 0
      %11321 = vmatmul.mubr.bf16.gmra.mrb[0].mxu0 %v11277
      %v11322 = vpop.f32.mrb[0].mxu0
      %v11323 = vadd.f32 0.0, %v11322
      %v11324 = vpop.f32.mrb[0].mxu0
      %v11325 = vpop.f32.mrb[0].mxu0
      %v11326 = vadd.f32 0.0, %v11325
      %v11327 = vpop.f32.mrb[0].mxu0
      %11328 = vmatprep.mubr.bf16.mxu0 0
      %11329 = vmatmul.mubr.bf16.gmra.mrb[0].mxu0 %v11280
      %v11330 = vpop.f32.mrb[0].mxu0
      %v11331 = vadd.f32 0.0, %v11330
      %v11332 = vpop.f32.mrb[0].mxu0
      %v11333 = vpop.f32.mrb[0].mxu0
      %v11334 = vadd.f32 0.0, %v11333
      %v11335 = vpop.f32.mrb[0].mxu0
      %11336 = vmatprep.mubr.bf16.mxu0 0
      %11337 = vmatmul.mubr.bf16.gmra.mrb[0].mxu0 %v11283
      %v11338 = vpop.f32.mrb[0].mxu0
      %v11339 = vadd.f32 0.0, %v11338
      %v11340 = vpop.f32.mrb[0].mxu0
      %v11341 = vpop.f32.mrb[0].mxu0
      %v11342 = vadd.f32 0.0, %v11341
      %v11343 = vpop.f32.mrb[0].mxu0
      %11344 = vmatprep.mubr.bf16.mxu0 0
      %11345 = vmatmul.mubr.bf16.gmra.mrb[0].mxu0 %v11286
      %v11346 = vpop.f32.mrb[0].mxu0
      %v11347 = vadd.f32 0.0, %v11346
      %v11348 = vpop.f32.mrb[0].mxu0
      %v11349 = vpop.f32.mrb[0].mxu0
      %v11350 = vadd.f32 0.0, %v11349
      %v11351 = vpop.f32.mrb[0].mxu0
      %11352 = vdwg.mxu0
      %11353 = vrot.lane.b32.xlu0 %v922, 40
      %v11354 = vpop.permute.xlu0 %11353
      %11355 = vrot.lane.b32.xlu0 %v923, 40
      %v11356 = vpop.permute.xlu0 %11355
      %11357 = vrot.lane.b32.xlu0 %v924, 40
      %v11358 = vpop.permute.xlu0 %11357
      %11359 = vrot.lane.b32.xlu0 %v925, 40
      %v11360 = vpop.permute.xlu0 %11359
      %v11366 = vsel %vm1799, %v10726, 0
      %v11369 = vsel %vm1799, %v10727, 0
      %v11372 = vsel %vm1799, %v10728, 0
      %v11375 = vsel %vm1799, %v10729, 0
      %11377 = vmatprep.subr.bf16.mxu0 0
      %11378 = vmatpush1.bf16.msra.mxu0 %v11354
      %11379 = vmatprep.subr.bf16.mxu0 0
      %11380 = vmatpush1.bf16.msra.mxu0 %v11356
      %11381 = vmatprep.subr.bf16.mxu0 0
      %11382 = vmatpush1.bf16.msra.mxu0 %v11358
      %11383 = vmatprep.subr.bf16.mxu0 0
      %11384 = vmatpush1.bf16.msra.mxu0 %v11360
      %11385 = vmatprep.subr.bf16.mxu0 0
      %11386 = vmatpush1.bf16.msra.mxu0 0
      %11387 = vmatprep.subr.bf16.mxu0 0
      %11388 = vmatpush1.bf16.msra.mxu0 0
      %11389 = vmatprep.subr.bf16.mxu0 0
      %11390 = vmatpush1.bf16.msra.mxu0 0
      %11391 = vmatprep.subr.bf16.mxu0 0
      %11392 = vmatpush1.bf16.msra.mxu0 0
      %11393 = vmatprep.subr.bf16.mxu0 0
      %11394 = vmatpush1.bf16.msra.mxu0 0
      %11395 = vmatprep.subr.bf16.mxu0 0
      %11396 = vmatpush1.bf16.msra.mxu0 0
      %11397 = vmatprep.subr.bf16.mxu0 0
      %11398 = vmatpush1.bf16.msra.mxu0 0
      %11399 = vmatprep.subr.bf16.mxu0 0
      %11400 = vmatpush1.bf16.msra.mxu0 0
      %11401 = vmatprep.subr.bf16.mxu0 0
      %11402 = vmatpush1.bf16.msra.mxu0 0
      %11403 = vmatprep.subr.bf16.mxu0 0
      %11404 = vmatpush1.bf16.msra.mxu0 0
      %11405 = vmatprep.subr.bf16.mxu0 0
      %11406 = vmatpush1.bf16.msra.mxu0 0
      %11407 = vmatprep.subr.bf16.mxu0 0
      %11408 = vmatpush1.bf16.msra.mxu0 0
      %11409 = vmatprep.mubr.bf16.mxu0 0
      %11410 = vmatmul.mubr.bf16.gmra.mrb[0].mxu0 %v11366
      %v11411 = vpop.f32.mrb[0].mxu0
      %v11412 = vadd.f32 0.0, %v11411
      %v11413 = vpop.f32.mrb[0].mxu0
      %v11414 = vpop.f32.mrb[0].mxu0
      %v11415 = vadd.f32 0.0, %v11414
      %v11416 = vpop.f32.mrb[0].mxu0
      %11417 = vmatprep.mubr.bf16.mxu0 0
      %11418 = vmatmul.mubr.bf16.gmra.mrb[0].mxu0 %v11369
      %v11419 = vpop.f32.mrb[0].mxu0
      %v11420 = vadd.f32 0.0, %v11419
      %v11421 = vpop.f32.mrb[0].mxu0
      %v11422 = vpop.f32.mrb[0].mxu0
      %v11423 = vadd.f32 0.0, %v11422
      %v11424 = vpop.f32.mrb[0].mxu0
      %11425 = vmatprep.mubr.bf16.mxu0 0
      %11426 = vmatmul.mubr.bf16.gmra.mrb[0].mxu0 %v11372
      %v11427 = vpop.f32.mrb[0].mxu0
      %v11428 = vadd.f32 0.0, %v11427
      %v11429 = vpop.f32.mrb[0].mxu0
      %v11430 = vpop.f32.mrb[0].mxu0
      %v11431 = vadd.f32 0.0, %v11430
      %v11432 = vpop.f32.mrb[0].mxu0
      %11433 = vmatprep.mubr.bf16.mxu0 0
      %11434 = vmatmul.mubr.bf16.gmra.mrb[0].mxu0 %v11375
      %v11435 = vpop.f32.mrb[0].mxu0
      %v11436 = vadd.f32 0.0, %v11435
      %v11437 = vpop.f32.mrb[0].mxu0
      %v11438 = vpop.f32.mrb[0].mxu0
      %v11439 = vadd.f32 0.0, %v11438
      %v11440 = vpop.f32.mrb[0].mxu0
      %11441 = vdwg.mxu0
      %v11442 = vpack.c.bf16 %v10792, %v10789
      %v11443 = vpack.c.bf16 %v10800, %v10797
      %v11444 = vpack.c.bf16 %v10808, %v10805
      %v11445 = vpack.c.bf16 %v10816, %v10813
      %v11446 = vpack.c.bf16 %v10881, %v10878
      %v11447 = vpack.c.bf16 %v10889, %v10886
      %v11448 = vpack.c.bf16 %v10897, %v10894
      %v11449 = vpack.c.bf16 %v10905, %v10902
      %v11450 = vpack.c.bf16 %v10970, %v10967
      %v11451 = vpack.c.bf16 %v10978, %v10975
      %v11452 = vpack.c.bf16 %v10986, %v10983
      %v11453 = vpack.c.bf16 %v10994, %v10991
      %v11454 = vpack.c.bf16 %v11059, %v11056
      %v11455 = vpack.c.bf16 %v11067, %v11064
      %v11456 = vpack.c.bf16 %v11075, %v11072
      %v11457 = vpack.c.bf16 %v11083, %v11080
      %v11458 = vpack.c.bf16 %v11148, %v11145
      %v11459 = vpack.c.bf16 %v11156, %v11153
      %v11460 = vpack.c.bf16 %v11164, %v11161
      %v11461 = vpack.c.bf16 %v11172, %v11169
      %v11462 = vpack.c.bf16 %v11237, %v11234
      %v11463 = vpack.c.bf16 %v11245, %v11242
      %v11464 = vpack.c.bf16 %v11253, %v11250
      %v11465 = vpack.c.bf16 %v11261, %v11258
      %v11466 = vpack.c.bf16 %v11326, %v11323
      %v11467 = vpack.c.bf16 %v11334, %v11331
      %v11468 = vpack.c.bf16 %v11342, %v11339
      %v11469 = vpack.c.bf16 %v11350, %v11347
      %v11470 = vpack.c.bf16 %v11415, %v11412
      %v11471 = vpack.c.bf16 %v11423, %v11420
      %v11472 = vpack.c.bf16 %v11431, %v11428
      %v11473 = vpack.c.bf16 %v11439, %v11436
      %s11474 = scalar_lea.vmem %s4, 12
      %v11475 = vld [vmem:[%s11474] sm:$0xf]
      %v11477 = vsel %vm1002, %v11442, 0
      %v11480 = vsel %vm1002, %v11443, 0
      %v11483 = vsel %vm1002, %v11444, 0
      %v11486 = vsel %vm1002, %v11445, 0
      %v11489 = vsel %vm1002, %v11446, 0
      %v11492 = vsel %vm1002, %v11447, 0
      %v11495 = vsel %vm1002, %v11448, 0
      %v11498 = vsel %vm1002, %v11449, 0
      %v11501 = vsel %vm1002, %v11450, 0
      %v11504 = vsel %vm1002, %v11451, 0
      %v11507 = vsel %vm1002, %v11452, 0
      %v11510 = vsel %vm1002, %v11453, 0
      %v11513 = vsel %vm1002, %v11454, 0
      %v11516 = vsel %vm1002, %v11455, 0
      %v11519 = vsel %vm1002, %v11456, 0
      %v11522 = vsel %vm1002, %v11457, 0
      %v11525 = vsel %vm1002, %v11458, 0
      %v11528 = vsel %vm1002, %v11459, 0
      %v11531 = vsel %vm1002, %v11460, 0
      %v11534 = vsel %vm1002, %v11461, 0
      %v11537 = vsel %vm1002, %v11462, 0
      %v11540 = vsel %vm1002, %v11463, 0
      %v11543 = vsel %vm1002, %v11464, 0
      %v11546 = vsel %vm1002, %v11465, 0
      %v11549 = vsel %vm1002, %v11466, 0
      %v11552 = vsel %vm1002, %v11467, 0
      %v11555 = vsel %vm1002, %v11468, 0
      %v11558 = vsel %vm1002, %v11469, 0
      %v11561 = vsel %vm1002, %v11470, 0
      %v11564 = vsel %vm1002, %v11471, 0
      %v11567 = vsel %vm1002, %v11472, 0
      %v11570 = vsel %vm1002, %v11473, 0
      %v11573 = vsel %vm5699, %v11475, 0
      %11575 = vmatprep.subr.bf16.mxu0 0
      %11576 = vmatpush1.bf16.msra.mxu0 %v11573
      %11577 = vmatprep.subr.bf16.mxu0 0
      %11578 = vmatpush1.bf16.msra.mxu0 0
      %11579 = vmatprep.subr.bf16.mxu0 0
      %11580 = vmatpush1.bf16.msra.mxu0 0
      %11581 = vmatprep.subr.bf16.mxu0 0
      %11582 = vmatpush1.bf16.msra.mxu0 0
      %11583 = vmatprep.subr.bf16.mxu0 0
      %11584 = vmatpush1.bf16.msra.mxu0 0
      %11585 = vmatprep.subr.bf16.mxu0 0
      %11586 = vmatpush1.bf16.msra.mxu0 0
      %11587 = vmatprep.subr.bf16.mxu0 0
      %11588 = vmatpush1.bf16.msra.mxu0 0
      %11589 = vmatprep.subr.bf16.mxu0 0
      %11590 = vmatpush1.bf16.msra.mxu0 0
      %11591 = vmatprep.subr.bf16.mxu0 0
      %11592 = vmatpush1.bf16.msra.mxu0 0
      %11593 = vmatprep.subr.bf16.mxu0 0
      %11594 = vmatpush1.bf16.msra.mxu0 0
      %11595 = vmatprep.subr.bf16.mxu0 0
      %11596 = vmatpush1.bf16.msra.mxu0 0
      %11597 = vmatprep.subr.bf16.mxu0 0
      %11598 = vmatpush1.bf16.msra.mxu0 0
      %11599 = vmatprep.subr.bf16.mxu0 0
      %11600 = vmatpush1.bf16.msra.mxu0 0
      %11601 = vmatprep.subr.bf16.mxu0 0
      %11602 = vmatpush1.bf16.msra.mxu0 0
      %11603 = vmatprep.subr.bf16.mxu0 0
      %11604 = vmatpush1.bf16.msra.mxu0 0
      %11605 = vmatprep.subr.bf16.mxu0 0
      %11606 = vmatpush1.bf16.msra.mxu0 0
      %11607 = vmatprep.mubr.bf16.mxu0 0
      %11608 = vmatmul.mubr.bf16.gmra.mrb[0].mxu0 %v11477
      %v11609 = vpop.f32.mrb[0].mxu0
      %v11610 = vadd.f32 0.0, %v11609
      %v11611 = vpop.f32.mrb[0].mxu0
      %v11612 = vpop.f32.mrb[0].mxu0
      %v11613 = vadd.f32 0.0, %v11612
      %v11614 = vpop.f32.mrb[0].mxu0
      %11615 = vmatprep.mubr.bf16.mxu0 0
      %11616 = vmatmul.mubr.bf16.gmra.mrb[0].mxu0 %v11480
      %v11617 = vpop.f32.mrb[0].mxu0
      %v11618 = vadd.f32 0.0, %v11617
      %v11619 = vpop.f32.mrb[0].mxu0
      %v11620 = vpop.f32.mrb[0].mxu0
      %v11621 = vadd.f32 0.0, %v11620
      %v11622 = vpop.f32.mrb[0].mxu0
      %11623 = vmatprep.mubr.bf16.mxu0 0
      %11624 = vmatmul.mubr.bf16.gmra.mrb[0].mxu0 %v11483
      %v11625 = vpop.f32.mrb[0].mxu0
      %v11626 = vadd.f32 0.0, %v11625
      %v11627 = vpop.f32.mrb[0].mxu0
      %v11628 = vpop.f32.mrb[0].mxu0
      %v11629 = vadd.f32 0.0, %v11628
      %v11630 = vpop.f32.mrb[0].mxu0
      %11631 = vmatprep.mubr.bf16.mxu0 0
      %11632 = vmatmul.mubr.bf16.gmra.mrb[0].mxu0 %v11486
      %v11633 = vpop.f32.mrb[0].mxu0
      %v11634 = vadd.f32 0.0, %v11633
      %v11635 = vpop.f32.mrb[0].mxu0
      %v11636 = vpop.f32.mrb[0].mxu0
      %v11637 = vadd.f32 0.0, %v11636
      %v11638 = vpop.f32.mrb[0].mxu0
      %11639 = vmatprep.mubr.bf16.mxu0 0
      %11640 = vmatmul.mubr.bf16.gmra.mrb[0].mxu0 %v11489
      %v11641 = vpop.f32.mrb[0].mxu0
      %v11642 = vadd.f32 0.0, %v11641
      %v11643 = vpop.f32.mrb[0].mxu0
      %v11644 = vpop.f32.mrb[0].mxu0
      %v11645 = vadd.f32 0.0, %v11644
      %v11646 = vpop.f32.mrb[0].mxu0
      %11647 = vmatprep.mubr.bf16.mxu0 0
      %11648 = vmatmul.mubr.bf16.gmra.mrb[0].mxu0 %v11492
      %v11649 = vpop.f32.mrb[0].mxu0
      %v11650 = vadd.f32 0.0, %v11649
      %v11651 = vpop.f32.mrb[0].mxu0
      %v11652 = vpop.f32.mrb[0].mxu0
      %v11653 = vadd.f32 0.0, %v11652
      %v11654 = vpop.f32.mrb[0].mxu0
      %11655 = vmatprep.mubr.bf16.mxu0 0
      %11656 = vmatmul.mubr.bf16.gmra.mrb[0].mxu0 %v11495
      %v11657 = vpop.f32.mrb[0].mxu0
      %v11658 = vadd.f32 0.0, %v11657
      %v11659 = vpop.f32.mrb[0].mxu0
      %v11660 = vpop.f32.mrb[0].mxu0
      %v11661 = vadd.f32 0.0, %v11660
      %v11662 = vpop.f32.mrb[0].mxu0
      %11663 = vmatprep.mubr.bf16.mxu0 0
      %11664 = vmatmul.mubr.bf16.gmra.mrb[0].mxu0 %v11498
      %v11665 = vpop.f32.mrb[0].mxu0
      %v11666 = vadd.f32 0.0, %v11665
      %v11667 = vpop.f32.mrb[0].mxu0
      %v11668 = vpop.f32.mrb[0].mxu0
      %v11669 = vadd.f32 0.0, %v11668
      %v11670 = vpop.f32.mrb[0].mxu0
      %11671 = vmatprep.mubr.bf16.mxu0 0
      %11672 = vmatmul.mubr.bf16.gmra.mrb[0].mxu0 %v11501
      %v11673 = vpop.f32.mrb[0].mxu0
      %v11674 = vadd.f32 0.0, %v11673
      %v11675 = vpop.f32.mrb[0].mxu0
      %v11676 = vpop.f32.mrb[0].mxu0
      %v11677 = vadd.f32 0.0, %v11676
      %v11678 = vpop.f32.mrb[0].mxu0
      %11679 = vmatprep.mubr.bf16.mxu0 0
      %11680 = vmatmul.mubr.bf16.gmra.mrb[0].mxu0 %v11504
      %v11681 = vpop.f32.mrb[0].mxu0
      %v11682 = vadd.f32 0.0, %v11681
      %v11683 = vpop.f32.mrb[0].mxu0
      %v11684 = vpop.f32.mrb[0].mxu0
      %v11685 = vadd.f32 0.0, %v11684
      %v11686 = vpop.f32.mrb[0].mxu0
      %11687 = vmatprep.mubr.bf16.mxu0 0
      %11688 = vmatmul.mubr.bf16.gmra.mrb[0].mxu0 %v11507
      %v11689 = vpop.f32.mrb[0].mxu0
      %v11690 = vadd.f32 0.0, %v11689
      %v11691 = vpop.f32.mrb[0].mxu0
      %v11692 = vpop.f32.mrb[0].mxu0
      %v11693 = vadd.f32 0.0, %v11692
      %v11694 = vpop.f32.mrb[0].mxu0
      %11695 = vmatprep.mubr.bf16.mxu0 0
      %11696 = vmatmul.mubr.bf16.gmra.mrb[0].mxu0 %v11510
      %v11697 = vpop.f32.mrb[0].mxu0
      %v11698 = vadd.f32 0.0, %v11697
      %v11699 = vpop.f32.mrb[0].mxu0
      %v11700 = vpop.f32.mrb[0].mxu0
      %v11701 = vadd.f32 0.0, %v11700
      %v11702 = vpop.f32.mrb[0].mxu0
      %11703 = vmatprep.mubr.bf16.mxu0 0
      %11704 = vmatmul.mubr.bf16.gmra.mrb[0].mxu0 %v11513
      %v11705 = vpop.f32.mrb[0].mxu0
      %v11706 = vadd.f32 0.0, %v11705
      %v11707 = vpop.f32.mrb[0].mxu0
      %v11708 = vpop.f32.mrb[0].mxu0
      %v11709 = vadd.f32 0.0, %v11708
      %v11710 = vpop.f32.mrb[0].mxu0
      %11711 = vmatprep.mubr.bf16.mxu0 0
      %11712 = vmatmul.mubr.bf16.gmra.mrb[0].mxu0 %v11516
      %v11713 = vpop.f32.mrb[0].mxu0
      %v11714 = vadd.f32 0.0, %v11713
      %v11715 = vpop.f32.mrb[0].mxu0
      %v11716 = vpop.f32.mrb[0].mxu0
      %v11717 = vadd.f32 0.0, %v11716
      %v11718 = vpop.f32.mrb[0].mxu0
      %11719 = vmatprep.mubr.bf16.mxu0 0
      %11720 = vmatmul.mubr.bf16.gmra.mrb[0].mxu0 %v11519
      %v11721 = vpop.f32.mrb[0].mxu0
      %v11722 = vadd.f32 0.0, %v11721
      %v11723 = vpop.f32.mrb[0].mxu0
      %v11724 = vpop.f32.mrb[0].mxu0
      %v11725 = vadd.f32 0.0, %v11724
      %v11726 = vpop.f32.mrb[0].mxu0
      %11727 = vmatprep.mubr.bf16.mxu0 0
      %11728 = vmatmul.mubr.bf16.gmra.mrb[0].mxu0 %v11522
      %v11729 = vpop.f32.mrb[0].mxu0
      %v11730 = vadd.f32 0.0, %v11729
      %v11731 = vpop.f32.mrb[0].mxu0
      %v11732 = vpop.f32.mrb[0].mxu0
      %v11733 = vadd.f32 0.0, %v11732
      %v11734 = vpop.f32.mrb[0].mxu0
      %11735 = vmatprep.mubr.bf16.mxu0 0
      %11736 = vmatmul.mubr.bf16.gmra.mrb[0].mxu0 %v11525
      %v11737 = vpop.f32.mrb[0].mxu0
      %v11738 = vadd.f32 0.0, %v11737
      %v11739 = vpop.f32.mrb[0].mxu0
      %v11740 = vpop.f32.mrb[0].mxu0
      %v11741 = vadd.f32 0.0, %v11740
      %v11742 = vpop.f32.mrb[0].mxu0
      %11743 = vmatprep.mubr.bf16.mxu0 0
      %11744 = vmatmul.mubr.bf16.gmra.mrb[0].mxu0 %v11528
      %v11745 = vpop.f32.mrb[0].mxu0
      %v11746 = vadd.f32 0.0, %v11745
      %v11747 = vpop.f32.mrb[0].mxu0
      %v11748 = vpop.f32.mrb[0].mxu0
      %v11749 = vadd.f32 0.0, %v11748
      %v11750 = vpop.f32.mrb[0].mxu0
      %11751 = vmatprep.mubr.bf16.mxu0 0
      %11752 = vmatmul.mubr.bf16.gmra.mrb[0].mxu0 %v11531
      %v11753 = vpop.f32.mrb[0].mxu0
      %v11754 = vadd.f32 0.0, %v11753
      %v11755 = vpop.f32.mrb[0].mxu0
      %v11756 = vpop.f32.mrb[0].mxu0
      %v11757 = vadd.f32 0.0, %v11756
      %v11758 = vpop.f32.mrb[0].mxu0
      %11759 = vmatprep.mubr.bf16.mxu0 0
      %11760 = vmatmul.mubr.bf16.gmra.mrb[0].mxu0 %v11534
      %v11761 = vpop.f32.mrb[0].mxu0
      %v11762 = vadd.f32 0.0, %v11761
      %v11763 = vpop.f32.mrb[0].mxu0
      %v11764 = vpop.f32.mrb[0].mxu0
      %v11765 = vadd.f32 0.0, %v11764
      %v11766 = vpop.f32.mrb[0].mxu0
      %11767 = vmatprep.mubr.bf16.mxu0 0
      %11768 = vmatmul.mubr.bf16.gmra.mrb[0].mxu0 %v11537
      %v11769 = vpop.f32.mrb[0].mxu0
      %v11770 = vadd.f32 0.0, %v11769
      %v11771 = vpop.f32.mrb[0].mxu0
      %v11772 = vpop.f32.mrb[0].mxu0
      %v11773 = vadd.f32 0.0, %v11772
      %v11774 = vpop.f32.mrb[0].mxu0
      %11775 = vmatprep.mubr.bf16.mxu0 0
      %11776 = vmatmul.mubr.bf16.gmra.mrb[0].mxu0 %v11540
      %v11777 = vpop.f32.mrb[0].mxu0
      %v11778 = vadd.f32 0.0, %v11777
      %v11779 = vpop.f32.mrb[0].mxu0
      %v11780 = vpop.f32.mrb[0].mxu0
      %v11781 = vadd.f32 0.0, %v11780
      %v11782 = vpop.f32.mrb[0].mxu0
      %11783 = vmatprep.mubr.bf16.mxu0 0
      %11784 = vmatmul.mubr.bf16.gmra.mrb[0].mxu0 %v11543
      %v11785 = vpop.f32.mrb[0].mxu0
      %v11786 = vadd.f32 0.0, %v11785
      %v11787 = vpop.f32.mrb[0].mxu0
      %v11788 = vpop.f32.mrb[0].mxu0
      %v11789 = vadd.f32 0.0, %v11788
      %v11790 = vpop.f32.mrb[0].mxu0
      %11791 = vmatprep.mubr.bf16.mxu0 0
      %11792 = vmatmul.mubr.bf16.gmra.mrb[0].mxu0 %v11546
      %v11793 = vpop.f32.mrb[0].mxu0
      %v11794 = vadd.f32 0.0, %v11793
      %v11795 = vpop.f32.mrb[0].mxu0
      %v11796 = vpop.f32.mrb[0].mxu0
      %v11797 = vadd.f32 0.0, %v11796
      %v11798 = vpop.f32.mrb[0].mxu0
      %11799 = vmatprep.mubr.bf16.mxu0 0
      %11800 = vmatmul.mubr.bf16.gmra.mrb[0].mxu0 %v11549
      %v11801 = vpop.f32.mrb[0].mxu0
      %v11802 = vadd.f32 0.0, %v11801
      %v11803 = vpop.f32.mrb[0].mxu0
      %v11804 = vpop.f32.mrb[0].mxu0
      %v11805 = vadd.f32 0.0, %v11804
      %v11806 = vpop.f32.mrb[0].mxu0
      %11807 = vmatprep.mubr.bf16.mxu0 0
      %11808 = vmatmul.mubr.bf16.gmra.mrb[0].mxu0 %v11552
      %v11809 = vpop.f32.mrb[0].mxu0
      %v11810 = vadd.f32 0.0, %v11809
      %v11811 = vpop.f32.mrb[0].mxu0
      %v11812 = vpop.f32.mrb[0].mxu0
      %v11813 = vadd.f32 0.0, %v11812
      %v11814 = vpop.f32.mrb[0].mxu0
      %11815 = vmatprep.mubr.bf16.mxu0 0
      %11816 = vmatmul.mubr.bf16.gmra.mrb[0].mxu0 %v11555
      %v11817 = vpop.f32.mrb[0].mxu0
      %v11818 = vadd.f32 0.0, %v11817
      %v11819 = vpop.f32.mrb[0].mxu0
      %v11820 = vpop.f32.mrb[0].mxu0
      %v11821 = vadd.f32 0.0, %v11820
      %v11822 = vpop.f32.mrb[0].mxu0
      %11823 = vmatprep.mubr.bf16.mxu0 0
      %11824 = vmatmul.mubr.bf16.gmra.mrb[0].mxu0 %v11558
      %v11825 = vpop.f32.mrb[0].mxu0
      %v11826 = vadd.f32 0.0, %v11825
      %v11827 = vpop.f32.mrb[0].mxu0
      %v11828 = vpop.f32.mrb[0].mxu0
      %v11829 = vadd.f32 0.0, %v11828
      %v11830 = vpop.f32.mrb[0].mxu0
      %11831 = vmatprep.mubr.bf16.mxu0 0
      %11832 = vmatmul.mubr.bf16.gmra.mrb[0].mxu0 %v11561
      %v11833 = vpop.f32.mrb[0].mxu0
      %v11834 = vadd.f32 0.0, %v11833
      %v11835 = vpop.f32.mrb[0].mxu0
      %v11836 = vpop.f32.mrb[0].mxu0
      %v11837 = vadd.f32 0.0, %v11836
      %v11838 = vpop.f32.mrb[0].mxu0
      %11839 = vmatprep.mubr.bf16.mxu0 0
      %11840 = vmatmul.mubr.bf16.gmra.mrb[0].mxu0 %v11564
      %v11841 = vpop.f32.mrb[0].mxu0
      %v11842 = vadd.f32 0.0, %v11841
      %v11843 = vpop.f32.mrb[0].mxu0
      %v11844 = vpop.f32.mrb[0].mxu0
      %v11845 = vadd.f32 0.0, %v11844
      %v11846 = vpop.f32.mrb[0].mxu0
      %11847 = vmatprep.mubr.bf16.mxu0 0
      %11848 = vmatmul.mubr.bf16.gmra.mrb[0].mxu0 %v11567
      %v11849 = vpop.f32.mrb[0].mxu0
      %v11850 = vadd.f32 0.0, %v11849
      %v11851 = vpop.f32.mrb[0].mxu0
      %v11852 = vpop.f32.mrb[0].mxu0
      %v11853 = vadd.f32 0.0, %v11852
      %v11854 = vpop.f32.mrb[0].mxu0
      %11855 = vmatprep.mubr.bf16.mxu0 0
      %11856 = vmatmul.mubr.bf16.gmra.mrb[0].mxu0 %v11570
      %v11857 = vpop.f32.mrb[0].mxu0
      %v11858 = vadd.f32 0.0, %v11857
      %v11859 = vpop.f32.mrb[0].mxu0
      %v11860 = vpop.f32.mrb[0].mxu0
      %v11861 = vadd.f32 0.0, %v11860
      %v11862 = vpop.f32.mrb[0].mxu0
      %11863 = vdwg.mxu0
      %v11864 = vadd.f32 %v9090, %v11610
      %v11865 = vadd.f32 %v9091, %v11613
      %v11866 = vadd.f32 %v9092, %v11618
      %v11867 = vadd.f32 %v9093, %v11621
      %v11868 = vadd.f32 %v9094, %v11626
      %v11869 = vadd.f32 %v9095, %v11629
      %v11870 = vadd.f32 %v9096, %v11634
      %v11871 = vadd.f32 %v9097, %v11637
      %v11872 = vadd.f32 %v9098, %v11642
      %v11873 = vadd.f32 %v9099, %v11645
      %v11874 = vadd.f32 %v9100, %v11650
      %v11875 = vadd.f32 %v9101, %v11653
      %v11876 = vadd.f32 %v9102, %v11658
      %v11877 = vadd.f32 %v9103, %v11661
      %v11878 = vadd.f32 %v9104, %v11666
      %v11879 = vadd.f32 %v9105, %v11669
      %v11880 = vadd.f32 %v9106, %v11674
      %v11881 = vadd.f32 %v9107, %v11677
      %v11882 = vadd.f32 %v9108, %v11682
      %v11883 = vadd.f32 %v9109, %v11685
      %v11884 = vadd.f32 %v9110, %v11690
      %v11885 = vadd.f32 %v9111, %v11693
      %v11886 = vadd.f32 %v9112, %v11698
      %v11887 = vadd.f32 %v9113, %v11701
      %v11888 = vadd.f32 %v9114, %v11706
      %v11889 = vadd.f32 %v9115, %v11709
      %v11890 = vadd.f32 %v9116, %v11714
      %v11891 = vadd.f32 %v9117, %v11717
      %v11892 = vadd.f32 %v9118, %v11722
      %v11893 = vadd.f32 %v9119, %v11725
      %v11894 = vadd.f32 %v9120, %v11730
      %v11895 = vadd.f32 %v9121, %v11733
      %v11896 = vadd.f32 %v9122, %v11738
      %v11897 = vadd.f32 %v9123, %v11741
      %v11898 = vadd.f32 %v9124, %v11746
      %v11899 = vadd.f32 %v9125, %v11749
      %v11900 = vadd.f32 %v9126, %v11754
      %v11901 = vadd.f32 %v9127, %v11757
      %v11902 = vadd.f32 %v9128, %v11762
      %v11903 = vadd.f32 %v9129, %v11765
      %v11904 = vadd.f32 %v9130, %v11770
      %v11905 = vadd.f32 %v9131, %v11773
      %v11906 = vadd.f32 %v9132, %v11778
      %v11907 = vadd.f32 %v9133, %v11781
      %v11908 = vadd.f32 %v9134, %v11786
      %v11909 = vadd.f32 %v9135, %v11789
      %v11910 = vadd.f32 %v9136, %v11794
      %v11911 = vadd.f32 %v9137, %v11797
      %v11912 = vadd.f32 %v9138, %v11802
      %v11913 = vadd.f32 %v9139, %v11805
      %v11914 = vadd.f32 %v9140, %v11810
      %v11915 = vadd.f32 %v9141, %v11813
      %v11916 = vadd.f32 %v9142, %v11818
      %v11917 = vadd.f32 %v9143, %v11821
      %v11918 = vadd.f32 %v9144, %v11826
      %v11919 = vadd.f32 %v9145, %v11829
      %v11920 = vadd.f32 %v9146, %v11834
      %v11921 = vadd.f32 %v9147, %v11837
      %v11922 = vadd.f32 %v9148, %v11842
      %v11923 = vadd.f32 %v9149, %v11845
      %v11924 = vadd.f32 %v9150, %v11850
      %v11925 = vadd.f32 %v9151, %v11853
      %v11926 = vadd.f32 %v9152, %v11858
      %v11927 = vadd.f32 %v9153, %v11861
      %v11928 = vld [vmem:[%s5] sm:$0x1]
      %v11930 = vlaneseq
      %v11931 = vshrl.u32 %v11930, 7
      %v11932 = vsub.s32 0, %v11931
      %v11933 = vrot.slane %v11928, %v11932
      %v11935 = vadd.f32 %v11864, %v11933
      %v11936 = vadd.f32 %v11865, %v11933
      %v11937 = vadd.f32 %v11866, %v11933
      %v11938 = vadd.f32 %v11867, %v11933
      %v11939 = vadd.f32 %v11868, %v11933
      %v11940 = vadd.f32 %v11869, %v11933
      %v11941 = vadd.f32 %v11870, %v11933
      %v11942 = vadd.f32 %v11871, %v11933
      %v11943 = vadd.f32 %v11872, %v11933
      %v11944 = vadd.f32 %v11873, %v11933
      %v11945 = vadd.f32 %v11874, %v11933
      %v11946 = vadd.f32 %v11875, %v11933
      %v11947 = vadd.f32 %v11876, %v11933
      %v11948 = vadd.f32 %v11877, %v11933
      %v11949 = vadd.f32 %v11878, %v11933
      %v11950 = vadd.f32 %v11879, %v11933
      %v11951 = vadd.f32 %v11880, %v11933
      %v11952 = vadd.f32 %v11881, %v11933
      %v11953 = vadd.f32 %v11882, %v11933
      %v11954 = vadd.f32 %v11883, %v11933
      %v11955 = vadd.f32 %v11884, %v11933
      %v11956 = vadd.f32 %v11885, %v11933
      %v11957 = vadd.f32 %v11886, %v11933
      %v11958 = vadd.f32 %v11887, %v11933
      %v11959 = vadd.f32 %v11888, %v11933
      %v11960 = vadd.f32 %v11889, %v11933
      %v11961 = vadd.f32 %v11890, %v11933
      %v11962 = vadd.f32 %v11891, %v11933
      %v11963 = vadd.f32 %v11892, %v11933
      %v11964 = vadd.f32 %v11893, %v11933
      %v11965 = vadd.f32 %v11894, %v11933
      %v11966 = vadd.f32 %v11895, %v11933
      %v11967 = vadd.f32 %v11896, %v11933
      %v11968 = vadd.f32 %v11897, %v11933
      %v11969 = vadd.f32 %v11898, %v11933
      %v11970 = vadd.f32 %v11899, %v11933
      %v11971 = vadd.f32 %v11900, %v11933
      %v11972 = vadd.f32 %v11901, %v11933
      %v11973 = vadd.f32 %v11902, %v11933
      %v11974 = vadd.f32 %v11903, %v11933
      %v11975 = vadd.f32 %v11904, %v11933
      %v11976 = vadd.f32 %v11905, %v11933
      %v11977 = vadd.f32 %v11906, %v11933
      %v11978 = vadd.f32 %v11907, %v11933
      %v11979 = vadd.f32 %v11908, %v11933
      %v11980 = vadd.f32 %v11909, %v11933
      %v11981 = vadd.f32 %v11910, %v11933
      %v11982 = vadd.f32 %v11911, %v11933
      %v11983 = vadd.f32 %v11912, %v11933
      %v11984 = vadd.f32 %v11913, %v11933
      %v11985 = vadd.f32 %v11914, %v11933
      %v11986 = vadd.f32 %v11915, %v11933
      %v11987 = vadd.f32 %v11916, %v11933
      %v11988 = vadd.f32 %v11917, %v11933
      %v11989 = vadd.f32 %v11918, %v11933
      %v11990 = vadd.f32 %v11919, %v11933
      %v11991 = vadd.f32 %v11920, %v11933
      %v11992 = vadd.f32 %v11921, %v11933
      %v11993 = vadd.f32 %v11922, %v11933
      %v11994 = vadd.f32 %v11923, %v11933
      %v11995 = vadd.f32 %v11924, %v11933
      %v11996 = vadd.f32 %v11925, %v11933
      %v11997 = vadd.f32 %v11926, %v11933
      %v11998 = vadd.f32 %v11927, %v11933
      %v11999 = vpack.c.bf16 %v11936, %v11935
      %v12000 = vpack.c.bf16 %v11938, %v11937
      %v12001 = vpack.c.bf16 %v11940, %v11939
      %v12002 = vpack.c.bf16 %v11942, %v11941
      %v12003 = vpack.c.bf16 %v11944, %v11943
      %v12004 = vpack.c.bf16 %v11946, %v11945
      %v12005 = vpack.c.bf16 %v11948, %v11947
      %v12006 = vpack.c.bf16 %v11950, %v11949
      %v12007 = vpack.c.bf16 %v11952, %v11951
      %v12008 = vpack.c.bf16 %v11954, %v11953
      %v12009 = vpack.c.bf16 %v11956, %v11955
      %v12010 = vpack.c.bf16 %v11958, %v11957
      %v12011 = vpack.c.bf16 %v11960, %v11959
      %v12012 = vpack.c.bf16 %v11962, %v11961
      %v12013 = vpack.c.bf16 %v11964, %v11963
      %v12014 = vpack.c.bf16 %v11966, %v11965
      %v12015 = vpack.c.bf16 %v11968, %v11967
      %v12016 = vpack.c.bf16 %v11970, %v11969
      %v12017 = vpack.c.bf16 %v11972, %v11971
      %v12018 = vpack.c.bf16 %v11974, %v11973
      %v12019 = vpack.c.bf16 %v11976, %v11975
      %v12020 = vpack.c.bf16 %v11978, %v11977
      %v12021 = vpack.c.bf16 %v11980, %v11979
      %v12022 = vpack.c.bf16 %v11982, %v11981
      %v12023 = vpack.c.bf16 %v11984, %v11983
      %v12024 = vpack.c.bf16 %v11986, %v11985
      %v12025 = vpack.c.bf16 %v11988, %v11987
      %v12026 = vpack.c.bf16 %v11990, %v11989
      %v12027 = vpack.c.bf16 %v11992, %v11991
      %v12028 = vpack.c.bf16 %v11994, %v11993
      %v12029 = vpack.c.bf16 %v11996, %v11995
      %v12030 = vpack.c.bf16 %v11998, %v11997
      %v12063 = vunpack.c.l.b16 %v11999
      %v12064 = vunpack.c.h.b16 %v11999
      %v12065 = vunpack.c.l.b16 %v12000
      %v12066 = vunpack.c.h.b16 %v12000
      %v12067 = vunpack.c.l.b16 %v12001
      %v12068 = vunpack.c.h.b16 %v12001
      %v12069 = vunpack.c.l.b16 %v12002
      %v12070 = vunpack.c.h.b16 %v12002
      %v12071 = vunpack.c.l.b16 %v12003
      %v12072 = vunpack.c.h.b16 %v12003
      %v12073 = vunpack.c.l.b16 %v12004
      %v12074 = vunpack.c.h.b16 %v12004
      %v12075 = vunpack.c.l.b16 %v12005
      %v12076 = vunpack.c.h.b16 %v12005
      %v12077 = vunpack.c.l.b16 %v12006
      %v12078 = vunpack.c.h.b16 %v12006
      %v12079 = vunpack.c.l.b16 %v12007
      %v12080 = vunpack.c.h.b16 %v12007
      %v12081 = vunpack.c.l.b16 %v12008
      %v12082 = vunpack.c.h.b16 %v12008
      %v12083 = vunpack.c.l.b16 %v12009
      %v12084 = vunpack.c.h.b16 %v12009
      %v12085 = vunpack.c.l.b16 %v12010
      %v12086 = vunpack.c.h.b16 %v12010
      %v12087 = vunpack.c.l.b16 %v12011
      %v12088 = vunpack.c.h.b16 %v12011
      %v12089 = vunpack.c.l.b16 %v12012
      %v12090 = vunpack.c.h.b16 %v12012
      %v12091 = vunpack.c.l.b16 %v12013
      %v12092 = vunpack.c.h.b16 %v12013
      %v12093 = vunpack.c.l.b16 %v12014
      %v12094 = vunpack.c.h.b16 %v12014
      %v12095 = vunpack.c.l.b16 %v12015
      %v12096 = vunpack.c.h.b16 %v12015
      %v12097 = vunpack.c.l.b16 %v12016
      %v12098 = vunpack.c.h.b16 %v12016
      %v12099 = vunpack.c.l.b16 %v12017
      %v12100 = vunpack.c.h.b16 %v12017
      %v12101 = vunpack.c.l.b16 %v12018
      %v12102 = vunpack.c.h.b16 %v12018
      %v12103 = vunpack.c.l.b16 %v12019
      %v12104 = vunpack.c.h.b16 %v12019
      %v12105 = vunpack.c.l.b16 %v12020
      %v12106 = vunpack.c.h.b16 %v12020
      %v12107 = vunpack.c.l.b16 %v12021
      %v12108 = vunpack.c.h.b16 %v12021
      %v12109 = vunpack.c.l.b16 %v12022
      %v12110 = vunpack.c.h.b16 %v12022
      %v12111 = vunpack.c.l.b16 %v12023
      %v12112 = vunpack.c.h.b16 %v12023
      %v12113 = vunpack.c.l.b16 %v12024
      %v12114 = vunpack.c.h.b16 %v12024
      %v12115 = vunpack.c.l.b16 %v12025
      %v12116 = vunpack.c.h.b16 %v12025
      %v12117 = vunpack.c.l.b16 %v12026
      %v12118 = vunpack.c.h.b16 %v12026
      %v12119 = vunpack.c.l.b16 %v12027
      %v12120 = vunpack.c.h.b16 %v12027
      %v12121 = vunpack.c.l.b16 %v12028
      %v12122 = vunpack.c.h.b16 %v12028
      %v12123 = vunpack.c.l.b16 %v12029
      %v12124 = vunpack.c.h.b16 %v12029
      %v12125 = vunpack.c.l.b16 %v12030
      %v12126 = vunpack.c.h.b16 %v12030
      %v12127 = vpack.c.b16 %v12063, %v12063
      %v12128 = vpack.c.b16 %v12064, %v12064
      %v12129 = vpack.c.b16 %v12065, %v12065
      %v12130 = vpack.c.b16 %v12066, %v12066
      %v12131 = vpack.c.b16 %v12067, %v12067
      %v12132 = vpack.c.b16 %v12068, %v12068
      %v12133 = vpack.c.b16 %v12069, %v12069
      %v12134 = vpack.c.b16 %v12070, %v12070
      %v12135 = vpack.c.b16 %v12071, %v12071
      %v12136 = vpack.c.b16 %v12072, %v12072
      %v12137 = vpack.c.b16 %v12073, %v12073
      %v12138 = vpack.c.b16 %v12074, %v12074
      %v12139 = vpack.c.b16 %v12075, %v12075
      %v12140 = vpack.c.b16 %v12076, %v12076
      %v12141 = vpack.c.b16 %v12077, %v12077
      %v12142 = vpack.c.b16 %v12078, %v12078
      %v12143 = vpack.c.b16 %v12079, %v12079
      %v12144 = vpack.c.b16 %v12080, %v12080
      %v12145 = vpack.c.b16 %v12081, %v12081
      %v12146 = vpack.c.b16 %v12082, %v12082
      %v12147 = vpack.c.b16 %v12083, %v12083
      %v12148 = vpack.c.b16 %v12084, %v12084
      %v12149 = vpack.c.b16 %v12085, %v12085
      %v12150 = vpack.c.b16 %v12086, %v12086
      %v12151 = vpack.c.b16 %v12087, %v12087
      %v12152 = vpack.c.b16 %v12088, %v12088
      %v12153 = vpack.c.b16 %v12089, %v12089
      %v12154 = vpack.c.b16 %v12090, %v12090
      %v12155 = vpack.c.b16 %v12091, %v12091
      %v12156 = vpack.c.b16 %v12092, %v12092
      %v12157 = vpack.c.b16 %v12093, %v12093
      %v12158 = vpack.c.b16 %v12094, %v12094
      %v12159 = vpack.c.b16 %v12095, %v12095
      %v12160 = vpack.c.b16 %v12096, %v12096
      %v12161 = vpack.c.b16 %v12097, %v12097
      %v12162 = vpack.c.b16 %v12098, %v12098
      %v12163 = vpack.c.b16 %v12099, %v12099
      %v12164 = vpack.c.b16 %v12100, %v12100
      %v12165 = vpack.c.b16 %v12101, %v12101
      %v12166 = vpack.c.b16 %v12102, %v12102
      %v12167 = vpack.c.b16 %v12103, %v12103
      %v12168 = vpack.c.b16 %v12104, %v12104
      %v12169 = vpack.c.b16 %v12105, %v12105
      %v12170 = vpack.c.b16 %v12106, %v12106
      %v12171 = vpack.c.b16 %v12107, %v12107
      %v12172 = vpack.c.b16 %v12108, %v12108
      %v12173 = vpack.c.b16 %v12109, %v12109
      %v12174 = vpack.c.b16 %v12110, %v12110
      %v12175 = vpack.c.b16 %v12111, %v12111
      %v12176 = vpack.c.b16 %v12112, %v12112
      %v12177 = vpack.c.b16 %v12113, %v12113
      %v12178 = vpack.c.b16 %v12114, %v12114
      %v12179 = vpack.c.b16 %v12115, %v12115
      %v12180 = vpack.c.b16 %v12116, %v12116
      %v12181 = vpack.c.b16 %v12117, %v12117
      %v12182 = vpack.c.b16 %v12118, %v12118
      %v12183 = vpack.c.b16 %v12119, %v12119
      %v12184 = vpack.c.b16 %v12120, %v12120
      %v12185 = vpack.c.b16 %v12121, %v12121
      %v12186 = vpack.c.b16 %v12122, %v12122
      %v12187 = vpack.c.b16 %v12123, %v12123
      %v12188 = vpack.c.b16 %v12124, %v12124
      %v12189 = vpack.c.b16 %v12125, %v12125
      %v12190 = vpack.c.b16 %v12126, %v12126
      %vm12255 = vcmask 257024
      %12256 = vst.msk [vmem:[%s258] sm:$0xf] %vm12255, %v12127
      %12257 = vst.msk [vmem:[%s258 + $0x4] sm:$0xf] %vm12255, %v12128
      %12258 = vst.msk [vmem:[%s258 + $0x8] sm:$0xf] %vm12255, %v12129
      %12259 = vst.msk [vmem:[%s258 + $0xc] sm:$0xf] %vm12255, %v12130
      %12260 = vst.msk [vmem:[%s258 + $0x10] sm:$0xf] %vm12255, %v12131
      %12261 = vst.msk [vmem:[%s258 + $0x14] sm:$0xf] %vm12255, %v12132
      %12262 = vst.msk [vmem:[%s258 + $0x18] sm:$0xf] %vm12255, %v12133
      %12263 = vst.msk [vmem:[%s258 + $0x1c] sm:$0xf] %vm12255, %v12134
      %12264 = vst.msk [vmem:[%s258 + $0x20] sm:$0xf] %vm12255, %v12135
      %12265 = vst.msk [vmem:[%s258 + $0x24] sm:$0xf] %vm12255, %v12136
      %12266 = vst.msk [vmem:[%s258 + $0x28] sm:$0xf] %vm12255, %v12137
      %12267 = vst.msk [vmem:[%s258 + $0x2c] sm:$0xf] %vm12255, %v12138
      %12268 = vst.msk [vmem:[%s258 + $0x30] sm:$0xf] %vm12255, %v12139
      %12269 = vst.msk [vmem:[%s258 + $0x34] sm:$0xf] %vm12255, %v12140
      %12270 = vst.msk [vmem:[%s258 + $0x38] sm:$0xf] %vm12255, %v12141
      %12271 = vst.msk [vmem:[%s258 + $0x3c] sm:$0xf] %vm12255, %v12142
      %12272 = vst.msk [vmem:[%s258 + $0x40] sm:$0xf] %vm12255, %v12143
      %12273 = vst.msk [vmem:[%s258 + $0x44] sm:$0xf] %vm12255, %v12144
      %12274 = vst.msk [vmem:[%s258 + $0x48] sm:$0xf] %vm12255, %v12145
      %12275 = vst.msk [vmem:[%s258 + $0x4c] sm:$0xf] %vm12255, %v12146
      %12276 = vst.msk [vmem:[%s258 + $0x50] sm:$0xf] %vm12255, %v12147
      %12277 = vst.msk [vmem:[%s258 + $0x54] sm:$0xf] %vm12255, %v12148
      %12278 = vst.msk [vmem:[%s258 + $0x58] sm:$0xf] %vm12255, %v12149
      %12279 = vst.msk [vmem:[%s258 + $0x5c] sm:$0xf] %vm12255, %v12150
      %12280 = vst.msk [vmem:[%s258 + $0x60] sm:$0xf] %vm12255, %v12151
      %12281 = vst.msk [vmem:[%s258 + $0x64] sm:$0xf] %vm12255, %v12152
      %12282 = vst.msk [vmem:[%s258 + $0x68] sm:$0xf] %vm12255, %v12153
      %12283 = vst.msk [vmem:[%s258 + $0x6c] sm:$0xf] %vm12255, %v12154
      %12284 = vst.msk [vmem:[%s258 + $0x70] sm:$0xf] %vm12255, %v12155
      %12285 = vst.msk [vmem:[%s258 + $0x74] sm:$0xf] %vm12255, %v12156
      %12286 = vst.msk [vmem:[%s258 + $0x78] sm:$0xf] %vm12255, %v12157
      %12287 = vst.msk [vmem:[%s258 + $0x7c] sm:$0xf] %vm12255, %v12158
      %12288 = vst.msk [vmem:[%s258 + $0x80] sm:$0xf] %vm12255, %v12159
      %12289 = vst.msk [vmem:[%s258 + $0x84] sm:$0xf] %vm12255, %v12160
      %12290 = vst.msk [vmem:[%s258 + $0x88] sm:$0xf] %vm12255, %v12161
      %12291 = vst.msk [vmem:[%s258 + $0x8c] sm:$0xf] %vm12255, %v12162
      %12292 = vst.msk [vmem:[%s258 + $0x90] sm:$0xf] %vm12255, %v12163
      %12293 = vst.msk [vmem:[%s258 + $0x94] sm:$0xf] %vm12255, %v12164
      %12294 = vst.msk [vmem:[%s258 + $0x98] sm:$0xf] %vm12255, %v12165
      %12295 = vst.msk [vmem:[%s258 + $0x9c] sm:$0xf] %vm12255, %v12166
      %12296 = vst.msk [vmem:[%s258 + $0xa0] sm:$0xf] %vm12255, %v12167
      %12297 = vst.msk [vmem:[%s258 + $0xa4] sm:$0xf] %vm12255, %v12168
      %12298 = vst.msk [vmem:[%s258 + $0xa8] sm:$0xf] %vm12255, %v12169
      %12299 = vst.msk [vmem:[%s258 + $0xac] sm:$0xf] %vm12255, %v12170
      %12300 = vst.msk [vmem:[%s258 + $0xb0] sm:$0xf] %vm12255, %v12171
      %12301 = vst.msk [vmem:[%s258 + $0xb4] sm:$0xf] %vm12255, %v12172
      %12302 = vst.msk [vmem:[%s258 + $0xb8] sm:$0xf] %vm12255, %v12173
      %12303 = vst.msk [vmem:[%s258 + $0xbc] sm:$0xf] %vm12255, %v12174
      %12304 = vst.msk [vmem:[%s258 + $0xc0] sm:$0xf] %vm12255, %v12175
      %12305 = vst.msk [vmem:[%s258 + $0xc4] sm:$0xf] %vm12255, %v12176
      %12306 = vst.msk [vmem:[%s258 + $0xc8] sm:$0xf] %vm12255, %v12177
      %12307 = vst.msk [vmem:[%s258 + $0xcc] sm:$0xf] %vm12255, %v12178
      %12308 = vst.msk [vmem:[%s258 + $0xd0] sm:$0xf] %vm12255, %v12179
      %12309 = vst.msk [vmem:[%s258 + $0xd4] sm:$0xf] %vm12255, %v12180
      %12310 = vst.msk [vmem:[%s258 + $0xd8] sm:$0xf] %vm12255, %v12181
      %12311 = vst.msk [vmem:[%s258 + $0xdc] sm:$0xf] %vm12255, %v12182
      %12312 = vst.msk [vmem:[%s258 + $0xe0] sm:$0xf] %vm12255, %v12183
      %12313 = vst.msk [vmem:[%s258 + $0xe4] sm:$0xf] %vm12255, %v12184
      %12314 = vst.msk [vmem:[%s258 + $0xe8] sm:$0xf] %vm12255, %v12185
      %12315 = vst.msk [vmem:[%s258 + $0xec] sm:$0xf] %vm12255, %v12186
      %12316 = vst.msk [vmem:[%s258 + $0xf0] sm:$0xf] %vm12255, %v12187
      %12317 = vst.msk [vmem:[%s258 + $0xf4] sm:$0xf] %vm12255, %v12188
      %12318 = vst.msk [vmem:[%s258 + $0xf8] sm:$0xf] %vm12255, %v12189
      %12319 = vst.msk [vmem:[%s258 + $0xfc] sm:$0xf] %vm12255, %v12190
      %s12320 = smul.u32 8, %s17
      %p12321 = scmp.lt.s32.totalorder %s12320, 15
      %s12322 = scalar_select %p12321, %s12320, 15
      %s12323 = smul.addr %s12322, 8
      %s12324 = smul.addr %s12323, 4
      %s12325 = scalar_lea.vmem %s6, %s12324
      // Predicated region
      $region45: #{tpu_custom_call.1} parent=43 // pred_check
        %p12326 = pneg %p166
      $region46: #{tpu_custom_call.1} parent=43 // pred_check_branch
        %12328 = sbr.rel (%p12326) target = $region48
      $region47: #{tpu_custom_call.1} parent=43 // pred_region
        %s12329 = smul.u32 8, %s17
      $region48: #{tpu_custom_call.1} parent=43 // pred_fallthru
        _
    $region44: #{tpu_custom_call.1} parent=5 // pred_fallthru
      _
    %p12330 = scmp.le.s32.totalorder 2, %s12
    // Predicated region
    $region49: #{tpu_custom_call.1} parent=5 // pred_check
      %p12331 = pneg %p12330
    $region50: #{tpu_custom_call.1} parent=5 // pred_check_branch
      %12333 = sbr.rel (%p12331) target = $region52
    $region51: #{tpu_custom_call.1} parent=5 // pred_region
      %s12334 = ssub.s32 %s12, 2
      // Predicated region
      $region53: #{tpu_custom_call.1} parent=51 // pred_check
        %p12335 = pneg %p172
      $region54: #{tpu_custom_call.1} parent=51 // pred_check_branch
        %12337 = sbr.rel (%p12335) target = $region56
      $region55: #{tpu_custom_call.1} parent=51 // pred_region
        %s12338 = smul.u32 8, %s18
        %p12339 = scmp.lt.s32.totalorder %s12338, 15
        %s12340 = scalar_select %p12339, %s12338, 15
        %s12341 = smul.addr %s12340, 8
        %s12342 = smul.addr %s12341, 4
        %s12343 = scalar_lea.vmem %s6, %s12342
      $region56: #{tpu_custom_call.1} parent=51 // pred_fallthru
        _
    $region52: #{tpu_custom_call.1} parent=5 // pred_fallthru
      _
  $region6: #{tpu_custom_call.1} parent=0 // loop_footer
    %s16 = sadd.s32 1, %s12
  $region7: #{tpu_custom_call.1} parent=0 // loop_footer_branch
    %11 = sbr.rel target = $region3
  $region8: #{tpu_custom_call.1} parent=0 // loop_exit
    _

</llo_original>
